<compile_context>
chip_gen: v7x
topology: tpu7x:2x2x1
jax: 0.10.0
libtpu: 0.0.40
codegen_flags: <defaults>
</compile_context>

<pallas_src>
from functools import partial

import numpy as np
import jax
import jax.numpy as jnp
from jax import lax
from jax.experimental import pallas as pl
from jax.experimental.pallas import tpu as pltpu

STATE_DIM = 34 * 4 + 4      # 140
SHOUPAI = 34 * 4            # 136
EXTRA = 4
N_CH = 16
OH, OW = 2, 34
CONV_OUT = N_CH * OH * OW   # 1088 (true conv/flatten width)
K_PAD = 1152                # 1088 conv + 4 extras + zero-pad, = 9 * 128 lanes
H1, H2 = 1024, 512
BN_EPS = 1e-5
LN_EPS = 1e-5


def _round_up(x, m):
    return (x + m - 1) // m * m


def _chip_config():
    """(batch_tile, vmem_limit_bytes, cores_per_chip) by TPU generation."""
    try:
        kind = jax.devices()[0].device_kind.lower()
    except Exception:
        kind = ""
    if "v5" in kind or "v6" in kind:       # 1 TensorCore, 128 MiB VMEM
        return 512, 64 << 20, 1
    if "v7" in kind:                       # 2 TensorCores, 64 MiB VMEM
        return 256, 48 << 20, 2
    return 256, 32 << 20, 2                # unknown: conservative


# ----------------------------------------------------------------------------
# Kernel
# ----------------------------------------------------------------------------
def _dqn_kernel(st_ref, cs_ref, ct_ref,
                wc_ref, bc_ref, lng_ref, lnb_ref,
                w1_ref, b1_ref, w2_ref, b2_ref, w3_ref, b3_ref,
                out_ref):
    st = st_ref[...]                                    # (tn, 140) f32

    # LayerNorm(4) row statistics of the 4 extra features (kept in f32).
    xex = st[:, SHOUPAI:]                               # (tn, 4)
    em = jnp.mean(xex, axis=-1, keepdims=True)
    ev = jnp.mean((xex - em) ** 2, axis=-1, keepdims=True)
    inv = lax.rsqrt(ev + LN_EPS)

    # Column-wise BatchNorm2d(1) affine (global-batch scale/shift on the 136
    # shoupai columns, identity on the 4 extras columns).
    stn = (st * cs_ref[...] + ct_ref[...]).astype(jnp.bfloat16)

    # Fused conv-Toeplitz + extras-routing matmul (K=140, N=1152):
    #   cols 0..1087  -> conv pre-activations, cols 1088..1091 -> raw extras,
    #   cols 1092..1151 -> 0 (they hit zero rows of W1, so anything is fine).
    t = jnp.dot(stn, wc_ref[...], preferred_element_type=jnp.float32) + bc_ref[...]
    col = lax.broadcasted_iota(jnp.int32, t.shape, 1)
    combined = jnp.where(
        col < CONV_OUT,
        jnp.maximum(t, 0.0),                                   # conv + bias + ReLU
        (t - em) * inv * lng_ref[...] + lnb_ref[...],          # LayerNorm(4) affine
    ).astype(jnp.bfloat16)                                     # (tn, 1152)

    # fc[0]: Linear(1088+4 -> 1024) as one K=1152 MXU matmul + ReLU.
    h1 = jnp.dot(combined, w1_ref[...], preferred_element_type=jnp.float32) + b1_ref[...]
    h1 = jnp.maximum(h1, 0.0).astype(jnp.bfloat16)

    # fc[2]: Linear(1024 -> 512) + ReLU.
    h2 = jnp.dot(h1, w2_ref[...], preferred_element_type=jnp.float32) + b2_ref[...]
    h2 = jnp.maximum(h2, 0.0).astype(jnp.bfloat16)

    # fc[4]: Linear(512 -> action_dim), lane-padded to a multiple of 128.
    out_ref[...] = jnp.dot(h2, w3_ref[...], preferred_element_type=jnp.float32) + b3_ref[...]


# ----------------------------------------------------------------------------
# Host-side (one-time) weight preparation
# ----------------------------------------------------------------------------
def _build_wc_aug(wconv):
    """(140, 1152) matrix: Toeplitz unfold of Conv2d(1,16,3x3,pad=(0,1)) into
    columns 0..1087 (Flatten channel-major order) + identity routing of the 4
    raw extra features into columns 1088..1091."""
    wconv = np.asarray(wconv, np.float32)                # (16, 1, 3, 3)
    mat = np.zeros((STATE_DIM, K_PAD), np.float32)
    for c in range(N_CH):
        for oh in range(OH):
            for ow in range(OW):
                out_idx = c * (OH * OW) + oh * OW + ow
                for kh in range(3):
                    ih = oh + kh                         # no padding along H
                    for kw in range(3):
                        iw = ow + kw - 1                 # padding of 1 along W
                        if 0 <= iw < OW:
                            mat[ih * OW + iw, out_idx] = wconv[c, 0, kh, kw]
    for k in range(EXTRA):
        mat[SHOUPAI + k, CONV_OUT + k] = 1.0
    return mat


def prepare_params(params):
    """Build device-resident, kernel-ready weights (bf16 casts, padding,
    Toeplitz unfold).  Call once per weight update, NOT per forward call."""
    action_dim = params["w3"].shape[1]
    out_pad = _round_up(max(action_dim, 128), 128)

    bc = np.zeros((1, K_PAD), np.float32)
    bc[0, :CONV_OUT] = np.repeat(np.asarray(params["bconv"], np.float32), OH * OW)

    lng = np.zeros((1, K_PAD), np.float32)
    lng[0, CONV_OUT:CONV_OUT + EXTRA] = np.asarray(params["ln_g"], np.float32)
    lnb = np.zeros((1, K_PAD), np.float32)
    lnb[0, CONV_OUT:CONV_OUT + EXTRA] = np.asarray(params["ln_b"], np.float32)

    w1_full = np.zeros((K_PAD, H1), np.float32)
    w1_full[:CONV_OUT] = np.asarray(params["w1a"], np.float32)
    w1_full[CONV_OUT:CONV_OUT + EXTRA] = np.asarray(params["w1b"], np.float32)

    w3p = np.zeros((H2, out_pad), np.float32)
    w3p[:, :action_dim] = np.asarray(params["w3"], np.float32)
    b3p = np.zeros((1, out_pad), np.float32)
    b3p[0, :action_dim] = np.asarray(params["b3"], np.float32)

    return {
        "bn_g": jnp.asarray(params["bn_g"], jnp.float32),
        "bn_b": jnp.asarray(params["bn_b"], jnp.float32),
        "wc": jnp.asarray(_build_wc_aug(params["wconv"])).astype(jnp.bfloat16),
        "bc": jnp.asarray(bc),
        "ln_gpad": jnp.asarray(lng),
        "ln_bpad": jnp.asarray(lnb),
        "w1": jnp.asarray(w1_full).astype(jnp.bfloat16),
        "b1": jnp.asarray(params["b1"], jnp.float32).reshape(1, H1),
        "w2": jnp.asarray(params["w2"]).astype(jnp.bfloat16),
        "b2": jnp.asarray(params["b2"], jnp.float32).reshape(1, H2),
        "w3": jnp.asarray(w3p).astype(jnp.bfloat16),
        "b3": jnp.asarray(b3p),
    }


# ----------------------------------------------------------------------------
# Forward
# ----------------------------------------------------------------------------
@partial(jax.jit, static_argnames=("action_dim",))
def dqn_forward(state, prep, *, action_dim):
    state = state.reshape(-1, STATE_DIM).astype(jnp.float32)
    n = state.shape[0]
    out_pad = prep["w3"].shape[1]

    # Train-mode BatchNorm2d(1): GLOBAL stats over the whole (un-padded) batch,
    # computed in a single fused sum / sum-of-squares pass here so that batch
    # tiling inside the kernel cannot change the semantics.
    # TODO(synk): BatchNorm running-stat buffer updates (a training side effect
    # in PyTorch) are not emulated; they do not affect the forward output.
    xsh = state[:, :SHOUPAI]
    cnt = float(xsh.size)
    s1 = jnp.sum(xsh)
    s2 = jnp.sum(xsh * xsh)
    m = s1 / cnt
    v = jnp.maximum(s2 / cnt - m * m, 0.0)
    scale = prep["bn_g"][0] * lax.rsqrt(v + BN_EPS)
    shift = prep["bn_b"][0] - m * scale
    # Column-wise affine: BN scale/shift on shoupai columns, identity on extras.
    cs = jnp.concatenate([jnp.broadcast_to(scale, (SHOUPAI,)),
                          jnp.ones((EXTRA,), jnp.float32)]).reshape(1, STATE_DIM)
    ct = jnp.concatenate([jnp.broadcast_to(shift, (SHOUPAI,)),
                          jnp.zeros((EXTRA,), jnp.float32)]).reshape(1, STATE_DIM)

    # Generation-aware batch tiling.
    batch_tile, vmem_limit, n_cores = _chip_config()
    tn = min(batch_tile, _round_up(n, 8))
    if n_cores > 1 and n >= 16:
        # At least `n_cores` grid steps so the "parallel" axis can shard.
        tn = min(tn, _round_up(-(-n // n_cores), 8))
    n_pad = _round_up(n, tn)
    if n_pad != n:
        # Padded rows are all-zero; their LayerNorm sees zero variance
        # (rsqrt(eps), finite) and they are sliced off below.
        state = jnp.pad(state, ((0, n_pad - n), (0, 0)))
    grid = (n_pad // tn,)

    in_specs = [
        pl.BlockSpec((tn, STATE_DIM), lambda i: (i, 0)),      # state tile
        pl.BlockSpec((1, STATE_DIM), lambda i: (0, 0)),       # BN column scale
        pl.BlockSpec((1, STATE_DIM), lambda i: (0, 0)),       # BN column shift
        pl.BlockSpec((STATE_DIM, K_PAD), lambda i: (0, 0)),   # wc_aug (bf16)
        pl.BlockSpec((1, K_PAD), lambda i: (0, 0)),           # conv bias (padded)
        pl.BlockSpec((1, K_PAD), lambda i: (0, 0)),           # LN gamma (scattered)
        pl.BlockSpec((1, K_PAD), lambda i: (0, 0)),           # LN beta  (scattered)
        pl.BlockSpec((K_PAD, H1), lambda i: (0, 0)),          # w1 (bf16, K-padded)
        pl.BlockSpec((1, H1), lambda i: (0, 0)),              # b1
        pl.BlockSpec((H1, H2), lambda i: (0, 0)),             # w2 (bf16)
        pl.BlockSpec((1, H2), lambda i: (0, 0)),              # b2
        pl.BlockSpec((H2, out_pad), lambda i: (0, 0)),        # w3 (bf16, padded)
        pl.BlockSpec((1, out_pad), lambda i: (0, 0)),         # b3 (padded)
    ]
    out_spec = pl.BlockSpec((tn, out_pad), lambda i: (i, 0))

    out = pl.pallas_call(
        _dqn_kernel,
        out_shape=jax.ShapeDtypeStruct((n_pad, out_pad), jnp.float32),
        grid=grid,
        in_specs=in_specs,
        out_specs=out_spec,
        compiler_params=pltpu.CompilerParams(
            dimension_semantics=("parallel",),
            vmem_limit_bytes=vmem_limit,
        ),
    )(state, cs, ct, prep["wc"], prep["bc"], prep["ln_gpad"], prep["ln_bpad"],
      prep["w1"], prep["b1"], prep["w2"], prep["b2"], prep["w3"], prep["b3"])

    return out[:n, :action_dim]


# ----------------------------------------------------------------------------
# Parameters & pure-JAX reference
# ----------------------------------------------------------------------------
def init_params(key, action_dim):
    ks = jax.random.split(key, 8)

    def uni(k, shape, fan_in):
        bound = 1.0 / np.sqrt(fan_in)
        return jax.random.uniform(k, shape, jnp.float32, -bound, bound)

    wconv = uni(ks[0], (N_CH, 1, 3, 3), 9)
    bconv = uni(ks[1], (N_CH,), 9)
    w1 = uni(ks[2], (CONV_OUT + EXTRA, H1), CONV_OUT + EXTRA)
    b1 = uni(ks[3], (H1,), CONV_OUT + EXTRA)
    w2 = uni(ks[4], (H1, H2), H1)
    b2 = uni(ks[5], (H2,), H1)
    w3 = uni(ks[6], (H2, action_dim), H2)
    b3 = uni(ks[7], (action_dim,), H2)

    return {
        "wconv": wconv, "bconv": bconv,
        # BatchNorm2d(1) / LayerNorm(4) affine params (PyTorch init: ones / zeros)
        "bn_g": jnp.ones((1,), jnp.float32), "bn_b": jnp.zeros((1,), jnp.float32),
        "ln_g": jnp.ones((EXTRA,), jnp.float32), "ln_b": jnp.zeros((EXTRA,), jnp.float32),
        # fc weights stored (in, out); W1 split at the cat([conv, extra]) boundary
        "w1a": w1[:CONV_OUT], "w1b": w1[CONV_OUT:], "b1": b1,
        "w2": w2, "b2": b2, "w3": w3, "b3": b3,
    }


def dqn_reference(state, params):
    """Pure-JAX f32 reference matching the PyTorch forward (train-mode BatchNorm)."""
    state = state.reshape(-1, STATE_DIM)
    xsh = state[:, :SHOUPAI].reshape(-1, 1, 4, 34)
    xex = state[:, SHOUPAI:].reshape(-1, 4)
    m = jnp.mean(xsh)
    v = jnp.mean((xsh - m) ** 2)
    xsh = (xsh - m) / jnp.sqrt(v + BN_EPS) * params["bn_g"][0] + params["bn_b"][0]
    em = jnp.mean(xex, -1, keepdims=True)
    ev = jnp.mean((xex - em) ** 2, -1, keepdims=True)
    xex = (xex - em) / jnp.sqrt(ev + LN_EPS) * params["ln_g"] + params["ln_b"]
    conv = lax.conv_general_dilated(
        xsh, params["wconv"], window_strides=(1, 1), padding=((0, 0), (1, 1)),
        dimension_numbers=("NCHW", "OIHW", "NCHW"))
    conv = conv + params["bconv"][None, :, None, None]
    conv = jnp.maximum(conv, 0.0).reshape(-1, CONV_OUT)
    comb = jnp.concatenate([conv, xex], axis=1)
    w1 = jnp.concatenate([params["w1a"], params["w1b"]], axis=0)
    h1 = jnp.maximum(comb @ w1 + params["b1"], 0.0)
    h2 = jnp.maximum(h1 @ params["w2"] + params["b2"], 0.0)
    return h2 @ params["w3"] + params["b3"]


if __name__ == "__main__":
    key = jax.random.PRNGKey(0)
    pkey, xkey = jax.random.split(key)
    action_dim = 64
    raw_params = init_params(pkey, action_dim)
    prep = prepare_params(raw_params)          # one-time, off the launch path

    batch = 8
    state = jax.random.normal(xkey, (batch, STATE_DIM), jnp.float32)

    out = dqn_forward(state, prep, action_dim=action_dim)
    out = jax.block_until_ready(out)

    ref = dqn_reference(state, raw_params)
    assert out.shape == (batch, action_dim), out.shape
    np.testing.assert_allclose(np.asarray(out), np.asarray(ref), rtol=2e-2, atol=2e-2)
    print("KERNEL_OK")
</pallas_src>

<mosaic_0001>
module attributes {stable_mosaic.version = 11 : i64} {
  func.func @_dqn_kernel(%arg0: i32, %arg1: memref<8x140xf32, #tpu.memory_space<vmem>>, %arg2: memref<1x140xf32, #tpu.memory_space<vmem>>, %arg3: memref<1x140xf32, #tpu.memory_space<vmem>>, %arg4: memref<140x1152xbf16, #tpu.memory_space<vmem>>, %arg5: memref<1x1152xf32, #tpu.memory_space<vmem>>, %arg6: memref<1x1152xf32, #tpu.memory_space<vmem>>, %arg7: memref<1x1152xf32, #tpu.memory_space<vmem>>, %arg8: memref<1152x1024xbf16, #tpu.memory_space<vmem>>, %arg9: memref<1x1024xf32, #tpu.memory_space<vmem>>, %arg10: memref<1024x512xbf16, #tpu.memory_space<vmem>>, %arg11: memref<1x512xf32, #tpu.memory_space<vmem>>, %arg12: memref<512x128xbf16, #tpu.memory_space<vmem>>, %arg13: memref<1x128xf32, #tpu.memory_space<vmem>>, %arg14: memref<8x128xf32, #tpu.memory_space<vmem>>) attributes {dimension_semantics = [#tpu.dimension_semantics<parallel>], iteration_bounds = array<i64: 1>, scalar_prefetch = 0 : i64, scratch_operands = 0 : i64, tpu.core_type = #tpu.core_type<tc>, window_params = [{transform_indices = @transform_0, window_bounds = array<i64: 8, 140>}, {pipeline_mode = #tpu.pipeline_mode<synchronous>, transform_indices = @transform_1, window_bounds = array<i64: 1, 140>}, {pipeline_mode = #tpu.pipeline_mode<synchronous>, transform_indices = @transform_2, window_bounds = array<i64: 1, 140>}, {pipeline_mode = #tpu.pipeline_mode<synchronous>, transform_indices = @transform_3, window_bounds = array<i64: 140, 1152>}, {pipeline_mode = #tpu.pipeline_mode<synchronous>, transform_indices = @transform_4, window_bounds = array<i64: 1, 1152>}, {pipeline_mode = #tpu.pipeline_mode<synchronous>, transform_indices = @transform_5, window_bounds = array<i64: 1, 1152>}, {pipeline_mode = #tpu.pipeline_mode<synchronous>, transform_indices = @transform_6, window_bounds = array<i64: 1, 1152>}, {pipeline_mode = #tpu.pipeline_mode<synchronous>, transform_indices = @transform_7, window_bounds = array<i64: 1152, 1024>}, {pipeline_mode = #tpu.pipeline_mode<synchronous>, transform_indices = @transform_8, window_bounds = array<i64: 1, 1024>}, {pipeline_mode = #tpu.pipeline_mode<synchronous>, transform_indices = @transform_9, window_bounds = array<i64: 1024, 512>}, {pipeline_mode = #tpu.pipeline_mode<synchronous>, transform_indices = @transform_10, window_bounds = array<i64: 1, 512>}, {pipeline_mode = #tpu.pipeline_mode<synchronous>, transform_indices = @transform_11, window_bounds = array<i64: 512, 128>}, {pipeline_mode = #tpu.pipeline_mode<synchronous>, transform_indices = @transform_12, window_bounds = array<i64: 1, 128>}, {transform_indices = @transform_13, window_bounds = array<i64: 8, 128>}]} {
    %c0 = arith.constant 0 : index
    %c0_0 = arith.constant 0 : index
    %0 = vector.load %arg1[%c0, %c0_0] : memref<8x140xf32, #tpu.memory_space<vmem>>, vector<8x140xf32>
    %1 = vector.extract_strided_slice %0 {offsets = [0, 136], sizes = [8, 4], strides = [1, 1]} : vector<8x140xf32> to vector<8x4xf32>
    %cst = arith.constant dense<0.000000e+00> : vector<8xf32>
    %2 = vector.multi_reduction <add>, %1, %cst [1] : vector<8x4xf32> to vector<8xf32>
    %3 = vector.shape_cast %2 : vector<8xf32> to vector<8x1xf32>
    %cst_1 = arith.constant 4.000000e+00 : f32
    %4 = vector.broadcast %cst_1 : f32 to vector<8x1xf32>
    %5 = arith.divf %3, %4 : vector<8x1xf32>
    %6 = vector.broadcast %5 : vector<8x1xf32> to vector<8x4xf32>
    %7 = arith.subf %1, %6 : vector<8x4xf32>
    %8 = arith.mulf %7, %7 : vector<8x4xf32>
    %cst_2 = arith.constant dense<0.000000e+00> : vector<8xf32>
    %9 = vector.multi_reduction <add>, %8, %cst_2 [1] : vector<8x4xf32> to vector<8xf32>
    %10 = vector.shape_cast %9 : vector<8xf32> to vector<8x1xf32>
    %cst_3 = arith.constant 4.000000e+00 : f32
    %11 = vector.broadcast %cst_3 : f32 to vector<8x1xf32>
    %12 = arith.divf %10, %11 : vector<8x1xf32>
    %cst_4 = arith.constant 9.99999974E-6 : f32
    %13 = vector.broadcast %cst_4 : f32 to vector<8x1xf32>
    %14 = arith.addf %12, %13 : vector<8x1xf32>
    %15 = math.rsqrt %14 : vector<8x1xf32>
    %c0_5 = arith.constant 0 : index
    %c0_6 = arith.constant 0 : index
    %16 = vector.load %arg2[%c0_5, %c0_6] : memref<1x140xf32, #tpu.memory_space<vmem>>, vector<1x140xf32>
    %17 = vector.broadcast %16 : vector<1x140xf32> to vector<8x140xf32>
    %18 = arith.mulf %0, %17 : vector<8x140xf32>
    %c0_7 = arith.constant 0 : index
    %c0_8 = arith.constant 0 : index
    %19 = vector.load %arg3[%c0_7, %c0_8] : memref<1x140xf32, #tpu.memory_space<vmem>>, vector<1x140xf32>
    %20 = vector.broadcast %19 : vector<1x140xf32> to vector<8x140xf32>
    %21 = arith.addf %18, %20 : vector<8x140xf32>
    %22 = arith.truncf %21 : vector<8x140xf32> to vector<8x140xbf16>
    %c0_9 = arith.constant 0 : index
    %c0_10 = arith.constant 0 : index
    %23 = vector.load %arg4[%c0_9, %c0_10] : memref<140x1152xbf16, #tpu.memory_space<vmem>>, vector<140x1152xbf16>
    %cst_11 = arith.constant dense<0.000000e+00> : vector<8x1152xf32>
    %24 = tpu.matmul %22, %23, %cst_11 {dimension_numbers = #tpu.dot_dimension_numbers<[1], [0], [0], [1], [0, 0, 1, 1], [], []>} : vector<8x140xbf16>, vector<140x1152xbf16>, vector<8x1152xf32> -> vector<8x1152xf32>
    %c0_12 = arith.constant 0 : index
    %c0_13 = arith.constant 0 : index
    %25 = vector.load %arg5[%c0_12, %c0_13] : memref<1x1152xf32, #tpu.memory_space<vmem>>, vector<1x1152xf32>
    %26 = vector.broadcast %25 : vector<1x1152xf32> to vector<8x1152xf32>
    %27 = arith.addf %24, %26 : vector<8x1152xf32>
    %28 = tpu.iota {dimensions = array<i32: 1>} : vector<8x1152xi32>
    %c1088_i32 = arith.constant 1088 : i32
    %29 = vector.broadcast %c1088_i32 : i32 to vector<8x1152xi32>
    %30 = arith.cmpi slt, %28, %29 : vector<8x1152xi32>
    %cst_14 = arith.constant 0.000000e+00 : f32
    %31 = vector.broadcast %cst_14 : f32 to vector<8x1152xf32>
    %32 = arith.maximumf %27, %31 : vector<8x1152xf32>
    %33 = vector.broadcast %5 : vector<8x1xf32> to vector<8x1152xf32>
    %34 = arith.subf %27, %33 : vector<8x1152xf32>
    %35 = vector.broadcast %15 : vector<8x1xf32> to vector<8x1152xf32>
    %36 = arith.mulf %34, %35 : vector<8x1152xf32>
    %c0_15 = arith.constant 0 : index
    %c0_16 = arith.constant 0 : index
    %37 = vector.load %arg6[%c0_15, %c0_16] : memref<1x1152xf32, #tpu.memory_space<vmem>>, vector<1x1152xf32>
    %38 = vector.broadcast %37 : vector<1x1152xf32> to vector<8x1152xf32>
    %39 = arith.mulf %36, %38 : vector<8x1152xf32>
    %c0_17 = arith.constant 0 : index
    %c0_18 = arith.constant 0 : index
    %40 = vector.load %arg7[%c0_17, %c0_18] : memref<1x1152xf32, #tpu.memory_space<vmem>>, vector<1x1152xf32>
    %41 = vector.broadcast %40 : vector<1x1152xf32> to vector<8x1152xf32>
    %42 = arith.addf %39, %41 : vector<8x1152xf32>
    %43 = arith.select %30, %32, %42 : vector<8x1152xi1>, vector<8x1152xf32>
    %44 = arith.truncf %43 : vector<8x1152xf32> to vector<8x1152xbf16>
    %c0_19 = arith.constant 0 : index
    %c0_20 = arith.constant 0 : index
    %45 = vector.load %arg8[%c0_19, %c0_20] : memref<1152x1024xbf16, #tpu.memory_space<vmem>>, vector<1152x1024xbf16>
    %cst_21 = arith.constant dense<0.000000e+00> : vector<8x1024xf32>
    %46 = tpu.matmul %44, %45, %cst_21 {dimension_numbers = #tpu.dot_dimension_numbers<[1], [0], [0], [1], [0, 0, 1, 1], [], []>} : vector<8x1152xbf16>, vector<1152x1024xbf16>, vector<8x1024xf32> -> vector<8x1024xf32>
    %c0_22 = arith.constant 0 : index
    %c0_23 = arith.constant 0 : index
    %47 = vector.load %arg9[%c0_22, %c0_23] : memref<1x1024xf32, #tpu.memory_space<vmem>>, vector<1x1024xf32>
    %48 = vector.broadcast %47 : vector<1x1024xf32> to vector<8x1024xf32>
    %49 = arith.addf %46, %48 : vector<8x1024xf32>
    %cst_24 = arith.constant 0.000000e+00 : f32
    %50 = vector.broadcast %cst_24 : f32 to vector<8x1024xf32>
    %51 = arith.maximumf %49, %50 : vector<8x1024xf32>
    %52 = arith.truncf %51 : vector<8x1024xf32> to vector<8x1024xbf16>
    %c0_25 = arith.constant 0 : index
    %c0_26 = arith.constant 0 : index
    %53 = vector.load %arg10[%c0_25, %c0_26] : memref<1024x512xbf16, #tpu.memory_space<vmem>>, vector<1024x512xbf16>
    %cst_27 = arith.constant dense<0.000000e+00> : vector<8x512xf32>
    %54 = tpu.matmul %52, %53, %cst_27 {dimension_numbers = #tpu.dot_dimension_numbers<[1], [0], [0], [1], [0, 0, 1, 1], [], []>} : vector<8x1024xbf16>, vector<1024x512xbf16>, vector<8x512xf32> -> vector<8x512xf32>
    %c0_28 = arith.constant 0 : index
    %c0_29 = arith.constant 0 : index
    %55 = vector.load %arg11[%c0_28, %c0_29] : memref<1x512xf32, #tpu.memory_space<vmem>>, vector<1x512xf32>
    %56 = vector.broadcast %55 : vector<1x512xf32> to vector<8x512xf32>
    %57 = arith.addf %54, %56 : vector<8x512xf32>
    %cst_30 = arith.constant 0.000000e+00 : f32
    %58 = vector.broadcast %cst_30 : f32 to vector<8x512xf32>
    %59 = arith.maximumf %57, %58 : vector<8x512xf32>
    %60 = arith.truncf %59 : vector<8x512xf32> to vector<8x512xbf16>
    %c0_31 = arith.constant 0 : index
    %c0_32 = arith.constant 0 : index
    %61 = vector.load %arg12[%c0_31, %c0_32] : memref<512x128xbf16, #tpu.memory_space<vmem>>, vector<512x128xbf16>
    %cst_33 = arith.constant dense<0.000000e+00> : vector<8x128xf32>
    %62 = tpu.matmul %60, %61, %cst_33 {dimension_numbers = #tpu.dot_dimension_numbers<[1], [0], [0], [1], [0, 0, 1, 1], [], []>} : vector<8x512xbf16>, vector<512x128xbf16>, vector<8x128xf32> -> vector<8x128xf32>
    %c0_34 = arith.constant 0 : index
    %c0_35 = arith.constant 0 : index
    %63 = vector.load %arg13[%c0_34, %c0_35] : memref<1x128xf32, #tpu.memory_space<vmem>>, vector<1x128xf32>
    %64 = vector.broadcast %63 : vector<1x128xf32> to vector<8x128xf32>
    %65 = arith.addf %62, %64 : vector<8x128xf32>
    %c0_36 = arith.constant 0 : index
    %c0_37 = arith.constant 0 : index
    %66 = vector.load %arg14[%c0_36, %c0_37] : memref<8x128xf32, #tpu.memory_space<vmem>>, vector<8x128xf32>
    tpu.vector_store %arg14[%c0_36, %c0_37], %65 {strides = array<i32>} : memref<8x128xf32, #tpu.memory_space<vmem>>, vector<8x128xf32>,
    return
  }
  func.func @transform_0(%arg0: i32) -> (i32, i32) {
    %c0_i32 = arith.constant 0 : i32
    %c0_i32_0 = arith.constant 0 : i32
    return %arg0, %c0_i32 : i32, i32
  }
  func.func @transform_1(%arg0: i32) -> (i32, i32) {
    %c0_i32 = arith.constant 0 : i32
    %c0_i32_0 = arith.constant 0 : i32
    %c0_i32_1 = arith.constant 0 : i32
    return %c0_i32, %c0_i32_0 : i32, i32
  }
  func.func @transform_2(%arg0: i32) -> (i32, i32) {
    %c0_i32 = arith.constant 0 : i32
    %c0_i32_0 = arith.constant 0 : i32
    %c0_i32_1 = arith.constant 0 : i32
    return %c0_i32, %c0_i32_0 : i32, i32
  }
  func.func @transform_3(%arg0: i32) -> (i32, i32) {
    %c0_i32 = arith.constant 0 : i32
    %c0_i32_0 = arith.constant 0 : i32
    %c0_i32_1 = arith.constant 0 : i32
    return %c0_i32, %c0_i32_0 : i32, i32
  }
  func.func @transform_4(%arg0: i32) -> (i32, i32) {
    %c0_i32 = arith.constant 0 : i32
    %c0_i32_0 = arith.constant 0 : i32
    %c0_i32_1 = arith.constant 0 : i32
    return %c0_i32, %c0_i32_0 : i32, i32
  }
  func.func @transform_5(%arg0: i32) -> (i32, i32) {
    %c0_i32 = arith.constant 0 : i32
    %c0_i32_0 = arith.constant 0 : i32
    %c0_i32_1 = arith.constant 0 : i32
    return %c0_i32, %c0_i32_0 : i32, i32
  }
  func.func @transform_6(%arg0: i32) -> (i32, i32) {
    %c0_i32 = arith.constant 0 : i32
    %c0_i32_0 = arith.constant 0 : i32
    %c0_i32_1 = arith.constant 0 : i32
    return %c0_i32, %c0_i32_0 : i32, i32
  }
  func.func @transform_7(%arg0: i32) -> (i32, i32) {
    %c0_i32 = arith.constant 0 : i32
    %c0_i32_0 = arith.constant 0 : i32
    %c0_i32_1 = arith.constant 0 : i32
    return %c0_i32, %c0_i32_0 : i32, i32
  }
  func.func @transform_8(%arg0: i32) -> (i32, i32) {
    %c0_i32 = arith.constant 0 : i32
    %c0_i32_0 = arith.constant 0 : i32
    %c0_i32_1 = arith.constant 0 : i32
    return %c0_i32, %c0_i32_0 : i32, i32
  }
  func.func @transform_9(%arg0: i32) -> (i32, i32) {
    %c0_i32 = arith.constant 0 : i32
    %c0_i32_0 = arith.constant 0 : i32
    %c0_i32_1 = arith.constant 0 : i32
    return %c0_i32, %c0_i32_0 : i32, i32
  }
  func.func @transform_10(%arg0: i32) -> (i32, i32) {
    %c0_i32 = arith.constant 0 : i32
    %c0_i32_0 = arith.constant 0 : i32
    %c0_i32_1 = arith.constant 0 : i32
    return %c0_i32, %c0_i32_0 : i32, i32
  }
  func.func @transform_11(%arg0: i32) -> (i32, i32) {
    %c0_i32 = arith.constant 0 : i32
    %c0_i32_0 = arith.constant 0 : i32
    %c0_i32_1 = arith.constant 0 : i32
    return %c0_i32, %c0_i32_0 : i32, i32
  }
  func.func @transform_12(%arg0: i32) -> (i32, i32) {
    %c0_i32 = arith.constant 0 : i32
    %c0_i32_0 = arith.constant 0 : i32
    %c0_i32_1 = arith.constant 0 : i32
    return %c0_i32, %c0_i32_0 : i32, i32
  }
  func.func @transform_13(%arg0: i32) -> (i32, i32) {
    %c0_i32 = arith.constant 0 : i32
    %c0_i32_0 = arith.constant 0 : i32
    return %arg0, %c0_i32 : i32, i32
  }
}

</mosaic_0001>

<llo_original>
// kernel: dqn_forward.1
$region0: #{dqn_forward.1}
  #allocation0 [shape = 'u32[]', space=smem, size = 0x4, offset = 0x4, fixed_abs, tag = 'smem constant byte address 0x4 - core index']
  #allocation1 [shape = 'u32[144,128]{1,0:T(1,128)}', space=vmem, size = 0x12000, scoped, tag = 'internal scratch']
  %s0 = inlined_call_operand.hbm [shape: f32[8,140], index: 0, kind: input, shape index: {}]
  %s1 = inlined_call_operand.vmem [shape: f32[1,140], index: 1, kind: input, shape index: {}]
  %s2 = inlined_call_operand.vmem [shape: f32[1,140], index: 2, kind: input, shape index: {}]
  %s3 = inlined_call_operand.hbm [shape: bf16[140,1152], index: 3, kind: input, shape index: {}]
  %s4 = inlined_call_operand.hbm [shape: f32[1,1152], index: 4, kind: input, shape index: {}]
  %s5 = inlined_call_operand.hbm [shape: f32[1,1152], index: 5, kind: input, shape index: {}]
  %s6 = inlined_call_operand.hbm [shape: f32[1,1152], index: 6, kind: input, shape index: {}]
  %s7 = inlined_call_operand.hbm [shape: bf16[1152,1024], index: 7, kind: input, shape index: {}]
  %s8 = inlined_call_operand.hbm [shape: f32[1,1024], index: 8, kind: input, shape index: {}]
  %s9 = inlined_call_operand.hbm [shape: bf16[1024,512], index: 9, kind: input, shape index: {}]
  %s10 = inlined_call_operand.hbm [shape: f32[1,512], index: 10, kind: input, shape index: {}]
  %s11 = inlined_call_operand.hbm [shape: bf16[512,128], index: 11, kind: input, shape index: {}]
  %s12 = inlined_call_operand.hbm [shape: f32[1,128], index: 12, kind: input, shape index: {}]
  %s13 = inlined_call_operand.hbm [shape: f32[8,128], index: 13, kind: output, shape index: {}]
  %s14 = sld [smem:[#allocation0]]
  $region106: #{dqn_forward.1} parent=0
    _
  %s16 = ssub.s32 1, %s14
  %s17 = scalar_select 0, %s16, %s14
  $region1: #{dqn_forward.1} parent=0
    #allocation2 [shape = 'u8[8192]{0}', space=vmem, size = 0x2000, scoped, tag = 'input window, operand 0, single buffered']
    #allocation3 [shape = 's32[1]{0}', space=sflag, size = 0x4, scoped, tag = 'scoped memory for dqn_forward.1']
    #allocation4 [shape = 's32[1]{0}', space=sflag, size = 0x4, scoped, tag = 'scoped memory for dqn_forward.1']
    #allocation5 [shape = 'u8[331776]{0}', space=vmem, size = 0x51000, scoped, tag = 'input window, operand 3, single buffered']
    #allocation6 [shape = 's32[1]{0}', space=sflag, size = 0x4, scoped, tag = 'scoped memory for dqn_forward.1']
    #allocation7 [shape = 'u8[4608]{0}', space=vmem, size = 0x1400, scoped, tag = 'input window, operand 4, single buffered']
    #allocation8 [shape = 'u8[4608]{0}', space=vmem, size = 0x1400, scoped, tag = 'input window, operand 5, single buffered']
    #allocation9 [shape = 's32[1]{0}', space=sflag, size = 0x4, scoped, tag = 'scoped memory for dqn_forward.1']
    #allocation10 [shape = 'u8[4608]{0}', space=vmem, size = 0x1400, scoped, tag = 'input window, operand 6, single buffered']
    #allocation11 [shape = 'u8[2359296]{0}', space=vmem, size = 0x240000, scoped, tag = 'input window, operand 7, single buffered']
    #allocation12 [shape = 's32[1]{0}', space=sflag, size = 0x4, scoped, tag = 'scoped memory for dqn_forward.1']
    #allocation13 [shape = 'u8[4096]{0}', space=vmem, size = 0x1000, scoped, tag = 'input window, operand 8, single buffered']
    #allocation14 [shape = 'u8[1048576]{0}', space=vmem, size = 0x100000, scoped, tag = 'input window, operand 9, single buffered']
    #allocation15 [shape = 's32[1]{0}', space=sflag, size = 0x4, scoped, tag = 'scoped memory for dqn_forward.1']
    #allocation16 [shape = 'u8[2048]{0}', space=vmem, size = 0x800, scoped, tag = 'input window, operand 10, single buffered']
    #allocation17 [shape = 'u8[131072]{0}', space=vmem, size = 0x20000, scoped, tag = 'input window, operand 11, single buffered']
    #allocation18 [shape = 's32[1]{0}', space=sflag, size = 0x4, scoped, tag = 'scoped memory for dqn_forward.1']
    #allocation19 [shape = 'u8[512]{0}', space=vmem, size = 0x400, scoped, tag = 'input window, operand 12, single buffered']
    #allocation20 [shape = 'u8[4096]{0}', space=vmem, size = 0x1000, scoped, tag = 'output window, operand 0, single buffered']
    %18 = vsyncpa [#allocation3], 0
    %19 = vsyncpa [#allocation6], 0
    %20 = vsyncpa [#allocation9], 0
    %21 = vsyncpa [#allocation12], 0
    %22 = vsyncpa [#allocation15], 0
    %23 = vsyncpa [#allocation18], 0
    %24 = vsyncpa [#allocation4], 0
    // Predicated region
    $region2: #{dqn_forward.1} parent=1 // pred_check
      _
    $region3: #{dqn_forward.1} parent=1 // pred_check_branch
      %26 = sbr.rel (0) target = $region5
    $region4: #{dqn_forward.1} parent=1 // pred_region
      %s28 = ssub.s32 256, 256
      %29 = vsyncadd [#allocation3], %s28
      %s31 = sshll.u32 [#allocation2], 4
      %s32 = int_to_ptr.vmem [resolvable:$true] %s31
      %34 = dma.hbm_to_vmem [thread:$0]  %s0, 256, %s32, [#allocation3]
    $region5: #{dqn_forward.1} parent=1 // pred_fallthru
      _
    // Predicated region
    $region6: #{dqn_forward.1} parent=1 // pred_check
      _
    $region7: #{dqn_forward.1} parent=1 // pred_check_branch
      %36 = sbr.rel (0) target = $region9
    $region8: #{dqn_forward.1} parent=1 // pred_region
      _
    $region9: #{dqn_forward.1} parent=1 // pred_fallthru
      _
    // Predicated region
    $region10: #{dqn_forward.1} parent=1 // pred_check
      _
    $region11: #{dqn_forward.1} parent=1 // pred_check_branch
      %38 = sbr.rel (0) target = $region13
    $region12: #{dqn_forward.1} parent=1 // pred_region
      _
    $region13: #{dqn_forward.1} parent=1 // pred_fallthru
      _
    // Predicated region
    $region14: #{dqn_forward.1} parent=1 // pred_check
      _
    $region15: #{dqn_forward.1} parent=1 // pred_check_branch
      %40 = sbr.rel (0) target = $region17
    $region16: #{dqn_forward.1} parent=1 // pred_region
      %s42 = ssub.s32 10368, 10368
      %43 = vsyncadd [#allocation6], %s42
      %s44 = sshll.u32 [#allocation5], 4
      %s45 = int_to_ptr.vmem [resolvable:$true] %s44
      %50 = dma.hbm_to_vmem [thread:$0]  %s3, 10368, %s45, [#allocation6], 576, 576, 36
    $region17: #{dqn_forward.1} parent=1 // pred_fallthru
      _
    // Predicated region
    $region18: #{dqn_forward.1} parent=1 // pred_check
      _
    $region19: #{dqn_forward.1} parent=1 // pred_check_branch
      %52 = sbr.rel (0) target = $region21
    $region20: #{dqn_forward.1} parent=1 // pred_region
      %s54 = ssub.s32 144, 144
      %55 = vsyncadd [#allocation6], %s54
      %s57 = sshll.u32 [#allocation7], 4
      %s58 = int_to_ptr.vmem [resolvable:$true] %s57
      %60 = dma.hbm_to_vmem [thread:$0]  %s4, 144, %s58, [#allocation6]
    $region21: #{dqn_forward.1} parent=1 // pred_fallthru
      _
    // Predicated region
    $region22: #{dqn_forward.1} parent=1 // pred_check
      _
    $region23: #{dqn_forward.1} parent=1 // pred_check_branch
      %62 = sbr.rel (0) target = $region25
    $region24: #{dqn_forward.1} parent=1 // pred_region
      %s64 = ssub.s32 144, 144
      %65 = vsyncadd [#allocation9], %s64
      %s67 = sshll.u32 [#allocation8], 4
      %s68 = int_to_ptr.vmem [resolvable:$true] %s67
      %70 = dma.hbm_to_vmem [thread:$0]  %s5, 144, %s68, [#allocation9]
    $region25: #{dqn_forward.1} parent=1 // pred_fallthru
      _
    // Predicated region
    $region26: #{dqn_forward.1} parent=1 // pred_check
      _
    $region27: #{dqn_forward.1} parent=1 // pred_check_branch
      %72 = sbr.rel (0) target = $region29
    $region28: #{dqn_forward.1} parent=1 // pred_region
      %s74 = ssub.s32 144, 144
      %75 = vsyncadd [#allocation9], %s74
      %s77 = sshll.u32 [#allocation10], 4
      %s78 = int_to_ptr.vmem [resolvable:$true] %s77
      %80 = dma.hbm_to_vmem [thread:$0]  %s6, 144, %s78, [#allocation9]
    $region29: #{dqn_forward.1} parent=1 // pred_fallthru
      _
    // Predicated region
    $region30: #{dqn_forward.1} parent=1 // pred_check
      _
    $region31: #{dqn_forward.1} parent=1 // pred_check_branch
      %82 = sbr.rel (0) target = $region33
    $region32: #{dqn_forward.1} parent=1 // pred_region
      %s84 = ssub.s32 73728, 73728
      %85 = vsyncadd [#allocation12], %s84
      %s86 = sshll.u32 [#allocation11], 4
      %s87 = int_to_ptr.vmem [resolvable:$true] %s86
      %92 = dma.hbm_to_vmem [thread:$0]  %s7, 73728, %s87, [#allocation12], 512, 512, 32
    $region33: #{dqn_forward.1} parent=1 // pred_fallthru
      _
    // Predicated region
    $region34: #{dqn_forward.1} parent=1 // pred_check
      _
    $region35: #{dqn_forward.1} parent=1 // pred_check_branch
      %94 = sbr.rel (0) target = $region37
    $region36: #{dqn_forward.1} parent=1 // pred_region
      %s96 = ssub.s32 128, 128
      %97 = vsyncadd [#allocation12], %s96
      %s99 = sshll.u32 [#allocation13], 4
      %s100 = int_to_ptr.vmem [resolvable:$true] %s99
      %102 = dma.hbm_to_vmem [thread:$0]  %s8, 128, %s100, [#allocation12]
    $region37: #{dqn_forward.1} parent=1 // pred_fallthru
      _
    // Predicated region
    $region38: #{dqn_forward.1} parent=1 // pred_check
      _
    $region39: #{dqn_forward.1} parent=1 // pred_check_branch
      %104 = sbr.rel (0) target = $region41
    $region40: #{dqn_forward.1} parent=1 // pred_region
      %s106 = ssub.s32 32768, 32768
      %107 = vsyncadd [#allocation15], %s106
      %s108 = sshll.u32 [#allocation14], 4
      %s109 = int_to_ptr.vmem [resolvable:$true] %s108
      %114 = dma.hbm_to_vmem [thread:$0]  %s9, 32768, %s109, [#allocation15], 256, 256, 16
    $region41: #{dqn_forward.1} parent=1 // pred_fallthru
      _
    // Predicated region
    $region42: #{dqn_forward.1} parent=1 // pred_check
      _
    $region43: #{dqn_forward.1} parent=1 // pred_check_branch
      %116 = sbr.rel (0) target = $region45
    $region44: #{dqn_forward.1} parent=1 // pred_region
      %s118 = ssub.s32 64, 64
      %119 = vsyncadd [#allocation15], %s118
      %s121 = sshll.u32 [#allocation16], 4
      %s122 = int_to_ptr.vmem [resolvable:$true] %s121
      %124 = dma.hbm_to_vmem [thread:$0]  %s10, 64, %s122, [#allocation15]
    $region45: #{dqn_forward.1} parent=1 // pred_fallthru
      _
    // Predicated region
    $region46: #{dqn_forward.1} parent=1 // pred_check
      _
    $region47: #{dqn_forward.1} parent=1 // pred_check_branch
      %126 = sbr.rel (0) target = $region49
    $region48: #{dqn_forward.1} parent=1 // pred_region
      %s128 = ssub.s32 4096, 4096
      %129 = vsyncadd [#allocation18], %s128
      %s130 = sshll.u32 [#allocation17], 4
      %s131 = int_to_ptr.vmem [resolvable:$true] %s130
      %136 = dma.hbm_to_vmem [thread:$0]  %s11, 4096, %s131, [#allocation18], 64, 64, 4
    $region49: #{dqn_forward.1} parent=1 // pred_fallthru
      _
    // Predicated region
    $region50: #{dqn_forward.1} parent=1 // pred_check
      _
    $region51: #{dqn_forward.1} parent=1 // pred_check_branch
      %138 = sbr.rel (0) target = $region53
    $region52: #{dqn_forward.1} parent=1 // pred_region
      %s140 = ssub.s32 16, 16
      %141 = vsyncadd [#allocation18], %s140
      %s143 = sshll.u32 [#allocation19], 4
      %s144 = int_to_ptr.vmem [resolvable:$true] %s143
      %146 = dma.hbm_to_vmem [thread:$0]  %s12, 16, %s144, [#allocation18]
    $region53: #{dqn_forward.1} parent=1 // pred_fallthru
      _
    // Predicated region
    $region54: #{dqn_forward.1} parent=1 // pred_check
      _
    $region55: #{dqn_forward.1} parent=1 // pred_check_branch
      %148 = sbr.rel (0) target = $region57
    $region56: #{dqn_forward.1} parent=1 // pred_region
      %149 = dma.done [#allocation3], 256
    $region57: #{dqn_forward.1} parent=1 // pred_fallthru
      _
    // Predicated region
    $region58: #{dqn_forward.1} parent=1 // pred_check
      _
    $region59: #{dqn_forward.1} parent=1 // pred_check_branch
      %151 = sbr.rel (0) target = $region61
    $region60: #{dqn_forward.1} parent=1 // pred_region
      %152 = dma.done [#allocation6], 10368
    $region61: #{dqn_forward.1} parent=1 // pred_fallthru
      _
    // Predicated region
    $region62: #{dqn_forward.1} parent=1 // pred_check
      _
    $region63: #{dqn_forward.1} parent=1 // pred_check_branch
      %154 = sbr.rel (0) target = $region65
    $region64: #{dqn_forward.1} parent=1 // pred_region
      %155 = dma.done [#allocation6], 144
    $region65: #{dqn_forward.1} parent=1 // pred_fallthru
      _
    // Predicated region
    $region66: #{dqn_forward.1} parent=1 // pred_check
      _
    $region67: #{dqn_forward.1} parent=1 // pred_check_branch
      %157 = sbr.rel (0) target = $region69
    $region68: #{dqn_forward.1} parent=1 // pred_region
      %158 = dma.done [#allocation9], 144
    $region69: #{dqn_forward.1} parent=1 // pred_fallthru
      _
    // Predicated region
    $region70: #{dqn_forward.1} parent=1 // pred_check
      _
    $region71: #{dqn_forward.1} parent=1 // pred_check_branch
      %160 = sbr.rel (0) target = $region73
    $region72: #{dqn_forward.1} parent=1 // pred_region
      %161 = dma.done [#allocation9], 144
    $region73: #{dqn_forward.1} parent=1 // pred_fallthru
      _
    // Predicated region
    $region74: #{dqn_forward.1} parent=1 // pred_check
      _
    $region75: #{dqn_forward.1} parent=1 // pred_check_branch
      %163 = sbr.rel (0) target = $region77
    $region76: #{dqn_forward.1} parent=1 // pred_region
      %164 = dma.done [#allocation12], 73728
    $region77: #{dqn_forward.1} parent=1 // pred_fallthru
      _
    // Predicated region
    $region78: #{dqn_forward.1} parent=1 // pred_check
      _
    $region79: #{dqn_forward.1} parent=1 // pred_check_branch
      %166 = sbr.rel (0) target = $region81
    $region80: #{dqn_forward.1} parent=1 // pred_region
      %167 = dma.done [#allocation12], 128
    $region81: #{dqn_forward.1} parent=1 // pred_fallthru
      _
    // Predicated region
    $region82: #{dqn_forward.1} parent=1 // pred_check
      _
    $region83: #{dqn_forward.1} parent=1 // pred_check_branch
      %169 = sbr.rel (0) target = $region85
    $region84: #{dqn_forward.1} parent=1 // pred_region
      %170 = dma.done [#allocation15], 32768
    $region85: #{dqn_forward.1} parent=1 // pred_fallthru
      _
    // Predicated region
    $region86: #{dqn_forward.1} parent=1 // pred_check
      _
    $region87: #{dqn_forward.1} parent=1 // pred_check_branch
      %172 = sbr.rel (0) target = $region89
    $region88: #{dqn_forward.1} parent=1 // pred_region
      %173 = dma.done [#allocation15], 64
    $region89: #{dqn_forward.1} parent=1 // pred_fallthru
      _
    // Predicated region
    $region90: #{dqn_forward.1} parent=1 // pred_check
      _
    $region91: #{dqn_forward.1} parent=1 // pred_check_branch
      %175 = sbr.rel (0) target = $region93
    $region92: #{dqn_forward.1} parent=1 // pred_region
      %176 = dma.done [#allocation18], 4096
    $region93: #{dqn_forward.1} parent=1 // pred_fallthru
      _
    // Predicated region
    $region94: #{dqn_forward.1} parent=1 // pred_check
      _
    $region95: #{dqn_forward.1} parent=1 // pred_check_branch
      %178 = sbr.rel (0) target = $region97
    $region96: #{dqn_forward.1} parent=1 // pred_region
      %179 = dma.done [#allocation18], 16
    $region97: #{dqn_forward.1} parent=1 // pred_fallthru
      _
    %v181 = vld [vmem:[#allocation2] sm:$0xff]
    %v182 = vld [vmem:[#allocation2 + $0x8] sm:$0xff]
    %184 = vrot.lane.b32.xlu0 %v182, 120
    %v185 = vpop.permute.xlu0 %184
    %vm187 = vcmask 31744
    %v188 = vsel %vm187, %v185, 0.0
    %189 = vadd.xlane.f32.xlu0 %v188
    %v190 = vpop.xlane.xlu0 %189
    %v191 = vrcp.pop 4.0
    %v192 = vmul.f32 %v190, %v191
    %v193 = vsub.f32 %v182, %v192
    %v194 = vmul.f32 %v193, %v193
    %196 = vrot.lane.b32.xlu0 %v194, 120
    %v197 = vpop.permute.xlu0 %196
    %v199 = vsel %vm187, %v197, 0.0
    %200 = vadd.xlane.f32.xlu0 %v199
    %v201 = vpop.xlane.xlu0 %200
    %v202 = vmul.f32 %v201, %v191
    %v203 = vadd.f32 %v202, 1e-05
    %v204 = vrsqrt.pop %v203
    %v205 = vld [vmem:[%s1] sm:$0x3]
    %v207 = vlaneseq
    %v208 = vshrl.u32 %v207, 7
    %v209 = vsub.s32 0, %v208
    %v210 = vrot.slane %v205, %v209
    %v211 = vlaneseq
    %v212 = vshrl.u32 %v211, 7
    %v213 = vsub.s32 1, %v212
    %v214 = vrot.slane %v205, %v213
    %v217 = vmul.f32 %v181, %v210
    %v218 = vmul.f32 %v182, %v214
    %v219 = vld [vmem:[%s2] sm:$0x3]
    %v221 = vlaneseq
    %v222 = vshrl.u32 %v221, 7
    %v223 = vsub.s32 0, %v222
    %v224 = vrot.slane %v219, %v223
    %v225 = vlaneseq
    %v226 = vshrl.u32 %v225, 7
    %v227 = vsub.s32 1, %v226
    %v228 = vrot.slane %v219, %v227
    %v231 = vadd.f32 %v217, %v224
    %v232 = vadd.f32 %v218, %v228
    %v233 = vpack.c.bf16 %v231, %v231
    %v234 = vpack.c.bf16 %v232, %v232
    %v235 = vld [vmem:[#allocation5] sm:$0xff]
    %v236 = vld [vmem:[#allocation5 + $0x8] sm:$0xff]
    %v237 = vld [vmem:[#allocation5 + $0x10] sm:$0xff]
    %v238 = vld [vmem:[#allocation5 + $0x18] sm:$0xff]
    %v239 = vld [vmem:[#allocation5 + $0x20] sm:$0xf]
    %v240 = vld [vmem:[#allocation5 + $0x24] sm:$0xff]
    %v241 = vld [vmem:[#allocation5 + $0x2c] sm:$0xff]
    %v242 = vld [vmem:[#allocation5 + $0x34] sm:$0xff]
    %v243 = vld [vmem:[#allocation5 + $0x3c] sm:$0xff]
    %v244 = vld [vmem:[#allocation5 + $0x44] sm:$0xf]
    %v245 = vld [vmem:[#allocation5 + $0x48] sm:$0xff]
    %v246 = vld [vmem:[#allocation5 + $0x50] sm:$0xff]
    %v247 = vld [vmem:[#allocation5 + $0x58] sm:$0xff]
    %v248 = vld [vmem:[#allocation5 + $0x60] sm:$0xff]
    %v249 = vld [vmem:[#allocation5 + $0x68] sm:$0xf]
    %v250 = vld [vmem:[#allocation5 + $0x6c] sm:$0xff]
    %v251 = vld [vmem:[#allocation5 + $0x74] sm:$0xff]
    %v252 = vld [vmem:[#allocation5 + $0x7c] sm:$0xff]
    %v253 = vld [vmem:[#allocation5 + $0x84] sm:$0xff]
    %v254 = vld [vmem:[#allocation5 + $0x8c] sm:$0xf]
    %v255 = vld [vmem:[#allocation5 + $0x90] sm:$0xff]
    %v256 = vld [vmem:[#allocation5 + $0x98] sm:$0xff]
    %v257 = vld [vmem:[#allocation5 + $0xa0] sm:$0xff]
    %v258 = vld [vmem:[#allocation5 + $0xa8] sm:$0xff]
    %v259 = vld [vmem:[#allocation5 + $0xb0] sm:$0xf]
    %v260 = vld [vmem:[#allocation5 + $0xb4] sm:$0xff]
    %v261 = vld [vmem:[#allocation5 + $0xbc] sm:$0xff]
    %v262 = vld [vmem:[#allocation5 + $0xc4] sm:$0xff]
    %v263 = vld [vmem:[#allocation5 + $0xcc] sm:$0xff]
    %v264 = vld [vmem:[#allocation5 + $0xd4] sm:$0xf]
    %v265 = vld [vmem:[#allocation5 + $0xd8] sm:$0xff]
    %v266 = vld [vmem:[#allocation5 + $0xe0] sm:$0xff]
    %v267 = vld [vmem:[#allocation5 + $0xe8] sm:$0xff]
    %v268 = vld [vmem:[#allocation5 + $0xf0] sm:$0xff]
    %v269 = vld [vmem:[#allocation5 + $0xf8] sm:$0xf]
    %v270 = vld [vmem:[#allocation5 + $0xfc] sm:$0xff]
    %v271 = vld [vmem:[#allocation5 + $0x104] sm:$0xff]
    %v272 = vld [vmem:[#allocation5 + $0x10c] sm:$0xff]
    %v273 = vld [vmem:[#allocation5 + $0x114] sm:$0xff]
    %v274 = vld [vmem:[#allocation5 + $0x11c] sm:$0xf]
    %v275 = vld [vmem:[#allocation5 + $0x120] sm:$0xff]
    %v276 = vld [vmem:[#allocation5 + $0x128] sm:$0xff]
    %v277 = vld [vmem:[#allocation5 + $0x130] sm:$0xff]
    %v278 = vld [vmem:[#allocation5 + $0x138] sm:$0xff]
    %v279 = vld [vmem:[#allocation5 + $0x140] sm:$0xf]
    %v280 = vld [vmem:[#allocation5 + $0x144] sm:$0xff]
    %v281 = vld [vmem:[#allocation5 + $0x14c] sm:$0xff]
    %v282 = vld [vmem:[#allocation5 + $0x154] sm:$0xff]
    %v283 = vld [vmem:[#allocation5 + $0x15c] sm:$0xff]
    %v284 = vld [vmem:[#allocation5 + $0x164] sm:$0xf]
    %v285 = vld [vmem:[#allocation5 + $0x168] sm:$0xff]
    %v286 = vld [vmem:[#allocation5 + $0x170] sm:$0xff]
    %v287 = vld [vmem:[#allocation5 + $0x178] sm:$0xff]
    %v288 = vld [vmem:[#allocation5 + $0x180] sm:$0xff]
    %v289 = vld [vmem:[#allocation5 + $0x188] sm:$0xf]
    %v290 = vld [vmem:[#allocation5 + $0x18c] sm:$0xff]
    %v291 = vld [vmem:[#allocation5 + $0x194] sm:$0xff]
    %v292 = vld [vmem:[#allocation5 + $0x19c] sm:$0xff]
    %v293 = vld [vmem:[#allocation5 + $0x1a4] sm:$0xff]
    %v294 = vld [vmem:[#allocation5 + $0x1ac] sm:$0xf]
    %v295 = vld [vmem:[#allocation5 + $0x1b0] sm:$0xff]
    %v296 = vld [vmem:[#allocation5 + $0x1b8] sm:$0xff]
    %v297 = vld [vmem:[#allocation5 + $0x1c0] sm:$0xff]
    %v298 = vld [vmem:[#allocation5 + $0x1c8] sm:$0xff]
    %v299 = vld [vmem:[#allocation5 + $0x1d0] sm:$0xf]
    %v300 = vld [vmem:[#allocation5 + $0x1d4] sm:$0xff]
    %v301 = vld [vmem:[#allocation5 + $0x1dc] sm:$0xff]
    %v302 = vld [vmem:[#allocation5 + $0x1e4] sm:$0xff]
    %v303 = vld [vmem:[#allocation5 + $0x1ec] sm:$0xff]
    %v304 = vld [vmem:[#allocation5 + $0x1f4] sm:$0xf]
    %v305 = vld [vmem:[#allocation5 + $0x1f8] sm:$0xff]
    %v306 = vld [vmem:[#allocation5 + $0x200] sm:$0xff]
    %v307 = vld [vmem:[#allocation5 + $0x208] sm:$0xff]
    %v308 = vld [vmem:[#allocation5 + $0x210] sm:$0xff]
    %v309 = vld [vmem:[#allocation5 + $0x218] sm:$0xf]
    %v310 = vld [vmem:[#allocation5 + $0x21c] sm:$0xff]
    %v311 = vld [vmem:[#allocation5 + $0x224] sm:$0xff]
    %v312 = vld [vmem:[#allocation5 + $0x22c] sm:$0xff]
    %v313 = vld [vmem:[#allocation5 + $0x234] sm:$0xff]
    %v314 = vld [vmem:[#allocation5 + $0x23c] sm:$0xf]
    %v315 = vld [vmem:[#allocation5 + $0x240] sm:$0xff]
    %v316 = vld [vmem:[#allocation5 + $0x248] sm:$0xff]
    %v317 = vld [vmem:[#allocation5 + $0x250] sm:$0xff]
    %v318 = vld [vmem:[#allocation5 + $0x258] sm:$0xff]
    %v319 = vld [vmem:[#allocation5 + $0x260] sm:$0xf]
    %v320 = vld [vmem:[#allocation5 + $0x264] sm:$0x33]
    %v321 = vld [vmem:[#allocation5 + $0x26c] sm:$0x33]
    %v322 = vld [vmem:[#allocation5 + $0x274] sm:$0x33]
    %v323 = vld [vmem:[#allocation5 + $0x27c] sm:$0x33]
    %v324 = vld [vmem:[#allocation5 + $0x284] sm:$0x3]
    %v325 = vld [vmem:[#allocation7] sm:$0xff]
    %v326 = vld [vmem:[#allocation7 + $0x8] sm:$0x1]
    %v329 = vlaneseq
    %v330 = vshrl.u32 %v329, 7
    %v331 = vsub.s32 0, %v330
    %v332 = vrot.slane %v325, %v331
    %v333 = vlaneseq
    %v334 = vshrl.u32 %v333, 7
    %v335 = vsub.s32 1, %v334
    %v336 = vrot.slane %v325, %v335
    %v337 = vlaneseq
    %v338 = vshrl.u32 %v337, 7
    %v339 = vsub.s32 2, %v338
    %v340 = vrot.slane %v325, %v339
    %v341 = vlaneseq
    %v342 = vshrl.u32 %v341, 7
    %v343 = vsub.s32 3, %v342
    %v344 = vrot.slane %v325, %v343
    %v345 = vlaneseq
    %v346 = vshrl.u32 %v345, 7
    %v347 = vsub.s32 4, %v346
    %v348 = vrot.slane %v325, %v347
    %v349 = vlaneseq
    %v350 = vshrl.u32 %v349, 7
    %v351 = vsub.s32 5, %v350
    %v352 = vrot.slane %v325, %v351
    %v353 = vlaneseq
    %v354 = vshrl.u32 %v353, 7
    %v355 = vsub.s32 6, %v354
    %v356 = vrot.slane %v325, %v355
    %v357 = vlaneseq
    %v358 = vshrl.u32 %v357, 7
    %v359 = vsub.s32 7, %v358
    %v360 = vrot.slane %v325, %v359
    %v361 = vlaneseq
    %v362 = vshrl.u32 %v361, 7
    %v363 = vsub.s32 0, %v362
    %v364 = vrot.slane %v326, %v363
    %v464 = vunpack.c.l.b16 %v235
    %v465 = vunpack.c.h.b16 %v235
    %v466 = vunpack.c.l.b16 %v236
    %v467 = vunpack.c.h.b16 %v236
    %v468 = vunpack.c.l.b16 %v237
    %v469 = vunpack.c.h.b16 %v237
    %v470 = vunpack.c.l.b16 %v238
    %v471 = vunpack.c.h.b16 %v238
    %v472 = vunpack.c.l.b16 %v239
    %v473 = vunpack.c.l.b16 %v240
    %v474 = vunpack.c.h.b16 %v240
    %v475 = vunpack.c.l.b16 %v241
    %v476 = vunpack.c.h.b16 %v241
    %v477 = vunpack.c.l.b16 %v242
    %v478 = vunpack.c.h.b16 %v242
    %v479 = vunpack.c.l.b16 %v243
    %v480 = vunpack.c.h.b16 %v243
    %v481 = vunpack.c.l.b16 %v244
    %v482 = vunpack.c.l.b16 %v245
    %v483 = vunpack.c.h.b16 %v245
    %v484 = vunpack.c.l.b16 %v246
    %v485 = vunpack.c.h.b16 %v246
    %v486 = vunpack.c.l.b16 %v247
    %v487 = vunpack.c.h.b16 %v247
    %v488 = vunpack.c.l.b16 %v248
    %v489 = vunpack.c.h.b16 %v248
    %v490 = vunpack.c.l.b16 %v249
    %v491 = vunpack.c.l.b16 %v250
    %v492 = vunpack.c.h.b16 %v250
    %v493 = vunpack.c.l.b16 %v251
    %v494 = vunpack.c.h.b16 %v251
    %v495 = vunpack.c.l.b16 %v252
    %v496 = vunpack.c.h.b16 %v252
    %v497 = vunpack.c.l.b16 %v253
    %v498 = vunpack.c.h.b16 %v253
    %v499 = vunpack.c.l.b16 %v254
    %v500 = vunpack.c.l.b16 %v255
    %v501 = vunpack.c.h.b16 %v255
    %v502 = vunpack.c.l.b16 %v256
    %v503 = vunpack.c.h.b16 %v256
    %v504 = vunpack.c.l.b16 %v257
    %v505 = vunpack.c.h.b16 %v257
    %v506 = vunpack.c.l.b16 %v258
    %v507 = vunpack.c.h.b16 %v258
    %v508 = vunpack.c.l.b16 %v259
    %v509 = vunpack.c.l.b16 %v260
    %v510 = vunpack.c.h.b16 %v260
    %v511 = vunpack.c.l.b16 %v261
    %v512 = vunpack.c.h.b16 %v261
    %v513 = vunpack.c.l.b16 %v262
    %v514 = vunpack.c.h.b16 %v262
    %v515 = vunpack.c.l.b16 %v263
    %v516 = vunpack.c.h.b16 %v263
    %v517 = vunpack.c.l.b16 %v264
    %v518 = vunpack.c.l.b16 %v265
    %v519 = vunpack.c.h.b16 %v265
    %v520 = vunpack.c.l.b16 %v266
    %v521 = vunpack.c.h.b16 %v266
    %v522 = vunpack.c.l.b16 %v267
    %v523 = vunpack.c.h.b16 %v267
    %v524 = vunpack.c.l.b16 %v268
    %v525 = vunpack.c.h.b16 %v268
    %v526 = vunpack.c.l.b16 %v269
    %v527 = vunpack.c.l.b16 %v270
    %v528 = vunpack.c.h.b16 %v270
    %v529 = vunpack.c.l.b16 %v271
    %v530 = vunpack.c.h.b16 %v271
    %v531 = vunpack.c.l.b16 %v272
    %v532 = vunpack.c.h.b16 %v272
    %v533 = vunpack.c.l.b16 %v273
    %v534 = vunpack.c.h.b16 %v273
    %v535 = vunpack.c.l.b16 %v274
    %v536 = vunpack.c.l.b16 %v275
    %v537 = vunpack.c.h.b16 %v275
    %v538 = vunpack.c.l.b16 %v276
    %v539 = vunpack.c.h.b16 %v276
    %v540 = vunpack.c.l.b16 %v277
    %v541 = vunpack.c.h.b16 %v277
    %v542 = vunpack.c.l.b16 %v278
    %v543 = vunpack.c.h.b16 %v278
    %v544 = vunpack.c.l.b16 %v279
    %v545 = vunpack.c.l.b16 %v280
    %v546 = vunpack.c.h.b16 %v280
    %v547 = vunpack.c.l.b16 %v281
    %v548 = vunpack.c.h.b16 %v281
    %v549 = vunpack.c.l.b16 %v282
    %v550 = vunpack.c.h.b16 %v282
    %v551 = vunpack.c.l.b16 %v283
    %v552 = vunpack.c.h.b16 %v283
    %v553 = vunpack.c.l.b16 %v284
    %v554 = vunpack.c.l.b16 %v285
    %v555 = vunpack.c.h.b16 %v285
    %v556 = vunpack.c.l.b16 %v286
    %v557 = vunpack.c.h.b16 %v286
    %v558 = vunpack.c.l.b16 %v287
    %v559 = vunpack.c.h.b16 %v287
    %v560 = vunpack.c.l.b16 %v288
    %v561 = vunpack.c.h.b16 %v288
    %v562 = vunpack.c.l.b16 %v289
    %v563 = vunpack.c.l.b16 %v290
    %v564 = vunpack.c.h.b16 %v290
    %v565 = vunpack.c.l.b16 %v291
    %v566 = vunpack.c.h.b16 %v291
    %v567 = vunpack.c.l.b16 %v292
    %v568 = vunpack.c.h.b16 %v292
    %v569 = vunpack.c.l.b16 %v293
    %v570 = vunpack.c.h.b16 %v293
    %v571 = vunpack.c.l.b16 %v294
    %v572 = vunpack.c.l.b16 %v295
    %v573 = vunpack.c.h.b16 %v295
    %v574 = vunpack.c.l.b16 %v296
    %v575 = vunpack.c.h.b16 %v296
    %v576 = vunpack.c.l.b16 %v297
    %v577 = vunpack.c.h.b16 %v297
    %v578 = vunpack.c.l.b16 %v298
    %v579 = vunpack.c.h.b16 %v298
    %v580 = vunpack.c.l.b16 %v299
    %v581 = vunpack.c.l.b16 %v300
    %v582 = vunpack.c.h.b16 %v300
    %v583 = vunpack.c.l.b16 %v301
    %v584 = vunpack.c.h.b16 %v301
    %v585 = vunpack.c.l.b16 %v302
    %v586 = vunpack.c.h.b16 %v302
    %v587 = vunpack.c.l.b16 %v303
    %v588 = vunpack.c.h.b16 %v303
    %v589 = vunpack.c.l.b16 %v304
    %v590 = vunpack.c.l.b16 %v305
    %v591 = vunpack.c.h.b16 %v305
    %v592 = vunpack.c.l.b16 %v306
    %v593 = vunpack.c.h.b16 %v306
    %v594 = vunpack.c.l.b16 %v307
    %v595 = vunpack.c.h.b16 %v307
    %v596 = vunpack.c.l.b16 %v308
    %v597 = vunpack.c.h.b16 %v308
    %v598 = vunpack.c.l.b16 %v309
    %v599 = vunpack.c.l.b16 %v310
    %v600 = vunpack.c.h.b16 %v310
    %v601 = vunpack.c.l.b16 %v311
    %v602 = vunpack.c.h.b16 %v311
    %v603 = vunpack.c.l.b16 %v312
    %v604 = vunpack.c.h.b16 %v312
    %v605 = vunpack.c.l.b16 %v313
    %v606 = vunpack.c.h.b16 %v313
    %v607 = vunpack.c.l.b16 %v314
    %v608 = vunpack.c.l.b16 %v315
    %v609 = vunpack.c.h.b16 %v315
    %v610 = vunpack.c.l.b16 %v316
    %v611 = vunpack.c.h.b16 %v316
    %v612 = vunpack.c.l.b16 %v317
    %v613 = vunpack.c.h.b16 %v317
    %v614 = vunpack.c.l.b16 %v318
    %v615 = vunpack.c.h.b16 %v318
    %v616 = vunpack.c.l.b16 %v319
    %v617 = vunpack.c.l.b16 %v320
    %v618 = vunpack.c.h.b16 %v320
    %v619 = vunpack.c.l.b16 %v321
    %v620 = vunpack.c.h.b16 %v321
    %v621 = vunpack.c.l.b16 %v322
    %v622 = vunpack.c.h.b16 %v322
    %v623 = vunpack.c.l.b16 %v323
    %v624 = vunpack.c.h.b16 %v323
    %v625 = vunpack.c.l.b16 %v324
    %v626 = vpack.c.b16 %v473, %v464
    %v627 = vpack.c.b16 %v474, %v465
    %v628 = vpack.c.b16 %v475, %v466
    %v629 = vpack.c.b16 %v476, %v467
    %v630 = vpack.c.b16 %v477, %v468
    %v631 = vpack.c.b16 %v478, %v469
    %v632 = vpack.c.b16 %v479, %v470
    %v633 = vpack.c.b16 %v480, %v471
    %v634 = vpack.c.b16 %v481, %v472
    %v635 = vpack.c.b16 %v491, %v482
    %v636 = vpack.c.b16 %v492, %v483
    %v637 = vpack.c.b16 %v493, %v484
    %v638 = vpack.c.b16 %v494, %v485
    %v639 = vpack.c.b16 %v495, %v486
    %v640 = vpack.c.b16 %v496, %v487
    %v641 = vpack.c.b16 %v497, %v488
    %v642 = vpack.c.b16 %v498, %v489
    %v643 = vpack.c.b16 %v499, %v490
    %v644 = vpack.c.b16 %v509, %v500
    %v645 = vpack.c.b16 %v510, %v501
    %v646 = vpack.c.b16 %v511, %v502
    %v647 = vpack.c.b16 %v512, %v503
    %v648 = vpack.c.b16 %v513, %v504
    %v649 = vpack.c.b16 %v514, %v505
    %v650 = vpack.c.b16 %v515, %v506
    %v651 = vpack.c.b16 %v516, %v507
    %v652 = vpack.c.b16 %v517, %v508
    %v653 = vpack.c.b16 %v527, %v518
    %v654 = vpack.c.b16 %v528, %v519
    %v655 = vpack.c.b16 %v529, %v520
    %v656 = vpack.c.b16 %v530, %v521
    %v657 = vpack.c.b16 %v531, %v522
    %v658 = vpack.c.b16 %v532, %v523
    %v659 = vpack.c.b16 %v533, %v524
    %v660 = vpack.c.b16 %v534, %v525
    %v661 = vpack.c.b16 %v535, %v526
    %v662 = vpack.c.b16 %v545, %v536
    %v663 = vpack.c.b16 %v546, %v537
    %v664 = vpack.c.b16 %v547, %v538
    %v665 = vpack.c.b16 %v548, %v539
    %v666 = vpack.c.b16 %v549, %v540
    %v667 = vpack.c.b16 %v550, %v541
    %v668 = vpack.c.b16 %v551, %v542
    %v669 = vpack.c.b16 %v552, %v543
    %v670 = vpack.c.b16 %v553, %v544
    %v671 = vpack.c.b16 %v563, %v554
    %v672 = vpack.c.b16 %v564, %v555
    %v673 = vpack.c.b16 %v565, %v556
    %v674 = vpack.c.b16 %v566, %v557
    %v675 = vpack.c.b16 %v567, %v558
    %v676 = vpack.c.b16 %v568, %v559
    %v677 = vpack.c.b16 %v569, %v560
    %v678 = vpack.c.b16 %v570, %v561
    %v679 = vpack.c.b16 %v571, %v562
    %v680 = vpack.c.b16 %v581, %v572
    %v681 = vpack.c.b16 %v582, %v573
    %v682 = vpack.c.b16 %v583, %v574
    %v683 = vpack.c.b16 %v584, %v575
    %v684 = vpack.c.b16 %v585, %v576
    %v685 = vpack.c.b16 %v586, %v577
    %v686 = vpack.c.b16 %v587, %v578
    %v687 = vpack.c.b16 %v588, %v579
    %v688 = vpack.c.b16 %v589, %v580
    %v689 = vpack.c.b16 %v599, %v590
    %v690 = vpack.c.b16 %v600, %v591
    %v691 = vpack.c.b16 %v601, %v592
    %v692 = vpack.c.b16 %v602, %v593
    %v693 = vpack.c.b16 %v603, %v594
    %v694 = vpack.c.b16 %v604, %v595
    %v695 = vpack.c.b16 %v605, %v596
    %v696 = vpack.c.b16 %v606, %v597
    %v697 = vpack.c.b16 %v607, %v598
    %v698 = vpack.c.b16 %v617, %v608
    %v699 = vpack.c.b16 %v618, %v609
    %v700 = vpack.c.b16 %v619, %v610
    %v701 = vpack.c.b16 %v620, %v611
    %v702 = vpack.c.b16 %v621, %v612
    %v703 = vpack.c.b16 %v622, %v613
    %v704 = vpack.c.b16 %v623, %v614
    %v705 = vpack.c.b16 %v624, %v615
    %v706 = vpack.c.b16 %v625, %v616
    %vm779 = vcmask 97280
    %v781 = vsel %vm779, %v234, 0
    %vm783 = vcmask 1045504
    %v785 = vsel %vm783, %v698, 0
    %v788 = vsel %vm783, %v699, 0
    %v791 = vsel %vm783, %v700, 0
    %v794 = vsel %vm783, %v701, 0
    %v797 = vsel %vm783, %v702, 0
    %v800 = vsel %vm783, %v703, 0
    %v803 = vsel %vm783, %v704, 0
    %v806 = vsel %vm783, %v705, 0
    %v809 = vsel %vm783, %v706, 0
    %811 = vmatprep.subr.bf16.mxu0 %v627
    %812 = vmatpush1.bf16.msra.mxu0 %v626
    %813 = vmatprep.subr.bf16.mxu0 %v636
    %814 = vmatpush1.bf16.msra.mxu0 %v635
    %815 = vmatprep.subr.bf16.mxu0 %v645
    %816 = vmatpush1.bf16.msra.mxu0 %v644
    %817 = vmatprep.subr.bf16.mxu0 %v654
    %818 = vmatpush1.bf16.msra.mxu0 %v653
    %819 = vmatprep.subr.bf16.mxu0 %v663
    %820 = vmatpush1.bf16.msra.mxu0 %v662
    %821 = vmatprep.subr.bf16.mxu0 %v672
    %822 = vmatpush1.bf16.msra.mxu0 %v671
    %823 = vmatprep.subr.bf16.mxu0 %v681
    %824 = vmatpush1.bf16.msra.mxu0 %v680
    %825 = vmatprep.subr.bf16.mxu0 %v690
    %826 = vmatpush1.bf16.msra.mxu0 %v689
    %827 = vmatprep.subr.bf16.mxu0 %v788
    %828 = vmatpush1.bf16.msra.mxu0 %v785
    %829 = vmatprep.subr.bf16.mxu0 0
    %830 = vmatpush1.bf16.msra.mxu0 0
    %831 = vmatprep.subr.bf16.mxu0 0
    %832 = vmatpush1.bf16.msra.mxu0 0
    %833 = vmatprep.subr.bf16.mxu0 0
    %834 = vmatpush1.bf16.msra.mxu0 0
    %835 = vmatprep.subr.bf16.mxu0 0
    %836 = vmatpush1.bf16.msra.mxu0 0
    %837 = vmatprep.subr.bf16.mxu0 0
    %838 = vmatpush1.bf16.msra.mxu0 0
    %839 = vmatprep.subr.bf16.mxu0 0
    %840 = vmatpush1.bf16.msra.mxu0 0
    %841 = vmatprep.subr.bf16.mxu0 0
    %842 = vmatpush1.bf16.msra.mxu0 0
    %843 = vmatprep.mubr.bf16.mxu0 %v781
    %844 = vmatmul.mubr.bf16.gmra.mrb[0].mxu0 %v233
    %v845 = vpop.f32.mrb[0].mxu0
    %v846 = vadd.f32 %v332, %v845
    %v847 = vpop.f32.mrb[0].mxu0
    %v848 = vadd.f32 %v336, %v847
    %v849 = vpop.f32.mrb[0].mxu0
    %v850 = vpop.f32.mrb[0].mxu0
    %851 = vdwg.mxu0
    %852 = vmatprep.subr.bf16.mxu0 %v629
    %853 = vmatpush1.bf16.msra.mxu0 %v628
    %854 = vmatprep.subr.bf16.mxu0 %v638
    %855 = vmatpush1.bf16.msra.mxu0 %v637
    %856 = vmatprep.subr.bf16.mxu0 %v647
    %857 = vmatpush1.bf16.msra.mxu0 %v646
    %858 = vmatprep.subr.bf16.mxu0 %v656
    %859 = vmatpush1.bf16.msra.mxu0 %v655
    %860 = vmatprep.subr.bf16.mxu0 %v665
    %861 = vmatpush1.bf16.msra.mxu0 %v664
    %862 = vmatprep.subr.bf16.mxu0 %v674
    %863 = vmatpush1.bf16.msra.mxu0 %v673
    %864 = vmatprep.subr.bf16.mxu0 %v683
    %865 = vmatpush1.bf16.msra.mxu0 %v682
    %866 = vmatprep.subr.bf16.mxu0 %v692
    %867 = vmatpush1.bf16.msra.mxu0 %v691
    %868 = vmatprep.subr.bf16.mxu0 %v794
    %869 = vmatpush1.bf16.msra.mxu0 %v791
    %870 = vmatprep.subr.bf16.mxu0 0
    %871 = vmatpush1.bf16.msra.mxu0 0
    %872 = vmatprep.subr.bf16.mxu0 0
    %873 = vmatpush1.bf16.msra.mxu0 0
    %874 = vmatprep.subr.bf16.mxu0 0
    %875 = vmatpush1.bf16.msra.mxu0 0
    %876 = vmatprep.subr.bf16.mxu0 0
    %877 = vmatpush1.bf16.msra.mxu0 0
    %878 = vmatprep.subr.bf16.mxu0 0
    %879 = vmatpush1.bf16.msra.mxu0 0
    %880 = vmatprep.subr.bf16.mxu0 0
    %881 = vmatpush1.bf16.msra.mxu0 0
    %882 = vmatprep.subr.bf16.mxu0 0
    %883 = vmatpush1.bf16.msra.mxu0 0
    %884 = vmatprep.mubr.bf16.mxu0 %v781
    %885 = vmatmul.mubr.bf16.gmra.mrb[0].mxu0 %v233
    %v886 = vpop.f32.mrb[0].mxu0
    %v887 = vadd.f32 %v340, %v886
    %v888 = vpop.f32.mrb[0].mxu0
    %v889 = vadd.f32 %v344, %v888
    %v890 = vpop.f32.mrb[0].mxu0
    %v891 = vpop.f32.mrb[0].mxu0
    %892 = vdwg.mxu0
    %893 = vmatprep.subr.bf16.mxu0 %v631
    %894 = vmatpush1.bf16.msra.mxu0 %v630
    %895 = vmatprep.subr.bf16.mxu0 %v640
    %896 = vmatpush1.bf16.msra.mxu0 %v639
    %897 = vmatprep.subr.bf16.mxu0 %v649
    %898 = vmatpush1.bf16.msra.mxu0 %v648
    %899 = vmatprep.subr.bf16.mxu0 %v658
    %900 = vmatpush1.bf16.msra.mxu0 %v657
    %901 = vmatprep.subr.bf16.mxu0 %v667
    %902 = vmatpush1.bf16.msra.mxu0 %v666
    %903 = vmatprep.subr.bf16.mxu0 %v676
    %904 = vmatpush1.bf16.msra.mxu0 %v675
    %905 = vmatprep.subr.bf16.mxu0 %v685
    %906 = vmatpush1.bf16.msra.mxu0 %v684
    %907 = vmatprep.subr.bf16.mxu0 %v694
    %908 = vmatpush1.bf16.msra.mxu0 %v693
    %909 = vmatprep.subr.bf16.mxu0 %v800
    %910 = vmatpush1.bf16.msra.mxu0 %v797
    %911 = vmatprep.subr.bf16.mxu0 0
    %912 = vmatpush1.bf16.msra.mxu0 0
    %913 = vmatprep.subr.bf16.mxu0 0
    %914 = vmatpush1.bf16.msra.mxu0 0
    %915 = vmatprep.subr.bf16.mxu0 0
    %916 = vmatpush1.bf16.msra.mxu0 0
    %917 = vmatprep.subr.bf16.mxu0 0
    %918 = vmatpush1.bf16.msra.mxu0 0
    %919 = vmatprep.subr.bf16.mxu0 0
    %920 = vmatpush1.bf16.msra.mxu0 0
    %921 = vmatprep.subr.bf16.mxu0 0
    %922 = vmatpush1.bf16.msra.mxu0 0
    %923 = vmatprep.subr.bf16.mxu0 0
    %924 = vmatpush1.bf16.msra.mxu0 0
    %925 = vmatprep.mubr.bf16.mxu0 %v781
    %926 = vmatmul.mubr.bf16.gmra.mrb[0].mxu0 %v233
    %v927 = vpop.f32.mrb[0].mxu0
    %v928 = vadd.f32 %v348, %v927
    %v929 = vpop.f32.mrb[0].mxu0
    %v930 = vadd.f32 %v352, %v929
    %v931 = vpop.f32.mrb[0].mxu0
    %v932 = vpop.f32.mrb[0].mxu0
    %933 = vdwg.mxu0
    %934 = vmatprep.subr.bf16.mxu0 %v633
    %935 = vmatpush1.bf16.msra.mxu0 %v632
    %936 = vmatprep.subr.bf16.mxu0 %v642
    %937 = vmatpush1.bf16.msra.mxu0 %v641
    %938 = vmatprep.subr.bf16.mxu0 %v651
    %939 = vmatpush1.bf16.msra.mxu0 %v650
    %940 = vmatprep.subr.bf16.mxu0 %v660
    %941 = vmatpush1.bf16.msra.mxu0 %v659
    %942 = vmatprep.subr.bf16.mxu0 %v669
    %943 = vmatpush1.bf16.msra.mxu0 %v668
    %944 = vmatprep.subr.bf16.mxu0 %v678
    %945 = vmatpush1.bf16.msra.mxu0 %v677
    %946 = vmatprep.subr.bf16.mxu0 %v687
    %947 = vmatpush1.bf16.msra.mxu0 %v686
    %948 = vmatprep.subr.bf16.mxu0 %v696
    %949 = vmatpush1.bf16.msra.mxu0 %v695
    %950 = vmatprep.subr.bf16.mxu0 %v806
    %951 = vmatpush1.bf16.msra.mxu0 %v803
    %952 = vmatprep.subr.bf16.mxu0 0
    %953 = vmatpush1.bf16.msra.mxu0 0
    %954 = vmatprep.subr.bf16.mxu0 0
    %955 = vmatpush1.bf16.msra.mxu0 0
    %956 = vmatprep.subr.bf16.mxu0 0
    %957 = vmatpush1.bf16.msra.mxu0 0
    %958 = vmatprep.subr.bf16.mxu0 0
    %959 = vmatpush1.bf16.msra.mxu0 0
    %960 = vmatprep.subr.bf16.mxu0 0
    %961 = vmatpush1.bf16.msra.mxu0 0
    %962 = vmatprep.subr.bf16.mxu0 0
    %963 = vmatpush1.bf16.msra.mxu0 0
    %964 = vmatprep.subr.bf16.mxu0 0
    %965 = vmatpush1.bf16.msra.mxu0 0
    %966 = vmatprep.mubr.bf16.mxu0 %v781
    %967 = vmatmul.mubr.bf16.gmra.mrb[0].mxu0 %v233
    %v968 = vpop.f32.mrb[0].mxu0
    %v969 = vadd.f32 %v356, %v968
    %v970 = vpop.f32.mrb[0].mxu0
    %v971 = vadd.f32 %v360, %v970
    %v972 = vpop.f32.mrb[0].mxu0
    %v973 = vpop.f32.mrb[0].mxu0
    %974 = vdwg.mxu0
    %975 = vmatprep.subr.bf16.mxu0 0
    %976 = vmatpush1.bf16.msra.mxu0 %v634
    %977 = vmatprep.subr.bf16.mxu0 0
    %978 = vmatpush1.bf16.msra.mxu0 %v643
    %979 = vmatprep.subr.bf16.mxu0 0
    %980 = vmatpush1.bf16.msra.mxu0 %v652
    %981 = vmatprep.subr.bf16.mxu0 0
    %982 = vmatpush1.bf16.msra.mxu0 %v661
    %983 = vmatprep.subr.bf16.mxu0 0
    %984 = vmatpush1.bf16.msra.mxu0 %v670
    %985 = vmatprep.subr.bf16.mxu0 0
    %986 = vmatpush1.bf16.msra.mxu0 %v679
    %987 = vmatprep.subr.bf16.mxu0 0
    %988 = vmatpush1.bf16.msra.mxu0 %v688
    %989 = vmatprep.subr.bf16.mxu0 0
    %990 = vmatpush1.bf16.msra.mxu0 %v697
    %991 = vmatprep.subr.bf16.mxu0 0
    %992 = vmatpush1.bf16.msra.mxu0 %v809
    %993 = vmatprep.subr.bf16.mxu0 0
    %994 = vmatpush1.bf16.msra.mxu0 0
    %995 = vmatprep.subr.bf16.mxu0 0
    %996 = vmatpush1.bf16.msra.mxu0 0
    %997 = vmatprep.subr.bf16.mxu0 0
    %998 = vmatpush1.bf16.msra.mxu0 0
    %999 = vmatprep.subr.bf16.mxu0 0
    %1000 = vmatpush1.bf16.msra.mxu0 0
    %1001 = vmatprep.subr.bf16.mxu0 0
    %1002 = vmatpush1.bf16.msra.mxu0 0
    %1003 = vmatprep.subr.bf16.mxu0 0
    %1004 = vmatpush1.bf16.msra.mxu0 0
    %1005 = vmatprep.subr.bf16.mxu0 0
    %1006 = vmatpush1.bf16.msra.mxu0 0
    %1007 = vmatprep.mubr.bf16.mxu0 %v781
    %1008 = vmatmul.mubr.bf16.gmra.mrb[0].mxu0 %v233
    %v1009 = vpop.f32.mrb[0].mxu0
    %v1010 = vadd.f32 %v364, %v1009
    %v1011 = vpop.f32.mrb[0].mxu0
    %v1012 = vpop.f32.mrb[0].mxu0
    %v1013 = vpop.f32.mrb[0].mxu0
    %1014 = vdwg.mxu0
    %v1015 = vlaneseq
    %v1016 = vand.u32 %v1015, 127
    %v1017 = vadd.s32 %v1016, 128
    %v1018 = vadd.s32 %v1016, 256
    %v1019 = vadd.s32 %v1016, 384
    %v1020 = vadd.s32 %v1016, 512
    %v1021 = vadd.s32 %v1016, 640
    %v1022 = vadd.s32 %v1016, 768
    %v1023 = vadd.s32 %v1016, 896
    %v1024 = vadd.s32 %v1016, 1024
    %vm1025 = vcmp.lt.s32.totalorder %v1016, 1088
    %vm1026 = vcmp.lt.s32.totalorder %v1017, 1088
    %vm1027 = vcmp.lt.s32.totalorder %v1018, 1088
    %vm1028 = vcmp.lt.s32.totalorder %v1019, 1088
    %vm1029 = vcmp.lt.s32.totalorder %v1020, 1088
    %vm1030 = vcmp.lt.s32.totalorder %v1021, 1088
    %vm1031 = vcmp.lt.s32.totalorder %v1022, 1088
    %vm1032 = vcmp.lt.s32.totalorder %v1023, 1088
    %vm1033 = vcmp.lt.s32.totalorder %v1024, 1088
    %v1034 = vmax.f32 %v846, 0.0
    %v1035 = vmax.f32 %v848, 0.0
    %v1036 = vmax.f32 %v887, 0.0
    %v1037 = vmax.f32 %v889, 0.0
    %v1038 = vmax.f32 %v928, 0.0
    %v1039 = vmax.f32 %v930, 0.0
    %v1040 = vmax.f32 %v969, 0.0
    %v1041 = vmax.f32 %v971, 0.0
    %v1042 = vmax.f32 %v1010, 0.0
    %v1043 = vsub.f32 %v846, %v192
    %v1044 = vsub.f32 %v848, %v192
    %v1045 = vsub.f32 %v887, %v192
    %v1046 = vsub.f32 %v889, %v192
    %v1047 = vsub.f32 %v928, %v192
    %v1048 = vsub.f32 %v930, %v192
    %v1049 = vsub.f32 %v969, %v192
    %v1050 = vsub.f32 %v971, %v192
    %v1051 = vsub.f32 %v1010, %v192
    %v1052 = vmul.f32 %v1043, %v204
    %v1053 = vmul.f32 %v1044, %v204
    %v1054 = vmul.f32 %v1045, %v204
    %v1055 = vmul.f32 %v1046, %v204
    %v1056 = vmul.f32 %v1047, %v204
    %v1057 = vmul.f32 %v1048, %v204
    %v1058 = vmul.f32 %v1049, %v204
    %v1059 = vmul.f32 %v1050, %v204
    %v1060 = vmul.f32 %v1051, %v204
    %v1061 = vld [vmem:[#allocation8] sm:$0xff]
    %v1062 = vld [vmem:[#allocation8 + $0x8] sm:$0x1]
    %v1065 = vlaneseq
    %v1066 = vshrl.u32 %v1065, 7
    %v1067 = vsub.s32 0, %v1066
    %v1068 = vrot.slane %v1061, %v1067
    %v1069 = vlaneseq
    %v1070 = vshrl.u32 %v1069, 7
    %v1071 = vsub.s32 1, %v1070
    %v1072 = vrot.slane %v1061, %v1071
    %v1073 = vlaneseq
    %v1074 = vshrl.u32 %v1073, 7
    %v1075 = vsub.s32 2, %v1074
    %v1076 = vrot.slane %v1061, %v1075
    %v1077 = vlaneseq
    %v1078 = vshrl.u32 %v1077, 7
    %v1079 = vsub.s32 3, %v1078
    %v1080 = vrot.slane %v1061, %v1079
    %v1081 = vlaneseq
    %v1082 = vshrl.u32 %v1081, 7
    %v1083 = vsub.s32 4, %v1082
    %v1084 = vrot.slane %v1061, %v1083
    %v1085 = vlaneseq
    %v1086 = vshrl.u32 %v1085, 7
    %v1087 = vsub.s32 5, %v1086
    %v1088 = vrot.slane %v1061, %v1087
    %v1089 = vlaneseq
    %v1090 = vshrl.u32 %v1089, 7
    %v1091 = vsub.s32 6, %v1090
    %v1092 = vrot.slane %v1061, %v1091
    %v1093 = vlaneseq
    %v1094 = vshrl.u32 %v1093, 7
    %v1095 = vsub.s32 7, %v1094
    %v1096 = vrot.slane %v1061, %v1095
    %v1097 = vlaneseq
    %v1098 = vshrl.u32 %v1097, 7
    %v1099 = vsub.s32 0, %v1098
    %v1100 = vrot.slane %v1062, %v1099
    %v1110 = vmul.f32 %v1052, %v1068
    %v1111 = vmul.f32 %v1053, %v1072
    %v1112 = vmul.f32 %v1054, %v1076
    %v1113 = vmul.f32 %v1055, %v1080
    %v1114 = vmul.f32 %v1056, %v1084
    %v1115 = vmul.f32 %v1057, %v1088
    %v1116 = vmul.f32 %v1058, %v1092
    %v1117 = vmul.f32 %v1059, %v1096
    %v1118 = vmul.f32 %v1060, %v1100
    %v1119 = vld [vmem:[#allocation10] sm:$0xff]
    %v1120 = vld [vmem:[#allocation10 + $0x8] sm:$0x1]
    %v1123 = vlaneseq
    %v1124 = vshrl.u32 %v1123, 7
    %v1125 = vsub.s32 0, %v1124
    %v1126 = vrot.slane %v1119, %v1125
    %v1127 = vlaneseq
    %v1128 = vshrl.u32 %v1127, 7
    %v1129 = vsub.s32 1, %v1128
    %v1130 = vrot.slane %v1119, %v1129
    %v1131 = vlaneseq
    %v1132 = vshrl.u32 %v1131, 7
    %v1133 = vsub.s32 2, %v1132
    %v1134 = vrot.slane %v1119, %v1133
    %v1135 = vlaneseq
    %v1136 = vshrl.u32 %v1135, 7
    %v1137 = vsub.s32 3, %v1136
    %v1138 = vrot.slane %v1119, %v1137
    %v1139 = vlaneseq
    %v1140 = vshrl.u32 %v1139, 7
    %v1141 = vsub.s32 4, %v1140
    %v1142 = vrot.slane %v1119, %v1141
    %v1143 = vlaneseq
    %v1144 = vshrl.u32 %v1143, 7
    %v1145 = vsub.s32 5, %v1144
    %v1146 = vrot.slane %v1119, %v1145
    %v1147 = vlaneseq
    %v1148 = vshrl.u32 %v1147, 7
    %v1149 = vsub.s32 6, %v1148
    %v1150 = vrot.slane %v1119, %v1149
    %v1151 = vlaneseq
    %v1152 = vshrl.u32 %v1151, 7
    %v1153 = vsub.s32 7, %v1152
    %v1154 = vrot.slane %v1119, %v1153
    %v1155 = vlaneseq
    %v1156 = vshrl.u32 %v1155, 7
    %v1157 = vsub.s32 0, %v1156
    %v1158 = vrot.slane %v1120, %v1157
    %v1168 = vadd.f32 %v1110, %v1126
    %v1169 = vadd.f32 %v1111, %v1130
    %v1170 = vadd.f32 %v1112, %v1134
    %v1171 = vadd.f32 %v1113, %v1138
    %v1172 = vadd.f32 %v1114, %v1142
    %v1173 = vadd.f32 %v1115, %v1146
    %v1174 = vadd.f32 %v1116, %v1150
    %v1175 = vadd.f32 %v1117, %v1154
    %v1176 = vadd.f32 %v1118, %v1158
    %v1177 = vsel %vm1025, %v1034, %v1168
    %v1178 = vsel %vm1026, %v1035, %v1169
    %v1179 = vsel %vm1027, %v1036, %v1170
    %v1180 = vsel %vm1028, %v1037, %v1171
    %v1181 = vsel %vm1029, %v1038, %v1172
    %v1182 = vsel %vm1030, %v1039, %v1173
    %v1183 = vsel %vm1031, %v1040, %v1174
    %v1184 = vsel %vm1032, %v1041, %v1175
    %v1185 = vsel %vm1033, %v1042, %v1176
    %v1186 = vpack.c.bf16 %v1177, %v1177
    %v1187 = vpack.c.bf16 %v1178, %v1178
    %v1188 = vpack.c.bf16 %v1179, %v1179
    %v1189 = vpack.c.bf16 %v1180, %v1180
    %v1190 = vpack.c.bf16 %v1181, %v1181
    %v1191 = vpack.c.bf16 %v1182, %v1182
    %v1192 = vpack.c.bf16 %v1183, %v1183
    %v1193 = vpack.c.bf16 %v1184, %v1184
    %v1194 = vpack.c.bf16 %v1185, %v1185
    %v1195 = vld [vmem:[#allocation11] sm:$0xff]
    %v1196 = vld [vmem:[#allocation11 + $0x8] sm:$0xff]
    %v1197 = vld [vmem:[#allocation11 + $0x10] sm:$0xff]
    %v1198 = vld [vmem:[#allocation11 + $0x18] sm:$0xff]
    %v1199 = vld [vmem:[#allocation11 + $0x20] sm:$0xff]
    %v1200 = vld [vmem:[#allocation11 + $0x28] sm:$0xff]
    %v1201 = vld [vmem:[#allocation11 + $0x30] sm:$0xff]
    %v1202 = vld [vmem:[#allocation11 + $0x38] sm:$0xff]
    %v1203 = vld [vmem:[#allocation11 + $0x40] sm:$0xff]
    %v1204 = vld [vmem:[#allocation11 + $0x48] sm:$0xff]
    %v1205 = vld [vmem:[#allocation11 + $0x50] sm:$0xff]
    %v1206 = vld [vmem:[#allocation11 + $0x58] sm:$0xff]
    %v1207 = vld [vmem:[#allocation11 + $0x60] sm:$0xff]
    %v1208 = vld [vmem:[#allocation11 + $0x68] sm:$0xff]
    %v1209 = vld [vmem:[#allocation11 + $0x70] sm:$0xff]
    %v1210 = vld [vmem:[#allocation11 + $0x78] sm:$0xff]
    %v1211 = vld [vmem:[#allocation11 + $0x80] sm:$0xff]
    %v1212 = vld [vmem:[#allocation11 + $0x88] sm:$0xff]
    %v1213 = vld [vmem:[#allocation11 + $0x90] sm:$0xff]
    %v1214 = vld [vmem:[#allocation11 + $0x98] sm:$0xff]
    %v1215 = vld [vmem:[#allocation11 + $0xa0] sm:$0xff]
    %v1216 = vld [vmem:[#allocation11 + $0xa8] sm:$0xff]
    %v1217 = vld [vmem:[#allocation11 + $0xb0] sm:$0xff]
    %v1218 = vld [vmem:[#allocation11 + $0xb8] sm:$0xff]
    %v1219 = vld [vmem:[#allocation11 + $0xc0] sm:$0xff]
    %v1220 = vld [vmem:[#allocation11 + $0xc8] sm:$0xff]
    %v1221 = vld [vmem:[#allocation11 + $0xd0] sm:$0xff]
    %v1222 = vld [vmem:[#allocation11 + $0xd8] sm:$0xff]
    %v1223 = vld [vmem:[#allocation11 + $0xe0] sm:$0xff]
    %v1224 = vld [vmem:[#allocation11 + $0xe8] sm:$0xff]
    %v1225 = vld [vmem:[#allocation11 + $0xf0] sm:$0xff]
    %v1226 = vld [vmem:[#allocation11 + $0xf8] sm:$0xff]
    %v1227 = vld [vmem:[#allocation11 + $0x100] sm:$0xff]
    %v1228 = vld [vmem:[#allocation11 + $0x108] sm:$0xff]
    %v1229 = vld [vmem:[#allocation11 + $0x110] sm:$0xff]
    %v1230 = vld [vmem:[#allocation11 + $0x118] sm:$0xff]
    %v1231 = vld [vmem:[#allocation11 + $0x120] sm:$0xff]
    %v1232 = vld [vmem:[#allocation11 + $0x128] sm:$0xff]
    %v1233 = vld [vmem:[#allocation11 + $0x130] sm:$0xff]
    %v1234 = vld [vmem:[#allocation11 + $0x138] sm:$0xff]
    %v1235 = vld [vmem:[#allocation11 + $0x140] sm:$0xff]
    %v1236 = vld [vmem:[#allocation11 + $0x148] sm:$0xff]
    %v1237 = vld [vmem:[#allocation11 + $0x150] sm:$0xff]
    %v1238 = vld [vmem:[#allocation11 + $0x158] sm:$0xff]
    %v1239 = vld [vmem:[#allocation11 + $0x160] sm:$0xff]
    %v1240 = vld [vmem:[#allocation11 + $0x168] sm:$0xff]
    %v1241 = vld [vmem:[#allocation11 + $0x170] sm:$0xff]
    %v1242 = vld [vmem:[#allocation11 + $0x178] sm:$0xff]
    %v1243 = vld [vmem:[#allocation11 + $0x180] sm:$0xff]
    %v1244 = vld [vmem:[#allocation11 + $0x188] sm:$0xff]
    %v1245 = vld [vmem:[#allocation11 + $0x190] sm:$0xff]
    %v1246 = vld [vmem:[#allocation11 + $0x198] sm:$0xff]
    %v1247 = vld [vmem:[#allocation11 + $0x1a0] sm:$0xff]
    %v1248 = vld [vmem:[#allocation11 + $0x1a8] sm:$0xff]
    %v1249 = vld [vmem:[#allocation11 + $0x1b0] sm:$0xff]
    %v1250 = vld [vmem:[#allocation11 + $0x1b8] sm:$0xff]
    %v1251 = vld [vmem:[#allocation11 + $0x1c0] sm:$0xff]
    %v1252 = vld [vmem:[#allocation11 + $0x1c8] sm:$0xff]
    %v1253 = vld [vmem:[#allocation11 + $0x1d0] sm:$0xff]
    %v1254 = vld [vmem:[#allocation11 + $0x1d8] sm:$0xff]
    %v1255 = vld [vmem:[#allocation11 + $0x1e0] sm:$0xff]
    %v1256 = vld [vmem:[#allocation11 + $0x1e8] sm:$0xff]
    %v1257 = vld [vmem:[#allocation11 + $0x1f0] sm:$0xff]
    %v1258 = vld [vmem:[#allocation11 + $0x1f8] sm:$0xff]
    %v1259 = vld [vmem:[#allocation11 + $0x200] sm:$0xff]
    %v1260 = vld [vmem:[#allocation11 + $0x208] sm:$0xff]
    %v1261 = vld [vmem:[#allocation11 + $0x210] sm:$0xff]
    %v1262 = vld [vmem:[#allocation11 + $0x218] sm:$0xff]
    %v1263 = vld [vmem:[#allocation11 + $0x220] sm:$0xff]
    %v1264 = vld [vmem:[#allocation11 + $0x228] sm:$0xff]
    %v1265 = vld [vmem:[#allocation11 + $0x230] sm:$0xff]
    %v1266 = vld [vmem:[#allocation11 + $0x238] sm:$0xff]
    %v1267 = vld [vmem:[#allocation11 + $0x240] sm:$0xff]
    %v1268 = vld [vmem:[#allocation11 + $0x248] sm:$0xff]
    %v1269 = vld [vmem:[#allocation11 + $0x250] sm:$0xff]
    %v1270 = vld [vmem:[#allocation11 + $0x258] sm:$0xff]
    %v1271 = vld [vmem:[#allocation11 + $0x260] sm:$0xff]
    %v1272 = vld [vmem:[#allocation11 + $0x268] sm:$0xff]
    %v1273 = vld [vmem:[#allocation11 + $0x270] sm:$0xff]
    %v1274 = vld [vmem:[#allocation11 + $0x278] sm:$0xff]
    %v1275 = vld [vmem:[#allocation11 + $0x280] sm:$0xff]
    %v1276 = vld [vmem:[#allocation11 + $0x288] sm:$0xff]
    %v1277 = vld [vmem:[#allocation11 + $0x290] sm:$0xff]
    %v1278 = vld [vmem:[#allocation11 + $0x298] sm:$0xff]
    %v1279 = vld [vmem:[#allocation11 + $0x2a0] sm:$0xff]
    %v1280 = vld [vmem:[#allocation11 + $0x2a8] sm:$0xff]
    %v1281 = vld [vmem:[#allocation11 + $0x2b0] sm:$0xff]
    %v1282 = vld [vmem:[#allocation11 + $0x2b8] sm:$0xff]
    %v1283 = vld [vmem:[#allocation11 + $0x2c0] sm:$0xff]
    %v1284 = vld [vmem:[#allocation11 + $0x2c8] sm:$0xff]
    %v1285 = vld [vmem:[#allocation11 + $0x2d0] sm:$0xff]
    %v1286 = vld [vmem:[#allocation11 + $0x2d8] sm:$0xff]
    %v1287 = vld [vmem:[#allocation11 + $0x2e0] sm:$0xff]
    %v1288 = vld [vmem:[#allocation11 + $0x2e8] sm:$0xff]
    %v1289 = vld [vmem:[#allocation11 + $0x2f0] sm:$0xff]
    %v1290 = vld [vmem:[#allocation11 + $0x2f8] sm:$0xff]
    %v1291 = vld [vmem:[#allocation11 + $0x300] sm:$0xff]
    %v1292 = vld [vmem:[#allocation11 + $0x308] sm:$0xff]
    %v1293 = vld [vmem:[#allocation11 + $0x310] sm:$0xff]
    %v1294 = vld [vmem:[#allocation11 + $0x318] sm:$0xff]
    %v1295 = vld [vmem:[#allocation11 + $0x320] sm:$0xff]
    %v1296 = vld [vmem:[#allocation11 + $0x328] sm:$0xff]
    %v1297 = vld [vmem:[#allocation11 + $0x330] sm:$0xff]
    %v1298 = vld [vmem:[#allocation11 + $0x338] sm:$0xff]
    %v1299 = vld [vmem:[#allocation11 + $0x340] sm:$0xff]
    %v1300 = vld [vmem:[#allocation11 + $0x348] sm:$0xff]
    %v1301 = vld [vmem:[#allocation11 + $0x350] sm:$0xff]
    %v1302 = vld [vmem:[#allocation11 + $0x358] sm:$0xff]
    %v1303 = vld [vmem:[#allocation11 + $0x360] sm:$0xff]
    %v1304 = vld [vmem:[#allocation11 + $0x368] sm:$0xff]
    %v1305 = vld [vmem:[#allocation11 + $0x370] sm:$0xff]
    %v1306 = vld [vmem:[#allocation11 + $0x378] sm:$0xff]
    %v1307 = vld [vmem:[#allocation11 + $0x380] sm:$0xff]
    %v1308 = vld [vmem:[#allocation11 + $0x388] sm:$0xff]
    %v1309 = vld [vmem:[#allocation11 + $0x390] sm:$0xff]
    %v1310 = vld [vmem:[#allocation11 + $0x398] sm:$0xff]
    %v1311 = vld [vmem:[#allocation11 + $0x3a0] sm:$0xff]
    %v1312 = vld [vmem:[#allocation11 + $0x3a8] sm:$0xff]
    %v1313 = vld [vmem:[#allocation11 + $0x3b0] sm:$0xff]
    %v1314 = vld [vmem:[#allocation11 + $0x3b8] sm:$0xff]
    %v1315 = vld [vmem:[#allocation11 + $0x3c0] sm:$0xff]
    %v1316 = vld [vmem:[#allocation11 + $0x3c8] sm:$0xff]
    %v1317 = vld [vmem:[#allocation11 + $0x3d0] sm:$0xff]
    %v1318 = vld [vmem:[#allocation11 + $0x3d8] sm:$0xff]
    %v1319 = vld [vmem:[#allocation11 + $0x3e0] sm:$0xff]
    %v1320 = vld [vmem:[#allocation11 + $0x3e8] sm:$0xff]
    %v1321 = vld [vmem:[#allocation11 + $0x3f0] sm:$0xff]
    %v1322 = vld [vmem:[#allocation11 + $0x3f8] sm:$0xff]
    %v1323 = vld [vmem:[#allocation11 + $0x400] sm:$0xff]
    %v1324 = vld [vmem:[#allocation11 + $0x408] sm:$0xff]
    %v1325 = vld [vmem:[#allocation11 + $0x410] sm:$0xff]
    %v1326 = vld [vmem:[#allocation11 + $0x418] sm:$0xff]
    %v1327 = vld [vmem:[#allocation11 + $0x420] sm:$0xff]
    %v1328 = vld [vmem:[#allocation11 + $0x428] sm:$0xff]
    %v1329 = vld [vmem:[#allocation11 + $0x430] sm:$0xff]
    %v1330 = vld [vmem:[#allocation11 + $0x438] sm:$0xff]
    %v1331 = vld [vmem:[#allocation11 + $0x440] sm:$0xff]
    %v1332 = vld [vmem:[#allocation11 + $0x448] sm:$0xff]
    %v1333 = vld [vmem:[#allocation11 + $0x450] sm:$0xff]
    %v1334 = vld [vmem:[#allocation11 + $0x458] sm:$0xff]
    %v1335 = vld [vmem:[#allocation11 + $0x460] sm:$0xff]
    %v1336 = vld [vmem:[#allocation11 + $0x468] sm:$0xff]
    %v1337 = vld [vmem:[#allocation11 + $0x470] sm:$0xff]
    %v1338 = vld [vmem:[#allocation11 + $0x478] sm:$0xff]
    %v1339 = vld [vmem:[#allocation11 + $0x480] sm:$0xff]
    %v1340 = vld [vmem:[#allocation11 + $0x488] sm:$0xff]
    %v1341 = vld [vmem:[#allocation11 + $0x490] sm:$0xff]
    %v1342 = vld [vmem:[#allocation11 + $0x498] sm:$0xff]
    %v1343 = vld [vmem:[#allocation11 + $0x4a0] sm:$0xff]
    %v1344 = vld [vmem:[#allocation11 + $0x4a8] sm:$0xff]
    %v1345 = vld [vmem:[#allocation11 + $0x4b0] sm:$0xff]
    %v1346 = vld [vmem:[#allocation11 + $0x4b8] sm:$0xff]
    %v1347 = vld [vmem:[#allocation11 + $0x4c0] sm:$0xff]
    %v1348 = vld [vmem:[#allocation11 + $0x4c8] sm:$0xff]
    %v1349 = vld [vmem:[#allocation11 + $0x4d0] sm:$0xff]
    %v1350 = vld [vmem:[#allocation11 + $0x4d8] sm:$0xff]
    %v1351 = vld [vmem:[#allocation11 + $0x4e0] sm:$0xff]
    %v1352 = vld [vmem:[#allocation11 + $0x4e8] sm:$0xff]
    %v1353 = vld [vmem:[#allocation11 + $0x4f0] sm:$0xff]
    %v1354 = vld [vmem:[#allocation11 + $0x4f8] sm:$0xff]
    %v1355 = vld [vmem:[#allocation11 + $0x500] sm:$0xff]
    %v1356 = vld [vmem:[#allocation11 + $0x508] sm:$0xff]
    %v1357 = vld [vmem:[#allocation11 + $0x510] sm:$0xff]
    %v1358 = vld [vmem:[#allocation11 + $0x518] sm:$0xff]
    %v1359 = vld [vmem:[#allocation11 + $0x520] sm:$0xff]
    %v1360 = vld [vmem:[#allocation11 + $0x528] sm:$0xff]
    %v1361 = vld [vmem:[#allocation11 + $0x530] sm:$0xff]
    %v1362 = vld [vmem:[#allocation11 + $0x538] sm:$0xff]
    %v1363 = vld [vmem:[#allocation11 + $0x540] sm:$0xff]
    %v1364 = vld [vmem:[#allocation11 + $0x548] sm:$0xff]
    %v1365 = vld [vmem:[#allocation11 + $0x550] sm:$0xff]
    %v1366 = vld [vmem:[#allocation11 + $0x558] sm:$0xff]
    %v1367 = vld [vmem:[#allocation11 + $0x560] sm:$0xff]
    %v1368 = vld [vmem:[#allocation11 + $0x568] sm:$0xff]
    %v1369 = vld [vmem:[#allocation11 + $0x570] sm:$0xff]
    %v1370 = vld [vmem:[#allocation11 + $0x578] sm:$0xff]
    %v1371 = vld [vmem:[#allocation11 + $0x580] sm:$0xff]
    %v1372 = vld [vmem:[#allocation11 + $0x588] sm:$0xff]
    %v1373 = vld [vmem:[#allocation11 + $0x590] sm:$0xff]
    %v1374 = vld [vmem:[#allocation11 + $0x598] sm:$0xff]
    %v1375 = vld [vmem:[#allocation11 + $0x5a0] sm:$0xff]
    %v1376 = vld [vmem:[#allocation11 + $0x5a8] sm:$0xff]
    %v1377 = vld [vmem:[#allocation11 + $0x5b0] sm:$0xff]
    %v1378 = vld [vmem:[#allocation11 + $0x5b8] sm:$0xff]
    %v1379 = vld [vmem:[#allocation11 + $0x5c0] sm:$0xff]
    %v1380 = vld [vmem:[#allocation11 + $0x5c8] sm:$0xff]
    %v1381 = vld [vmem:[#allocation11 + $0x5d0] sm:$0xff]
    %v1382 = vld [vmem:[#allocation11 + $0x5d8] sm:$0xff]
    %v1383 = vld [vmem:[#allocation11 + $0x5e0] sm:$0xff]
    %v1384 = vld [vmem:[#allocation11 + $0x5e8] sm:$0xff]
    %v1385 = vld [vmem:[#allocation11 + $0x5f0] sm:$0xff]
    %v1386 = vld [vmem:[#allocation11 + $0x5f8] sm:$0xff]
    %v1387 = vld [vmem:[#allocation11 + $0x600] sm:$0xff]
    %v1388 = vld [vmem:[#allocation11 + $0x608] sm:$0xff]
    %v1389 = vld [vmem:[#allocation11 + $0x610] sm:$0xff]
    %v1390 = vld [vmem:[#allocation11 + $0x618] sm:$0xff]
    %v1391 = vld [vmem:[#allocation11 + $0x620] sm:$0xff]
    %v1392 = vld [vmem:[#allocation11 + $0x628] sm:$0xff]
    %v1393 = vld [vmem:[#allocation11 + $0x630] sm:$0xff]
    %v1394 = vld [vmem:[#allocation11 + $0x638] sm:$0xff]
    %v1395 = vld [vmem:[#allocation11 + $0x640] sm:$0xff]
    %v1396 = vld [vmem:[#allocation11 + $0x648] sm:$0xff]
    %v1397 = vld [vmem:[#allocation11 + $0x650] sm:$0xff]
    %v1398 = vld [vmem:[#allocation11 + $0x658] sm:$0xff]
    %v1399 = vld [vmem:[#allocation11 + $0x660] sm:$0xff]
    %v1400 = vld [vmem:[#allocation11 + $0x668] sm:$0xff]
    %v1401 = vld [vmem:[#allocation11 + $0x670] sm:$0xff]
    %v1402 = vld [vmem:[#allocation11 + $0x678] sm:$0xff]
    %v1403 = vld [vmem:[#allocation11 + $0x680] sm:$0xff]
    %v1404 = vld [vmem:[#allocation11 + $0x688] sm:$0xff]
    %v1405 = vld [vmem:[#allocation11 + $0x690] sm:$0xff]
    %v1406 = vld [vmem:[#allocation11 + $0x698] sm:$0xff]
    %v1407 = vld [vmem:[#allocation11 + $0x6a0] sm:$0xff]
    %v1408 = vld [vmem:[#allocation11 + $0x6a8] sm:$0xff]
    %v1409 = vld [vmem:[#allocation11 + $0x6b0] sm:$0xff]
    %v1410 = vld [vmem:[#allocation11 + $0x6b8] sm:$0xff]
    %v1411 = vld [vmem:[#allocation11 + $0x6c0] sm:$0xff]
    %v1412 = vld [vmem:[#allocation11 + $0x6c8] sm:$0xff]
    %v1413 = vld [vmem:[#allocation11 + $0x6d0] sm:$0xff]
    %v1414 = vld [vmem:[#allocation11 + $0x6d8] sm:$0xff]
    %v1415 = vld [vmem:[#allocation11 + $0x6e0] sm:$0xff]
    %v1416 = vld [vmem:[#allocation11 + $0x6e8] sm:$0xff]
    %v1417 = vld [vmem:[#allocation11 + $0x6f0] sm:$0xff]
    %v1418 = vld [vmem:[#allocation11 + $0x6f8] sm:$0xff]
    %v1419 = vld [vmem:[#allocation11 + $0x700] sm:$0xff]
    %v1420 = vld [vmem:[#allocation11 + $0x708] sm:$0xff]
    %v1421 = vld [vmem:[#allocation11 + $0x710] sm:$0xff]
    %v1422 = vld [vmem:[#allocation11 + $0x718] sm:$0xff]
    %v1423 = vld [vmem:[#allocation11 + $0x720] sm:$0xff]
    %v1424 = vld [vmem:[#allocation11 + $0x728] sm:$0xff]
    %v1425 = vld [vmem:[#allocation11 + $0x730] sm:$0xff]
    %v1426 = vld [vmem:[#allocation11 + $0x738] sm:$0xff]
    %v1427 = vld [vmem:[#allocation11 + $0x740] sm:$0xff]
    %v1428 = vld [vmem:[#allocation11 + $0x748] sm:$0xff]
    %v1429 = vld [vmem:[#allocation11 + $0x750] sm:$0xff]
    %v1430 = vld [vmem:[#allocation11 + $0x758] sm:$0xff]
    %v1431 = vld [vmem:[#allocation11 + $0x760] sm:$0xff]
    %v1432 = vld [vmem:[#allocation11 + $0x768] sm:$0xff]
    %v1433 = vld [vmem:[#allocation11 + $0x770] sm:$0xff]
    %v1434 = vld [vmem:[#allocation11 + $0x778] sm:$0xff]
    %v1435 = vld [vmem:[#allocation11 + $0x780] sm:$0xff]
    %v1436 = vld [vmem:[#allocation11 + $0x788] sm:$0xff]
    %v1437 = vld [vmem:[#allocation11 + $0x790] sm:$0xff]
    %v1438 = vld [vmem:[#allocation11 + $0x798] sm:$0xff]
    %v1439 = vld [vmem:[#allocation11 + $0x7a0] sm:$0xff]
    %v1440 = vld [vmem:[#allocation11 + $0x7a8] sm:$0xff]
    %v1441 = vld [vmem:[#allocation11 + $0x7b0] sm:$0xff]
    %v1442 = vld [vmem:[#allocation11 + $0x7b8] sm:$0xff]
    %v1443 = vld [vmem:[#allocation11 + $0x7c0] sm:$0xff]
    %v1444 = vld [vmem:[#allocation11 + $0x7c8] sm:$0xff]
    %v1445 = vld [vmem:[#allocation11 + $0x7d0] sm:$0xff]
    %v1446 = vld [vmem:[#allocation11 + $0x7d8] sm:$0xff]
    %v1447 = vld [vmem:[#allocation11 + $0x7e0] sm:$0xff]
    %v1448 = vld [vmem:[#allocation11 + $0x7e8] sm:$0xff]
    %v1449 = vld [vmem:[#allocation11 + $0x7f0] sm:$0xff]
    %v1450 = vld [vmem:[#allocation11 + $0x7f8] sm:$0xff]
    %v1451 = vld [vmem:[#allocation11 + $0x800] sm:$0xff]
    %v1452 = vld [vmem:[#allocation11 + $0x808] sm:$0xff]
    %v1453 = vld [vmem:[#allocation11 + $0x810] sm:$0xff]
    %v1454 = vld [vmem:[#allocation11 + $0x818] sm:$0xff]
    %v1455 = vld [vmem:[#allocation11 + $0x820] sm:$0xff]
    %v1456 = vld [vmem:[#allocation11 + $0x828] sm:$0xff]
    %v1457 = vld [vmem:[#allocation11 + $0x830] sm:$0xff]
    %v1458 = vld [vmem:[#allocation11 + $0x838] sm:$0xff]
    %v1459 = vld [vmem:[#allocation11 + $0x840] sm:$0xff]
    %v1460 = vld [vmem:[#allocation11 + $0x848] sm:$0xff]
    %v1461 = vld [vmem:[#allocation11 + $0x850] sm:$0xff]
    %v1462 = vld [vmem:[#allocation11 + $0x858] sm:$0xff]
    %v1463 = vld [vmem:[#allocation11 + $0x860] sm:$0xff]
    %v1464 = vld [vmem:[#allocation11 + $0x868] sm:$0xff]
    %v1465 = vld [vmem:[#allocation11 + $0x870] sm:$0xff]
    %v1466 = vld [vmem:[#allocation11 + $0x878] sm:$0xff]
    %v1467 = vld [vmem:[#allocation11 + $0x880] sm:$0xff]
    %v1468 = vld [vmem:[#allocation11 + $0x888] sm:$0xff]
    %v1469 = vld [vmem:[#allocation11 + $0x890] sm:$0xff]
    %v1470 = vld [vmem:[#allocation11 + $0x898] sm:$0xff]
    %v1471 = vld [vmem:[#allocation11 + $0x8a0] sm:$0xff]
    %v1472 = vld [vmem:[#allocation11 + $0x8a8] sm:$0xff]
    %v1473 = vld [vmem:[#allocation11 + $0x8b0] sm:$0xff]
    %v1474 = vld [vmem:[#allocation11 + $0x8b8] sm:$0xff]
    %v1475 = vld [vmem:[#allocation11 + $0x8c0] sm:$0xff]
    %v1476 = vld [vmem:[#allocation11 + $0x8c8] sm:$0xff]
    %v1477 = vld [vmem:[#allocation11 + $0x8d0] sm:$0xff]
    %v1478 = vld [vmem:[#allocation11 + $0x8d8] sm:$0xff]
    %v1479 = vld [vmem:[#allocation11 + $0x8e0] sm:$0xff]
    %v1480 = vld [vmem:[#allocation11 + $0x8e8] sm:$0xff]
    %v1481 = vld [vmem:[#allocation11 + $0x8f0] sm:$0xff]
    %v1482 = vld [vmem:[#allocation11 + $0x8f8] sm:$0xff]
    %v1483 = vld [vmem:[#allocation11 + $0x900] sm:$0xff]
    %v1484 = vld [vmem:[#allocation11 + $0x908] sm:$0xff]
    %v1485 = vld [vmem:[#allocation11 + $0x910] sm:$0xff]
    %v1486 = vld [vmem:[#allocation11 + $0x918] sm:$0xff]
    %v1487 = vld [vmem:[#allocation11 + $0x920] sm:$0xff]
    %v1488 = vld [vmem:[#allocation11 + $0x928] sm:$0xff]
    %v1489 = vld [vmem:[#allocation11 + $0x930] sm:$0xff]
    %v1490 = vld [vmem:[#allocation11 + $0x938] sm:$0xff]
    %v1491 = vld [vmem:[#allocation11 + $0x940] sm:$0xff]
    %v1492 = vld [vmem:[#allocation11 + $0x948] sm:$0xff]
    %v1493 = vld [vmem:[#allocation11 + $0x950] sm:$0xff]
    %v1494 = vld [vmem:[#allocation11 + $0x958] sm:$0xff]
    %v1495 = vld [vmem:[#allocation11 + $0x960] sm:$0xff]
    %v1496 = vld [vmem:[#allocation11 + $0x968] sm:$0xff]
    %v1497 = vld [vmem:[#allocation11 + $0x970] sm:$0xff]
    %v1498 = vld [vmem:[#allocation11 + $0x978] sm:$0xff]
    %v1499 = vld [vmem:[#allocation11 + $0x980] sm:$0xff]
    %v1500 = vld [vmem:[#allocation11 + $0x988] sm:$0xff]
    %v1501 = vld [vmem:[#allocation11 + $0x990] sm:$0xff]
    %v1502 = vld [vmem:[#allocation11 + $0x998] sm:$0xff]
    %v1503 = vld [vmem:[#allocation11 + $0x9a0] sm:$0xff]
    %v1504 = vld [vmem:[#allocation11 + $0x9a8] sm:$0xff]
    %v1505 = vld [vmem:[#allocation11 + $0x9b0] sm:$0xff]
    %v1506 = vld [vmem:[#allocation11 + $0x9b8] sm:$0xff]
    %v1507 = vld [vmem:[#allocation11 + $0x9c0] sm:$0xff]
    %v1508 = vld [vmem:[#allocation11 + $0x9c8] sm:$0xff]
    %v1509 = vld [vmem:[#allocation11 + $0x9d0] sm:$0xff]
    %v1510 = vld [vmem:[#allocation11 + $0x9d8] sm:$0xff]
    %v1511 = vld [vmem:[#allocation11 + $0x9e0] sm:$0xff]
    %v1512 = vld [vmem:[#allocation11 + $0x9e8] sm:$0xff]
    %v1513 = vld [vmem:[#allocation11 + $0x9f0] sm:$0xff]
    %v1514 = vld [vmem:[#allocation11 + $0x9f8] sm:$0xff]
    %v1515 = vld [vmem:[#allocation11 + $0xa00] sm:$0xff]
    %v1516 = vld [vmem:[#allocation11 + $0xa08] sm:$0xff]
    %v1517 = vld [vmem:[#allocation11 + $0xa10] sm:$0xff]
    %v1518 = vld [vmem:[#allocation11 + $0xa18] sm:$0xff]
    %v1519 = vld [vmem:[#allocation11 + $0xa20] sm:$0xff]
    %v1520 = vld [vmem:[#allocation11 + $0xa28] sm:$0xff]
    %v1521 = vld [vmem:[#allocation11 + $0xa30] sm:$0xff]
    %v1522 = vld [vmem:[#allocation11 + $0xa38] sm:$0xff]
    %v1523 = vld [vmem:[#allocation11 + $0xa40] sm:$0xff]
    %v1524 = vld [vmem:[#allocation11 + $0xa48] sm:$0xff]
    %v1525 = vld [vmem:[#allocation11 + $0xa50] sm:$0xff]
    %v1526 = vld [vmem:[#allocation11 + $0xa58] sm:$0xff]
    %v1527 = vld [vmem:[#allocation11 + $0xa60] sm:$0xff]
    %v1528 = vld [vmem:[#allocation11 + $0xa68] sm:$0xff]
    %v1529 = vld [vmem:[#allocation11 + $0xa70] sm:$0xff]
    %v1530 = vld [vmem:[#allocation11 + $0xa78] sm:$0xff]
    %v1531 = vld [vmem:[#allocation11 + $0xa80] sm:$0xff]
    %v1532 = vld [vmem:[#allocation11 + $0xa88] sm:$0xff]
    %v1533 = vld [vmem:[#allocation11 + $0xa90] sm:$0xff]
    %v1534 = vld [vmem:[#allocation11 + $0xa98] sm:$0xff]
    %v1535 = vld [vmem:[#allocation11 + $0xaa0] sm:$0xff]
    %v1536 = vld [vmem:[#allocation11 + $0xaa8] sm:$0xff]
    %v1537 = vld [vmem:[#allocation11 + $0xab0] sm:$0xff]
    %v1538 = vld [vmem:[#allocation11 + $0xab8] sm:$0xff]
    %v1539 = vld [vmem:[#allocation11 + $0xac0] sm:$0xff]
    %v1540 = vld [vmem:[#allocation11 + $0xac8] sm:$0xff]
    %v1541 = vld [vmem:[#allocation11 + $0xad0] sm:$0xff]
    %v1542 = vld [vmem:[#allocation11 + $0xad8] sm:$0xff]
    %v1543 = vld [vmem:[#allocation11 + $0xae0] sm:$0xff]
    %v1544 = vld [vmem:[#allocation11 + $0xae8] sm:$0xff]
    %v1545 = vld [vmem:[#allocation11 + $0xaf0] sm:$0xff]
    %v1546 = vld [vmem:[#allocation11 + $0xaf8] sm:$0xff]
    %v1547 = vld [vmem:[#allocation11 + $0xb00] sm:$0xff]
    %v1548 = vld [vmem:[#allocation11 + $0xb08] sm:$0xff]
    %v1549 = vld [vmem:[#allocation11 + $0xb10] sm:$0xff]
    %v1550 = vld [vmem:[#allocation11 + $0xb18] sm:$0xff]
    %v1551 = vld [vmem:[#allocation11 + $0xb20] sm:$0xff]
    %v1552 = vld [vmem:[#allocation11 + $0xb28] sm:$0xff]
    %v1553 = vld [vmem:[#allocation11 + $0xb30] sm:$0xff]
    %v1554 = vld [vmem:[#allocation11 + $0xb38] sm:$0xff]
    %v1555 = vld [vmem:[#allocation11 + $0xb40] sm:$0xff]
    %v1556 = vld [vmem:[#allocation11 + $0xb48] sm:$0xff]
    %v1557 = vld [vmem:[#allocation11 + $0xb50] sm:$0xff]
    %v1558 = vld [vmem:[#allocation11 + $0xb58] sm:$0xff]
    %v1559 = vld [vmem:[#allocation11 + $0xb60] sm:$0xff]
    %v1560 = vld [vmem:[#allocation11 + $0xb68] sm:$0xff]
    %v1561 = vld [vmem:[#allocation11 + $0xb70] sm:$0xff]
    %v1562 = vld [vmem:[#allocation11 + $0xb78] sm:$0xff]
    %v1563 = vld [vmem:[#allocation11 + $0xb80] sm:$0xff]
    %v1564 = vld [vmem:[#allocation11 + $0xb88] sm:$0xff]
    %v1565 = vld [vmem:[#allocation11 + $0xb90] sm:$0xff]
    %v1566 = vld [vmem:[#allocation11 + $0xb98] sm:$0xff]
    %v1567 = vld [vmem:[#allocation11 + $0xba0] sm:$0xff]
    %v1568 = vld [vmem:[#allocation11 + $0xba8] sm:$0xff]
    %v1569 = vld [vmem:[#allocation11 + $0xbb0] sm:$0xff]
    %v1570 = vld [vmem:[#allocation11 + $0xbb8] sm:$0xff]
    %v1571 = vld [vmem:[#allocation11 + $0xbc0] sm:$0xff]
    %v1572 = vld [vmem:[#allocation11 + $0xbc8] sm:$0xff]
    %v1573 = vld [vmem:[#allocation11 + $0xbd0] sm:$0xff]
    %v1574 = vld [vmem:[#allocation11 + $0xbd8] sm:$0xff]
    %v1575 = vld [vmem:[#allocation11 + $0xbe0] sm:$0xff]
    %v1576 = vld [vmem:[#allocation11 + $0xbe8] sm:$0xff]
    %v1577 = vld [vmem:[#allocation11 + $0xbf0] sm:$0xff]
    %v1578 = vld [vmem:[#allocation11 + $0xbf8] sm:$0xff]
    %v1579 = vld [vmem:[#allocation11 + $0xc00] sm:$0xff]
    %v1580 = vld [vmem:[#allocation11 + $0xc08] sm:$0xff]
    %v1581 = vld [vmem:[#allocation11 + $0xc10] sm:$0xff]
    %v1582 = vld [vmem:[#allocation11 + $0xc18] sm:$0xff]
    %v1583 = vld [vmem:[#allocation11 + $0xc20] sm:$0xff]
    %v1584 = vld [vmem:[#allocation11 + $0xc28] sm:$0xff]
    %v1585 = vld [vmem:[#allocation11 + $0xc30] sm:$0xff]
    %v1586 = vld [vmem:[#allocation11 + $0xc38] sm:$0xff]
    %v1587 = vld [vmem:[#allocation11 + $0xc40] sm:$0xff]
    %v1588 = vld [vmem:[#allocation11 + $0xc48] sm:$0xff]
    %v1589 = vld [vmem:[#allocation11 + $0xc50] sm:$0xff]
    %v1590 = vld [vmem:[#allocation11 + $0xc58] sm:$0xff]
    %v1591 = vld [vmem:[#allocation11 + $0xc60] sm:$0xff]
    %v1592 = vld [vmem:[#allocation11 + $0xc68] sm:$0xff]
    %v1593 = vld [vmem:[#allocation11 + $0xc70] sm:$0xff]
    %v1594 = vld [vmem:[#allocation11 + $0xc78] sm:$0xff]
    %v1595 = vld [vmem:[#allocation11 + $0xc80] sm:$0xff]
    %v1596 = vld [vmem:[#allocation11 + $0xc88] sm:$0xff]
    %v1597 = vld [vmem:[#allocation11 + $0xc90] sm:$0xff]
    %v1598 = vld [vmem:[#allocation11 + $0xc98] sm:$0xff]
    %v1599 = vld [vmem:[#allocation11 + $0xca0] sm:$0xff]
    %v1600 = vld [vmem:[#allocation11 + $0xca8] sm:$0xff]
    %v1601 = vld [vmem:[#allocation11 + $0xcb0] sm:$0xff]
    %v1602 = vld [vmem:[#allocation11 + $0xcb8] sm:$0xff]
    %v1603 = vld [vmem:[#allocation11 + $0xcc0] sm:$0xff]
    %v1604 = vld [vmem:[#allocation11 + $0xcc8] sm:$0xff]
    %v1605 = vld [vmem:[#allocation11 + $0xcd0] sm:$0xff]
    %v1606 = vld [vmem:[#allocation11 + $0xcd8] sm:$0xff]
    %v1607 = vld [vmem:[#allocation11 + $0xce0] sm:$0xff]
    %v1608 = vld [vmem:[#allocation11 + $0xce8] sm:$0xff]
    %v1609 = vld [vmem:[#allocation11 + $0xcf0] sm:$0xff]
    %v1610 = vld [vmem:[#allocation11 + $0xcf8] sm:$0xff]
    %v1611 = vld [vmem:[#allocation11 + $0xd00] sm:$0xff]
    %v1612 = vld [vmem:[#allocation11 + $0xd08] sm:$0xff]
    %v1613 = vld [vmem:[#allocation11 + $0xd10] sm:$0xff]
    %v1614 = vld [vmem:[#allocation11 + $0xd18] sm:$0xff]
    %v1615 = vld [vmem:[#allocation11 + $0xd20] sm:$0xff]
    %v1616 = vld [vmem:[#allocation11 + $0xd28] sm:$0xff]
    %v1617 = vld [vmem:[#allocation11 + $0xd30] sm:$0xff]
    %v1618 = vld [vmem:[#allocation11 + $0xd38] sm:$0xff]
    %v1619 = vld [vmem:[#allocation11 + $0xd40] sm:$0xff]
    %v1620 = vld [vmem:[#allocation11 + $0xd48] sm:$0xff]
    %v1621 = vld [vmem:[#allocation11 + $0xd50] sm:$0xff]
    %v1622 = vld [vmem:[#allocation11 + $0xd58] sm:$0xff]
    %v1623 = vld [vmem:[#allocation11 + $0xd60] sm:$0xff]
    %v1624 = vld [vmem:[#allocation11 + $0xd68] sm:$0xff]
    %v1625 = vld [vmem:[#allocation11 + $0xd70] sm:$0xff]
    %v1626 = vld [vmem:[#allocation11 + $0xd78] sm:$0xff]
    %v1627 = vld [vmem:[#allocation11 + $0xd80] sm:$0xff]
    %v1628 = vld [vmem:[#allocation11 + $0xd88] sm:$0xff]
    %v1629 = vld [vmem:[#allocation11 + $0xd90] sm:$0xff]
    %v1630 = vld [vmem:[#allocation11 + $0xd98] sm:$0xff]
    %v1631 = vld [vmem:[#allocation11 + $0xda0] sm:$0xff]
    %v1632 = vld [vmem:[#allocation11 + $0xda8] sm:$0xff]
    %v1633 = vld [vmem:[#allocation11 + $0xdb0] sm:$0xff]
    %v1634 = vld [vmem:[#allocation11 + $0xdb8] sm:$0xff]
    %v1635 = vld [vmem:[#allocation11 + $0xdc0] sm:$0xff]
    %v1636 = vld [vmem:[#allocation11 + $0xdc8] sm:$0xff]
    %v1637 = vld [vmem:[#allocation11 + $0xdd0] sm:$0xff]
    %v1638 = vld [vmem:[#allocation11 + $0xdd8] sm:$0xff]
    %v1639 = vld [vmem:[#allocation11 + $0xde0] sm:$0xff]
    %v1640 = vld [vmem:[#allocation11 + $0xde8] sm:$0xff]
    %v1641 = vld [vmem:[#allocation11 + $0xdf0] sm:$0xff]
    %v1642 = vld [vmem:[#allocation11 + $0xdf8] sm:$0xff]
    %v1643 = vld [vmem:[#allocation11 + $0xe00] sm:$0xff]
    %v1644 = vld [vmem:[#allocation11 + $0xe08] sm:$0xff]
    %v1645 = vld [vmem:[#allocation11 + $0xe10] sm:$0xff]
    %v1646 = vld [vmem:[#allocation11 + $0xe18] sm:$0xff]
    %v1647 = vld [vmem:[#allocation11 + $0xe20] sm:$0xff]
    %v1648 = vld [vmem:[#allocation11 + $0xe28] sm:$0xff]
    %v1649 = vld [vmem:[#allocation11 + $0xe30] sm:$0xff]
    %v1650 = vld [vmem:[#allocation11 + $0xe38] sm:$0xff]
    %v1651 = vld [vmem:[#allocation11 + $0xe40] sm:$0xff]
    %v1652 = vld [vmem:[#allocation11 + $0xe48] sm:$0xff]
    %v1653 = vld [vmem:[#allocation11 + $0xe50] sm:$0xff]
    %v1654 = vld [vmem:[#allocation11 + $0xe58] sm:$0xff]
    %v1655 = vld [vmem:[#allocation11 + $0xe60] sm:$0xff]
    %v1656 = vld [vmem:[#allocation11 + $0xe68] sm:$0xff]
    %v1657 = vld [vmem:[#allocation11 + $0xe70] sm:$0xff]
    %v1658 = vld [vmem:[#allocation11 + $0xe78] sm:$0xff]
    %v1659 = vld [vmem:[#allocation11 + $0xe80] sm:$0xff]
    %v1660 = vld [vmem:[#allocation11 + $0xe88] sm:$0xff]
    %v1661 = vld [vmem:[#allocation11 + $0xe90] sm:$0xff]
    %v1662 = vld [vmem:[#allocation11 + $0xe98] sm:$0xff]
    %v1663 = vld [vmem:[#allocation11 + $0xea0] sm:$0xff]
    %v1664 = vld [vmem:[#allocation11 + $0xea8] sm:$0xff]
    %v1665 = vld [vmem:[#allocation11 + $0xeb0] sm:$0xff]
    %v1666 = vld [vmem:[#allocation11 + $0xeb8] sm:$0xff]
    %v1667 = vld [vmem:[#allocation11 + $0xec0] sm:$0xff]
    %v1668 = vld [vmem:[#allocation11 + $0xec8] sm:$0xff]
    %v1669 = vld [vmem:[#allocation11 + $0xed0] sm:$0xff]
    %v1670 = vld [vmem:[#allocation11 + $0xed8] sm:$0xff]
    %v1671 = vld [vmem:[#allocation11 + $0xee0] sm:$0xff]
    %v1672 = vld [vmem:[#allocation11 + $0xee8] sm:$0xff]
    %v1673 = vld [vmem:[#allocation11 + $0xef0] sm:$0xff]
    %v1674 = vld [vmem:[#allocation11 + $0xef8] sm:$0xff]
    %v1675 = vld [vmem:[#allocation11 + $0xf00] sm:$0xff]
    %v1676 = vld [vmem:[#allocation11 + $0xf08] sm:$0xff]
    %v1677 = vld [vmem:[#allocation11 + $0xf10] sm:$0xff]
    %v1678 = vld [vmem:[#allocation11 + $0xf18] sm:$0xff]
    %v1679 = vld [vmem:[#allocation11 + $0xf20] sm:$0xff]
    %v1680 = vld [vmem:[#allocation11 + $0xf28] sm:$0xff]
    %v1681 = vld [vmem:[#allocation11 + $0xf30] sm:$0xff]
    %v1682 = vld [vmem:[#allocation11 + $0xf38] sm:$0xff]
    %v1683 = vld [vmem:[#allocation11 + $0xf40] sm:$0xff]
    %v1684 = vld [vmem:[#allocation11 + $0xf48] sm:$0xff]
    %v1685 = vld [vmem:[#allocation11 + $0xf50] sm:$0xff]
    %v1686 = vld [vmem:[#allocation11 + $0xf58] sm:$0xff]
    %v1687 = vld [vmem:[#allocation11 + $0xf60] sm:$0xff]
    %v1688 = vld [vmem:[#allocation11 + $0xf68] sm:$0xff]
    %v1689 = vld [vmem:[#allocation11 + $0xf70] sm:$0xff]
    %v1690 = vld [vmem:[#allocation11 + $0xf78] sm:$0xff]
    %v1691 = vld [vmem:[#allocation11 + $0xf80] sm:$0xff]
    %v1692 = vld [vmem:[#allocation11 + $0xf88] sm:$0xff]
    %v1693 = vld [vmem:[#allocation11 + $0xf90] sm:$0xff]
    %v1694 = vld [vmem:[#allocation11 + $0xf98] sm:$0xff]
    %v1695 = vld [vmem:[#allocation11 + $0xfa0] sm:$0xff]
    %v1696 = vld [vmem:[#allocation11 + $0xfa8] sm:$0xff]
    %v1697 = vld [vmem:[#allocation11 + $0xfb0] sm:$0xff]
    %v1698 = vld [vmem:[#allocation11 + $0xfb8] sm:$0xff]
    %v1699 = vld [vmem:[#allocation11 + $0xfc0] sm:$0xff]
    %v1700 = vld [vmem:[#allocation11 + $0xfc8] sm:$0xff]
    %v1701 = vld [vmem:[#allocation11 + $0xfd0] sm:$0xff]
    %v1702 = vld [vmem:[#allocation11 + $0xfd8] sm:$0xff]
    %v1703 = vld [vmem:[#allocation11 + $0xfe0] sm:$0xff]
    %v1704 = vld [vmem:[#allocation11 + $0xfe8] sm:$0xff]
    %v1705 = vld [vmem:[#allocation11 + $0xff0] sm:$0xff]
    %v1706 = vld [vmem:[#allocation11 + $0xff8] sm:$0xff]
    %v1707 = vld [vmem:[#allocation11 + $0x1000] sm:$0xff]
    %v1708 = vld [vmem:[#allocation11 + $0x1008] sm:$0xff]
    %v1709 = vld [vmem:[#allocation11 + $0x1010] sm:$0xff]
    %v1710 = vld [vmem:[#allocation11 + $0x1018] sm:$0xff]
    %v1711 = vld [vmem:[#allocation11 + $0x1020] sm:$0xff]
    %v1712 = vld [vmem:[#allocation11 + $0x1028] sm:$0xff]
    %v1713 = vld [vmem:[#allocation11 + $0x1030] sm:$0xff]
    %v1714 = vld [vmem:[#allocation11 + $0x1038] sm:$0xff]
    %v1715 = vld [vmem:[#allocation11 + $0x1040] sm:$0xff]
    %v1716 = vld [vmem:[#allocation11 + $0x1048] sm:$0xff]
    %v1717 = vld [vmem:[#allocation11 + $0x1050] sm:$0xff]
    %v1718 = vld [vmem:[#allocation11 + $0x1058] sm:$0xff]
    %v1719 = vld [vmem:[#allocation11 + $0x1060] sm:$0xff]
    %v1720 = vld [vmem:[#allocation11 + $0x1068] sm:$0xff]
    %v1721 = vld [vmem:[#allocation11 + $0x1070] sm:$0xff]
    %v1722 = vld [vmem:[#allocation11 + $0x1078] sm:$0xff]
    %v1723 = vld [vmem:[#allocation11 + $0x1080] sm:$0xff]
    %v1724 = vld [vmem:[#allocation11 + $0x1088] sm:$0xff]
    %v1725 = vld [vmem:[#allocation11 + $0x1090] sm:$0xff]
    %v1726 = vld [vmem:[#allocation11 + $0x1098] sm:$0xff]
    %v1727 = vld [vmem:[#allocation11 + $0x10a0] sm:$0xff]
    %v1728 = vld [vmem:[#allocation11 + $0x10a8] sm:$0xff]
    %v1729 = vld [vmem:[#allocation11 + $0x10b0] sm:$0xff]
    %v1730 = vld [vmem:[#allocation11 + $0x10b8] sm:$0xff]
    %v1731 = vld [vmem:[#allocation11 + $0x10c0] sm:$0xff]
    %v1732 = vld [vmem:[#allocation11 + $0x10c8] sm:$0xff]
    %v1733 = vld [vmem:[#allocation11 + $0x10d0] sm:$0xff]
    %v1734 = vld [vmem:[#allocation11 + $0x10d8] sm:$0xff]
    %v1735 = vld [vmem:[#allocation11 + $0x10e0] sm:$0xff]
    %v1736 = vld [vmem:[#allocation11 + $0x10e8] sm:$0xff]
    %v1737 = vld [vmem:[#allocation11 + $0x10f0] sm:$0xff]
    %v1738 = vld [vmem:[#allocation11 + $0x10f8] sm:$0xff]
    %v1739 = vld [vmem:[#allocation11 + $0x1100] sm:$0xff]
    %v1740 = vld [vmem:[#allocation11 + $0x1108] sm:$0xff]
    %v1741 = vld [vmem:[#allocation11 + $0x1110] sm:$0xff]
    %v1742 = vld [vmem:[#allocation11 + $0x1118] sm:$0xff]
    %v1743 = vld [vmem:[#allocation11 + $0x1120] sm:$0xff]
    %v1744 = vld [vmem:[#allocation11 + $0x1128] sm:$0xff]
    %v1745 = vld [vmem:[#allocation11 + $0x1130] sm:$0xff]
    %v1746 = vld [vmem:[#allocation11 + $0x1138] sm:$0xff]
    %v1747 = vld [vmem:[#allocation11 + $0x1140] sm:$0xff]
    %v1748 = vld [vmem:[#allocation11 + $0x1148] sm:$0xff]
    %v1749 = vld [vmem:[#allocation11 + $0x1150] sm:$0xff]
    %v1750 = vld [vmem:[#allocation11 + $0x1158] sm:$0xff]
    %v1751 = vld [vmem:[#allocation11 + $0x1160] sm:$0xff]
    %v1752 = vld [vmem:[#allocation11 + $0x1168] sm:$0xff]
    %v1753 = vld [vmem:[#allocation11 + $0x1170] sm:$0xff]
    %v1754 = vld [vmem:[#allocation11 + $0x1178] sm:$0xff]
    %v1755 = vld [vmem:[#allocation11 + $0x1180] sm:$0xff]
    %v1756 = vld [vmem:[#allocation11 + $0x1188] sm:$0xff]
    %v1757 = vld [vmem:[#allocation11 + $0x1190] sm:$0xff]
    %v1758 = vld [vmem:[#allocation11 + $0x1198] sm:$0xff]
    %v1759 = vld [vmem:[#allocation11 + $0x11a0] sm:$0xff]
    %v1760 = vld [vmem:[#allocation11 + $0x11a8] sm:$0xff]
    %v1761 = vld [vmem:[#allocation11 + $0x11b0] sm:$0xff]
    %v1762 = vld [vmem:[#allocation11 + $0x11b8] sm:$0xff]
    %v1763 = vld [vmem:[#allocation11 + $0x11c0] sm:$0xff]
    %v1764 = vld [vmem:[#allocation11 + $0x11c8] sm:$0xff]
    %v1765 = vld [vmem:[#allocation11 + $0x11d0] sm:$0xff]
    %v1766 = vld [vmem:[#allocation11 + $0x11d8] sm:$0xff]
    %v1767 = vld [vmem:[#allocation11 + $0x11e0] sm:$0xff]
    %v1768 = vld [vmem:[#allocation11 + $0x11e8] sm:$0xff]
    %v1769 = vld [vmem:[#allocation11 + $0x11f0] sm:$0xff]
    %v1770 = vld [vmem:[#allocation11 + $0x11f8] sm:$0xff]
    %v1771 = vld [vmem:[#allocation13] sm:$0xff]
    %v1773 = vlaneseq
    %v1774 = vshrl.u32 %v1773, 7
    %v1775 = vsub.s32 0, %v1774
    %v1776 = vrot.slane %v1771, %v1775
    %v1777 = vlaneseq
    %v1778 = vshrl.u32 %v1777, 7
    %v1779 = vsub.s32 1, %v1778
    %v1780 = vrot.slane %v1771, %v1779
    %v1781 = vlaneseq
    %v1782 = vshrl.u32 %v1781, 7
    %v1783 = vsub.s32 2, %v1782
    %v1784 = vrot.slane %v1771, %v1783
    %v1785 = vlaneseq
    %v1786 = vshrl.u32 %v1785, 7
    %v1787 = vsub.s32 3, %v1786
    %v1788 = vrot.slane %v1771, %v1787
    %v1789 = vlaneseq
    %v1790 = vshrl.u32 %v1789, 7
    %v1791 = vsub.s32 4, %v1790
    %v1792 = vrot.slane %v1771, %v1791
    %v1793 = vlaneseq
    %v1794 = vshrl.u32 %v1793, 7
    %v1795 = vsub.s32 5, %v1794
    %v1796 = vrot.slane %v1771, %v1795
    %v1797 = vlaneseq
    %v1798 = vshrl.u32 %v1797, 7
    %v1799 = vsub.s32 6, %v1798
    %v1800 = vrot.slane %v1771, %v1799
    %v1801 = vlaneseq
    %v1802 = vshrl.u32 %v1801, 7
    %v1803 = vsub.s32 7, %v1802
    %v1804 = vrot.slane %v1771, %v1803
    %v2389 = vunpack.c.l.b16 %v1195
    %v2390 = vunpack.c.h.b16 %v1195
    %v2391 = vunpack.c.l.b16 %v1196
    %v2392 = vunpack.c.h.b16 %v1196
    %v2393 = vunpack.c.l.b16 %v1197
    %v2394 = vunpack.c.h.b16 %v1197
    %v2395 = vunpack.c.l.b16 %v1198
    %v2396 = vunpack.c.h.b16 %v1198
    %v2397 = vunpack.c.l.b16 %v1199
    %v2398 = vunpack.c.h.b16 %v1199
    %v2399 = vunpack.c.l.b16 %v1200
    %v2400 = vunpack.c.h.b16 %v1200
    %v2401 = vunpack.c.l.b16 %v1201
    %v2402 = vunpack.c.h.b16 %v1201
    %v2403 = vunpack.c.l.b16 %v1202
    %v2404 = vunpack.c.h.b16 %v1202
    %v2405 = vunpack.c.l.b16 %v1203
    %v2406 = vunpack.c.h.b16 %v1203
    %v2407 = vunpack.c.l.b16 %v1204
    %v2408 = vunpack.c.h.b16 %v1204
    %v2409 = vunpack.c.l.b16 %v1205
    %v2410 = vunpack.c.h.b16 %v1205
    %v2411 = vunpack.c.l.b16 %v1206
    %v2412 = vunpack.c.h.b16 %v1206
    %v2413 = vunpack.c.l.b16 %v1207
    %v2414 = vunpack.c.h.b16 %v1207
    %v2415 = vunpack.c.l.b16 %v1208
    %v2416 = vunpack.c.h.b16 %v1208
    %v2417 = vunpack.c.l.b16 %v1209
    %v2418 = vunpack.c.h.b16 %v1209
    %v2419 = vunpack.c.l.b16 %v1210
    %v2420 = vunpack.c.h.b16 %v1210
    %v2421 = vunpack.c.l.b16 %v1211
    %v2422 = vunpack.c.h.b16 %v1211
    %v2423 = vunpack.c.l.b16 %v1212
    %v2424 = vunpack.c.h.b16 %v1212
    %v2425 = vunpack.c.l.b16 %v1213
    %v2426 = vunpack.c.h.b16 %v1213
    %v2427 = vunpack.c.l.b16 %v1214
    %v2428 = vunpack.c.h.b16 %v1214
    %v2429 = vunpack.c.l.b16 %v1215
    %v2430 = vunpack.c.h.b16 %v1215
    %v2431 = vunpack.c.l.b16 %v1216
    %v2432 = vunpack.c.h.b16 %v1216
    %v2433 = vunpack.c.l.b16 %v1217
    %v2434 = vunpack.c.h.b16 %v1217
    %v2435 = vunpack.c.l.b16 %v1218
    %v2436 = vunpack.c.h.b16 %v1218
    %v2437 = vunpack.c.l.b16 %v1219
    %v2438 = vunpack.c.h.b16 %v1219
    %v2439 = vunpack.c.l.b16 %v1220
    %v2440 = vunpack.c.h.b16 %v1220
    %v2441 = vunpack.c.l.b16 %v1221
    %v2442 = vunpack.c.h.b16 %v1221
    %v2443 = vunpack.c.l.b16 %v1222
    %v2444 = vunpack.c.h.b16 %v1222
    %v2445 = vunpack.c.l.b16 %v1223
    %v2446 = vunpack.c.h.b16 %v1223
    %v2447 = vunpack.c.l.b16 %v1224
    %v2448 = vunpack.c.h.b16 %v1224
    %v2449 = vunpack.c.l.b16 %v1225
    %v2450 = vunpack.c.h.b16 %v1225
    %v2451 = vunpack.c.l.b16 %v1226
    %v2452 = vunpack.c.h.b16 %v1226
    %v2453 = vunpack.c.l.b16 %v1227
    %v2454 = vunpack.c.h.b16 %v1227
    %v2455 = vunpack.c.l.b16 %v1228
    %v2456 = vunpack.c.h.b16 %v1228
    %v2457 = vunpack.c.l.b16 %v1229
    %v2458 = vunpack.c.h.b16 %v1229
    %v2459 = vunpack.c.l.b16 %v1230
    %v2460 = vunpack.c.h.b16 %v1230
    %v2461 = vunpack.c.l.b16 %v1231
    %v2462 = vunpack.c.h.b16 %v1231
    %v2463 = vunpack.c.l.b16 %v1232
    %v2464 = vunpack.c.h.b16 %v1232
    %v2465 = vunpack.c.l.b16 %v1233
    %v2466 = vunpack.c.h.b16 %v1233
    %v2467 = vunpack.c.l.b16 %v1234
    %v2468 = vunpack.c.h.b16 %v1234
    %v2469 = vunpack.c.l.b16 %v1235
    %v2470 = vunpack.c.h.b16 %v1235
    %v2471 = vunpack.c.l.b16 %v1236
    %v2472 = vunpack.c.h.b16 %v1236
    %v2473 = vunpack.c.l.b16 %v1237
    %v2474 = vunpack.c.h.b16 %v1237
    %v2475 = vunpack.c.l.b16 %v1238
    %v2476 = vunpack.c.h.b16 %v1238
    %v2477 = vunpack.c.l.b16 %v1239
    %v2478 = vunpack.c.h.b16 %v1239
    %v2479 = vunpack.c.l.b16 %v1240
    %v2480 = vunpack.c.h.b16 %v1240
    %v2481 = vunpack.c.l.b16 %v1241
    %v2482 = vunpack.c.h.b16 %v1241
    %v2483 = vunpack.c.l.b16 %v1242
    %v2484 = vunpack.c.h.b16 %v1242
    %v2485 = vunpack.c.l.b16 %v1243
    %v2486 = vunpack.c.h.b16 %v1243
    %v2487 = vunpack.c.l.b16 %v1244
    %v2488 = vunpack.c.h.b16 %v1244
    %v2489 = vunpack.c.l.b16 %v1245
    %v2490 = vunpack.c.h.b16 %v1245
    %v2491 = vunpack.c.l.b16 %v1246
    %v2492 = vunpack.c.h.b16 %v1246
    %v2493 = vunpack.c.l.b16 %v1247
    %v2494 = vunpack.c.h.b16 %v1247
    %v2495 = vunpack.c.l.b16 %v1248
    %v2496 = vunpack.c.h.b16 %v1248
    %v2497 = vunpack.c.l.b16 %v1249
    %v2498 = vunpack.c.h.b16 %v1249
    %v2499 = vunpack.c.l.b16 %v1250
    %v2500 = vunpack.c.h.b16 %v1250
    %v2501 = vunpack.c.l.b16 %v1251
    %v2502 = vunpack.c.h.b16 %v1251
    %v2503 = vunpack.c.l.b16 %v1252
    %v2504 = vunpack.c.h.b16 %v1252
    %v2505 = vunpack.c.l.b16 %v1253
    %v2506 = vunpack.c.h.b16 %v1253
    %v2507 = vunpack.c.l.b16 %v1254
    %v2508 = vunpack.c.h.b16 %v1254
    %v2509 = vunpack.c.l.b16 %v1255
    %v2510 = vunpack.c.h.b16 %v1255
    %v2511 = vunpack.c.l.b16 %v1256
    %v2512 = vunpack.c.h.b16 %v1256
    %v2513 = vunpack.c.l.b16 %v1257
    %v2514 = vunpack.c.h.b16 %v1257
    %v2515 = vunpack.c.l.b16 %v1258
    %v2516 = vunpack.c.h.b16 %v1258
    %v2517 = vunpack.c.l.b16 %v1259
    %v2518 = vunpack.c.h.b16 %v1259
    %v2519 = vunpack.c.l.b16 %v1260
    %v2520 = vunpack.c.h.b16 %v1260
    %v2521 = vunpack.c.l.b16 %v1261
    %v2522 = vunpack.c.h.b16 %v1261
    %v2523 = vunpack.c.l.b16 %v1262
    %v2524 = vunpack.c.h.b16 %v1262
    %v2525 = vunpack.c.l.b16 %v1263
    %v2526 = vunpack.c.h.b16 %v1263
    %v2527 = vunpack.c.l.b16 %v1264
    %v2528 = vunpack.c.h.b16 %v1264
    %v2529 = vunpack.c.l.b16 %v1265
    %v2530 = vunpack.c.h.b16 %v1265
    %v2531 = vunpack.c.l.b16 %v1266
    %v2532 = vunpack.c.h.b16 %v1266
    %v2533 = vunpack.c.l.b16 %v1267
    %v2534 = vunpack.c.h.b16 %v1267
    %v2535 = vunpack.c.l.b16 %v1268
    %v2536 = vunpack.c.h.b16 %v1268
    %v2537 = vunpack.c.l.b16 %v1269
    %v2538 = vunpack.c.h.b16 %v1269
    %v2539 = vunpack.c.l.b16 %v1270
    %v2540 = vunpack.c.h.b16 %v1270
    %v2541 = vunpack.c.l.b16 %v1271
    %v2542 = vunpack.c.h.b16 %v1271
    %v2543 = vunpack.c.l.b16 %v1272
    %v2544 = vunpack.c.h.b16 %v1272
    %v2545 = vunpack.c.l.b16 %v1273
    %v2546 = vunpack.c.h.b16 %v1273
    %v2547 = vunpack.c.l.b16 %v1274
    %v2548 = vunpack.c.h.b16 %v1274
    %v2549 = vunpack.c.l.b16 %v1275
    %v2550 = vunpack.c.h.b16 %v1275
    %v2551 = vunpack.c.l.b16 %v1276
    %v2552 = vunpack.c.h.b16 %v1276
    %v2553 = vunpack.c.l.b16 %v1277
    %v2554 = vunpack.c.h.b16 %v1277
    %v2555 = vunpack.c.l.b16 %v1278
    %v2556 = vunpack.c.h.b16 %v1278
    %v2557 = vunpack.c.l.b16 %v1279
    %v2558 = vunpack.c.h.b16 %v1279
    %v2559 = vunpack.c.l.b16 %v1280
    %v2560 = vunpack.c.h.b16 %v1280
    %v2561 = vunpack.c.l.b16 %v1281
    %v2562 = vunpack.c.h.b16 %v1281
    %v2563 = vunpack.c.l.b16 %v1282
    %v2564 = vunpack.c.h.b16 %v1282
    %v2565 = vunpack.c.l.b16 %v1283
    %v2566 = vunpack.c.h.b16 %v1283
    %v2567 = vunpack.c.l.b16 %v1284
    %v2568 = vunpack.c.h.b16 %v1284
    %v2569 = vunpack.c.l.b16 %v1285
    %v2570 = vunpack.c.h.b16 %v1285
    %v2571 = vunpack.c.l.b16 %v1286
    %v2572 = vunpack.c.h.b16 %v1286
    %v2573 = vunpack.c.l.b16 %v1287
    %v2574 = vunpack.c.h.b16 %v1287
    %v2575 = vunpack.c.l.b16 %v1288
    %v2576 = vunpack.c.h.b16 %v1288
    %v2577 = vunpack.c.l.b16 %v1289
    %v2578 = vunpack.c.h.b16 %v1289
    %v2579 = vunpack.c.l.b16 %v1290
    %v2580 = vunpack.c.h.b16 %v1290
    %v2581 = vunpack.c.l.b16 %v1291
    %v2582 = vunpack.c.h.b16 %v1291
    %v2583 = vunpack.c.l.b16 %v1292
    %v2584 = vunpack.c.h.b16 %v1292
    %v2585 = vunpack.c.l.b16 %v1293
    %v2586 = vunpack.c.h.b16 %v1293
    %v2587 = vunpack.c.l.b16 %v1294
    %v2588 = vunpack.c.h.b16 %v1294
    %v2589 = vunpack.c.l.b16 %v1295
    %v2590 = vunpack.c.h.b16 %v1295
    %v2591 = vunpack.c.l.b16 %v1296
    %v2592 = vunpack.c.h.b16 %v1296
    %v2593 = vunpack.c.l.b16 %v1297
    %v2594 = vunpack.c.h.b16 %v1297
    %v2595 = vunpack.c.l.b16 %v1298
    %v2596 = vunpack.c.h.b16 %v1298
    %v2597 = vunpack.c.l.b16 %v1299
    %v2598 = vunpack.c.h.b16 %v1299
    %v2599 = vunpack.c.l.b16 %v1300
    %v2600 = vunpack.c.h.b16 %v1300
    %v2601 = vunpack.c.l.b16 %v1301
    %v2602 = vunpack.c.h.b16 %v1301
    %v2603 = vunpack.c.l.b16 %v1302
    %v2604 = vunpack.c.h.b16 %v1302
    %v2605 = vunpack.c.l.b16 %v1303
    %v2606 = vunpack.c.h.b16 %v1303
    %v2607 = vunpack.c.l.b16 %v1304
    %v2608 = vunpack.c.h.b16 %v1304
    %v2609 = vunpack.c.l.b16 %v1305
    %v2610 = vunpack.c.h.b16 %v1305
    %v2611 = vunpack.c.l.b16 %v1306
    %v2612 = vunpack.c.h.b16 %v1306
    %v2613 = vunpack.c.l.b16 %v1307
    %v2614 = vunpack.c.h.b16 %v1307
    %v2615 = vunpack.c.l.b16 %v1308
    %v2616 = vunpack.c.h.b16 %v1308
    %v2617 = vunpack.c.l.b16 %v1309
    %v2618 = vunpack.c.h.b16 %v1309
    %v2619 = vunpack.c.l.b16 %v1310
    %v2620 = vunpack.c.h.b16 %v1310
    %v2621 = vunpack.c.l.b16 %v1311
    %v2622 = vunpack.c.h.b16 %v1311
    %v2623 = vunpack.c.l.b16 %v1312
    %v2624 = vunpack.c.h.b16 %v1312
    %v2625 = vunpack.c.l.b16 %v1313
    %v2626 = vunpack.c.h.b16 %v1313
    %v2627 = vunpack.c.l.b16 %v1314
    %v2628 = vunpack.c.h.b16 %v1314
    %v2629 = vunpack.c.l.b16 %v1315
    %v2630 = vunpack.c.h.b16 %v1315
    %v2631 = vunpack.c.l.b16 %v1316
    %v2632 = vunpack.c.h.b16 %v1316
    %v2633 = vunpack.c.l.b16 %v1317
    %v2634 = vunpack.c.h.b16 %v1317
    %v2635 = vunpack.c.l.b16 %v1318
    %v2636 = vunpack.c.h.b16 %v1318
    %v2637 = vunpack.c.l.b16 %v1319
    %v2638 = vunpack.c.h.b16 %v1319
    %v2639 = vunpack.c.l.b16 %v1320
    %v2640 = vunpack.c.h.b16 %v1320
    %v2641 = vunpack.c.l.b16 %v1321
    %v2642 = vunpack.c.h.b16 %v1321
    %v2643 = vunpack.c.l.b16 %v1322
    %v2644 = vunpack.c.h.b16 %v1322
    %v2645 = vunpack.c.l.b16 %v1323
    %v2646 = vunpack.c.h.b16 %v1323
    %v2647 = vunpack.c.l.b16 %v1324
    %v2648 = vunpack.c.h.b16 %v1324
    %v2649 = vunpack.c.l.b16 %v1325
    %v2650 = vunpack.c.h.b16 %v1325
    %v2651 = vunpack.c.l.b16 %v1326
    %v2652 = vunpack.c.h.b16 %v1326
    %v2653 = vunpack.c.l.b16 %v1327
    %v2654 = vunpack.c.h.b16 %v1327
    %v2655 = vunpack.c.l.b16 %v1328
    %v2656 = vunpack.c.h.b16 %v1328
    %v2657 = vunpack.c.l.b16 %v1329
    %v2658 = vunpack.c.h.b16 %v1329
    %v2659 = vunpack.c.l.b16 %v1330
    %v2660 = vunpack.c.h.b16 %v1330
    %v2661 = vunpack.c.l.b16 %v1331
    %v2662 = vunpack.c.h.b16 %v1331
    %v2663 = vunpack.c.l.b16 %v1332
    %v2664 = vunpack.c.h.b16 %v1332
    %v2665 = vunpack.c.l.b16 %v1333
    %v2666 = vunpack.c.h.b16 %v1333
    %v2667 = vunpack.c.l.b16 %v1334
    %v2668 = vunpack.c.h.b16 %v1334
    %v2669 = vunpack.c.l.b16 %v1335
    %v2670 = vunpack.c.h.b16 %v1335
    %v2671 = vunpack.c.l.b16 %v1336
    %v2672 = vunpack.c.h.b16 %v1336
    %v2673 = vunpack.c.l.b16 %v1337
    %v2674 = vunpack.c.h.b16 %v1337
    %v2675 = vunpack.c.l.b16 %v1338
    %v2676 = vunpack.c.h.b16 %v1338
    %v2677 = vunpack.c.l.b16 %v1339
    %v2678 = vunpack.c.h.b16 %v1339
    %v2679 = vunpack.c.l.b16 %v1340
    %v2680 = vunpack.c.h.b16 %v1340
    %v2681 = vunpack.c.l.b16 %v1341
    %v2682 = vunpack.c.h.b16 %v1341
    %v2683 = vunpack.c.l.b16 %v1342
    %v2684 = vunpack.c.h.b16 %v1342
    %v2685 = vunpack.c.l.b16 %v1343
    %v2686 = vunpack.c.h.b16 %v1343
    %v2687 = vunpack.c.l.b16 %v1344
    %v2688 = vunpack.c.h.b16 %v1344
    %v2689 = vunpack.c.l.b16 %v1345
    %v2690 = vunpack.c.h.b16 %v1345
    %v2691 = vunpack.c.l.b16 %v1346
    %v2692 = vunpack.c.h.b16 %v1346
    %v2693 = vunpack.c.l.b16 %v1347
    %v2694 = vunpack.c.h.b16 %v1347
    %v2695 = vunpack.c.l.b16 %v1348
    %v2696 = vunpack.c.h.b16 %v1348
    %v2697 = vunpack.c.l.b16 %v1349
    %v2698 = vunpack.c.h.b16 %v1349
    %v2699 = vunpack.c.l.b16 %v1350
    %v2700 = vunpack.c.h.b16 %v1350
    %v2701 = vunpack.c.l.b16 %v1351
    %v2702 = vunpack.c.h.b16 %v1351
    %v2703 = vunpack.c.l.b16 %v1352
    %v2704 = vunpack.c.h.b16 %v1352
    %v2705 = vunpack.c.l.b16 %v1353
    %v2706 = vunpack.c.h.b16 %v1353
    %v2707 = vunpack.c.l.b16 %v1354
    %v2708 = vunpack.c.h.b16 %v1354
    %v2709 = vunpack.c.l.b16 %v1355
    %v2710 = vunpack.c.h.b16 %v1355
    %v2711 = vunpack.c.l.b16 %v1356
    %v2712 = vunpack.c.h.b16 %v1356
    %v2713 = vunpack.c.l.b16 %v1357
    %v2714 = vunpack.c.h.b16 %v1357
    %v2715 = vunpack.c.l.b16 %v1358
    %v2716 = vunpack.c.h.b16 %v1358
    %v2717 = vunpack.c.l.b16 %v1359
    %v2718 = vunpack.c.h.b16 %v1359
    %v2719 = vunpack.c.l.b16 %v1360
    %v2720 = vunpack.c.h.b16 %v1360
    %v2721 = vunpack.c.l.b16 %v1361
    %v2722 = vunpack.c.h.b16 %v1361
    %v2723 = vunpack.c.l.b16 %v1362
    %v2724 = vunpack.c.h.b16 %v1362
    %v2725 = vunpack.c.l.b16 %v1363
    %v2726 = vunpack.c.h.b16 %v1363
    %v2727 = vunpack.c.l.b16 %v1364
    %v2728 = vunpack.c.h.b16 %v1364
    %v2729 = vunpack.c.l.b16 %v1365
    %v2730 = vunpack.c.h.b16 %v1365
    %v2731 = vunpack.c.l.b16 %v1366
    %v2732 = vunpack.c.h.b16 %v1366
    %v2733 = vunpack.c.l.b16 %v1367
    %v2734 = vunpack.c.h.b16 %v1367
    %v2735 = vunpack.c.l.b16 %v1368
    %v2736 = vunpack.c.h.b16 %v1368
    %v2737 = vunpack.c.l.b16 %v1369
    %v2738 = vunpack.c.h.b16 %v1369
    %v2739 = vunpack.c.l.b16 %v1370
    %v2740 = vunpack.c.h.b16 %v1370
    %v2741 = vunpack.c.l.b16 %v1371
    %v2742 = vunpack.c.h.b16 %v1371
    %v2743 = vunpack.c.l.b16 %v1372
    %v2744 = vunpack.c.h.b16 %v1372
    %v2745 = vunpack.c.l.b16 %v1373
    %v2746 = vunpack.c.h.b16 %v1373
    %v2747 = vunpack.c.l.b16 %v1374
    %v2748 = vunpack.c.h.b16 %v1374
    %v2749 = vunpack.c.l.b16 %v1375
    %v2750 = vunpack.c.h.b16 %v1375
    %v2751 = vunpack.c.l.b16 %v1376
    %v2752 = vunpack.c.h.b16 %v1376
    %v2753 = vunpack.c.l.b16 %v1377
    %v2754 = vunpack.c.h.b16 %v1377
    %v2755 = vunpack.c.l.b16 %v1378
    %v2756 = vunpack.c.h.b16 %v1378
    %v2757 = vunpack.c.l.b16 %v1379
    %v2758 = vunpack.c.h.b16 %v1379
    %v2759 = vunpack.c.l.b16 %v1380
    %v2760 = vunpack.c.h.b16 %v1380
    %v2761 = vunpack.c.l.b16 %v1381
    %v2762 = vunpack.c.h.b16 %v1381
    %v2763 = vunpack.c.l.b16 %v1382
    %v2764 = vunpack.c.h.b16 %v1382
    %v2765 = vunpack.c.l.b16 %v1383
    %v2766 = vunpack.c.h.b16 %v1383
    %v2767 = vunpack.c.l.b16 %v1384
    %v2768 = vunpack.c.h.b16 %v1384
    %v2769 = vunpack.c.l.b16 %v1385
    %v2770 = vunpack.c.h.b16 %v1385
    %v2771 = vunpack.c.l.b16 %v1386
    %v2772 = vunpack.c.h.b16 %v1386
    %v2773 = vunpack.c.l.b16 %v1387
    %v2774 = vunpack.c.h.b16 %v1387
    %v2775 = vunpack.c.l.b16 %v1388
    %v2776 = vunpack.c.h.b16 %v1388
    %v2777 = vunpack.c.l.b16 %v1389
    %v2778 = vunpack.c.h.b16 %v1389
    %v2779 = vunpack.c.l.b16 %v1390
    %v2780 = vunpack.c.h.b16 %v1390
    %v2781 = vunpack.c.l.b16 %v1391
    %v2782 = vunpack.c.h.b16 %v1391
    %v2783 = vunpack.c.l.b16 %v1392
    %v2784 = vunpack.c.h.b16 %v1392
    %v2785 = vunpack.c.l.b16 %v1393
    %v2786 = vunpack.c.h.b16 %v1393
    %v2787 = vunpack.c.l.b16 %v1394
    %v2788 = vunpack.c.h.b16 %v1394
    %v2789 = vunpack.c.l.b16 %v1395
    %v2790 = vunpack.c.h.b16 %v1395
    %v2791 = vunpack.c.l.b16 %v1396
    %v2792 = vunpack.c.h.b16 %v1396
    %v2793 = vunpack.c.l.b16 %v1397
    %v2794 = vunpack.c.h.b16 %v1397
    %v2795 = vunpack.c.l.b16 %v1398
    %v2796 = vunpack.c.h.b16 %v1398
    %v2797 = vunpack.c.l.b16 %v1399
    %v2798 = vunpack.c.h.b16 %v1399
    %v2799 = vunpack.c.l.b16 %v1400
    %v2800 = vunpack.c.h.b16 %v1400
    %v2801 = vunpack.c.l.b16 %v1401
    %v2802 = vunpack.c.h.b16 %v1401
    %v2803 = vunpack.c.l.b16 %v1402
    %v2804 = vunpack.c.h.b16 %v1402
    %v2805 = vunpack.c.l.b16 %v1403
    %v2806 = vunpack.c.h.b16 %v1403
    %v2807 = vunpack.c.l.b16 %v1404
    %v2808 = vunpack.c.h.b16 %v1404
    %v2809 = vunpack.c.l.b16 %v1405
    %v2810 = vunpack.c.h.b16 %v1405
    %v2811 = vunpack.c.l.b16 %v1406
    %v2812 = vunpack.c.h.b16 %v1406
    %v2813 = vunpack.c.l.b16 %v1407
    %v2814 = vunpack.c.h.b16 %v1407
    %v2815 = vunpack.c.l.b16 %v1408
    %v2816 = vunpack.c.h.b16 %v1408
    %v2817 = vunpack.c.l.b16 %v1409
    %v2818 = vunpack.c.h.b16 %v1409
    %v2819 = vunpack.c.l.b16 %v1410
    %v2820 = vunpack.c.h.b16 %v1410
    %v2821 = vunpack.c.l.b16 %v1411
    %v2822 = vunpack.c.h.b16 %v1411
    %v2823 = vunpack.c.l.b16 %v1412
    %v2824 = vunpack.c.h.b16 %v1412
    %v2825 = vunpack.c.l.b16 %v1413
    %v2826 = vunpack.c.h.b16 %v1413
    %v2827 = vunpack.c.l.b16 %v1414
    %v2828 = vunpack.c.h.b16 %v1414
    %v2829 = vunpack.c.l.b16 %v1415
    %v2830 = vunpack.c.h.b16 %v1415
    %v2831 = vunpack.c.l.b16 %v1416
    %v2832 = vunpack.c.h.b16 %v1416
    %v2833 = vunpack.c.l.b16 %v1417
    %v2834 = vunpack.c.h.b16 %v1417
    %v2835 = vunpack.c.l.b16 %v1418
    %v2836 = vunpack.c.h.b16 %v1418
    %v2837 = vunpack.c.l.b16 %v1419
    %v2838 = vunpack.c.h.b16 %v1419
    %v2839 = vunpack.c.l.b16 %v1420
    %v2840 = vunpack.c.h.b16 %v1420
    %v2841 = vunpack.c.l.b16 %v1421
    %v2842 = vunpack.c.h.b16 %v1421
    %v2843 = vunpack.c.l.b16 %v1422
    %v2844 = vunpack.c.h.b16 %v1422
    %v2845 = vunpack.c.l.b16 %v1423
    %v2846 = vunpack.c.h.b16 %v1423
    %v2847 = vunpack.c.l.b16 %v1424
    %v2848 = vunpack.c.h.b16 %v1424
    %v2849 = vunpack.c.l.b16 %v1425
    %v2850 = vunpack.c.h.b16 %v1425
    %v2851 = vunpack.c.l.b16 %v1426
    %v2852 = vunpack.c.h.b16 %v1426
    %v2853 = vunpack.c.l.b16 %v1427
    %v2854 = vunpack.c.h.b16 %v1427
    %v2855 = vunpack.c.l.b16 %v1428
    %v2856 = vunpack.c.h.b16 %v1428
    %v2857 = vunpack.c.l.b16 %v1429
    %v2858 = vunpack.c.h.b16 %v1429
    %v2859 = vunpack.c.l.b16 %v1430
    %v2860 = vunpack.c.h.b16 %v1430
    %v2861 = vunpack.c.l.b16 %v1431
    %v2862 = vunpack.c.h.b16 %v1431
    %v2863 = vunpack.c.l.b16 %v1432
    %v2864 = vunpack.c.h.b16 %v1432
    %v2865 = vunpack.c.l.b16 %v1433
    %v2866 = vunpack.c.h.b16 %v1433
    %v2867 = vunpack.c.l.b16 %v1434
    %v2868 = vunpack.c.h.b16 %v1434
    %v2869 = vunpack.c.l.b16 %v1435
    %v2870 = vunpack.c.h.b16 %v1435
    %v2871 = vunpack.c.l.b16 %v1436
    %v2872 = vunpack.c.h.b16 %v1436
    %v2873 = vunpack.c.l.b16 %v1437
    %v2874 = vunpack.c.h.b16 %v1437
    %v2875 = vunpack.c.l.b16 %v1438
    %v2876 = vunpack.c.h.b16 %v1438
    %v2877 = vunpack.c.l.b16 %v1439
    %v2878 = vunpack.c.h.b16 %v1439
    %v2879 = vunpack.c.l.b16 %v1440
    %v2880 = vunpack.c.h.b16 %v1440
    %v2881 = vunpack.c.l.b16 %v1441
    %v2882 = vunpack.c.h.b16 %v1441
    %v2883 = vunpack.c.l.b16 %v1442
    %v2884 = vunpack.c.h.b16 %v1442
    %v2885 = vunpack.c.l.b16 %v1443
    %v2886 = vunpack.c.h.b16 %v1443
    %v2887 = vunpack.c.l.b16 %v1444
    %v2888 = vunpack.c.h.b16 %v1444
    %v2889 = vunpack.c.l.b16 %v1445
    %v2890 = vunpack.c.h.b16 %v1445
    %v2891 = vunpack.c.l.b16 %v1446
    %v2892 = vunpack.c.h.b16 %v1446
    %v2893 = vunpack.c.l.b16 %v1447
    %v2894 = vunpack.c.h.b16 %v1447
    %v2895 = vunpack.c.l.b16 %v1448
    %v2896 = vunpack.c.h.b16 %v1448
    %v2897 = vunpack.c.l.b16 %v1449
    %v2898 = vunpack.c.h.b16 %v1449
    %v2899 = vunpack.c.l.b16 %v1450
    %v2900 = vunpack.c.h.b16 %v1450
    %v2901 = vunpack.c.l.b16 %v1451
    %v2902 = vunpack.c.h.b16 %v1451
    %v2903 = vunpack.c.l.b16 %v1452
    %v2904 = vunpack.c.h.b16 %v1452
    %v2905 = vunpack.c.l.b16 %v1453
    %v2906 = vunpack.c.h.b16 %v1453
    %v2907 = vunpack.c.l.b16 %v1454
    %v2908 = vunpack.c.h.b16 %v1454
    %v2909 = vunpack.c.l.b16 %v1455
    %v2910 = vunpack.c.h.b16 %v1455
    %v2911 = vunpack.c.l.b16 %v1456
    %v2912 = vunpack.c.h.b16 %v1456
    %v2913 = vunpack.c.l.b16 %v1457
    %v2914 = vunpack.c.h.b16 %v1457
    %v2915 = vunpack.c.l.b16 %v1458
    %v2916 = vunpack.c.h.b16 %v1458
    %v2917 = vunpack.c.l.b16 %v1459
    %v2918 = vunpack.c.h.b16 %v1459
    %v2919 = vunpack.c.l.b16 %v1460
    %v2920 = vunpack.c.h.b16 %v1460
    %v2921 = vunpack.c.l.b16 %v1461
    %v2922 = vunpack.c.h.b16 %v1461
    %v2923 = vunpack.c.l.b16 %v1462
    %v2924 = vunpack.c.h.b16 %v1462
    %v2925 = vunpack.c.l.b16 %v1463
    %v2926 = vunpack.c.h.b16 %v1463
    %v2927 = vunpack.c.l.b16 %v1464
    %v2928 = vunpack.c.h.b16 %v1464
    %v2929 = vunpack.c.l.b16 %v1465
    %v2930 = vunpack.c.h.b16 %v1465
    %v2931 = vunpack.c.l.b16 %v1466
    %v2932 = vunpack.c.h.b16 %v1466
    %v2933 = vunpack.c.l.b16 %v1467
    %v2934 = vunpack.c.h.b16 %v1467
    %v2935 = vunpack.c.l.b16 %v1468
    %v2936 = vunpack.c.h.b16 %v1468
    %v2937 = vunpack.c.l.b16 %v1469
    %v2938 = vunpack.c.h.b16 %v1469
    %v2939 = vunpack.c.l.b16 %v1470
    %v2940 = vunpack.c.h.b16 %v1470
    %v2941 = vunpack.c.l.b16 %v1471
    %v2942 = vunpack.c.h.b16 %v1471
    %v2943 = vunpack.c.l.b16 %v1472
    %v2944 = vunpack.c.h.b16 %v1472
    %v2945 = vunpack.c.l.b16 %v1473
    %v2946 = vunpack.c.h.b16 %v1473
    %v2947 = vunpack.c.l.b16 %v1474
    %v2948 = vunpack.c.h.b16 %v1474
    %v2949 = vunpack.c.l.b16 %v1475
    %v2950 = vunpack.c.h.b16 %v1475
    %v2951 = vunpack.c.l.b16 %v1476
    %v2952 = vunpack.c.h.b16 %v1476
    %v2953 = vunpack.c.l.b16 %v1477
    %v2954 = vunpack.c.h.b16 %v1477
    %v2955 = vunpack.c.l.b16 %v1478
    %v2956 = vunpack.c.h.b16 %v1478
    %v2957 = vunpack.c.l.b16 %v1479
    %v2958 = vunpack.c.h.b16 %v1479
    %v2959 = vunpack.c.l.b16 %v1480
    %v2960 = vunpack.c.h.b16 %v1480
    %v2961 = vunpack.c.l.b16 %v1481
    %v2962 = vunpack.c.h.b16 %v1481
    %v2963 = vunpack.c.l.b16 %v1482
    %v2964 = vunpack.c.h.b16 %v1482
    %v2965 = vunpack.c.l.b16 %v1483
    %v2966 = vunpack.c.h.b16 %v1483
    %v2967 = vunpack.c.l.b16 %v1484
    %v2968 = vunpack.c.h.b16 %v1484
    %v2969 = vunpack.c.l.b16 %v1485
    %v2970 = vunpack.c.h.b16 %v1485
    %v2971 = vunpack.c.l.b16 %v1486
    %v2972 = vunpack.c.h.b16 %v1486
    %v2973 = vunpack.c.l.b16 %v1487
    %v2974 = vunpack.c.h.b16 %v1487
    %v2975 = vunpack.c.l.b16 %v1488
    %v2976 = vunpack.c.h.b16 %v1488
    %v2977 = vunpack.c.l.b16 %v1489
    %v2978 = vunpack.c.h.b16 %v1489
    %v2979 = vunpack.c.l.b16 %v1490
    %v2980 = vunpack.c.h.b16 %v1490
    %v2981 = vunpack.c.l.b16 %v1491
    %v2982 = vunpack.c.h.b16 %v1491
    %v2983 = vunpack.c.l.b16 %v1492
    %v2984 = vunpack.c.h.b16 %v1492
    %v2985 = vunpack.c.l.b16 %v1493
    %v2986 = vunpack.c.h.b16 %v1493
    %v2987 = vunpack.c.l.b16 %v1494
    %v2988 = vunpack.c.h.b16 %v1494
    %v2989 = vunpack.c.l.b16 %v1495
    %v2990 = vunpack.c.h.b16 %v1495
    %v2991 = vunpack.c.l.b16 %v1496
    %v2992 = vunpack.c.h.b16 %v1496
    %v2993 = vunpack.c.l.b16 %v1497
    %v2994 = vunpack.c.h.b16 %v1497
    %v2995 = vunpack.c.l.b16 %v1498
    %v2996 = vunpack.c.h.b16 %v1498
    %v2997 = vunpack.c.l.b16 %v1499
    %v2998 = vunpack.c.h.b16 %v1499
    %v2999 = vunpack.c.l.b16 %v1500
    %v3000 = vunpack.c.h.b16 %v1500
    %v3001 = vunpack.c.l.b16 %v1501
    %v3002 = vunpack.c.h.b16 %v1501
    %v3003 = vunpack.c.l.b16 %v1502
    %v3004 = vunpack.c.h.b16 %v1502
    %v3005 = vunpack.c.l.b16 %v1503
    %v3006 = vunpack.c.h.b16 %v1503
    %v3007 = vunpack.c.l.b16 %v1504
    %v3008 = vunpack.c.h.b16 %v1504
    %v3009 = vunpack.c.l.b16 %v1505
    %v3010 = vunpack.c.h.b16 %v1505
    %v3011 = vunpack.c.l.b16 %v1506
    %v3012 = vunpack.c.h.b16 %v1506
    %v3013 = vunpack.c.l.b16 %v1507
    %v3014 = vunpack.c.h.b16 %v1507
    %v3015 = vunpack.c.l.b16 %v1508
    %v3016 = vunpack.c.h.b16 %v1508
    %v3017 = vunpack.c.l.b16 %v1509
    %v3018 = vunpack.c.h.b16 %v1509
    %v3019 = vunpack.c.l.b16 %v1510
    %v3020 = vunpack.c.h.b16 %v1510
    %v3021 = vunpack.c.l.b16 %v1511
    %v3022 = vunpack.c.h.b16 %v1511
    %v3023 = vunpack.c.l.b16 %v1512
    %v3024 = vunpack.c.h.b16 %v1512
    %v3025 = vunpack.c.l.b16 %v1513
    %v3026 = vunpack.c.h.b16 %v1513
    %v3027 = vunpack.c.l.b16 %v1514
    %v3028 = vunpack.c.h.b16 %v1514
    %v3029 = vunpack.c.l.b16 %v1515
    %v3030 = vunpack.c.h.b16 %v1515
    %v3031 = vunpack.c.l.b16 %v1516
    %v3032 = vunpack.c.h.b16 %v1516
    %v3033 = vunpack.c.l.b16 %v1517
    %v3034 = vunpack.c.h.b16 %v1517
    %v3035 = vunpack.c.l.b16 %v1518
    %v3036 = vunpack.c.h.b16 %v1518
    %v3037 = vunpack.c.l.b16 %v1519
    %v3038 = vunpack.c.h.b16 %v1519
    %v3039 = vunpack.c.l.b16 %v1520
    %v3040 = vunpack.c.h.b16 %v1520
    %v3041 = vunpack.c.l.b16 %v1521
    %v3042 = vunpack.c.h.b16 %v1521
    %v3043 = vunpack.c.l.b16 %v1522
    %v3044 = vunpack.c.h.b16 %v1522
    %v3045 = vunpack.c.l.b16 %v1523
    %v3046 = vunpack.c.h.b16 %v1523
    %v3047 = vunpack.c.l.b16 %v1524
    %v3048 = vunpack.c.h.b16 %v1524
    %v3049 = vunpack.c.l.b16 %v1525
    %v3050 = vunpack.c.h.b16 %v1525
    %v3051 = vunpack.c.l.b16 %v1526
    %v3052 = vunpack.c.h.b16 %v1526
    %v3053 = vunpack.c.l.b16 %v1527
    %v3054 = vunpack.c.h.b16 %v1527
    %v3055 = vunpack.c.l.b16 %v1528
    %v3056 = vunpack.c.h.b16 %v1528
    %v3057 = vunpack.c.l.b16 %v1529
    %v3058 = vunpack.c.h.b16 %v1529
    %v3059 = vunpack.c.l.b16 %v1530
    %v3060 = vunpack.c.h.b16 %v1530
    %v3061 = vunpack.c.l.b16 %v1531
    %v3062 = vunpack.c.h.b16 %v1531
    %v3063 = vunpack.c.l.b16 %v1532
    %v3064 = vunpack.c.h.b16 %v1532
    %v3065 = vunpack.c.l.b16 %v1533
    %v3066 = vunpack.c.h.b16 %v1533
    %v3067 = vunpack.c.l.b16 %v1534
    %v3068 = vunpack.c.h.b16 %v1534
    %v3069 = vunpack.c.l.b16 %v1535
    %v3070 = vunpack.c.h.b16 %v1535
    %v3071 = vunpack.c.l.b16 %v1536
    %v3072 = vunpack.c.h.b16 %v1536
    %v3073 = vunpack.c.l.b16 %v1537
    %v3074 = vunpack.c.h.b16 %v1537
    %v3075 = vunpack.c.l.b16 %v1538
    %v3076 = vunpack.c.h.b16 %v1538
    %v3077 = vunpack.c.l.b16 %v1539
    %v3078 = vunpack.c.h.b16 %v1539
    %v3079 = vunpack.c.l.b16 %v1540
    %v3080 = vunpack.c.h.b16 %v1540
    %v3081 = vunpack.c.l.b16 %v1541
    %v3082 = vunpack.c.h.b16 %v1541
    %v3083 = vunpack.c.l.b16 %v1542
    %v3084 = vunpack.c.h.b16 %v1542
    %v3085 = vunpack.c.l.b16 %v1543
    %v3086 = vunpack.c.h.b16 %v1543
    %v3087 = vunpack.c.l.b16 %v1544
    %v3088 = vunpack.c.h.b16 %v1544
    %v3089 = vunpack.c.l.b16 %v1545
    %v3090 = vunpack.c.h.b16 %v1545
    %v3091 = vunpack.c.l.b16 %v1546
    %v3092 = vunpack.c.h.b16 %v1546
    %v3093 = vunpack.c.l.b16 %v1547
    %v3094 = vunpack.c.h.b16 %v1547
    %v3095 = vunpack.c.l.b16 %v1548
    %v3096 = vunpack.c.h.b16 %v1548
    %v3097 = vunpack.c.l.b16 %v1549
    %v3098 = vunpack.c.h.b16 %v1549
    %v3099 = vunpack.c.l.b16 %v1550
    %v3100 = vunpack.c.h.b16 %v1550
    %v3101 = vunpack.c.l.b16 %v1551
    %v3102 = vunpack.c.h.b16 %v1551
    %v3103 = vunpack.c.l.b16 %v1552
    %v3104 = vunpack.c.h.b16 %v1552
    %v3105 = vunpack.c.l.b16 %v1553
    %v3106 = vunpack.c.h.b16 %v1553
    %v3107 = vunpack.c.l.b16 %v1554
    %v3108 = vunpack.c.h.b16 %v1554
    %v3109 = vunpack.c.l.b16 %v1555
    %v3110 = vunpack.c.h.b16 %v1555
    %v3111 = vunpack.c.l.b16 %v1556
    %v3112 = vunpack.c.h.b16 %v1556
    %v3113 = vunpack.c.l.b16 %v1557
    %v3114 = vunpack.c.h.b16 %v1557
    %v3115 = vunpack.c.l.b16 %v1558
    %v3116 = vunpack.c.h.b16 %v1558
    %v3117 = vunpack.c.l.b16 %v1559
    %v3118 = vunpack.c.h.b16 %v1559
    %v3119 = vunpack.c.l.b16 %v1560
    %v3120 = vunpack.c.h.b16 %v1560
    %v3121 = vunpack.c.l.b16 %v1561
    %v3122 = vunpack.c.h.b16 %v1561
    %v3123 = vunpack.c.l.b16 %v1562
    %v3124 = vunpack.c.h.b16 %v1562
    %v3125 = vunpack.c.l.b16 %v1563
    %v3126 = vunpack.c.h.b16 %v1563
    %v3127 = vunpack.c.l.b16 %v1564
    %v3128 = vunpack.c.h.b16 %v1564
    %v3129 = vunpack.c.l.b16 %v1565
    %v3130 = vunpack.c.h.b16 %v1565
    %v3131 = vunpack.c.l.b16 %v1566
    %v3132 = vunpack.c.h.b16 %v1566
    %v3133 = vunpack.c.l.b16 %v1567
    %v3134 = vunpack.c.h.b16 %v1567
    %v3135 = vunpack.c.l.b16 %v1568
    %v3136 = vunpack.c.h.b16 %v1568
    %v3137 = vunpack.c.l.b16 %v1569
    %v3138 = vunpack.c.h.b16 %v1569
    %v3139 = vunpack.c.l.b16 %v1570
    %v3140 = vunpack.c.h.b16 %v1570
    %v3141 = vunpack.c.l.b16 %v1571
    %v3142 = vunpack.c.h.b16 %v1571
    %v3143 = vunpack.c.l.b16 %v1572
    %v3144 = vunpack.c.h.b16 %v1572
    %v3145 = vunpack.c.l.b16 %v1573
    %v3146 = vunpack.c.h.b16 %v1573
    %v3147 = vunpack.c.l.b16 %v1574
    %v3148 = vunpack.c.h.b16 %v1574
    %v3149 = vunpack.c.l.b16 %v1575
    %v3150 = vunpack.c.h.b16 %v1575
    %v3151 = vunpack.c.l.b16 %v1576
    %v3152 = vunpack.c.h.b16 %v1576
    %v3153 = vunpack.c.l.b16 %v1577
    %v3154 = vunpack.c.h.b16 %v1577
    %v3155 = vunpack.c.l.b16 %v1578
    %v3156 = vunpack.c.h.b16 %v1578
    %v3157 = vunpack.c.l.b16 %v1579
    %v3158 = vunpack.c.h.b16 %v1579
    %v3159 = vunpack.c.l.b16 %v1580
    %v3160 = vunpack.c.h.b16 %v1580
    %v3161 = vunpack.c.l.b16 %v1581
    %v3162 = vunpack.c.h.b16 %v1581
    %v3163 = vunpack.c.l.b16 %v1582
    %v3164 = vunpack.c.h.b16 %v1582
    %v3165 = vunpack.c.l.b16 %v1583
    %v3166 = vunpack.c.h.b16 %v1583
    %v3167 = vunpack.c.l.b16 %v1584
    %v3168 = vunpack.c.h.b16 %v1584
    %v3169 = vunpack.c.l.b16 %v1585
    %v3170 = vunpack.c.h.b16 %v1585
    %v3171 = vunpack.c.l.b16 %v1586
    %v3172 = vunpack.c.h.b16 %v1586
    %v3173 = vunpack.c.l.b16 %v1587
    %v3174 = vunpack.c.h.b16 %v1587
    %v3175 = vunpack.c.l.b16 %v1588
    %v3176 = vunpack.c.h.b16 %v1588
    %v3177 = vunpack.c.l.b16 %v1589
    %v3178 = vunpack.c.h.b16 %v1589
    %v3179 = vunpack.c.l.b16 %v1590
    %v3180 = vunpack.c.h.b16 %v1590
    %v3181 = vunpack.c.l.b16 %v1591
    %v3182 = vunpack.c.h.b16 %v1591
    %v3183 = vunpack.c.l.b16 %v1592
    %v3184 = vunpack.c.h.b16 %v1592
    %v3185 = vunpack.c.l.b16 %v1593
    %v3186 = vunpack.c.h.b16 %v1593
    %v3187 = vunpack.c.l.b16 %v1594
    %v3188 = vunpack.c.h.b16 %v1594
    %v3189 = vunpack.c.l.b16 %v1595
    %v3190 = vunpack.c.h.b16 %v1595
    %v3191 = vunpack.c.l.b16 %v1596
    %v3192 = vunpack.c.h.b16 %v1596
    %v3193 = vunpack.c.l.b16 %v1597
    %v3194 = vunpack.c.h.b16 %v1597
    %v3195 = vunpack.c.l.b16 %v1598
    %v3196 = vunpack.c.h.b16 %v1598
    %v3197 = vunpack.c.l.b16 %v1599
    %v3198 = vunpack.c.h.b16 %v1599
    %v3199 = vunpack.c.l.b16 %v1600
    %v3200 = vunpack.c.h.b16 %v1600
    %v3201 = vunpack.c.l.b16 %v1601
    %v3202 = vunpack.c.h.b16 %v1601
    %v3203 = vunpack.c.l.b16 %v1602
    %v3204 = vunpack.c.h.b16 %v1602
    %v3205 = vunpack.c.l.b16 %v1603
    %v3206 = vunpack.c.h.b16 %v1603
    %v3207 = vunpack.c.l.b16 %v1604
    %v3208 = vunpack.c.h.b16 %v1604
    %v3209 = vunpack.c.l.b16 %v1605
    %v3210 = vunpack.c.h.b16 %v1605
    %v3211 = vunpack.c.l.b16 %v1606
    %v3212 = vunpack.c.h.b16 %v1606
    %v3213 = vunpack.c.l.b16 %v1607
    %v3214 = vunpack.c.h.b16 %v1607
    %v3215 = vunpack.c.l.b16 %v1608
    %v3216 = vunpack.c.h.b16 %v1608
    %v3217 = vunpack.c.l.b16 %v1609
    %v3218 = vunpack.c.h.b16 %v1609
    %v3219 = vunpack.c.l.b16 %v1610
    %v3220 = vunpack.c.h.b16 %v1610
    %v3221 = vunpack.c.l.b16 %v1611
    %v3222 = vunpack.c.h.b16 %v1611
    %v3223 = vunpack.c.l.b16 %v1612
    %v3224 = vunpack.c.h.b16 %v1612
    %v3225 = vunpack.c.l.b16 %v1613
    %v3226 = vunpack.c.h.b16 %v1613
    %v3227 = vunpack.c.l.b16 %v1614
    %v3228 = vunpack.c.h.b16 %v1614
    %v3229 = vunpack.c.l.b16 %v1615
    %v3230 = vunpack.c.h.b16 %v1615
    %v3231 = vunpack.c.l.b16 %v1616
    %v3232 = vunpack.c.h.b16 %v1616
    %v3233 = vunpack.c.l.b16 %v1617
    %v3234 = vunpack.c.h.b16 %v1617
    %v3235 = vunpack.c.l.b16 %v1618
    %v3236 = vunpack.c.h.b16 %v1618
    %v3237 = vunpack.c.l.b16 %v1619
    %v3238 = vunpack.c.h.b16 %v1619
    %v3239 = vunpack.c.l.b16 %v1620
    %v3240 = vunpack.c.h.b16 %v1620
    %v3241 = vunpack.c.l.b16 %v1621
    %v3242 = vunpack.c.h.b16 %v1621
    %v3243 = vunpack.c.l.b16 %v1622
    %v3244 = vunpack.c.h.b16 %v1622
    %v3245 = vunpack.c.l.b16 %v1623
    %v3246 = vunpack.c.h.b16 %v1623
    %v3247 = vunpack.c.l.b16 %v1624
    %v3248 = vunpack.c.h.b16 %v1624
    %v3249 = vunpack.c.l.b16 %v1625
    %v3250 = vunpack.c.h.b16 %v1625
    %v3251 = vunpack.c.l.b16 %v1626
    %v3252 = vunpack.c.h.b16 %v1626
    %v3253 = vunpack.c.l.b16 %v1627
    %v3254 = vunpack.c.h.b16 %v1627
    %v3255 = vunpack.c.l.b16 %v1628
    %v3256 = vunpack.c.h.b16 %v1628
    %v3257 = vunpack.c.l.b16 %v1629
    %v3258 = vunpack.c.h.b16 %v1629
    %v3259 = vunpack.c.l.b16 %v1630
    %v3260 = vunpack.c.h.b16 %v1630
    %v3261 = vunpack.c.l.b16 %v1631
    %v3262 = vunpack.c.h.b16 %v1631
    %v3263 = vunpack.c.l.b16 %v1632
    %v3264 = vunpack.c.h.b16 %v1632
    %v3265 = vunpack.c.l.b16 %v1633
    %v3266 = vunpack.c.h.b16 %v1633
    %v3267 = vunpack.c.l.b16 %v1634
    %v3268 = vunpack.c.h.b16 %v1634
    %v3269 = vunpack.c.l.b16 %v1635
    %v3270 = vunpack.c.h.b16 %v1635
    %v3271 = vunpack.c.l.b16 %v1636
    %v3272 = vunpack.c.h.b16 %v1636
    %v3273 = vunpack.c.l.b16 %v1637
    %v3274 = vunpack.c.h.b16 %v1637
    %v3275 = vunpack.c.l.b16 %v1638
    %v3276 = vunpack.c.h.b16 %v1638
    %v3277 = vunpack.c.l.b16 %v1639
    %v3278 = vunpack.c.h.b16 %v1639
    %v3279 = vunpack.c.l.b16 %v1640
    %v3280 = vunpack.c.h.b16 %v1640
    %v3281 = vunpack.c.l.b16 %v1641
    %v3282 = vunpack.c.h.b16 %v1641
    %v3283 = vunpack.c.l.b16 %v1642
    %v3284 = vunpack.c.h.b16 %v1642
    %v3285 = vunpack.c.l.b16 %v1643
    %v3286 = vunpack.c.h.b16 %v1643
    %v3287 = vunpack.c.l.b16 %v1644
    %v3288 = vunpack.c.h.b16 %v1644
    %v3289 = vunpack.c.l.b16 %v1645
    %v3290 = vunpack.c.h.b16 %v1645
    %v3291 = vunpack.c.l.b16 %v1646
    %v3292 = vunpack.c.h.b16 %v1646
    %v3293 = vunpack.c.l.b16 %v1647
    %v3294 = vunpack.c.h.b16 %v1647
    %v3295 = vunpack.c.l.b16 %v1648
    %v3296 = vunpack.c.h.b16 %v1648
    %v3297 = vunpack.c.l.b16 %v1649
    %v3298 = vunpack.c.h.b16 %v1649
    %v3299 = vunpack.c.l.b16 %v1650
    %v3300 = vunpack.c.h.b16 %v1650
    %v3301 = vunpack.c.l.b16 %v1651
    %v3302 = vunpack.c.h.b16 %v1651
    %v3303 = vunpack.c.l.b16 %v1652
    %v3304 = vunpack.c.h.b16 %v1652
    %v3305 = vunpack.c.l.b16 %v1653
    %v3306 = vunpack.c.h.b16 %v1653
    %v3307 = vunpack.c.l.b16 %v1654
    %v3308 = vunpack.c.h.b16 %v1654
    %v3309 = vunpack.c.l.b16 %v1655
    %v3310 = vunpack.c.h.b16 %v1655
    %v3311 = vunpack.c.l.b16 %v1656
    %v3312 = vunpack.c.h.b16 %v1656
    %v3313 = vunpack.c.l.b16 %v1657
    %v3314 = vunpack.c.h.b16 %v1657
    %v3315 = vunpack.c.l.b16 %v1658
    %v3316 = vunpack.c.h.b16 %v1658
    %v3317 = vunpack.c.l.b16 %v1659
    %v3318 = vunpack.c.h.b16 %v1659
    %v3319 = vunpack.c.l.b16 %v1660
    %v3320 = vunpack.c.h.b16 %v1660
    %v3321 = vunpack.c.l.b16 %v1661
    %v3322 = vunpack.c.h.b16 %v1661
    %v3323 = vunpack.c.l.b16 %v1662
    %v3324 = vunpack.c.h.b16 %v1662
    %v3325 = vunpack.c.l.b16 %v1663
    %v3326 = vunpack.c.h.b16 %v1663
    %v3327 = vunpack.c.l.b16 %v1664
    %v3328 = vunpack.c.h.b16 %v1664
    %v3329 = vunpack.c.l.b16 %v1665
    %v3330 = vunpack.c.h.b16 %v1665
    %v3331 = vunpack.c.l.b16 %v1666
    %v3332 = vunpack.c.h.b16 %v1666
    %v3333 = vunpack.c.l.b16 %v1667
    %v3334 = vunpack.c.h.b16 %v1667
    %v3335 = vunpack.c.l.b16 %v1668
    %v3336 = vunpack.c.h.b16 %v1668
    %v3337 = vunpack.c.l.b16 %v1669
    %v3338 = vunpack.c.h.b16 %v1669
    %v3339 = vunpack.c.l.b16 %v1670
    %v3340 = vunpack.c.h.b16 %v1670
    %v3341 = vunpack.c.l.b16 %v1671
    %v3342 = vunpack.c.h.b16 %v1671
    %v3343 = vunpack.c.l.b16 %v1672
    %v3344 = vunpack.c.h.b16 %v1672
    %v3345 = vunpack.c.l.b16 %v1673
    %v3346 = vunpack.c.h.b16 %v1673
    %v3347 = vunpack.c.l.b16 %v1674
    %v3348 = vunpack.c.h.b16 %v1674
    %v3349 = vunpack.c.l.b16 %v1675
    %v3350 = vunpack.c.h.b16 %v1675
    %v3351 = vunpack.c.l.b16 %v1676
    %v3352 = vunpack.c.h.b16 %v1676
    %v3353 = vunpack.c.l.b16 %v1677
    %v3354 = vunpack.c.h.b16 %v1677
    %v3355 = vunpack.c.l.b16 %v1678
    %v3356 = vunpack.c.h.b16 %v1678
    %v3357 = vunpack.c.l.b16 %v1679
    %v3358 = vunpack.c.h.b16 %v1679
    %v3359 = vunpack.c.l.b16 %v1680
    %v3360 = vunpack.c.h.b16 %v1680
    %v3361 = vunpack.c.l.b16 %v1681
    %v3362 = vunpack.c.h.b16 %v1681
    %v3363 = vunpack.c.l.b16 %v1682
    %v3364 = vunpack.c.h.b16 %v1682
    %v3365 = vunpack.c.l.b16 %v1683
    %v3366 = vunpack.c.h.b16 %v1683
    %v3367 = vunpack.c.l.b16 %v1684
    %v3368 = vunpack.c.h.b16 %v1684
    %v3369 = vunpack.c.l.b16 %v1685
    %v3370 = vunpack.c.h.b16 %v1685
    %v3371 = vunpack.c.l.b16 %v1686
    %v3372 = vunpack.c.h.b16 %v1686
    %v3373 = vunpack.c.l.b16 %v1687
    %v3374 = vunpack.c.h.b16 %v1687
    %v3375 = vunpack.c.l.b16 %v1688
    %v3376 = vunpack.c.h.b16 %v1688
    %v3377 = vunpack.c.l.b16 %v1689
    %v3378 = vunpack.c.h.b16 %v1689
    %v3379 = vunpack.c.l.b16 %v1690
    %v3380 = vunpack.c.h.b16 %v1690
    %v3381 = vunpack.c.l.b16 %v1691
    %v3382 = vunpack.c.h.b16 %v1691
    %v3383 = vunpack.c.l.b16 %v1692
    %v3384 = vunpack.c.h.b16 %v1692
    %v3385 = vunpack.c.l.b16 %v1693
    %v3386 = vunpack.c.h.b16 %v1693
    %v3387 = vunpack.c.l.b16 %v1694
    %v3388 = vunpack.c.h.b16 %v1694
    %v3389 = vunpack.c.l.b16 %v1695
    %v3390 = vunpack.c.h.b16 %v1695
    %v3391 = vunpack.c.l.b16 %v1696
    %v3392 = vunpack.c.h.b16 %v1696
    %v3393 = vunpack.c.l.b16 %v1697
    %v3394 = vunpack.c.h.b16 %v1697
    %v3395 = vunpack.c.l.b16 %v1698
    %v3396 = vunpack.c.h.b16 %v1698
    %v3397 = vunpack.c.l.b16 %v1699
    %v3398 = vunpack.c.h.b16 %v1699
    %v3399 = vunpack.c.l.b16 %v1700
    %v3400 = vunpack.c.h.b16 %v1700
    %v3401 = vunpack.c.l.b16 %v1701
    %v3402 = vunpack.c.h.b16 %v1701
    %v3403 = vunpack.c.l.b16 %v1702
    %v3404 = vunpack.c.h.b16 %v1702
    %v3405 = vunpack.c.l.b16 %v1703
    %v3406 = vunpack.c.h.b16 %v1703
    %v3407 = vunpack.c.l.b16 %v1704
    %v3408 = vunpack.c.h.b16 %v1704
    %v3409 = vunpack.c.l.b16 %v1705
    %v3410 = vunpack.c.h.b16 %v1705
    %v3411 = vunpack.c.l.b16 %v1706
    %v3412 = vunpack.c.h.b16 %v1706
    %v3413 = vunpack.c.l.b16 %v1707
    %v3414 = vunpack.c.h.b16 %v1707
    %v3415 = vunpack.c.l.b16 %v1708
    %v3416 = vunpack.c.h.b16 %v1708
    %v3417 = vunpack.c.l.b16 %v1709
    %v3418 = vunpack.c.h.b16 %v1709
    %v3419 = vunpack.c.l.b16 %v1710
    %v3420 = vunpack.c.h.b16 %v1710
    %v3421 = vunpack.c.l.b16 %v1711
    %v3422 = vunpack.c.h.b16 %v1711
    %v3423 = vunpack.c.l.b16 %v1712
    %v3424 = vunpack.c.h.b16 %v1712
    %v3425 = vunpack.c.l.b16 %v1713
    %v3426 = vunpack.c.h.b16 %v1713
    %v3427 = vunpack.c.l.b16 %v1714
    %v3428 = vunpack.c.h.b16 %v1714
    %v3429 = vunpack.c.l.b16 %v1715
    %v3430 = vunpack.c.h.b16 %v1715
    %v3431 = vunpack.c.l.b16 %v1716
    %v3432 = vunpack.c.h.b16 %v1716
    %v3433 = vunpack.c.l.b16 %v1717
    %v3434 = vunpack.c.h.b16 %v1717
    %v3435 = vunpack.c.l.b16 %v1718
    %v3436 = vunpack.c.h.b16 %v1718
    %v3437 = vunpack.c.l.b16 %v1719
    %v3438 = vunpack.c.h.b16 %v1719
    %v3439 = vunpack.c.l.b16 %v1720
    %v3440 = vunpack.c.h.b16 %v1720
    %v3441 = vunpack.c.l.b16 %v1721
    %v3442 = vunpack.c.h.b16 %v1721
    %v3443 = vunpack.c.l.b16 %v1722
    %v3444 = vunpack.c.h.b16 %v1722
    %v3445 = vunpack.c.l.b16 %v1723
    %v3446 = vunpack.c.h.b16 %v1723
    %v3447 = vunpack.c.l.b16 %v1724
    %v3448 = vunpack.c.h.b16 %v1724
    %v3449 = vunpack.c.l.b16 %v1725
    %v3450 = vunpack.c.h.b16 %v1725
    %v3451 = vunpack.c.l.b16 %v1726
    %v3452 = vunpack.c.h.b16 %v1726
    %v3453 = vunpack.c.l.b16 %v1727
    %v3454 = vunpack.c.h.b16 %v1727
    %v3455 = vunpack.c.l.b16 %v1728
    %v3456 = vunpack.c.h.b16 %v1728
    %v3457 = vunpack.c.l.b16 %v1729
    %v3458 = vunpack.c.h.b16 %v1729
    %v3459 = vunpack.c.l.b16 %v1730
    %v3460 = vunpack.c.h.b16 %v1730
    %v3461 = vunpack.c.l.b16 %v1731
    %v3462 = vunpack.c.h.b16 %v1731
    %v3463 = vunpack.c.l.b16 %v1732
    %v3464 = vunpack.c.h.b16 %v1732
    %v3465 = vunpack.c.l.b16 %v1733
    %v3466 = vunpack.c.h.b16 %v1733
    %v3467 = vunpack.c.l.b16 %v1734
    %v3468 = vunpack.c.h.b16 %v1734
    %v3469 = vunpack.c.l.b16 %v1735
    %v3470 = vunpack.c.h.b16 %v1735
    %v3471 = vunpack.c.l.b16 %v1736
    %v3472 = vunpack.c.h.b16 %v1736
    %v3473 = vunpack.c.l.b16 %v1737
    %v3474 = vunpack.c.h.b16 %v1737
    %v3475 = vunpack.c.l.b16 %v1738
    %v3476 = vunpack.c.h.b16 %v1738
    %v3477 = vunpack.c.l.b16 %v1739
    %v3478 = vunpack.c.h.b16 %v1739
    %v3479 = vunpack.c.l.b16 %v1740
    %v3480 = vunpack.c.h.b16 %v1740
    %v3481 = vunpack.c.l.b16 %v1741
    %v3482 = vunpack.c.h.b16 %v1741
    %v3483 = vunpack.c.l.b16 %v1742
    %v3484 = vunpack.c.h.b16 %v1742
    %v3485 = vunpack.c.l.b16 %v1743
    %v3486 = vunpack.c.h.b16 %v1743
    %v3487 = vunpack.c.l.b16 %v1744
    %v3488 = vunpack.c.h.b16 %v1744
    %v3489 = vunpack.c.l.b16 %v1745
    %v3490 = vunpack.c.h.b16 %v1745
    %v3491 = vunpack.c.l.b16 %v1746
    %v3492 = vunpack.c.h.b16 %v1746
    %v3493 = vunpack.c.l.b16 %v1747
    %v3494 = vunpack.c.h.b16 %v1747
    %v3495 = vunpack.c.l.b16 %v1748
    %v3496 = vunpack.c.h.b16 %v1748
    %v3497 = vunpack.c.l.b16 %v1749
    %v3498 = vunpack.c.h.b16 %v1749
    %v3499 = vunpack.c.l.b16 %v1750
    %v3500 = vunpack.c.h.b16 %v1750
    %v3501 = vunpack.c.l.b16 %v1751
    %v3502 = vunpack.c.h.b16 %v1751
    %v3503 = vunpack.c.l.b16 %v1752
    %v3504 = vunpack.c.h.b16 %v1752
    %v3505 = vunpack.c.l.b16 %v1753
    %v3506 = vunpack.c.h.b16 %v1753
    %v3507 = vunpack.c.l.b16 %v1754
    %v3508 = vunpack.c.h.b16 %v1754
    %v3509 = vunpack.c.l.b16 %v1755
    %v3510 = vunpack.c.h.b16 %v1755
    %v3511 = vunpack.c.l.b16 %v1756
    %v3512 = vunpack.c.h.b16 %v1756
    %v3513 = vunpack.c.l.b16 %v1757
    %v3514 = vunpack.c.h.b16 %v1757
    %v3515 = vunpack.c.l.b16 %v1758
    %v3516 = vunpack.c.h.b16 %v1758
    %v3517 = vunpack.c.l.b16 %v1759
    %v3518 = vunpack.c.h.b16 %v1759
    %v3519 = vunpack.c.l.b16 %v1760
    %v3520 = vunpack.c.h.b16 %v1760
    %v3521 = vunpack.c.l.b16 %v1761
    %v3522 = vunpack.c.h.b16 %v1761
    %v3523 = vunpack.c.l.b16 %v1762
    %v3524 = vunpack.c.h.b16 %v1762
    %v3525 = vunpack.c.l.b16 %v1763
    %v3526 = vunpack.c.h.b16 %v1763
    %v3527 = vunpack.c.l.b16 %v1764
    %v3528 = vunpack.c.h.b16 %v1764
    %v3529 = vunpack.c.l.b16 %v1765
    %v3530 = vunpack.c.h.b16 %v1765
    %v3531 = vunpack.c.l.b16 %v1766
    %v3532 = vunpack.c.h.b16 %v1766
    %v3533 = vunpack.c.l.b16 %v1767
    %v3534 = vunpack.c.h.b16 %v1767
    %v3535 = vunpack.c.l.b16 %v1768
    %v3536 = vunpack.c.h.b16 %v1768
    %v3537 = vunpack.c.l.b16 %v1769
    %v3538 = vunpack.c.h.b16 %v1769
    %v3539 = vunpack.c.l.b16 %v1770
    %v3540 = vunpack.c.h.b16 %v1770
    %v3541 = vpack.c.b16 %v2397, %v2389
    %v3542 = vpack.c.b16 %v2398, %v2390
    %v3543 = vpack.c.b16 %v2399, %v2391
    %v3544 = vpack.c.b16 %v2400, %v2392
    %v3545 = vpack.c.b16 %v2401, %v2393
    %v3546 = vpack.c.b16 %v2402, %v2394
    %v3547 = vpack.c.b16 %v2403, %v2395
    %v3548 = vpack.c.b16 %v2404, %v2396
    %v3549 = vpack.c.b16 %v2413, %v2405
    %v3550 = vpack.c.b16 %v2414, %v2406
    %v3551 = vpack.c.b16 %v2415, %v2407
    %v3552 = vpack.c.b16 %v2416, %v2408
    %v3553 = vpack.c.b16 %v2417, %v2409
    %v3554 = vpack.c.b16 %v2418, %v2410
    %v3555 = vpack.c.b16 %v2419, %v2411
    %v3556 = vpack.c.b16 %v2420, %v2412
    %v3557 = vpack.c.b16 %v2429, %v2421
    %v3558 = vpack.c.b16 %v2430, %v2422
    %v3559 = vpack.c.b16 %v2431, %v2423
    %v3560 = vpack.c.b16 %v2432, %v2424
    %v3561 = vpack.c.b16 %v2433, %v2425
    %v3562 = vpack.c.b16 %v2434, %v2426
    %v3563 = vpack.c.b16 %v2435, %v2427
    %v3564 = vpack.c.b16 %v2436, %v2428
    %v3565 = vpack.c.b16 %v2445, %v2437
    %v3566 = vpack.c.b16 %v2446, %v2438
    %v3567 = vpack.c.b16 %v2447, %v2439
    %v3568 = vpack.c.b16 %v2448, %v2440
    %v3569 = vpack.c.b16 %v2449, %v2441
    %v3570 = vpack.c.b16 %v2450, %v2442
    %v3571 = vpack.c.b16 %v2451, %v2443
    %v3572 = vpack.c.b16 %v2452, %v2444
    %v3573 = vpack.c.b16 %v2461, %v2453
    %v3574 = vpack.c.b16 %v2462, %v2454
    %v3575 = vpack.c.b16 %v2463, %v2455
    %v3576 = vpack.c.b16 %v2464, %v2456
    %v3577 = vpack.c.b16 %v2465, %v2457
    %v3578 = vpack.c.b16 %v2466, %v2458
    %v3579 = vpack.c.b16 %v2467, %v2459
    %v3580 = vpack.c.b16 %v2468, %v2460
    %v3581 = vpack.c.b16 %v2477, %v2469
    %v3582 = vpack.c.b16 %v2478, %v2470
    %v3583 = vpack.c.b16 %v2479, %v2471
    %v3584 = vpack.c.b16 %v2480, %v2472
    %v3585 = vpack.c.b16 %v2481, %v2473
    %v3586 = vpack.c.b16 %v2482, %v2474
    %v3587 = vpack.c.b16 %v2483, %v2475
    %v3588 = vpack.c.b16 %v2484, %v2476
    %v3589 = vpack.c.b16 %v2493, %v2485
    %v3590 = vpack.c.b16 %v2494, %v2486
    %v3591 = vpack.c.b16 %v2495, %v2487
    %v3592 = vpack.c.b16 %v2496, %v2488
    %v3593 = vpack.c.b16 %v2497, %v2489
    %v3594 = vpack.c.b16 %v2498, %v2490
    %v3595 = vpack.c.b16 %v2499, %v2491
    %v3596 = vpack.c.b16 %v2500, %v2492
    %v3597 = vpack.c.b16 %v2509, %v2501
    %v3598 = vpack.c.b16 %v2510, %v2502
    %v3599 = vpack.c.b16 %v2511, %v2503
    %v3600 = vpack.c.b16 %v2512, %v2504
    %v3601 = vpack.c.b16 %v2513, %v2505
    %v3602 = vpack.c.b16 %v2514, %v2506
    %v3603 = vpack.c.b16 %v2515, %v2507
    %v3604 = vpack.c.b16 %v2516, %v2508
    %v3605 = vpack.c.b16 %v2525, %v2517
    %v3606 = vpack.c.b16 %v2526, %v2518
    %v3607 = vpack.c.b16 %v2527, %v2519
    %v3608 = vpack.c.b16 %v2528, %v2520
    %v3609 = vpack.c.b16 %v2529, %v2521
    %v3610 = vpack.c.b16 %v2530, %v2522
    %v3611 = vpack.c.b16 %v2531, %v2523
    %v3612 = vpack.c.b16 %v2532, %v2524
    %v3613 = vpack.c.b16 %v2541, %v2533
    %v3614 = vpack.c.b16 %v2542, %v2534
    %v3615 = vpack.c.b16 %v2543, %v2535
    %v3616 = vpack.c.b16 %v2544, %v2536
    %v3617 = vpack.c.b16 %v2545, %v2537
    %v3618 = vpack.c.b16 %v2546, %v2538
    %v3619 = vpack.c.b16 %v2547, %v2539
    %v3620 = vpack.c.b16 %v2548, %v2540
    %v3621 = vpack.c.b16 %v2557, %v2549
    %v3622 = vpack.c.b16 %v2558, %v2550
    %v3623 = vpack.c.b16 %v2559, %v2551
    %v3624 = vpack.c.b16 %v2560, %v2552
    %v3625 = vpack.c.b16 %v2561, %v2553
    %v3626 = vpack.c.b16 %v2562, %v2554
    %v3627 = vpack.c.b16 %v2563, %v2555
    %v3628 = vpack.c.b16 %v2564, %v2556
    %v3629 = vpack.c.b16 %v2573, %v2565
    %v3630 = vpack.c.b16 %v2574, %v2566
    %v3631 = vpack.c.b16 %v2575, %v2567
    %v3632 = vpack.c.b16 %v2576, %v2568
    %v3633 = vpack.c.b16 %v2577, %v2569
    %v3634 = vpack.c.b16 %v2578, %v2570
    %v3635 = vpack.c.b16 %v2579, %v2571
    %v3636 = vpack.c.b16 %v2580, %v2572
    %v3637 = vpack.c.b16 %v2589, %v2581
    %v3638 = vpack.c.b16 %v2590, %v2582
    %v3639 = vpack.c.b16 %v2591, %v2583
    %v3640 = vpack.c.b16 %v2592, %v2584
    %v3641 = vpack.c.b16 %v2593, %v2585
    %v3642 = vpack.c.b16 %v2594, %v2586
    %v3643 = vpack.c.b16 %v2595, %v2587
    %v3644 = vpack.c.b16 %v2596, %v2588
    %v3645 = vpack.c.b16 %v2605, %v2597
    %v3646 = vpack.c.b16 %v2606, %v2598
    %v3647 = vpack.c.b16 %v2607, %v2599
    %v3648 = vpack.c.b16 %v2608, %v2600
    %v3649 = vpack.c.b16 %v2609, %v2601
    %v3650 = vpack.c.b16 %v2610, %v2602
    %v3651 = vpack.c.b16 %v2611, %v2603
    %v3652 = vpack.c.b16 %v2612, %v2604
    %v3653 = vpack.c.b16 %v2621, %v2613
    %v3654 = vpack.c.b16 %v2622, %v2614
    %v3655 = vpack.c.b16 %v2623, %v2615
    %v3656 = vpack.c.b16 %v2624, %v2616
    %v3657 = vpack.c.b16 %v2625, %v2617
    %v3658 = vpack.c.b16 %v2626, %v2618
    %v3659 = vpack.c.b16 %v2627, %v2619
    %v3660 = vpack.c.b16 %v2628, %v2620
    %v3661 = vpack.c.b16 %v2637, %v2629
    %v3662 = vpack.c.b16 %v2638, %v2630
    %v3663 = vpack.c.b16 %v2639, %v2631
    %v3664 = vpack.c.b16 %v2640, %v2632
    %v3665 = vpack.c.b16 %v2641, %v2633
    %v3666 = vpack.c.b16 %v2642, %v2634
    %v3667 = vpack.c.b16 %v2643, %v2635
    %v3668 = vpack.c.b16 %v2644, %v2636
    %v3669 = vpack.c.b16 %v2653, %v2645
    %v3670 = vpack.c.b16 %v2654, %v2646
    %v3671 = vpack.c.b16 %v2655, %v2647
    %v3672 = vpack.c.b16 %v2656, %v2648
    %v3673 = vpack.c.b16 %v2657, %v2649
    %v3674 = vpack.c.b16 %v2658, %v2650
    %v3675 = vpack.c.b16 %v2659, %v2651
    %v3676 = vpack.c.b16 %v2660, %v2652
    %v3677 = vpack.c.b16 %v2669, %v2661
    %v3678 = vpack.c.b16 %v2670, %v2662
    %v3679 = vpack.c.b16 %v2671, %v2663
    %v3680 = vpack.c.b16 %v2672, %v2664
    %v3681 = vpack.c.b16 %v2673, %v2665
    %v3682 = vpack.c.b16 %v2674, %v2666
    %v3683 = vpack.c.b16 %v2675, %v2667
    %v3684 = vpack.c.b16 %v2676, %v2668
    %v3685 = vpack.c.b16 %v2685, %v2677
    %v3686 = vpack.c.b16 %v2686, %v2678
    %v3687 = vpack.c.b16 %v2687, %v2679
    %v3688 = vpack.c.b16 %v2688, %v2680
    %v3689 = vpack.c.b16 %v2689, %v2681
    %v3690 = vpack.c.b16 %v2690, %v2682
    %v3691 = vpack.c.b16 %v2691, %v2683
    %v3692 = vpack.c.b16 %v2692, %v2684
    %v3693 = vpack.c.b16 %v2701, %v2693
    %v3694 = vpack.c.b16 %v2702, %v2694
    %v3695 = vpack.c.b16 %v2703, %v2695
    %v3696 = vpack.c.b16 %v2704, %v2696
    %v3697 = vpack.c.b16 %v2705, %v2697
    %v3698 = vpack.c.b16 %v2706, %v2698
    %v3699 = vpack.c.b16 %v2707, %v2699
    %v3700 = vpack.c.b16 %v2708, %v2700
    %v3701 = vpack.c.b16 %v2717, %v2709
    %v3702 = vpack.c.b16 %v2718, %v2710
    %v3703 = vpack.c.b16 %v2719, %v2711
    %v3704 = vpack.c.b16 %v2720, %v2712
    %v3705 = vpack.c.b16 %v2721, %v2713
    %v3706 = vpack.c.b16 %v2722, %v2714
    %v3707 = vpack.c.b16 %v2723, %v2715
    %v3708 = vpack.c.b16 %v2724, %v2716
    %v3709 = vpack.c.b16 %v2733, %v2725
    %v3710 = vpack.c.b16 %v2734, %v2726
    %v3711 = vpack.c.b16 %v2735, %v2727
    %v3712 = vpack.c.b16 %v2736, %v2728
    %v3713 = vpack.c.b16 %v2737, %v2729
    %v3714 = vpack.c.b16 %v2738, %v2730
    %v3715 = vpack.c.b16 %v2739, %v2731
    %v3716 = vpack.c.b16 %v2740, %v2732
    %v3717 = vpack.c.b16 %v2749, %v2741
    %v3718 = vpack.c.b16 %v2750, %v2742
    %v3719 = vpack.c.b16 %v2751, %v2743
    %v3720 = vpack.c.b16 %v2752, %v2744
    %v3721 = vpack.c.b16 %v2753, %v2745
    %v3722 = vpack.c.b16 %v2754, %v2746
    %v3723 = vpack.c.b16 %v2755, %v2747
    %v3724 = vpack.c.b16 %v2756, %v2748
    %v3725 = vpack.c.b16 %v2765, %v2757
    %v3726 = vpack.c.b16 %v2766, %v2758
    %v3727 = vpack.c.b16 %v2767, %v2759
    %v3728 = vpack.c.b16 %v2768, %v2760
    %v3729 = vpack.c.b16 %v2769, %v2761
    %v3730 = vpack.c.b16 %v2770, %v2762
    %v3731 = vpack.c.b16 %v2771, %v2763
    %v3732 = vpack.c.b16 %v2772, %v2764
    %v3733 = vpack.c.b16 %v2781, %v2773
    %v3734 = vpack.c.b16 %v2782, %v2774
    %v3735 = vpack.c.b16 %v2783, %v2775
    %v3736 = vpack.c.b16 %v2784, %v2776
    %v3737 = vpack.c.b16 %v2785, %v2777
    %v3738 = vpack.c.b16 %v2786, %v2778
    %v3739 = vpack.c.b16 %v2787, %v2779
    %v3740 = vpack.c.b16 %v2788, %v2780
    %v3741 = vpack.c.b16 %v2797, %v2789
    %v3742 = vpack.c.b16 %v2798, %v2790
    %v3743 = vpack.c.b16 %v2799, %v2791
    %v3744 = vpack.c.b16 %v2800, %v2792
    %v3745 = vpack.c.b16 %v2801, %v2793
    %v3746 = vpack.c.b16 %v2802, %v2794
    %v3747 = vpack.c.b16 %v2803, %v2795
    %v3748 = vpack.c.b16 %v2804, %v2796
    %v3749 = vpack.c.b16 %v2813, %v2805
    %v3750 = vpack.c.b16 %v2814, %v2806
    %v3751 = vpack.c.b16 %v2815, %v2807
    %v3752 = vpack.c.b16 %v2816, %v2808
    %v3753 = vpack.c.b16 %v2817, %v2809
    %v3754 = vpack.c.b16 %v2818, %v2810
    %v3755 = vpack.c.b16 %v2819, %v2811
    %v3756 = vpack.c.b16 %v2820, %v2812
    %v3757 = vpack.c.b16 %v2829, %v2821
    %v3758 = vpack.c.b16 %v2830, %v2822
    %v3759 = vpack.c.b16 %v2831, %v2823
    %v3760 = vpack.c.b16 %v2832, %v2824
    %v3761 = vpack.c.b16 %v2833, %v2825
    %v3762 = vpack.c.b16 %v2834, %v2826
    %v3763 = vpack.c.b16 %v2835, %v2827
    %v3764 = vpack.c.b16 %v2836, %v2828
    %v3765 = vpack.c.b16 %v2845, %v2837
    %v3766 = vpack.c.b16 %v2846, %v2838
    %v3767 = vpack.c.b16 %v2847, %v2839
    %v3768 = vpack.c.b16 %v2848, %v2840
    %v3769 = vpack.c.b16 %v2849, %v2841
    %v3770 = vpack.c.b16 %v2850, %v2842
    %v3771 = vpack.c.b16 %v2851, %v2843
    %v3772 = vpack.c.b16 %v2852, %v2844
    %v3773 = vpack.c.b16 %v2861, %v2853
    %v3774 = vpack.c.b16 %v2862, %v2854
    %v3775 = vpack.c.b16 %v2863, %v2855
    %v3776 = vpack.c.b16 %v2864, %v2856
    %v3777 = vpack.c.b16 %v2865, %v2857
    %v3778 = vpack.c.b16 %v2866, %v2858
    %v3779 = vpack.c.b16 %v2867, %v2859
    %v3780 = vpack.c.b16 %v2868, %v2860
    %v3781 = vpack.c.b16 %v2877, %v2869
    %v3782 = vpack.c.b16 %v2878, %v2870
    %v3783 = vpack.c.b16 %v2879, %v2871
    %v3784 = vpack.c.b16 %v2880, %v2872
    %v3785 = vpack.c.b16 %v2881, %v2873
    %v3786 = vpack.c.b16 %v2882, %v2874
    %v3787 = vpack.c.b16 %v2883, %v2875
    %v3788 = vpack.c.b16 %v2884, %v2876
    %v3789 = vpack.c.b16 %v2893, %v2885
    %v3790 = vpack.c.b16 %v2894, %v2886
    %v3791 = vpack.c.b16 %v2895, %v2887
    %v3792 = vpack.c.b16 %v2896, %v2888
    %v3793 = vpack.c.b16 %v2897, %v2889
    %v3794 = vpack.c.b16 %v2898, %v2890
    %v3795 = vpack.c.b16 %v2899, %v2891
    %v3796 = vpack.c.b16 %v2900, %v2892
    %v3797 = vpack.c.b16 %v2909, %v2901
    %v3798 = vpack.c.b16 %v2910, %v2902
    %v3799 = vpack.c.b16 %v2911, %v2903
    %v3800 = vpack.c.b16 %v2912, %v2904
    %v3801 = vpack.c.b16 %v2913, %v2905
    %v3802 = vpack.c.b16 %v2914, %v2906
    %v3803 = vpack.c.b16 %v2915, %v2907
    %v3804 = vpack.c.b16 %v2916, %v2908
    %v3805 = vpack.c.b16 %v2925, %v2917
    %v3806 = vpack.c.b16 %v2926, %v2918
    %v3807 = vpack.c.b16 %v2927, %v2919
    %v3808 = vpack.c.b16 %v2928, %v2920
    %v3809 = vpack.c.b16 %v2929, %v2921
    %v3810 = vpack.c.b16 %v2930, %v2922
    %v3811 = vpack.c.b16 %v2931, %v2923
    %v3812 = vpack.c.b16 %v2932, %v2924
    %v3813 = vpack.c.b16 %v2941, %v2933
    %v3814 = vpack.c.b16 %v2942, %v2934
    %v3815 = vpack.c.b16 %v2943, %v2935
    %v3816 = vpack.c.b16 %v2944, %v2936
    %v3817 = vpack.c.b16 %v2945, %v2937
    %v3818 = vpack.c.b16 %v2946, %v2938
    %v3819 = vpack.c.b16 %v2947, %v2939
    %v3820 = vpack.c.b16 %v2948, %v2940
    %v3821 = vpack.c.b16 %v2957, %v2949
    %v3822 = vpack.c.b16 %v2958, %v2950
    %v3823 = vpack.c.b16 %v2959, %v2951
    %v3824 = vpack.c.b16 %v2960, %v2952
    %v3825 = vpack.c.b16 %v2961, %v2953
    %v3826 = vpack.c.b16 %v2962, %v2954
    %v3827 = vpack.c.b16 %v2963, %v2955
    %v3828 = vpack.c.b16 %v2964, %v2956
    %v3829 = vpack.c.b16 %v2973, %v2965
    %v3830 = vpack.c.b16 %v2974, %v2966
    %v3831 = vpack.c.b16 %v2975, %v2967
    %v3832 = vpack.c.b16 %v2976, %v2968
    %v3833 = vpack.c.b16 %v2977, %v2969
    %v3834 = vpack.c.b16 %v2978, %v2970
    %v3835 = vpack.c.b16 %v2979, %v2971
    %v3836 = vpack.c.b16 %v2980, %v2972
    %v3837 = vpack.c.b16 %v2989, %v2981
    %v3838 = vpack.c.b16 %v2990, %v2982
    %v3839 = vpack.c.b16 %v2991, %v2983
    %v3840 = vpack.c.b16 %v2992, %v2984
    %v3841 = vpack.c.b16 %v2993, %v2985
    %v3842 = vpack.c.b16 %v2994, %v2986
    %v3843 = vpack.c.b16 %v2995, %v2987
    %v3844 = vpack.c.b16 %v2996, %v2988
    %v3845 = vpack.c.b16 %v3005, %v2997
    %v3846 = vpack.c.b16 %v3006, %v2998
    %v3847 = vpack.c.b16 %v3007, %v2999
    %v3848 = vpack.c.b16 %v3008, %v3000
    %v3849 = vpack.c.b16 %v3009, %v3001
    %v3850 = vpack.c.b16 %v3010, %v3002
    %v3851 = vpack.c.b16 %v3011, %v3003
    %v3852 = vpack.c.b16 %v3012, %v3004
    %v3853 = vpack.c.b16 %v3021, %v3013
    %v3854 = vpack.c.b16 %v3022, %v3014
    %v3855 = vpack.c.b16 %v3023, %v3015
    %v3856 = vpack.c.b16 %v3024, %v3016
    %v3857 = vpack.c.b16 %v3025, %v3017
    %v3858 = vpack.c.b16 %v3026, %v3018
    %v3859 = vpack.c.b16 %v3027, %v3019
    %v3860 = vpack.c.b16 %v3028, %v3020
    %v3861 = vpack.c.b16 %v3037, %v3029
    %v3862 = vpack.c.b16 %v3038, %v3030
    %v3863 = vpack.c.b16 %v3039, %v3031
    %v3864 = vpack.c.b16 %v3040, %v3032
    %v3865 = vpack.c.b16 %v3041, %v3033
    %v3866 = vpack.c.b16 %v3042, %v3034
    %v3867 = vpack.c.b16 %v3043, %v3035
    %v3868 = vpack.c.b16 %v3044, %v3036
    %v3869 = vpack.c.b16 %v3053, %v3045
    %v3870 = vpack.c.b16 %v3054, %v3046
    %v3871 = vpack.c.b16 %v3055, %v3047
    %v3872 = vpack.c.b16 %v3056, %v3048
    %v3873 = vpack.c.b16 %v3057, %v3049
    %v3874 = vpack.c.b16 %v3058, %v3050
    %v3875 = vpack.c.b16 %v3059, %v3051
    %v3876 = vpack.c.b16 %v3060, %v3052
    %v3877 = vpack.c.b16 %v3069, %v3061
    %v3878 = vpack.c.b16 %v3070, %v3062
    %v3879 = vpack.c.b16 %v3071, %v3063
    %v3880 = vpack.c.b16 %v3072, %v3064
    %v3881 = vpack.c.b16 %v3073, %v3065
    %v3882 = vpack.c.b16 %v3074, %v3066
    %v3883 = vpack.c.b16 %v3075, %v3067
    %v3884 = vpack.c.b16 %v3076, %v3068
    %v3885 = vpack.c.b16 %v3085, %v3077
    %v3886 = vpack.c.b16 %v3086, %v3078
    %v3887 = vpack.c.b16 %v3087, %v3079
    %v3888 = vpack.c.b16 %v3088, %v3080
    %v3889 = vpack.c.b16 %v3089, %v3081
    %v3890 = vpack.c.b16 %v3090, %v3082
    %v3891 = vpack.c.b16 %v3091, %v3083
    %v3892 = vpack.c.b16 %v3092, %v3084
    %v3893 = vpack.c.b16 %v3101, %v3093
    %v3894 = vpack.c.b16 %v3102, %v3094
    %v3895 = vpack.c.b16 %v3103, %v3095
    %v3896 = vpack.c.b16 %v3104, %v3096
    %v3897 = vpack.c.b16 %v3105, %v3097
    %v3898 = vpack.c.b16 %v3106, %v3098
    %v3899 = vpack.c.b16 %v3107, %v3099
    %v3900 = vpack.c.b16 %v3108, %v3100
    %v3901 = vpack.c.b16 %v3117, %v3109
    %v3902 = vpack.c.b16 %v3118, %v3110
    %v3903 = vpack.c.b16 %v3119, %v3111
    %v3904 = vpack.c.b16 %v3120, %v3112
    %v3905 = vpack.c.b16 %v3121, %v3113
    %v3906 = vpack.c.b16 %v3122, %v3114
    %v3907 = vpack.c.b16 %v3123, %v3115
    %v3908 = vpack.c.b16 %v3124, %v3116
    %v3909 = vpack.c.b16 %v3133, %v3125
    %v3910 = vpack.c.b16 %v3134, %v3126
    %v3911 = vpack.c.b16 %v3135, %v3127
    %v3912 = vpack.c.b16 %v3136, %v3128
    %v3913 = vpack.c.b16 %v3137, %v3129
    %v3914 = vpack.c.b16 %v3138, %v3130
    %v3915 = vpack.c.b16 %v3139, %v3131
    %v3916 = vpack.c.b16 %v3140, %v3132
    %v3917 = vpack.c.b16 %v3149, %v3141
    %v3918 = vpack.c.b16 %v3150, %v3142
    %v3919 = vpack.c.b16 %v3151, %v3143
    %v3920 = vpack.c.b16 %v3152, %v3144
    %v3921 = vpack.c.b16 %v3153, %v3145
    %v3922 = vpack.c.b16 %v3154, %v3146
    %v3923 = vpack.c.b16 %v3155, %v3147
    %v3924 = vpack.c.b16 %v3156, %v3148
    %v3925 = vpack.c.b16 %v3165, %v3157
    %v3926 = vpack.c.b16 %v3166, %v3158
    %v3927 = vpack.c.b16 %v3167, %v3159
    %v3928 = vpack.c.b16 %v3168, %v3160
    %v3929 = vpack.c.b16 %v3169, %v3161
    %v3930 = vpack.c.b16 %v3170, %v3162
    %v3931 = vpack.c.b16 %v3171, %v3163
    %v3932 = vpack.c.b16 %v3172, %v3164
    %v3933 = vpack.c.b16 %v3181, %v3173
    %v3934 = vpack.c.b16 %v3182, %v3174
    %v3935 = vpack.c.b16 %v3183, %v3175
    %v3936 = vpack.c.b16 %v3184, %v3176
    %v3937 = vpack.c.b16 %v3185, %v3177
    %v3938 = vpack.c.b16 %v3186, %v3178
    %v3939 = vpack.c.b16 %v3187, %v3179
    %v3940 = vpack.c.b16 %v3188, %v3180
    %v3941 = vpack.c.b16 %v3197, %v3189
    %v3942 = vpack.c.b16 %v3198, %v3190
    %v3943 = vpack.c.b16 %v3199, %v3191
    %v3944 = vpack.c.b16 %v3200, %v3192
    %v3945 = vpack.c.b16 %v3201, %v3193
    %v3946 = vpack.c.b16 %v3202, %v3194
    %v3947 = vpack.c.b16 %v3203, %v3195
    %v3948 = vpack.c.b16 %v3204, %v3196
    %v3949 = vpack.c.b16 %v3213, %v3205
    %v3950 = vpack.c.b16 %v3214, %v3206
    %v3951 = vpack.c.b16 %v3215, %v3207
    %v3952 = vpack.c.b16 %v3216, %v3208
    %v3953 = vpack.c.b16 %v3217, %v3209
    %v3954 = vpack.c.b16 %v3218, %v3210
    %v3955 = vpack.c.b16 %v3219, %v3211
    %v3956 = vpack.c.b16 %v3220, %v3212
    %v3957 = vpack.c.b16 %v3229, %v3221
    %v3958 = vpack.c.b16 %v3230, %v3222
    %v3959 = vpack.c.b16 %v3231, %v3223
    %v3960 = vpack.c.b16 %v3232, %v3224
    %v3961 = vpack.c.b16 %v3233, %v3225
    %v3962 = vpack.c.b16 %v3234, %v3226
    %v3963 = vpack.c.b16 %v3235, %v3227
    %v3964 = vpack.c.b16 %v3236, %v3228
    %v3965 = vpack.c.b16 %v3245, %v3237
    %v3966 = vpack.c.b16 %v3246, %v3238
    %v3967 = vpack.c.b16 %v3247, %v3239
    %v3968 = vpack.c.b16 %v3248, %v3240
    %v3969 = vpack.c.b16 %v3249, %v3241
    %v3970 = vpack.c.b16 %v3250, %v3242
    %v3971 = vpack.c.b16 %v3251, %v3243
    %v3972 = vpack.c.b16 %v3252, %v3244
    %v3973 = vpack.c.b16 %v3261, %v3253
    %v3974 = vpack.c.b16 %v3262, %v3254
    %v3975 = vpack.c.b16 %v3263, %v3255
    %v3976 = vpack.c.b16 %v3264, %v3256
    %v3977 = vpack.c.b16 %v3265, %v3257
    %v3978 = vpack.c.b16 %v3266, %v3258
    %v3979 = vpack.c.b16 %v3267, %v3259
    %v3980 = vpack.c.b16 %v3268, %v3260
    %v3981 = vpack.c.b16 %v3277, %v3269
    %v3982 = vpack.c.b16 %v3278, %v3270
    %v3983 = vpack.c.b16 %v3279, %v3271
    %v3984 = vpack.c.b16 %v3280, %v3272
    %v3985 = vpack.c.b16 %v3281, %v3273
    %v3986 = vpack.c.b16 %v3282, %v3274
    %v3987 = vpack.c.b16 %v3283, %v3275
    %v3988 = vpack.c.b16 %v3284, %v3276
    %v3989 = vpack.c.b16 %v3293, %v3285
    %v3990 = vpack.c.b16 %v3294, %v3286
    %v3991 = vpack.c.b16 %v3295, %v3287
    %v3992 = vpack.c.b16 %v3296, %v3288
    %v3993 = vpack.c.b16 %v3297, %v3289
    %v3994 = vpack.c.b16 %v3298, %v3290
    %v3995 = vpack.c.b16 %v3299, %v3291
    %v3996 = vpack.c.b16 %v3300, %v3292
    %v3997 = vpack.c.b16 %v3309, %v3301
    %v3998 = vpack.c.b16 %v3310, %v3302
    %v3999 = vpack.c.b16 %v3311, %v3303
    %v4000 = vpack.c.b16 %v3312, %v3304
    %v4001 = vpack.c.b16 %v3313, %v3305
    %v4002 = vpack.c.b16 %v3314, %v3306
    %v4003 = vpack.c.b16 %v3315, %v3307
    %v4004 = vpack.c.b16 %v3316, %v3308
    %v4005 = vpack.c.b16 %v3325, %v3317
    %v4006 = vpack.c.b16 %v3326, %v3318
    %v4007 = vpack.c.b16 %v3327, %v3319
    %v4008 = vpack.c.b16 %v3328, %v3320
    %v4009 = vpack.c.b16 %v3329, %v3321
    %v4010 = vpack.c.b16 %v3330, %v3322
    %v4011 = vpack.c.b16 %v3331, %v3323
    %v4012 = vpack.c.b16 %v3332, %v3324
    %v4013 = vpack.c.b16 %v3341, %v3333
    %v4014 = vpack.c.b16 %v3342, %v3334
    %v4015 = vpack.c.b16 %v3343, %v3335
    %v4016 = vpack.c.b16 %v3344, %v3336
    %v4017 = vpack.c.b16 %v3345, %v3337
    %v4018 = vpack.c.b16 %v3346, %v3338
    %v4019 = vpack.c.b16 %v3347, %v3339
    %v4020 = vpack.c.b16 %v3348, %v3340
    %v4021 = vpack.c.b16 %v3357, %v3349
    %v4022 = vpack.c.b16 %v3358, %v3350
    %v4023 = vpack.c.b16 %v3359, %v3351
    %v4024 = vpack.c.b16 %v3360, %v3352
    %v4025 = vpack.c.b16 %v3361, %v3353
    %v4026 = vpack.c.b16 %v3362, %v3354
    %v4027 = vpack.c.b16 %v3363, %v3355
    %v4028 = vpack.c.b16 %v3364, %v3356
    %v4029 = vpack.c.b16 %v3373, %v3365
    %v4030 = vpack.c.b16 %v3374, %v3366
    %v4031 = vpack.c.b16 %v3375, %v3367
    %v4032 = vpack.c.b16 %v3376, %v3368
    %v4033 = vpack.c.b16 %v3377, %v3369
    %v4034 = vpack.c.b16 %v3378, %v3370
    %v4035 = vpack.c.b16 %v3379, %v3371
    %v4036 = vpack.c.b16 %v3380, %v3372
    %v4037 = vpack.c.b16 %v3389, %v3381
    %v4038 = vpack.c.b16 %v3390, %v3382
    %v4039 = vpack.c.b16 %v3391, %v3383
    %v4040 = vpack.c.b16 %v3392, %v3384
    %v4041 = vpack.c.b16 %v3393, %v3385
    %v4042 = vpack.c.b16 %v3394, %v3386
    %v4043 = vpack.c.b16 %v3395, %v3387
    %v4044 = vpack.c.b16 %v3396, %v3388
    %v4045 = vpack.c.b16 %v3405, %v3397
    %v4046 = vpack.c.b16 %v3406, %v3398
    %v4047 = vpack.c.b16 %v3407, %v3399
    %v4048 = vpack.c.b16 %v3408, %v3400
    %v4049 = vpack.c.b16 %v3409, %v3401
    %v4050 = vpack.c.b16 %v3410, %v3402
    %v4051 = vpack.c.b16 %v3411, %v3403
    %v4052 = vpack.c.b16 %v3412, %v3404
    %v4053 = vpack.c.b16 %v3421, %v3413
    %v4054 = vpack.c.b16 %v3422, %v3414
    %v4055 = vpack.c.b16 %v3423, %v3415
    %v4056 = vpack.c.b16 %v3424, %v3416
    %v4057 = vpack.c.b16 %v3425, %v3417
    %v4058 = vpack.c.b16 %v3426, %v3418
    %v4059 = vpack.c.b16 %v3427, %v3419
    %v4060 = vpack.c.b16 %v3428, %v3420
    %v4061 = vpack.c.b16 %v3437, %v3429
    %v4062 = vpack.c.b16 %v3438, %v3430
    %v4063 = vpack.c.b16 %v3439, %v3431
    %v4064 = vpack.c.b16 %v3440, %v3432
    %v4065 = vpack.c.b16 %v3441, %v3433
    %v4066 = vpack.c.b16 %v3442, %v3434
    %v4067 = vpack.c.b16 %v3443, %v3435
    %v4068 = vpack.c.b16 %v3444, %v3436
    %v4069 = vpack.c.b16 %v3453, %v3445
    %v4070 = vpack.c.b16 %v3454, %v3446
    %v4071 = vpack.c.b16 %v3455, %v3447
    %v4072 = vpack.c.b16 %v3456, %v3448
    %v4073 = vpack.c.b16 %v3457, %v3449
    %v4074 = vpack.c.b16 %v3458, %v3450
    %v4075 = vpack.c.b16 %v3459, %v3451
    %v4076 = vpack.c.b16 %v3460, %v3452
    %v4077 = vpack.c.b16 %v3469, %v3461
    %v4078 = vpack.c.b16 %v3470, %v3462
    %v4079 = vpack.c.b16 %v3471, %v3463
    %v4080 = vpack.c.b16 %v3472, %v3464
    %v4081 = vpack.c.b16 %v3473, %v3465
    %v4082 = vpack.c.b16 %v3474, %v3466
    %v4083 = vpack.c.b16 %v3475, %v3467
    %v4084 = vpack.c.b16 %v3476, %v3468
    %v4085 = vpack.c.b16 %v3485, %v3477
    %v4086 = vpack.c.b16 %v3486, %v3478
    %v4087 = vpack.c.b16 %v3487, %v3479
    %v4088 = vpack.c.b16 %v3488, %v3480
    %v4089 = vpack.c.b16 %v3489, %v3481
    %v4090 = vpack.c.b16 %v3490, %v3482
    %v4091 = vpack.c.b16 %v3491, %v3483
    %v4092 = vpack.c.b16 %v3492, %v3484
    %v4093 = vpack.c.b16 %v3501, %v3493
    %v4094 = vpack.c.b16 %v3502, %v3494
    %v4095 = vpack.c.b16 %v3503, %v3495
    %v4096 = vpack.c.b16 %v3504, %v3496
    %v4097 = vpack.c.b16 %v3505, %v3497
    %v4098 = vpack.c.b16 %v3506, %v3498
    %v4099 = vpack.c.b16 %v3507, %v3499
    %v4100 = vpack.c.b16 %v3508, %v3500
    %v4101 = vpack.c.b16 %v3517, %v3509
    %v4102 = vpack.c.b16 %v3518, %v3510
    %v4103 = vpack.c.b16 %v3519, %v3511
    %v4104 = vpack.c.b16 %v3520, %v3512
    %v4105 = vpack.c.b16 %v3521, %v3513
    %v4106 = vpack.c.b16 %v3522, %v3514
    %v4107 = vpack.c.b16 %v3523, %v3515
    %v4108 = vpack.c.b16 %v3524, %v3516
    %v4109 = vpack.c.b16 %v3533, %v3525
    %v4110 = vpack.c.b16 %v3534, %v3526
    %v4111 = vpack.c.b16 %v3535, %v3527
    %v4112 = vpack.c.b16 %v3536, %v3528
    %v4113 = vpack.c.b16 %v3537, %v3529
    %v4114 = vpack.c.b16 %v3538, %v3530
    %v4115 = vpack.c.b16 %v3539, %v3531
    %v4116 = vpack.c.b16 %v3540, %v3532
    %4693 = vmatprep.subr.bf16.mxu0 %v3542
    %4694 = vmatpush1.bf16.msra.mxu0 %v3541
    %4695 = vmatprep.subr.bf16.mxu0 %v3550
    %4696 = vmatpush1.bf16.msra.mxu0 %v3549
    %4697 = vmatprep.subr.bf16.mxu0 %v3558
    %4698 = vmatpush1.bf16.msra.mxu0 %v3557
    %4699 = vmatprep.subr.bf16.mxu0 %v3566
    %4700 = vmatpush1.bf16.msra.mxu0 %v3565
    %4701 = vmatprep.subr.bf16.mxu0 %v3574
    %4702 = vmatpush1.bf16.msra.mxu0 %v3573
    %4703 = vmatprep.subr.bf16.mxu0 %v3582
    %4704 = vmatpush1.bf16.msra.mxu0 %v3581
    %4705 = vmatprep.subr.bf16.mxu0 %v3590
    %4706 = vmatpush1.bf16.msra.mxu0 %v3589
    %4707 = vmatprep.subr.bf16.mxu0 %v3598
    %4708 = vmatpush1.bf16.msra.mxu0 %v3597
    %4709 = vmatprep.subr.bf16.mxu0 %v3606
    %4710 = vmatpush1.bf16.msra.mxu0 %v3605
    %4711 = vmatprep.subr.bf16.mxu0 %v3614
    %4712 = vmatpush1.bf16.msra.mxu0 %v3613
    %4713 = vmatprep.subr.bf16.mxu0 %v3622
    %4714 = vmatpush1.bf16.msra.mxu0 %v3621
    %4715 = vmatprep.subr.bf16.mxu0 %v3630
    %4716 = vmatpush1.bf16.msra.mxu0 %v3629
    %4717 = vmatprep.subr.bf16.mxu0 %v3638
    %4718 = vmatpush1.bf16.msra.mxu0 %v3637
    %4719 = vmatprep.subr.bf16.mxu0 %v3646
    %4720 = vmatpush1.bf16.msra.mxu0 %v3645
    %4721 = vmatprep.subr.bf16.mxu0 %v3654
    %4722 = vmatpush1.bf16.msra.mxu0 %v3653
    %4723 = vmatprep.subr.bf16.mxu0 %v3662
    %4724 = vmatpush1.bf16.msra.mxu0 %v3661
    %4725 = vmatprep.mubr.bf16.mxu0 %v1187
    %4726 = vmatmul.mubr.bf16.gmra.mrb[0].mxu0 %v1186
    %v4727 = vpop.f32.mrb[0].mxu0
    %v4728 = vadd.f32 %v1776, %v4727
    %v4729 = vpop.f32.mrb[0].mxu0
    %v4730 = vadd.f32 %v1780, %v4729
    %v4731 = vpop.f32.mrb[0].mxu0
    %v4732 = vpop.f32.mrb[0].mxu0
    %4733 = vdwg.mxu0
    %4734 = vmatprep.subr.bf16.mxu0 %v3670
    %4735 = vmatpush1.bf16.msra.mxu0 %v3669
    %4736 = vmatprep.subr.bf16.mxu0 %v3678
    %4737 = vmatpush1.bf16.msra.mxu0 %v3677
    %4738 = vmatprep.subr.bf16.mxu0 %v3686
    %4739 = vmatpush1.bf16.msra.mxu0 %v3685
    %4740 = vmatprep.subr.bf16.mxu0 %v3694
    %4741 = vmatpush1.bf16.msra.mxu0 %v3693
    %4742 = vmatprep.subr.bf16.mxu0 %v3702
    %4743 = vmatpush1.bf16.msra.mxu0 %v3701
    %4744 = vmatprep.subr.bf16.mxu0 %v3710
    %4745 = vmatpush1.bf16.msra.mxu0 %v3709
    %4746 = vmatprep.subr.bf16.mxu0 %v3718
    %4747 = vmatpush1.bf16.msra.mxu0 %v3717
    %4748 = vmatprep.subr.bf16.mxu0 %v3726
    %4749 = vmatpush1.bf16.msra.mxu0 %v3725
    %4750 = vmatprep.subr.bf16.mxu0 %v3734
    %4751 = vmatpush1.bf16.msra.mxu0 %v3733
    %4752 = vmatprep.subr.bf16.mxu0 %v3742
    %4753 = vmatpush1.bf16.msra.mxu0 %v3741
    %4754 = vmatprep.subr.bf16.mxu0 %v3750
    %4755 = vmatpush1.bf16.msra.mxu0 %v3749
    %4756 = vmatprep.subr.bf16.mxu0 %v3758
    %4757 = vmatpush1.bf16.msra.mxu0 %v3757
    %4758 = vmatprep.subr.bf16.mxu0 %v3766
    %4759 = vmatpush1.bf16.msra.mxu0 %v3765
    %4760 = vmatprep.subr.bf16.mxu0 %v3774
    %4761 = vmatpush1.bf16.msra.mxu0 %v3773
    %4762 = vmatprep.subr.bf16.mxu0 %v3782
    %4763 = vmatpush1.bf16.msra.mxu0 %v3781
    %4764 = vmatprep.subr.bf16.mxu0 %v3790
    %4765 = vmatpush1.bf16.msra.mxu0 %v3789
    %4766 = vmatprep.mubr.bf16.mxu0 %v1189
    %4767 = vmatmul.mubr.bf16.gmra.mrb[0].mxu0 %v1188
    %v4768 = vpop.f32.mrb[0].mxu0
    %v4769 = vadd.f32 %v4728, %v4768
    %v4770 = vpop.f32.mrb[0].mxu0
    %v4771 = vadd.f32 %v4730, %v4770
    %v4772 = vpop.f32.mrb[0].mxu0
    %v4773 = vpop.f32.mrb[0].mxu0
    %4774 = vdwg.mxu0
    %4775 = vmatprep.subr.bf16.mxu0 %v3798
    %4776 = vmatpush1.bf16.msra.mxu0 %v3797
    %4777 = vmatprep.subr.bf16.mxu0 %v3806
    %4778 = vmatpush1.bf16.msra.mxu0 %v3805
    %4779 = vmatprep.subr.bf16.mxu0 %v3814
    %4780 = vmatpush1.bf16.msra.mxu0 %v3813
    %4781 = vmatprep.subr.bf16.mxu0 %v3822
    %4782 = vmatpush1.bf16.msra.mxu0 %v3821
    %4783 = vmatprep.subr.bf16.mxu0 %v3830
    %4784 = vmatpush1.bf16.msra.mxu0 %v3829
    %4785 = vmatprep.subr.bf16.mxu0 %v3838
    %4786 = vmatpush1.bf16.msra.mxu0 %v3837
    %4787 = vmatprep.subr.bf16.mxu0 %v3846
    %4788 = vmatpush1.bf16.msra.mxu0 %v3845
    %4789 = vmatprep.subr.bf16.mxu0 %v3854
    %4790 = vmatpush1.bf16.msra.mxu0 %v3853
    %4791 = vmatprep.subr.bf16.mxu0 %v3862
    %4792 = vmatpush1.bf16.msra.mxu0 %v3861
    %4793 = vmatprep.subr.bf16.mxu0 %v3870
    %4794 = vmatpush1.bf16.msra.mxu0 %v3869
    %4795 = vmatprep.subr.bf16.mxu0 %v3878
    %4796 = vmatpush1.bf16.msra.mxu0 %v3877
    %4797 = vmatprep.subr.bf16.mxu0 %v3886
    %4798 = vmatpush1.bf16.msra.mxu0 %v3885
    %4799 = vmatprep.subr.bf16.mxu0 %v3894
    %4800 = vmatpush1.bf16.msra.mxu0 %v3893
    %4801 = vmatprep.subr.bf16.mxu0 %v3902
    %4802 = vmatpush1.bf16.msra.mxu0 %v3901
    %4803 = vmatprep.subr.bf16.mxu0 %v3910
    %4804 = vmatpush1.bf16.msra.mxu0 %v3909
    %4805 = vmatprep.subr.bf16.mxu0 %v3918
    %4806 = vmatpush1.bf16.msra.mxu0 %v3917
    %4807 = vmatprep.mubr.bf16.mxu0 %v1191
    %4808 = vmatmul.mubr.bf16.gmra.mrb[0].mxu0 %v1190
    %v4809 = vpop.f32.mrb[0].mxu0
    %v4810 = vadd.f32 %v4769, %v4809
    %v4811 = vpop.f32.mrb[0].mxu0
    %v4812 = vadd.f32 %v4771, %v4811
    %v4813 = vpop.f32.mrb[0].mxu0
    %v4814 = vpop.f32.mrb[0].mxu0
    %4815 = vdwg.mxu0
    %4816 = vmatprep.subr.bf16.mxu0 %v3926
    %4817 = vmatpush1.bf16.msra.mxu0 %v3925
    %4818 = vmatprep.subr.bf16.mxu0 %v3934
    %4819 = vmatpush1.bf16.msra.mxu0 %v3933
    %4820 = vmatprep.subr.bf16.mxu0 %v3942
    %4821 = vmatpush1.bf16.msra.mxu0 %v3941
    %4822 = vmatprep.subr.bf16.mxu0 %v3950
    %4823 = vmatpush1.bf16.msra.mxu0 %v3949
    %4824 = vmatprep.subr.bf16.mxu0 %v3958
    %4825 = vmatpush1.bf16.msra.mxu0 %v3957
    %4826 = vmatprep.subr.bf16.mxu0 %v3966
    %4827 = vmatpush1.bf16.msra.mxu0 %v3965
    %4828 = vmatprep.subr.bf16.mxu0 %v3974
    %4829 = vmatpush1.bf16.msra.mxu0 %v3973
    %4830 = vmatprep.subr.bf16.mxu0 %v3982
    %4831 = vmatpush1.bf16.msra.mxu0 %v3981
    %4832 = vmatprep.subr.bf16.mxu0 %v3990
    %4833 = vmatpush1.bf16.msra.mxu0 %v3989
    %4834 = vmatprep.subr.bf16.mxu0 %v3998
    %4835 = vmatpush1.bf16.msra.mxu0 %v3997
    %4836 = vmatprep.subr.bf16.mxu0 %v4006
    %4837 = vmatpush1.bf16.msra.mxu0 %v4005
    %4838 = vmatprep.subr.bf16.mxu0 %v4014
    %4839 = vmatpush1.bf16.msra.mxu0 %v4013
    %4840 = vmatprep.subr.bf16.mxu0 %v4022
    %4841 = vmatpush1.bf16.msra.mxu0 %v4021
    %4842 = vmatprep.subr.bf16.mxu0 %v4030
    %4843 = vmatpush1.bf16.msra.mxu0 %v4029
    %4844 = vmatprep.subr.bf16.mxu0 %v4038
    %4845 = vmatpush1.bf16.msra.mxu0 %v4037
    %4846 = vmatprep.subr.bf16.mxu0 %v4046
    %4847 = vmatpush1.bf16.msra.mxu0 %v4045
    %4848 = vmatprep.mubr.bf16.mxu0 %v1193
    %4849 = vmatmul.mubr.bf16.gmra.mrb[0].mxu0 %v1192
    %v4850 = vpop.f32.mrb[0].mxu0
    %v4851 = vadd.f32 %v4810, %v4850
    %v4852 = vpop.f32.mrb[0].mxu0
    %v4853 = vadd.f32 %v4812, %v4852
    %v4854 = vpop.f32.mrb[0].mxu0
    %v4855 = vpop.f32.mrb[0].mxu0
    %4856 = vdwg.mxu0
    %4857 = vmatprep.subr.bf16.mxu0 %v4054
    %4858 = vmatpush1.bf16.msra.mxu0 %v4053
    %4859 = vmatprep.subr.bf16.mxu0 %v4062
    %4860 = vmatpush1.bf16.msra.mxu0 %v4061
    %4861 = vmatprep.subr.bf16.mxu0 %v4070
    %4862 = vmatpush1.bf16.msra.mxu0 %v4069
    %4863 = vmatprep.subr.bf16.mxu0 %v4078
    %4864 = vmatpush1.bf16.msra.mxu0 %v4077
    %4865 = vmatprep.subr.bf16.mxu0 %v4086
    %4866 = vmatpush1.bf16.msra.mxu0 %v4085
    %4867 = vmatprep.subr.bf16.mxu0 %v4094
    %4868 = vmatpush1.bf16.msra.mxu0 %v4093
    %4869 = vmatprep.subr.bf16.mxu0 %v4102
    %4870 = vmatpush1.bf16.msra.mxu0 %v4101
    %4871 = vmatprep.subr.bf16.mxu0 %v4110
    %4872 = vmatpush1.bf16.msra.mxu0 %v4109
    %4873 = vmatprep.subr.bf16.mxu0 0
    %4874 = vmatpush1.bf16.msra.mxu0 0
    %4875 = vmatprep.subr.bf16.mxu0 0
    %4876 = vmatpush1.bf16.msra.mxu0 0
    %4877 = vmatprep.subr.bf16.mxu0 0
    %4878 = vmatpush1.bf16.msra.mxu0 0
    %4879 = vmatprep.subr.bf16.mxu0 0
    %4880 = vmatpush1.bf16.msra.mxu0 0
    %4881 = vmatprep.subr.bf16.mxu0 0
    %4882 = vmatpush1.bf16.msra.mxu0 0
    %4883 = vmatprep.subr.bf16.mxu0 0
    %4884 = vmatpush1.bf16.msra.mxu0 0
    %4885 = vmatprep.subr.bf16.mxu0 0
    %4886 = vmatpush1.bf16.msra.mxu0 0
    %4887 = vmatprep.subr.bf16.mxu0 0
    %4888 = vmatpush1.bf16.msra.mxu0 0
    %4889 = vmatprep.mubr.bf16.mxu0 0
    %4890 = vmatmul.mubr.bf16.gmra.mrb[0].mxu0 %v1194
    %v4891 = vpop.f32.mrb[0].mxu0
    %v4892 = vadd.f32 %v4851, %v4891
    %v4893 = vpop.f32.mrb[0].mxu0
    %v4894 = vadd.f32 %v4853, %v4893
    %v4895 = vpop.f32.mrb[0].mxu0
    %v4896 = vpop.f32.mrb[0].mxu0
    %4897 = vdwg.mxu0
    %4898 = vmatprep.subr.bf16.mxu0 %v3544
    %4899 = vmatpush1.bf16.msra.mxu0 %v3543
    %4900 = vmatprep.subr.bf16.mxu0 %v3552
    %4901 = vmatpush1.bf16.msra.mxu0 %v3551
    %4902 = vmatprep.subr.bf16.mxu0 %v3560
    %4903 = vmatpush1.bf16.msra.mxu0 %v3559
    %4904 = vmatprep.subr.bf16.mxu0 %v3568
    %4905 = vmatpush1.bf16.msra.mxu0 %v3567
    %4906 = vmatprep.subr.bf16.mxu0 %v3576
    %4907 = vmatpush1.bf16.msra.mxu0 %v3575
    %4908 = vmatprep.subr.bf16.mxu0 %v3584
    %4909 = vmatpush1.bf16.msra.mxu0 %v3583
    %4910 = vmatprep.subr.bf16.mxu0 %v3592
    %4911 = vmatpush1.bf16.msra.mxu0 %v3591
    %4912 = vmatprep.subr.bf16.mxu0 %v3600
    %4913 = vmatpush1.bf16.msra.mxu0 %v3599
    %4914 = vmatprep.subr.bf16.mxu0 %v3608
    %4915 = vmatpush1.bf16.msra.mxu0 %v3607
    %4916 = vmatprep.subr.bf16.mxu0 %v3616
    %4917 = vmatpush1.bf16.msra.mxu0 %v3615
    %4918 = vmatprep.subr.bf16.mxu0 %v3624
    %4919 = vmatpush1.bf16.msra.mxu0 %v3623
    %4920 = vmatprep.subr.bf16.mxu0 %v3632
    %4921 = vmatpush1.bf16.msra.mxu0 %v3631
    %4922 = vmatprep.subr.bf16.mxu0 %v3640
    %4923 = vmatpush1.bf16.msra.mxu0 %v3639
    %4924 = vmatprep.subr.bf16.mxu0 %v3648
    %4925 = vmatpush1.bf16.msra.mxu0 %v3647
    %4926 = vmatprep.subr.bf16.mxu0 %v3656
    %4927 = vmatpush1.bf16.msra.mxu0 %v3655
    %4928 = vmatprep.subr.bf16.mxu0 %v3664
    %4929 = vmatpush1.bf16.msra.mxu0 %v3663
    %4930 = vmatprep.mubr.bf16.mxu0 %v1187
    %4931 = vmatmul.mubr.bf16.gmra.mrb[0].mxu0 %v1186
    %v4932 = vpop.f32.mrb[0].mxu0
    %v4933 = vadd.f32 %v1784, %v4932
    %v4934 = vpop.f32.mrb[0].mxu0
    %v4935 = vadd.f32 %v1788, %v4934
    %v4936 = vpop.f32.mrb[0].mxu0
    %v4937 = vpop.f32.mrb[0].mxu0
    %4938 = vdwg.mxu0
    %4939 = vmatprep.subr.bf16.mxu0 %v3672
    %4940 = vmatpush1.bf16.msra.mxu0 %v3671
    %4941 = vmatprep.subr.bf16.mxu0 %v3680
    %4942 = vmatpush1.bf16.msra.mxu0 %v3679
    %4943 = vmatprep.subr.bf16.mxu0 %v3688
    %4944 = vmatpush1.bf16.msra.mxu0 %v3687
    %4945 = vmatprep.subr.bf16.mxu0 %v3696
    %4946 = vmatpush1.bf16.msra.mxu0 %v3695
    %4947 = vmatprep.subr.bf16.mxu0 %v3704
    %4948 = vmatpush1.bf16.msra.mxu0 %v3703
    %4949 = vmatprep.subr.bf16.mxu0 %v3712
    %4950 = vmatpush1.bf16.msra.mxu0 %v3711
    %4951 = vmatprep.subr.bf16.mxu0 %v3720
    %4952 = vmatpush1.bf16.msra.mxu0 %v3719
    %4953 = vmatprep.subr.bf16.mxu0 %v3728
    %4954 = vmatpush1.bf16.msra.mxu0 %v3727
    %4955 = vmatprep.subr.bf16.mxu0 %v3736
    %4956 = vmatpush1.bf16.msra.mxu0 %v3735
    %4957 = vmatprep.subr.bf16.mxu0 %v3744
    %4958 = vmatpush1.bf16.msra.mxu0 %v3743
    %4959 = vmatprep.subr.bf16.mxu0 %v3752
    %4960 = vmatpush1.bf16.msra.mxu0 %v3751
    %4961 = vmatprep.subr.bf16.mxu0 %v3760
    %4962 = vmatpush1.bf16.msra.mxu0 %v3759
    %4963 = vmatprep.subr.bf16.mxu0 %v3768
    %4964 = vmatpush1.bf16.msra.mxu0 %v3767
    %4965 = vmatprep.subr.bf16.mxu0 %v3776
    %4966 = vmatpush1.bf16.msra.mxu0 %v3775
    %4967 = vmatprep.subr.bf16.mxu0 %v3784
    %4968 = vmatpush1.bf16.msra.mxu0 %v3783
    %4969 = vmatprep.subr.bf16.mxu0 %v3792
    %4970 = vmatpush1.bf16.msra.mxu0 %v3791
    %4971 = vmatprep.mubr.bf16.mxu0 %v1189
    %4972 = vmatmul.mubr.bf16.gmra.mrb[0].mxu0 %v1188
    %v4973 = vpop.f32.mrb[0].mxu0
    %v4974 = vadd.f32 %v4933, %v4973
    %v4975 = vpop.f32.mrb[0].mxu0
    %v4976 = vadd.f32 %v4935, %v4975
    %v4977 = vpop.f32.mrb[0].mxu0
    %v4978 = vpop.f32.mrb[0].mxu0
    %4979 = vdwg.mxu0
    %4980 = vmatprep.subr.bf16.mxu0 %v3800
    %4981 = vmatpush1.bf16.msra.mxu0 %v3799
    %4982 = vmatprep.subr.bf16.mxu0 %v3808
    %4983 = vmatpush1.bf16.msra.mxu0 %v3807
    %4984 = vmatprep.subr.bf16.mxu0 %v3816
    %4985 = vmatpush1.bf16.msra.mxu0 %v3815
    %4986 = vmatprep.subr.bf16.mxu0 %v3824
    %4987 = vmatpush1.bf16.msra.mxu0 %v3823
    %4988 = vmatprep.subr.bf16.mxu0 %v3832
    %4989 = vmatpush1.bf16.msra.mxu0 %v3831
    %4990 = vmatprep.subr.bf16.mxu0 %v3840
    %4991 = vmatpush1.bf16.msra.mxu0 %v3839
    %4992 = vmatprep.subr.bf16.mxu0 %v3848
    %4993 = vmatpush1.bf16.msra.mxu0 %v3847
    %4994 = vmatprep.subr.bf16.mxu0 %v3856
    %4995 = vmatpush1.bf16.msra.mxu0 %v3855
    %4996 = vmatprep.subr.bf16.mxu0 %v3864
    %4997 = vmatpush1.bf16.msra.mxu0 %v3863
    %4998 = vmatprep.subr.bf16.mxu0 %v3872
    %4999 = vmatpush1.bf16.msra.mxu0 %v3871
    %5000 = vmatprep.subr.bf16.mxu0 %v3880
    %5001 = vmatpush1.bf16.msra.mxu0 %v3879
    %5002 = vmatprep.subr.bf16.mxu0 %v3888
    %5003 = vmatpush1.bf16.msra.mxu0 %v3887
    %5004 = vmatprep.subr.bf16.mxu0 %v3896
    %5005 = vmatpush1.bf16.msra.mxu0 %v3895
    %5006 = vmatprep.subr.bf16.mxu0 %v3904
    %5007 = vmatpush1.bf16.msra.mxu0 %v3903
    %5008 = vmatprep.subr.bf16.mxu0 %v3912
    %5009 = vmatpush1.bf16.msra.mxu0 %v3911
    %5010 = vmatprep.subr.bf16.mxu0 %v3920
    %5011 = vmatpush1.bf16.msra.mxu0 %v3919
    %5012 = vmatprep.mubr.bf16.mxu0 %v1191
    %5013 = vmatmul.mubr.bf16.gmra.mrb[0].mxu0 %v1190
    %v5014 = vpop.f32.mrb[0].mxu0
    %v5015 = vadd.f32 %v4974, %v5014
    %v5016 = vpop.f32.mrb[0].mxu0
    %v5017 = vadd.f32 %v4976, %v5016
    %v5018 = vpop.f32.mrb[0].mxu0
    %v5019 = vpop.f32.mrb[0].mxu0
    %5020 = vdwg.mxu0
    %5021 = vmatprep.subr.bf16.mxu0 %v3928
    %5022 = vmatpush1.bf16.msra.mxu0 %v3927
    %5023 = vmatprep.subr.bf16.mxu0 %v3936
    %5024 = vmatpush1.bf16.msra.mxu0 %v3935
    %5025 = vmatprep.subr.bf16.mxu0 %v3944
    %5026 = vmatpush1.bf16.msra.mxu0 %v3943
    %5027 = vmatprep.subr.bf16.mxu0 %v3952
    %5028 = vmatpush1.bf16.msra.mxu0 %v3951
    %5029 = vmatprep.subr.bf16.mxu0 %v3960
    %5030 = vmatpush1.bf16.msra.mxu0 %v3959
    %5031 = vmatprep.subr.bf16.mxu0 %v3968
    %5032 = vmatpush1.bf16.msra.mxu0 %v3967
    %5033 = vmatprep.subr.bf16.mxu0 %v3976
    %5034 = vmatpush1.bf16.msra.mxu0 %v3975
    %5035 = vmatprep.subr.bf16.mxu0 %v3984
    %5036 = vmatpush1.bf16.msra.mxu0 %v3983
    %5037 = vmatprep.subr.bf16.mxu0 %v3992
    %5038 = vmatpush1.bf16.msra.mxu0 %v3991
    %5039 = vmatprep.subr.bf16.mxu0 %v4000
    %5040 = vmatpush1.bf16.msra.mxu0 %v3999
    %5041 = vmatprep.subr.bf16.mxu0 %v4008
    %5042 = vmatpush1.bf16.msra.mxu0 %v4007
    %5043 = vmatprep.subr.bf16.mxu0 %v4016
    %5044 = vmatpush1.bf16.msra.mxu0 %v4015
    %5045 = vmatprep.subr.bf16.mxu0 %v4024
    %5046 = vmatpush1.bf16.msra.mxu0 %v4023
    %5047 = vmatprep.subr.bf16.mxu0 %v4032
    %5048 = vmatpush1.bf16.msra.mxu0 %v4031
    %5049 = vmatprep.subr.bf16.mxu0 %v4040
    %5050 = vmatpush1.bf16.msra.mxu0 %v4039
    %5051 = vmatprep.subr.bf16.mxu0 %v4048
    %5052 = vmatpush1.bf16.msra.mxu0 %v4047
    %5053 = vmatprep.mubr.bf16.mxu0 %v1193
    %5054 = vmatmul.mubr.bf16.gmra.mrb[0].mxu0 %v1192
    %v5055 = vpop.f32.mrb[0].mxu0
    %v5056 = vadd.f32 %v5015, %v5055
    %v5057 = vpop.f32.mrb[0].mxu0
    %v5058 = vadd.f32 %v5017, %v5057
    %v5059 = vpop.f32.mrb[0].mxu0
    %v5060 = vpop.f32.mrb[0].mxu0
    %5061 = vdwg.mxu0
    %5062 = vmatprep.subr.bf16.mxu0 %v4056
    %5063 = vmatpush1.bf16.msra.mxu0 %v4055
    %5064 = vmatprep.subr.bf16.mxu0 %v4064
    %5065 = vmatpush1.bf16.msra.mxu0 %v4063
    %5066 = vmatprep.subr.bf16.mxu0 %v4072
    %5067 = vmatpush1.bf16.msra.mxu0 %v4071
    %5068 = vmatprep.subr.bf16.mxu0 %v4080
    %5069 = vmatpush1.bf16.msra.mxu0 %v4079
    %5070 = vmatprep.subr.bf16.mxu0 %v4088
    %5071 = vmatpush1.bf16.msra.mxu0 %v4087
    %5072 = vmatprep.subr.bf16.mxu0 %v4096
    %5073 = vmatpush1.bf16.msra.mxu0 %v4095
    %5074 = vmatprep.subr.bf16.mxu0 %v4104
    %5075 = vmatpush1.bf16.msra.mxu0 %v4103
    %5076 = vmatprep.subr.bf16.mxu0 %v4112
    %5077 = vmatpush1.bf16.msra.mxu0 %v4111
    %5078 = vmatprep.subr.bf16.mxu0 0
    %5079 = vmatpush1.bf16.msra.mxu0 0
    %5080 = vmatprep.subr.bf16.mxu0 0
    %5081 = vmatpush1.bf16.msra.mxu0 0
    %5082 = vmatprep.subr.bf16.mxu0 0
    %5083 = vmatpush1.bf16.msra.mxu0 0
    %5084 = vmatprep.subr.bf16.mxu0 0
    %5085 = vmatpush1.bf16.msra.mxu0 0
    %5086 = vmatprep.subr.bf16.mxu0 0
    %5087 = vmatpush1.bf16.msra.mxu0 0
    %5088 = vmatprep.subr.bf16.mxu0 0
    %5089 = vmatpush1.bf16.msra.mxu0 0
    %5090 = vmatprep.subr.bf16.mxu0 0
    %5091 = vmatpush1.bf16.msra.mxu0 0
    %5092 = vmatprep.subr.bf16.mxu0 0
    %5093 = vmatpush1.bf16.msra.mxu0 0
    %5094 = vmatprep.mubr.bf16.mxu0 0
    %5095 = vmatmul.mubr.bf16.gmra.mrb[0].mxu0 %v1194
    %v5096 = vpop.f32.mrb[0].mxu0
    %v5097 = vadd.f32 %v5056, %v5096
    %v5098 = vpop.f32.mrb[0].mxu0
    %v5099 = vadd.f32 %v5058, %v5098
    %v5100 = vpop.f32.mrb[0].mxu0
    %v5101 = vpop.f32.mrb[0].mxu0
    %5102 = vdwg.mxu0
    %5103 = vmatprep.subr.bf16.mxu0 %v3546
    %5104 = vmatpush1.bf16.msra.mxu0 %v3545
    %5105 = vmatprep.subr.bf16.mxu0 %v3554
    %5106 = vmatpush1.bf16.msra.mxu0 %v3553
    %5107 = vmatprep.subr.bf16.mxu0 %v3562
    %5108 = vmatpush1.bf16.msra.mxu0 %v3561
    %5109 = vmatprep.subr.bf16.mxu0 %v3570
    %5110 = vmatpush1.bf16.msra.mxu0 %v3569
    %5111 = vmatprep.subr.bf16.mxu0 %v3578
    %5112 = vmatpush1.bf16.msra.mxu0 %v3577
    %5113 = vmatprep.subr.bf16.mxu0 %v3586
    %5114 = vmatpush1.bf16.msra.mxu0 %v3585
    %5115 = vmatprep.subr.bf16.mxu0 %v3594
    %5116 = vmatpush1.bf16.msra.mxu0 %v3593
    %5117 = vmatprep.subr.bf16.mxu0 %v3602
    %5118 = vmatpush1.bf16.msra.mxu0 %v3601
    %5119 = vmatprep.subr.bf16.mxu0 %v3610
    %5120 = vmatpush1.bf16.msra.mxu0 %v3609
    %5121 = vmatprep.subr.bf16.mxu0 %v3618
    %5122 = vmatpush1.bf16.msra.mxu0 %v3617
    %5123 = vmatprep.subr.bf16.mxu0 %v3626
    %5124 = vmatpush1.bf16.msra.mxu0 %v3625
    %5125 = vmatprep.subr.bf16.mxu0 %v3634
    %5126 = vmatpush1.bf16.msra.mxu0 %v3633
    %5127 = vmatprep.subr.bf16.mxu0 %v3642
    %5128 = vmatpush1.bf16.msra.mxu0 %v3641
    %5129 = vmatprep.subr.bf16.mxu0 %v3650
    %5130 = vmatpush1.bf16.msra.mxu0 %v3649
    %5131 = vmatprep.subr.bf16.mxu0 %v3658
    %5132 = vmatpush1.bf16.msra.mxu0 %v3657
    %5133 = vmatprep.subr.bf16.mxu0 %v3666
    %5134 = vmatpush1.bf16.msra.mxu0 %v3665
    %5135 = vmatprep.mubr.bf16.mxu0 %v1187
    %5136 = vmatmul.mubr.bf16.gmra.mrb[0].mxu0 %v1186
    %v5137 = vpop.f32.mrb[0].mxu0
    %v5138 = vadd.f32 %v1792, %v5137
    %v5139 = vpop.f32.mrb[0].mxu0
    %v5140 = vadd.f32 %v1796, %v5139
    %v5141 = vpop.f32.mrb[0].mxu0
    %v5142 = vpop.f32.mrb[0].mxu0
    %5143 = vdwg.mxu0
    %5144 = vmatprep.subr.bf16.mxu0 %v3674
    %5145 = vmatpush1.bf16.msra.mxu0 %v3673
    %5146 = vmatprep.subr.bf16.mxu0 %v3682
    %5147 = vmatpush1.bf16.msra.mxu0 %v3681
    %5148 = vmatprep.subr.bf16.mxu0 %v3690
    %5149 = vmatpush1.bf16.msra.mxu0 %v3689
    %5150 = vmatprep.subr.bf16.mxu0 %v3698
    %5151 = vmatpush1.bf16.msra.mxu0 %v3697
    %5152 = vmatprep.subr.bf16.mxu0 %v3706
    %5153 = vmatpush1.bf16.msra.mxu0 %v3705
    %5154 = vmatprep.subr.bf16.mxu0 %v3714
    %5155 = vmatpush1.bf16.msra.mxu0 %v3713
    %5156 = vmatprep.subr.bf16.mxu0 %v3722
    %5157 = vmatpush1.bf16.msra.mxu0 %v3721
    %5158 = vmatprep.subr.bf16.mxu0 %v3730
    %5159 = vmatpush1.bf16.msra.mxu0 %v3729
    %5160 = vmatprep.subr.bf16.mxu0 %v3738
    %5161 = vmatpush1.bf16.msra.mxu0 %v3737
    %5162 = vmatprep.subr.bf16.mxu0 %v3746
    %5163 = vmatpush1.bf16.msra.mxu0 %v3745
    %5164 = vmatprep.subr.bf16.mxu0 %v3754
    %5165 = vmatpush1.bf16.msra.mxu0 %v3753
    %5166 = vmatprep.subr.bf16.mxu0 %v3762
    %5167 = vmatpush1.bf16.msra.mxu0 %v3761
    %5168 = vmatprep.subr.bf16.mxu0 %v3770
    %5169 = vmatpush1.bf16.msra.mxu0 %v3769
    %5170 = vmatprep.subr.bf16.mxu0 %v3778
    %5171 = vmatpush1.bf16.msra.mxu0 %v3777
    %5172 = vmatprep.subr.bf16.mxu0 %v3786
    %5173 = vmatpush1.bf16.msra.mxu0 %v3785
    %5174 = vmatprep.subr.bf16.mxu0 %v3794
    %5175 = vmatpush1.bf16.msra.mxu0 %v3793
    %5176 = vmatprep.mubr.bf16.mxu0 %v1189
    %5177 = vmatmul.mubr.bf16.gmra.mrb[0].mxu0 %v1188
    %v5178 = vpop.f32.mrb[0].mxu0
    %v5179 = vadd.f32 %v5138, %v5178
    %v5180 = vpop.f32.mrb[0].mxu0
    %v5181 = vadd.f32 %v5140, %v5180
    %v5182 = vpop.f32.mrb[0].mxu0
    %v5183 = vpop.f32.mrb[0].mxu0
    %5184 = vdwg.mxu0
    %5185 = vmatprep.subr.bf16.mxu0 %v3802
    %5186 = vmatpush1.bf16.msra.mxu0 %v3801
    %5187 = vmatprep.subr.bf16.mxu0 %v3810
    %5188 = vmatpush1.bf16.msra.mxu0 %v3809
    %5189 = vmatprep.subr.bf16.mxu0 %v3818
    %5190 = vmatpush1.bf16.msra.mxu0 %v3817
    %5191 = vmatprep.subr.bf16.mxu0 %v3826
    %5192 = vmatpush1.bf16.msra.mxu0 %v3825
    %5193 = vmatprep.subr.bf16.mxu0 %v3834
    %5194 = vmatpush1.bf16.msra.mxu0 %v3833
    %5195 = vmatprep.subr.bf16.mxu0 %v3842
    %5196 = vmatpush1.bf16.msra.mxu0 %v3841
    %5197 = vmatprep.subr.bf16.mxu0 %v3850
    %5198 = vmatpush1.bf16.msra.mxu0 %v3849
    %5199 = vmatprep.subr.bf16.mxu0 %v3858
    %5200 = vmatpush1.bf16.msra.mxu0 %v3857
    %5201 = vmatprep.subr.bf16.mxu0 %v3866
    %5202 = vmatpush1.bf16.msra.mxu0 %v3865
    %5203 = vmatprep.subr.bf16.mxu0 %v3874
    %5204 = vmatpush1.bf16.msra.mxu0 %v3873
    %5205 = vmatprep.subr.bf16.mxu0 %v3882
    %5206 = vmatpush1.bf16.msra.mxu0 %v3881
    %5207 = vmatprep.subr.bf16.mxu0 %v3890
    %5208 = vmatpush1.bf16.msra.mxu0 %v3889
    %5209 = vmatprep.subr.bf16.mxu0 %v3898
    %5210 = vmatpush1.bf16.msra.mxu0 %v3897
    %5211 = vmatprep.subr.bf16.mxu0 %v3906
    %5212 = vmatpush1.bf16.msra.mxu0 %v3905
    %5213 = vmatprep.subr.bf16.mxu0 %v3914
    %5214 = vmatpush1.bf16.msra.mxu0 %v3913
    %5215 = vmatprep.subr.bf16.mxu0 %v3922
    %5216 = vmatpush1.bf16.msra.mxu0 %v3921
    %5217 = vmatprep.mubr.bf16.mxu0 %v1191
    %5218 = vmatmul.mubr.bf16.gmra.mrb[0].mxu0 %v1190
    %v5219 = vpop.f32.mrb[0].mxu0
    %v5220 = vadd.f32 %v5179, %v5219
    %v5221 = vpop.f32.mrb[0].mxu0
    %v5222 = vadd.f32 %v5181, %v5221
    %v5223 = vpop.f32.mrb[0].mxu0
    %v5224 = vpop.f32.mrb[0].mxu0
    %5225 = vdwg.mxu0
    %5226 = vmatprep.subr.bf16.mxu0 %v3930
    %5227 = vmatpush1.bf16.msra.mxu0 %v3929
    %5228 = vmatprep.subr.bf16.mxu0 %v3938
    %5229 = vmatpush1.bf16.msra.mxu0 %v3937
    %5230 = vmatprep.subr.bf16.mxu0 %v3946
    %5231 = vmatpush1.bf16.msra.mxu0 %v3945
    %5232 = vmatprep.subr.bf16.mxu0 %v3954
    %5233 = vmatpush1.bf16.msra.mxu0 %v3953
    %5234 = vmatprep.subr.bf16.mxu0 %v3962
    %5235 = vmatpush1.bf16.msra.mxu0 %v3961
    %5236 = vmatprep.subr.bf16.mxu0 %v3970
    %5237 = vmatpush1.bf16.msra.mxu0 %v3969
    %5238 = vmatprep.subr.bf16.mxu0 %v3978
    %5239 = vmatpush1.bf16.msra.mxu0 %v3977
    %5240 = vmatprep.subr.bf16.mxu0 %v3986
    %5241 = vmatpush1.bf16.msra.mxu0 %v3985
    %5242 = vmatprep.subr.bf16.mxu0 %v3994
    %5243 = vmatpush1.bf16.msra.mxu0 %v3993
    %5244 = vmatprep.subr.bf16.mxu0 %v4002
    %5245 = vmatpush1.bf16.msra.mxu0 %v4001
    %5246 = vmatprep.subr.bf16.mxu0 %v4010
    %5247 = vmatpush1.bf16.msra.mxu0 %v4009
    %5248 = vmatprep.subr.bf16.mxu0 %v4018
    %5249 = vmatpush1.bf16.msra.mxu0 %v4017
    %5250 = vmatprep.subr.bf16.mxu0 %v4026
    %5251 = vmatpush1.bf16.msra.mxu0 %v4025
    %5252 = vmatprep.subr.bf16.mxu0 %v4034
    %5253 = vmatpush1.bf16.msra.mxu0 %v4033
    %5254 = vmatprep.subr.bf16.mxu0 %v4042
    %5255 = vmatpush1.bf16.msra.mxu0 %v4041
    %5256 = vmatprep.subr.bf16.mxu0 %v4050
    %5257 = vmatpush1.bf16.msra.mxu0 %v4049
    %5258 = vmatprep.mubr.bf16.mxu0 %v1193
    %5259 = vmatmul.mubr.bf16.gmra.mrb[0].mxu0 %v1192
    %v5260 = vpop.f32.mrb[0].mxu0
    %v5261 = vadd.f32 %v5220, %v5260
    %v5262 = vpop.f32.mrb[0].mxu0
    %v5263 = vadd.f32 %v5222, %v5262
    %v5264 = vpop.f32.mrb[0].mxu0
    %v5265 = vpop.f32.mrb[0].mxu0
    %5266 = vdwg.mxu0
    %5267 = vmatprep.subr.bf16.mxu0 %v4058
    %5268 = vmatpush1.bf16.msra.mxu0 %v4057
    %5269 = vmatprep.subr.bf16.mxu0 %v4066
    %5270 = vmatpush1.bf16.msra.mxu0 %v4065
    %5271 = vmatprep.subr.bf16.mxu0 %v4074
    %5272 = vmatpush1.bf16.msra.mxu0 %v4073
    %5273 = vmatprep.subr.bf16.mxu0 %v4082
    %5274 = vmatpush1.bf16.msra.mxu0 %v4081
    %5275 = vmatprep.subr.bf16.mxu0 %v4090
    %5276 = vmatpush1.bf16.msra.mxu0 %v4089
    %5277 = vmatprep.subr.bf16.mxu0 %v4098
    %5278 = vmatpush1.bf16.msra.mxu0 %v4097
    %5279 = vmatprep.subr.bf16.mxu0 %v4106
    %5280 = vmatpush1.bf16.msra.mxu0 %v4105
    %5281 = vmatprep.subr.bf16.mxu0 %v4114
    %5282 = vmatpush1.bf16.msra.mxu0 %v4113
    %5283 = vmatprep.subr.bf16.mxu0 0
    %5284 = vmatpush1.bf16.msra.mxu0 0
    %5285 = vmatprep.subr.bf16.mxu0 0
    %5286 = vmatpush1.bf16.msra.mxu0 0
    %5287 = vmatprep.subr.bf16.mxu0 0
    %5288 = vmatpush1.bf16.msra.mxu0 0
    %5289 = vmatprep.subr.bf16.mxu0 0
    %5290 = vmatpush1.bf16.msra.mxu0 0
    %5291 = vmatprep.subr.bf16.mxu0 0
    %5292 = vmatpush1.bf16.msra.mxu0 0
    %5293 = vmatprep.subr.bf16.mxu0 0
    %5294 = vmatpush1.bf16.msra.mxu0 0
    %5295 = vmatprep.subr.bf16.mxu0 0
    %5296 = vmatpush1.bf16.msra.mxu0 0
    %5297 = vmatprep.subr.bf16.mxu0 0
    %5298 = vmatpush1.bf16.msra.mxu0 0
    %5299 = vmatprep.mubr.bf16.mxu0 0
    %5300 = vmatmul.mubr.bf16.gmra.mrb[0].mxu0 %v1194
    %v5301 = vpop.f32.mrb[0].mxu0
    %v5302 = vadd.f32 %v5261, %v5301
    %v5303 = vpop.f32.mrb[0].mxu0
    %v5304 = vadd.f32 %v5263, %v5303
    %v5305 = vpop.f32.mrb[0].mxu0
    %v5306 = vpop.f32.mrb[0].mxu0
    %5307 = vdwg.mxu0
    %5308 = vmatprep.subr.bf16.mxu0 %v3548
    %5309 = vmatpush1.bf16.msra.mxu0 %v3547
    %5310 = vmatprep.subr.bf16.mxu0 %v3556
    %5311 = vmatpush1.bf16.msra.mxu0 %v3555
    %5312 = vmatprep.subr.bf16.mxu0 %v3564
    %5313 = vmatpush1.bf16.msra.mxu0 %v3563
    %5314 = vmatprep.subr.bf16.mxu0 %v3572
    %5315 = vmatpush1.bf16.msra.mxu0 %v3571
    %5316 = vmatprep.subr.bf16.mxu0 %v3580
    %5317 = vmatpush1.bf16.msra.mxu0 %v3579
    %5318 = vmatprep.subr.bf16.mxu0 %v3588
    %5319 = vmatpush1.bf16.msra.mxu0 %v3587
    %5320 = vmatprep.subr.bf16.mxu0 %v3596
    %5321 = vmatpush1.bf16.msra.mxu0 %v3595
    %5322 = vmatprep.subr.bf16.mxu0 %v3604
    %5323 = vmatpush1.bf16.msra.mxu0 %v3603
    %5324 = vmatprep.subr.bf16.mxu0 %v3612
    %5325 = vmatpush1.bf16.msra.mxu0 %v3611
    %5326 = vmatprep.subr.bf16.mxu0 %v3620
    %5327 = vmatpush1.bf16.msra.mxu0 %v3619
    %5328 = vmatprep.subr.bf16.mxu0 %v3628
    %5329 = vmatpush1.bf16.msra.mxu0 %v3627
    %5330 = vmatprep.subr.bf16.mxu0 %v3636
    %5331 = vmatpush1.bf16.msra.mxu0 %v3635
    %5332 = vmatprep.subr.bf16.mxu0 %v3644
    %5333 = vmatpush1.bf16.msra.mxu0 %v3643
    %5334 = vmatprep.subr.bf16.mxu0 %v3652
    %5335 = vmatpush1.bf16.msra.mxu0 %v3651
    %5336 = vmatprep.subr.bf16.mxu0 %v3660
    %5337 = vmatpush1.bf16.msra.mxu0 %v3659
    %5338 = vmatprep.subr.bf16.mxu0 %v3668
    %5339 = vmatpush1.bf16.msra.mxu0 %v3667
    %5340 = vmatprep.mubr.bf16.mxu0 %v1187
    %5341 = vmatmul.mubr.bf16.gmra.mrb[0].mxu0 %v1186
    %v5342 = vpop.f32.mrb[0].mxu0
    %v5343 = vadd.f32 %v1800, %v5342
    %v5344 = vpop.f32.mrb[0].mxu0
    %v5345 = vadd.f32 %v1804, %v5344
    %v5346 = vpop.f32.mrb[0].mxu0
    %v5347 = vpop.f32.mrb[0].mxu0
    %5348 = vdwg.mxu0
    %5349 = vmatprep.subr.bf16.mxu0 %v3676
    %5350 = vmatpush1.bf16.msra.mxu0 %v3675
    %5351 = vmatprep.subr.bf16.mxu0 %v3684
    %5352 = vmatpush1.bf16.msra.mxu0 %v3683
    %5353 = vmatprep.subr.bf16.mxu0 %v3692
    %5354 = vmatpush1.bf16.msra.mxu0 %v3691
    %5355 = vmatprep.subr.bf16.mxu0 %v3700
    %5356 = vmatpush1.bf16.msra.mxu0 %v3699
    %5357 = vmatprep.subr.bf16.mxu0 %v3708
    %5358 = vmatpush1.bf16.msra.mxu0 %v3707
    %5359 = vmatprep.subr.bf16.mxu0 %v3716
    %5360 = vmatpush1.bf16.msra.mxu0 %v3715
    %5361 = vmatprep.subr.bf16.mxu0 %v3724
    %5362 = vmatpush1.bf16.msra.mxu0 %v3723
    %5363 = vmatprep.subr.bf16.mxu0 %v3732
    %5364 = vmatpush1.bf16.msra.mxu0 %v3731
    %5365 = vmatprep.subr.bf16.mxu0 %v3740
    %5366 = vmatpush1.bf16.msra.mxu0 %v3739
    %5367 = vmatprep.subr.bf16.mxu0 %v3748
    %5368 = vmatpush1.bf16.msra.mxu0 %v3747
    %5369 = vmatprep.subr.bf16.mxu0 %v3756
    %5370 = vmatpush1.bf16.msra.mxu0 %v3755
    %5371 = vmatprep.subr.bf16.mxu0 %v3764
    %5372 = vmatpush1.bf16.msra.mxu0 %v3763
    %5373 = vmatprep.subr.bf16.mxu0 %v3772
    %5374 = vmatpush1.bf16.msra.mxu0 %v3771
    %5375 = vmatprep.subr.bf16.mxu0 %v3780
    %5376 = vmatpush1.bf16.msra.mxu0 %v3779
    %5377 = vmatprep.subr.bf16.mxu0 %v3788
    %5378 = vmatpush1.bf16.msra.mxu0 %v3787
    %5379 = vmatprep.subr.bf16.mxu0 %v3796
    %5380 = vmatpush1.bf16.msra.mxu0 %v3795
    %5381 = vmatprep.mubr.bf16.mxu0 %v1189
    %5382 = vmatmul.mubr.bf16.gmra.mrb[0].mxu0 %v1188
    %v5383 = vpop.f32.mrb[0].mxu0
    %v5384 = vadd.f32 %v5343, %v5383
    %v5385 = vpop.f32.mrb[0].mxu0
    %v5386 = vadd.f32 %v5345, %v5385
    %v5387 = vpop.f32.mrb[0].mxu0
    %v5388 = vpop.f32.mrb[0].mxu0
    %5389 = vdwg.mxu0
    %5390 = vmatprep.subr.bf16.mxu0 %v3804
    %5391 = vmatpush1.bf16.msra.mxu0 %v3803
    %5392 = vmatprep.subr.bf16.mxu0 %v3812
    %5393 = vmatpush1.bf16.msra.mxu0 %v3811
    %5394 = vmatprep.subr.bf16.mxu0 %v3820
    %5395 = vmatpush1.bf16.msra.mxu0 %v3819
    %5396 = vmatprep.subr.bf16.mxu0 %v3828
    %5397 = vmatpush1.bf16.msra.mxu0 %v3827
    %5398 = vmatprep.subr.bf16.mxu0 %v3836
    %5399 = vmatpush1.bf16.msra.mxu0 %v3835
    %5400 = vmatprep.subr.bf16.mxu0 %v3844
    %5401 = vmatpush1.bf16.msra.mxu0 %v3843
    %5402 = vmatprep.subr.bf16.mxu0 %v3852
    %5403 = vmatpush1.bf16.msra.mxu0 %v3851
    %5404 = vmatprep.subr.bf16.mxu0 %v3860
    %5405 = vmatpush1.bf16.msra.mxu0 %v3859
    %5406 = vmatprep.subr.bf16.mxu0 %v3868
    %5407 = vmatpush1.bf16.msra.mxu0 %v3867
    %5408 = vmatprep.subr.bf16.mxu0 %v3876
    %5409 = vmatpush1.bf16.msra.mxu0 %v3875
    %5410 = vmatprep.subr.bf16.mxu0 %v3884
    %5411 = vmatpush1.bf16.msra.mxu0 %v3883
    %5412 = vmatprep.subr.bf16.mxu0 %v3892
    %5413 = vmatpush1.bf16.msra.mxu0 %v3891
    %5414 = vmatprep.subr.bf16.mxu0 %v3900
    %5415 = vmatpush1.bf16.msra.mxu0 %v3899
    %5416 = vmatprep.subr.bf16.mxu0 %v3908
    %5417 = vmatpush1.bf16.msra.mxu0 %v3907
    %5418 = vmatprep.subr.bf16.mxu0 %v3916
    %5419 = vmatpush1.bf16.msra.mxu0 %v3915
    %5420 = vmatprep.subr.bf16.mxu0 %v3924
    %5421 = vmatpush1.bf16.msra.mxu0 %v3923
    %5422 = vmatprep.mubr.bf16.mxu0 %v1191
    %5423 = vmatmul.mubr.bf16.gmra.mrb[0].mxu0 %v1190
    %v5424 = vpop.f32.mrb[0].mxu0
    %v5425 = vadd.f32 %v5384, %v5424
    %v5426 = vpop.f32.mrb[0].mxu0
    %v5427 = vadd.f32 %v5386, %v5426
    %v5428 = vpop.f32.mrb[0].mxu0
    %v5429 = vpop.f32.mrb[0].mxu0
    %5430 = vdwg.mxu0
    %5431 = vmatprep.subr.bf16.mxu0 %v3932
    %5432 = vmatpush1.bf16.msra.mxu0 %v3931
    %5433 = vmatprep.subr.bf16.mxu0 %v3940
    %5434 = vmatpush1.bf16.msra.mxu0 %v3939
    %5435 = vmatprep.subr.bf16.mxu0 %v3948
    %5436 = vmatpush1.bf16.msra.mxu0 %v3947
    %5437 = vmatprep.subr.bf16.mxu0 %v3956
    %5438 = vmatpush1.bf16.msra.mxu0 %v3955
    %5439 = vmatprep.subr.bf16.mxu0 %v3964
    %5440 = vmatpush1.bf16.msra.mxu0 %v3963
    %5441 = vmatprep.subr.bf16.mxu0 %v3972
    %5442 = vmatpush1.bf16.msra.mxu0 %v3971
    %5443 = vmatprep.subr.bf16.mxu0 %v3980
    %5444 = vmatpush1.bf16.msra.mxu0 %v3979
    %5445 = vmatprep.subr.bf16.mxu0 %v3988
    %5446 = vmatpush1.bf16.msra.mxu0 %v3987
    %5447 = vmatprep.subr.bf16.mxu0 %v3996
    %5448 = vmatpush1.bf16.msra.mxu0 %v3995
    %5449 = vmatprep.subr.bf16.mxu0 %v4004
    %5450 = vmatpush1.bf16.msra.mxu0 %v4003
    %5451 = vmatprep.subr.bf16.mxu0 %v4012
    %5452 = vmatpush1.bf16.msra.mxu0 %v4011
    %5453 = vmatprep.subr.bf16.mxu0 %v4020
    %5454 = vmatpush1.bf16.msra.mxu0 %v4019
    %5455 = vmatprep.subr.bf16.mxu0 %v4028
    %5456 = vmatpush1.bf16.msra.mxu0 %v4027
    %5457 = vmatprep.subr.bf16.mxu0 %v4036
    %5458 = vmatpush1.bf16.msra.mxu0 %v4035
    %5459 = vmatprep.subr.bf16.mxu0 %v4044
    %5460 = vmatpush1.bf16.msra.mxu0 %v4043
    %5461 = vmatprep.subr.bf16.mxu0 %v4052
    %5462 = vmatpush1.bf16.msra.mxu0 %v4051
    %5463 = vmatprep.mubr.bf16.mxu0 %v1193
    %5464 = vmatmul.mubr.bf16.gmra.mrb[0].mxu0 %v1192
    %v5465 = vpop.f32.mrb[0].mxu0
    %v5466 = vadd.f32 %v5425, %v5465
    %v5467 = vpop.f32.mrb[0].mxu0
    %v5468 = vadd.f32 %v5427, %v5467
    %v5469 = vpop.f32.mrb[0].mxu0
    %v5470 = vpop.f32.mrb[0].mxu0
    %5471 = vdwg.mxu0
    %5472 = vmatprep.subr.bf16.mxu0 %v4060
    %5473 = vmatpush1.bf16.msra.mxu0 %v4059
    %5474 = vmatprep.subr.bf16.mxu0 %v4068
    %5475 = vmatpush1.bf16.msra.mxu0 %v4067
    %5476 = vmatprep.subr.bf16.mxu0 %v4076
    %5477 = vmatpush1.bf16.msra.mxu0 %v4075
    %5478 = vmatprep.subr.bf16.mxu0 %v4084
    %5479 = vmatpush1.bf16.msra.mxu0 %v4083
    %5480 = vmatprep.subr.bf16.mxu0 %v4092
    %5481 = vmatpush1.bf16.msra.mxu0 %v4091
    %5482 = vmatprep.subr.bf16.mxu0 %v4100
    %5483 = vmatpush1.bf16.msra.mxu0 %v4099
    %5484 = vmatprep.subr.bf16.mxu0 %v4108
    %5485 = vmatpush1.bf16.msra.mxu0 %v4107
    %5486 = vmatprep.subr.bf16.mxu0 %v4116
    %5487 = vmatpush1.bf16.msra.mxu0 %v4115
    %5488 = vmatprep.subr.bf16.mxu0 0
    %5489 = vmatpush1.bf16.msra.mxu0 0
    %5490 = vmatprep.subr.bf16.mxu0 0
    %5491 = vmatpush1.bf16.msra.mxu0 0
    %5492 = vmatprep.subr.bf16.mxu0 0
    %5493 = vmatpush1.bf16.msra.mxu0 0
    %5494 = vmatprep.subr.bf16.mxu0 0
    %5495 = vmatpush1.bf16.msra.mxu0 0
    %5496 = vmatprep.subr.bf16.mxu0 0
    %5497 = vmatpush1.bf16.msra.mxu0 0
    %5498 = vmatprep.subr.bf16.mxu0 0
    %5499 = vmatpush1.bf16.msra.mxu0 0
    %5500 = vmatprep.subr.bf16.mxu0 0
    %5501 = vmatpush1.bf16.msra.mxu0 0
    %5502 = vmatprep.subr.bf16.mxu0 0
    %5503 = vmatpush1.bf16.msra.mxu0 0
    %5504 = vmatprep.mubr.bf16.mxu0 0
    %5505 = vmatmul.mubr.bf16.gmra.mrb[0].mxu0 %v1194
    %v5506 = vpop.f32.mrb[0].mxu0
    %v5507 = vadd.f32 %v5466, %v5506
    %v5508 = vpop.f32.mrb[0].mxu0
    %v5509 = vadd.f32 %v5468, %v5508
    %v5510 = vpop.f32.mrb[0].mxu0
    %v5511 = vpop.f32.mrb[0].mxu0
    %5512 = vdwg.mxu0
    %v5513 = vmax.f32 %v4892, 0.0
    %v5514 = vmax.f32 %v4894, 0.0
    %v5515 = vmax.f32 %v5097, 0.0
    %v5516 = vmax.f32 %v5099, 0.0
    %v5517 = vmax.f32 %v5302, 0.0
    %v5518 = vmax.f32 %v5304, 0.0
    %v5519 = vmax.f32 %v5507, 0.0
    %v5520 = vmax.f32 %v5509, 0.0
    %v5521 = vpack.c.bf16 %v5513, %v5513
    %v5522 = vpack.c.bf16 %v5514, %v5514
    %v5523 = vpack.c.bf16 %v5515, %v5515
    %v5524 = vpack.c.bf16 %v5516, %v5516
    %v5525 = vpack.c.bf16 %v5517, %v5517
    %v5526 = vpack.c.bf16 %v5518, %v5518
    %v5527 = vpack.c.bf16 %v5519, %v5519
    %v5528 = vpack.c.bf16 %v5520, %v5520
    %v5529 = vld [vmem:[#allocation14] sm:$0xff]
    %v5530 = vld [vmem:[#allocation14 + $0x8] sm:$0xff]
    %v5531 = vld [vmem:[#allocation14 + $0x10] sm:$0xff]
    %v5532 = vld [vmem:[#allocation14 + $0x18] sm:$0xff]
    %v5533 = vld [vmem:[#allocation14 + $0x20] sm:$0xff]
    %v5534 = vld [vmem:[#allocation14 + $0x28] sm:$0xff]
    %v5535 = vld [vmem:[#allocation14 + $0x30] sm:$0xff]
    %v5536 = vld [vmem:[#allocation14 + $0x38] sm:$0xff]
    %v5537 = vld [vmem:[#allocation14 + $0x40] sm:$0xff]
    %v5538 = vld [vmem:[#allocation14 + $0x48] sm:$0xff]
    %v5539 = vld [vmem:[#allocation14 + $0x50] sm:$0xff]
    %v5540 = vld [vmem:[#allocation14 + $0x58] sm:$0xff]
    %v5541 = vld [vmem:[#allocation14 + $0x60] sm:$0xff]
    %v5542 = vld [vmem:[#allocation14 + $0x68] sm:$0xff]
    %v5543 = vld [vmem:[#allocation14 + $0x70] sm:$0xff]
    %v5544 = vld [vmem:[#allocation14 + $0x78] sm:$0xff]
    %v5545 = vld [vmem:[#allocation14 + $0x80] sm:$0xff]
    %v5546 = vld [vmem:[#allocation14 + $0x88] sm:$0xff]
    %v5547 = vld [vmem:[#allocation14 + $0x90] sm:$0xff]
    %v5548 = vld [vmem:[#allocation14 + $0x98] sm:$0xff]
    %v5549 = vld [vmem:[#allocation14 + $0xa0] sm:$0xff]
    %v5550 = vld [vmem:[#allocation14 + $0xa8] sm:$0xff]
    %v5551 = vld [vmem:[#allocation14 + $0xb0] sm:$0xff]
    %v5552 = vld [vmem:[#allocation14 + $0xb8] sm:$0xff]
    %v5553 = vld [vmem:[#allocation14 + $0xc0] sm:$0xff]
    %v5554 = vld [vmem:[#allocation14 + $0xc8] sm:$0xff]
    %v5555 = vld [vmem:[#allocation14 + $0xd0] sm:$0xff]
    %v5556 = vld [vmem:[#allocation14 + $0xd8] sm:$0xff]
    %v5557 = vld [vmem:[#allocation14 + $0xe0] sm:$0xff]
    %v5558 = vld [vmem:[#allocation14 + $0xe8] sm:$0xff]
    %v5559 = vld [vmem:[#allocation14 + $0xf0] sm:$0xff]
    %v5560 = vld [vmem:[#allocation14 + $0xf8] sm:$0xff]
    %v5561 = vld [vmem:[#allocation14 + $0x100] sm:$0xff]
    %v5562 = vld [vmem:[#allocation14 + $0x108] sm:$0xff]
    %v5563 = vld [vmem:[#allocation14 + $0x110] sm:$0xff]
    %v5564 = vld [vmem:[#allocation14 + $0x118] sm:$0xff]
    %v5565 = vld [vmem:[#allocation14 + $0x120] sm:$0xff]
    %v5566 = vld [vmem:[#allocation14 + $0x128] sm:$0xff]
    %v5567 = vld [vmem:[#allocation14 + $0x130] sm:$0xff]
    %v5568 = vld [vmem:[#allocation14 + $0x138] sm:$0xff]
    %v5569 = vld [vmem:[#allocation14 + $0x140] sm:$0xff]
    %v5570 = vld [vmem:[#allocation14 + $0x148] sm:$0xff]
    %v5571 = vld [vmem:[#allocation14 + $0x150] sm:$0xff]
    %v5572 = vld [vmem:[#allocation14 + $0x158] sm:$0xff]
    %v5573 = vld [vmem:[#allocation14 + $0x160] sm:$0xff]
    %v5574 = vld [vmem:[#allocation14 + $0x168] sm:$0xff]
    %v5575 = vld [vmem:[#allocation14 + $0x170] sm:$0xff]
    %v5576 = vld [vmem:[#allocation14 + $0x178] sm:$0xff]
    %v5577 = vld [vmem:[#allocation14 + $0x180] sm:$0xff]
    %v5578 = vld [vmem:[#allocation14 + $0x188] sm:$0xff]
    %v5579 = vld [vmem:[#allocation14 + $0x190] sm:$0xff]
    %v5580 = vld [vmem:[#allocation14 + $0x198] sm:$0xff]
    %v5581 = vld [vmem:[#allocation14 + $0x1a0] sm:$0xff]
    %v5582 = vld [vmem:[#allocation14 + $0x1a8] sm:$0xff]
    %v5583 = vld [vmem:[#allocation14 + $0x1b0] sm:$0xff]
    %v5584 = vld [vmem:[#allocation14 + $0x1b8] sm:$0xff]
    %v5585 = vld [vmem:[#allocation14 + $0x1c0] sm:$0xff]
    %v5586 = vld [vmem:[#allocation14 + $0x1c8] sm:$0xff]
    %v5587 = vld [vmem:[#allocation14 + $0x1d0] sm:$0xff]
    %v5588 = vld [vmem:[#allocation14 + $0x1d8] sm:$0xff]
    %v5589 = vld [vmem:[#allocation14 + $0x1e0] sm:$0xff]
    %v5590 = vld [vmem:[#allocation14 + $0x1e8] sm:$0xff]
    %v5591 = vld [vmem:[#allocation14 + $0x1f0] sm:$0xff]
    %v5592 = vld [vmem:[#allocation14 + $0x1f8] sm:$0xff]
    %v5593 = vld [vmem:[#allocation14 + $0x200] sm:$0xff]
    %v5594 = vld [vmem:[#allocation14 + $0x208] sm:$0xff]
    %v5595 = vld [vmem:[#allocation14 + $0x210] sm:$0xff]
    %v5596 = vld [vmem:[#allocation14 + $0x218] sm:$0xff]
    %v5597 = vld [vmem:[#allocation14 + $0x220] sm:$0xff]
    %v5598 = vld [vmem:[#allocation14 + $0x228] sm:$0xff]
    %v5599 = vld [vmem:[#allocation14 + $0x230] sm:$0xff]
    %v5600 = vld [vmem:[#allocation14 + $0x238] sm:$0xff]
    %v5601 = vld [vmem:[#allocation14 + $0x240] sm:$0xff]
    %v5602 = vld [vmem:[#allocation14 + $0x248] sm:$0xff]
    %v5603 = vld [vmem:[#allocation14 + $0x250] sm:$0xff]
    %v5604 = vld [vmem:[#allocation14 + $0x258] sm:$0xff]
    %v5605 = vld [vmem:[#allocation14 + $0x260] sm:$0xff]
    %v5606 = vld [vmem:[#allocation14 + $0x268] sm:$0xff]
    %v5607 = vld [vmem:[#allocation14 + $0x270] sm:$0xff]
    %v5608 = vld [vmem:[#allocation14 + $0x278] sm:$0xff]
    %v5609 = vld [vmem:[#allocation14 + $0x280] sm:$0xff]
    %v5610 = vld [vmem:[#allocation14 + $0x288] sm:$0xff]
    %v5611 = vld [vmem:[#allocation14 + $0x290] sm:$0xff]
    %v5612 = vld [vmem:[#allocation14 + $0x298] sm:$0xff]
    %v5613 = vld [vmem:[#allocation14 + $0x2a0] sm:$0xff]
    %v5614 = vld [vmem:[#allocation14 + $0x2a8] sm:$0xff]
    %v5615 = vld [vmem:[#allocation14 + $0x2b0] sm:$0xff]
    %v5616 = vld [vmem:[#allocation14 + $0x2b8] sm:$0xff]
    %v5617 = vld [vmem:[#allocation14 + $0x2c0] sm:$0xff]
    %v5618 = vld [vmem:[#allocation14 + $0x2c8] sm:$0xff]
    %v5619 = vld [vmem:[#allocation14 + $0x2d0] sm:$0xff]
    %v5620 = vld [vmem:[#allocation14 + $0x2d8] sm:$0xff]
    %v5621 = vld [vmem:[#allocation14 + $0x2e0] sm:$0xff]
    %v5622 = vld [vmem:[#allocation14 + $0x2e8] sm:$0xff]
    %v5623 = vld [vmem:[#allocation14 + $0x2f0] sm:$0xff]
    %v5624 = vld [vmem:[#allocation14 + $0x2f8] sm:$0xff]
    %v5625 = vld [vmem:[#allocation14 + $0x300] sm:$0xff]
    %v5626 = vld [vmem:[#allocation14 + $0x308] sm:$0xff]
    %v5627 = vld [vmem:[#allocation14 + $0x310] sm:$0xff]
    %v5628 = vld [vmem:[#allocation14 + $0x318] sm:$0xff]
    %v5629 = vld [vmem:[#allocation14 + $0x320] sm:$0xff]
    %v5630 = vld [vmem:[#allocation14 + $0x328] sm:$0xff]
    %v5631 = vld [vmem:[#allocation14 + $0x330] sm:$0xff]
    %v5632 = vld [vmem:[#allocation14 + $0x338] sm:$0xff]
    %v5633 = vld [vmem:[#allocation14 + $0x340] sm:$0xff]
    %v5634 = vld [vmem:[#allocation14 + $0x348] sm:$0xff]
    %v5635 = vld [vmem:[#allocation14 + $0x350] sm:$0xff]
    %v5636 = vld [vmem:[#allocation14 + $0x358] sm:$0xff]
    %v5637 = vld [vmem:[#allocation14 + $0x360] sm:$0xff]
    %v5638 = vld [vmem:[#allocation14 + $0x368] sm:$0xff]
    %v5639 = vld [vmem:[#allocation14 + $0x370] sm:$0xff]
    %v5640 = vld [vmem:[#allocation14 + $0x378] sm:$0xff]
    %v5641 = vld [vmem:[#allocation14 + $0x380] sm:$0xff]
    %v5642 = vld [vmem:[#allocation14 + $0x388] sm:$0xff]
    %v5643 = vld [vmem:[#allocation14 + $0x390] sm:$0xff]
    %v5644 = vld [vmem:[#allocation14 + $0x398] sm:$0xff]
    %v5645 = vld [vmem:[#allocation14 + $0x3a0] sm:$0xff]
    %v5646 = vld [vmem:[#allocation14 + $0x3a8] sm:$0xff]
    %v5647 = vld [vmem:[#allocation14 + $0x3b0] sm:$0xff]
    %v5648 = vld [vmem:[#allocation14 + $0x3b8] sm:$0xff]
    %v5649 = vld [vmem:[#allocation14 + $0x3c0] sm:$0xff]
    %v5650 = vld [vmem:[#allocation14 + $0x3c8] sm:$0xff]
    %v5651 = vld [vmem:[#allocation14 + $0x3d0] sm:$0xff]
    %v5652 = vld [vmem:[#allocation14 + $0x3d8] sm:$0xff]
    %v5653 = vld [vmem:[#allocation14 + $0x3e0] sm:$0xff]
    %v5654 = vld [vmem:[#allocation14 + $0x3e8] sm:$0xff]
    %v5655 = vld [vmem:[#allocation14 + $0x3f0] sm:$0xff]
    %v5656 = vld [vmem:[#allocation14 + $0x3f8] sm:$0xff]
    %v5657 = vld [vmem:[#allocation14 + $0x400] sm:$0xff]
    %v5658 = vld [vmem:[#allocation14 + $0x408] sm:$0xff]
    %v5659 = vld [vmem:[#allocation14 + $0x410] sm:$0xff]
    %v5660 = vld [vmem:[#allocation14 + $0x418] sm:$0xff]
    %v5661 = vld [vmem:[#allocation14 + $0x420] sm:$0xff]
    %v5662 = vld [vmem:[#allocation14 + $0x428] sm:$0xff]
    %v5663 = vld [vmem:[#allocation14 + $0x430] sm:$0xff]
    %v5664 = vld [vmem:[#allocation14 + $0x438] sm:$0xff]
    %v5665 = vld [vmem:[#allocation14 + $0x440] sm:$0xff]
    %v5666 = vld [vmem:[#allocation14 + $0x448] sm:$0xff]
    %v5667 = vld [vmem:[#allocation14 + $0x450] sm:$0xff]
    %v5668 = vld [vmem:[#allocation14 + $0x458] sm:$0xff]
    %v5669 = vld [vmem:[#allocation14 + $0x460] sm:$0xff]
    %v5670 = vld [vmem:[#allocation14 + $0x468] sm:$0xff]
    %v5671 = vld [vmem:[#allocation14 + $0x470] sm:$0xff]
    %v5672 = vld [vmem:[#allocation14 + $0x478] sm:$0xff]
    %v5673 = vld [vmem:[#allocation14 + $0x480] sm:$0xff]
    %v5674 = vld [vmem:[#allocation14 + $0x488] sm:$0xff]
    %v5675 = vld [vmem:[#allocation14 + $0x490] sm:$0xff]
    %v5676 = vld [vmem:[#allocation14 + $0x498] sm:$0xff]
    %v5677 = vld [vmem:[#allocation14 + $0x4a0] sm:$0xff]
    %v5678 = vld [vmem:[#allocation14 + $0x4a8] sm:$0xff]
    %v5679 = vld [vmem:[#allocation14 + $0x4b0] sm:$0xff]
    %v5680 = vld [vmem:[#allocation14 + $0x4b8] sm:$0xff]
    %v5681 = vld [vmem:[#allocation14 + $0x4c0] sm:$0xff]
    %v5682 = vld [vmem:[#allocation14 + $0x4c8] sm:$0xff]
    %v5683 = vld [vmem:[#allocation14 + $0x4d0] sm:$0xff]
    %v5684 = vld [vmem:[#allocation14 + $0x4d8] sm:$0xff]
    %v5685 = vld [vmem:[#allocation14 + $0x4e0] sm:$0xff]
    %v5686 = vld [vmem:[#allocation14 + $0x4e8] sm:$0xff]
    %v5687 = vld [vmem:[#allocation14 + $0x4f0] sm:$0xff]
    %v5688 = vld [vmem:[#allocation14 + $0x4f8] sm:$0xff]
    %v5689 = vld [vmem:[#allocation14 + $0x500] sm:$0xff]
    %v5690 = vld [vmem:[#allocation14 + $0x508] sm:$0xff]
    %v5691 = vld [vmem:[#allocation14 + $0x510] sm:$0xff]
    %v5692 = vld [vmem:[#allocation14 + $0x518] sm:$0xff]
    %v5693 = vld [vmem:[#allocation14 + $0x520] sm:$0xff]
    %v5694 = vld [vmem:[#allocation14 + $0x528] sm:$0xff]
    %v5695 = vld [vmem:[#allocation14 + $0x530] sm:$0xff]
    %v5696 = vld [vmem:[#allocation14 + $0x538] sm:$0xff]
    %v5697 = vld [vmem:[#allocation14 + $0x540] sm:$0xff]
    %v5698 = vld [vmem:[#allocation14 + $0x548] sm:$0xff]
    %v5699 = vld [vmem:[#allocation14 + $0x550] sm:$0xff]
    %v5700 = vld [vmem:[#allocation14 + $0x558] sm:$0xff]
    %v5701 = vld [vmem:[#allocation14 + $0x560] sm:$0xff]
    %v5702 = vld [vmem:[#allocation14 + $0x568] sm:$0xff]
    %v5703 = vld [vmem:[#allocation14 + $0x570] sm:$0xff]
    %v5704 = vld [vmem:[#allocation14 + $0x578] sm:$0xff]
    %v5705 = vld [vmem:[#allocation14 + $0x580] sm:$0xff]
    %v5706 = vld [vmem:[#allocation14 + $0x588] sm:$0xff]
    %v5707 = vld [vmem:[#allocation14 + $0x590] sm:$0xff]
    %v5708 = vld [vmem:[#allocation14 + $0x598] sm:$0xff]
    %v5709 = vld [vmem:[#allocation14 + $0x5a0] sm:$0xff]
    %v5710 = vld [vmem:[#allocation14 + $0x5a8] sm:$0xff]
    %v5711 = vld [vmem:[#allocation14 + $0x5b0] sm:$0xff]
    %v5712 = vld [vmem:[#allocation14 + $0x5b8] sm:$0xff]
    %v5713 = vld [vmem:[#allocation14 + $0x5c0] sm:$0xff]
    %v5714 = vld [vmem:[#allocation14 + $0x5c8] sm:$0xff]
    %v5715 = vld [vmem:[#allocation14 + $0x5d0] sm:$0xff]
    %v5716 = vld [vmem:[#allocation14 + $0x5d8] sm:$0xff]
    %v5717 = vld [vmem:[#allocation14 + $0x5e0] sm:$0xff]
    %v5718 = vld [vmem:[#allocation14 + $0x5e8] sm:$0xff]
    %v5719 = vld [vmem:[#allocation14 + $0x5f0] sm:$0xff]
    %v5720 = vld [vmem:[#allocation14 + $0x5f8] sm:$0xff]
    %v5721 = vld [vmem:[#allocation14 + $0x600] sm:$0xff]
    %v5722 = vld [vmem:[#allocation14 + $0x608] sm:$0xff]
    %v5723 = vld [vmem:[#allocation14 + $0x610] sm:$0xff]
    %v5724 = vld [vmem:[#allocation14 + $0x618] sm:$0xff]
    %v5725 = vld [vmem:[#allocation14 + $0x620] sm:$0xff]
    %v5726 = vld [vmem:[#allocation14 + $0x628] sm:$0xff]
    %v5727 = vld [vmem:[#allocation14 + $0x630] sm:$0xff]
    %v5728 = vld [vmem:[#allocation14 + $0x638] sm:$0xff]
    %v5729 = vld [vmem:[#allocation14 + $0x640] sm:$0xff]
    %v5730 = vld [vmem:[#allocation14 + $0x648] sm:$0xff]
    %v5731 = vld [vmem:[#allocation14 + $0x650] sm:$0xff]
    %v5732 = vld [vmem:[#allocation14 + $0x658] sm:$0xff]
    %v5733 = vld [vmem:[#allocation14 + $0x660] sm:$0xff]
    %v5734 = vld [vmem:[#allocation14 + $0x668] sm:$0xff]
    %v5735 = vld [vmem:[#allocation14 + $0x670] sm:$0xff]
    %v5736 = vld [vmem:[#allocation14 + $0x678] sm:$0xff]
    %v5737 = vld [vmem:[#allocation14 + $0x680] sm:$0xff]
    %v5738 = vld [vmem:[#allocation14 + $0x688] sm:$0xff]
    %v5739 = vld [vmem:[#allocation14 + $0x690] sm:$0xff]
    %v5740 = vld [vmem:[#allocation14 + $0x698] sm:$0xff]
    %v5741 = vld [vmem:[#allocation14 + $0x6a0] sm:$0xff]
    %v5742 = vld [vmem:[#allocation14 + $0x6a8] sm:$0xff]
    %v5743 = vld [vmem:[#allocation14 + $0x6b0] sm:$0xff]
    %v5744 = vld [vmem:[#allocation14 + $0x6b8] sm:$0xff]
    %v5745 = vld [vmem:[#allocation14 + $0x6c0] sm:$0xff]
    %v5746 = vld [vmem:[#allocation14 + $0x6c8] sm:$0xff]
    %v5747 = vld [vmem:[#allocation14 + $0x6d0] sm:$0xff]
    %v5748 = vld [vmem:[#allocation14 + $0x6d8] sm:$0xff]
    %v5749 = vld [vmem:[#allocation14 + $0x6e0] sm:$0xff]
    %v5750 = vld [vmem:[#allocation14 + $0x6e8] sm:$0xff]
    %v5751 = vld [vmem:[#allocation14 + $0x6f0] sm:$0xff]
    %v5752 = vld [vmem:[#allocation14 + $0x6f8] sm:$0xff]
    %v5753 = vld [vmem:[#allocation14 + $0x700] sm:$0xff]
    %v5754 = vld [vmem:[#allocation14 + $0x708] sm:$0xff]
    %v5755 = vld [vmem:[#allocation14 + $0x710] sm:$0xff]
    %v5756 = vld [vmem:[#allocation14 + $0x718] sm:$0xff]
    %v5757 = vld [vmem:[#allocation14 + $0x720] sm:$0xff]
    %v5758 = vld [vmem:[#allocation14 + $0x728] sm:$0xff]
    %v5759 = vld [vmem:[#allocation14 + $0x730] sm:$0xff]
    %v5760 = vld [vmem:[#allocation14 + $0x738] sm:$0xff]
    %v5761 = vld [vmem:[#allocation14 + $0x740] sm:$0xff]
    %v5762 = vld [vmem:[#allocation14 + $0x748] sm:$0xff]
    %v5763 = vld [vmem:[#allocation14 + $0x750] sm:$0xff]
    %v5764 = vld [vmem:[#allocation14 + $0x758] sm:$0xff]
    %v5765 = vld [vmem:[#allocation14 + $0x760] sm:$0xff]
    %v5766 = vld [vmem:[#allocation14 + $0x768] sm:$0xff]
    %v5767 = vld [vmem:[#allocation14 + $0x770] sm:$0xff]
    %v5768 = vld [vmem:[#allocation14 + $0x778] sm:$0xff]
    %v5769 = vld [vmem:[#allocation14 + $0x780] sm:$0xff]
    %v5770 = vld [vmem:[#allocation14 + $0x788] sm:$0xff]
    %v5771 = vld [vmem:[#allocation14 + $0x790] sm:$0xff]
    %v5772 = vld [vmem:[#allocation14 + $0x798] sm:$0xff]
    %v5773 = vld [vmem:[#allocation14 + $0x7a0] sm:$0xff]
    %v5774 = vld [vmem:[#allocation14 + $0x7a8] sm:$0xff]
    %v5775 = vld [vmem:[#allocation14 + $0x7b0] sm:$0xff]
    %v5776 = vld [vmem:[#allocation14 + $0x7b8] sm:$0xff]
    %v5777 = vld [vmem:[#allocation14 + $0x7c0] sm:$0xff]
    %v5778 = vld [vmem:[#allocation14 + $0x7c8] sm:$0xff]
    %v5779 = vld [vmem:[#allocation14 + $0x7d0] sm:$0xff]
    %v5780 = vld [vmem:[#allocation14 + $0x7d8] sm:$0xff]
    %v5781 = vld [vmem:[#allocation14 + $0x7e0] sm:$0xff]
    %v5782 = vld [vmem:[#allocation14 + $0x7e8] sm:$0xff]
    %v5783 = vld [vmem:[#allocation14 + $0x7f0] sm:$0xff]
    %v5784 = vld [vmem:[#allocation14 + $0x7f8] sm:$0xff]
    %v5785 = vld [vmem:[#allocation16] sm:$0xf]
    %v5787 = vlaneseq
    %v5788 = vshrl.u32 %v5787, 7
    %v5789 = vsub.s32 0, %v5788
    %v5790 = vrot.slane %v5785, %v5789
    %v5791 = vlaneseq
    %v5792 = vshrl.u32 %v5791, 7
    %v5793 = vsub.s32 1, %v5792
    %v5794 = vrot.slane %v5785, %v5793
    %v5795 = vlaneseq
    %v5796 = vshrl.u32 %v5795, 7
    %v5797 = vsub.s32 2, %v5796
    %v5798 = vrot.slane %v5785, %v5797
    %v5799 = vlaneseq
    %v5800 = vshrl.u32 %v5799, 7
    %v5801 = vsub.s32 3, %v5800
    %v5802 = vrot.slane %v5785, %v5801
    %v6063 = vunpack.c.l.b16 %v5529
    %v6064 = vunpack.c.h.b16 %v5529
    %v6065 = vunpack.c.l.b16 %v5530
    %v6066 = vunpack.c.h.b16 %v5530
    %v6067 = vunpack.c.l.b16 %v5531
    %v6068 = vunpack.c.h.b16 %v5531
    %v6069 = vunpack.c.l.b16 %v5532
    %v6070 = vunpack.c.h.b16 %v5532
    %v6071 = vunpack.c.l.b16 %v5533
    %v6072 = vunpack.c.h.b16 %v5533
    %v6073 = vunpack.c.l.b16 %v5534
    %v6074 = vunpack.c.h.b16 %v5534
    %v6075 = vunpack.c.l.b16 %v5535
    %v6076 = vunpack.c.h.b16 %v5535
    %v6077 = vunpack.c.l.b16 %v5536
    %v6078 = vunpack.c.h.b16 %v5536
    %v6079 = vunpack.c.l.b16 %v5537
    %v6080 = vunpack.c.h.b16 %v5537
    %v6081 = vunpack.c.l.b16 %v5538
    %v6082 = vunpack.c.h.b16 %v5538
    %v6083 = vunpack.c.l.b16 %v5539
    %v6084 = vunpack.c.h.b16 %v5539
    %v6085 = vunpack.c.l.b16 %v5540
    %v6086 = vunpack.c.h.b16 %v5540
    %v6087 = vunpack.c.l.b16 %v5541
    %v6088 = vunpack.c.h.b16 %v5541
    %v6089 = vunpack.c.l.b16 %v5542
    %v6090 = vunpack.c.h.b16 %v5542
    %v6091 = vunpack.c.l.b16 %v5543
    %v6092 = vunpack.c.h.b16 %v5543
    %v6093 = vunpack.c.l.b16 %v5544
    %v6094 = vunpack.c.h.b16 %v5544
    %v6095 = vunpack.c.l.b16 %v5545
    %v6096 = vunpack.c.h.b16 %v5545
    %v6097 = vunpack.c.l.b16 %v5546
    %v6098 = vunpack.c.h.b16 %v5546
    %v6099 = vunpack.c.l.b16 %v5547
    %v6100 = vunpack.c.h.b16 %v5547
    %v6101 = vunpack.c.l.b16 %v5548
    %v6102 = vunpack.c.h.b16 %v5548
    %v6103 = vunpack.c.l.b16 %v5549
    %v6104 = vunpack.c.h.b16 %v5549
    %v6105 = vunpack.c.l.b16 %v5550
    %v6106 = vunpack.c.h.b16 %v5550
    %v6107 = vunpack.c.l.b16 %v5551
    %v6108 = vunpack.c.h.b16 %v5551
    %v6109 = vunpack.c.l.b16 %v5552
    %v6110 = vunpack.c.h.b16 %v5552
    %v6111 = vunpack.c.l.b16 %v5553
    %v6112 = vunpack.c.h.b16 %v5553
    %v6113 = vunpack.c.l.b16 %v5554
    %v6114 = vunpack.c.h.b16 %v5554
    %v6115 = vunpack.c.l.b16 %v5555
    %v6116 = vunpack.c.h.b16 %v5555
    %v6117 = vunpack.c.l.b16 %v5556
    %v6118 = vunpack.c.h.b16 %v5556
    %v6119 = vunpack.c.l.b16 %v5557
    %v6120 = vunpack.c.h.b16 %v5557
    %v6121 = vunpack.c.l.b16 %v5558
    %v6122 = vunpack.c.h.b16 %v5558
    %v6123 = vunpack.c.l.b16 %v5559
    %v6124 = vunpack.c.h.b16 %v5559
    %v6125 = vunpack.c.l.b16 %v5560
    %v6126 = vunpack.c.h.b16 %v5560
    %v6127 = vunpack.c.l.b16 %v5561
    %v6128 = vunpack.c.h.b16 %v5561
    %v6129 = vunpack.c.l.b16 %v5562
    %v6130 = vunpack.c.h.b16 %v5562
    %v6131 = vunpack.c.l.b16 %v5563
    %v6132 = vunpack.c.h.b16 %v5563
    %v6133 = vunpack.c.l.b16 %v5564
    %v6134 = vunpack.c.h.b16 %v5564
    %v6135 = vunpack.c.l.b16 %v5565
    %v6136 = vunpack.c.h.b16 %v5565
    %v6137 = vunpack.c.l.b16 %v5566
    %v6138 = vunpack.c.h.b16 %v5566
    %v6139 = vunpack.c.l.b16 %v5567
    %v6140 = vunpack.c.h.b16 %v5567
    %v6141 = vunpack.c.l.b16 %v5568
    %v6142 = vunpack.c.h.b16 %v5568
    %v6143 = vunpack.c.l.b16 %v5569
    %v6144 = vunpack.c.h.b16 %v5569
    %v6145 = vunpack.c.l.b16 %v5570
    %v6146 = vunpack.c.h.b16 %v5570
    %v6147 = vunpack.c.l.b16 %v5571
    %v6148 = vunpack.c.h.b16 %v5571
    %v6149 = vunpack.c.l.b16 %v5572
    %v6150 = vunpack.c.h.b16 %v5572
    %v6151 = vunpack.c.l.b16 %v5573
    %v6152 = vunpack.c.h.b16 %v5573
    %v6153 = vunpack.c.l.b16 %v5574
    %v6154 = vunpack.c.h.b16 %v5574
    %v6155 = vunpack.c.l.b16 %v5575
    %v6156 = vunpack.c.h.b16 %v5575
    %v6157 = vunpack.c.l.b16 %v5576
    %v6158 = vunpack.c.h.b16 %v5576
    %v6159 = vunpack.c.l.b16 %v5577
    %v6160 = vunpack.c.h.b16 %v5577
    %v6161 = vunpack.c.l.b16 %v5578
    %v6162 = vunpack.c.h.b16 %v5578
    %v6163 = vunpack.c.l.b16 %v5579
    %v6164 = vunpack.c.h.b16 %v5579
    %v6165 = vunpack.c.l.b16 %v5580
    %v6166 = vunpack.c.h.b16 %v5580
    %v6167 = vunpack.c.l.b16 %v5581
    %v6168 = vunpack.c.h.b16 %v5581
    %v6169 = vunpack.c.l.b16 %v5582
    %v6170 = vunpack.c.h.b16 %v5582
    %v6171 = vunpack.c.l.b16 %v5583
    %v6172 = vunpack.c.h.b16 %v5583
    %v6173 = vunpack.c.l.b16 %v5584
    %v6174 = vunpack.c.h.b16 %v5584
    %v6175 = vunpack.c.l.b16 %v5585
    %v6176 = vunpack.c.h.b16 %v5585
    %v6177 = vunpack.c.l.b16 %v5586
    %v6178 = vunpack.c.h.b16 %v5586
    %v6179 = vunpack.c.l.b16 %v5587
    %v6180 = vunpack.c.h.b16 %v5587
    %v6181 = vunpack.c.l.b16 %v5588
    %v6182 = vunpack.c.h.b16 %v5588
    %v6183 = vunpack.c.l.b16 %v5589
    %v6184 = vunpack.c.h.b16 %v5589
    %v6185 = vunpack.c.l.b16 %v5590
    %v6186 = vunpack.c.h.b16 %v5590
    %v6187 = vunpack.c.l.b16 %v5591
    %v6188 = vunpack.c.h.b16 %v5591
    %v6189 = vunpack.c.l.b16 %v5592
    %v6190 = vunpack.c.h.b16 %v5592
    %v6191 = vunpack.c.l.b16 %v5593
    %v6192 = vunpack.c.h.b16 %v5593
    %v6193 = vunpack.c.l.b16 %v5594
    %v6194 = vunpack.c.h.b16 %v5594
    %v6195 = vunpack.c.l.b16 %v5595
    %v6196 = vunpack.c.h.b16 %v5595
    %v6197 = vunpack.c.l.b16 %v5596
    %v6198 = vunpack.c.h.b16 %v5596
    %v6199 = vunpack.c.l.b16 %v5597
    %v6200 = vunpack.c.h.b16 %v5597
    %v6201 = vunpack.c.l.b16 %v5598
    %v6202 = vunpack.c.h.b16 %v5598
    %v6203 = vunpack.c.l.b16 %v5599
    %v6204 = vunpack.c.h.b16 %v5599
    %v6205 = vunpack.c.l.b16 %v5600
    %v6206 = vunpack.c.h.b16 %v5600
    %v6207 = vunpack.c.l.b16 %v5601
    %v6208 = vunpack.c.h.b16 %v5601
    %v6209 = vunpack.c.l.b16 %v5602
    %v6210 = vunpack.c.h.b16 %v5602
    %v6211 = vunpack.c.l.b16 %v5603
    %v6212 = vunpack.c.h.b16 %v5603
    %v6213 = vunpack.c.l.b16 %v5604
    %v6214 = vunpack.c.h.b16 %v5604
    %v6215 = vunpack.c.l.b16 %v5605
    %v6216 = vunpack.c.h.b16 %v5605
    %v6217 = vunpack.c.l.b16 %v5606
    %v6218 = vunpack.c.h.b16 %v5606
    %v6219 = vunpack.c.l.b16 %v5607
    %v6220 = vunpack.c.h.b16 %v5607
    %v6221 = vunpack.c.l.b16 %v5608
    %v6222 = vunpack.c.h.b16 %v5608
    %v6223 = vunpack.c.l.b16 %v5609
    %v6224 = vunpack.c.h.b16 %v5609
    %v6225 = vunpack.c.l.b16 %v5610
    %v6226 = vunpack.c.h.b16 %v5610
    %v6227 = vunpack.c.l.b16 %v5611
    %v6228 = vunpack.c.h.b16 %v5611
    %v6229 = vunpack.c.l.b16 %v5612
    %v6230 = vunpack.c.h.b16 %v5612
    %v6231 = vunpack.c.l.b16 %v5613
    %v6232 = vunpack.c.h.b16 %v5613
    %v6233 = vunpack.c.l.b16 %v5614
    %v6234 = vunpack.c.h.b16 %v5614
    %v6235 = vunpack.c.l.b16 %v5615
    %v6236 = vunpack.c.h.b16 %v5615
    %v6237 = vunpack.c.l.b16 %v5616
    %v6238 = vunpack.c.h.b16 %v5616
    %v6239 = vunpack.c.l.b16 %v5617
    %v6240 = vunpack.c.h.b16 %v5617
    %v6241 = vunpack.c.l.b16 %v5618
    %v6242 = vunpack.c.h.b16 %v5618
    %v6243 = vunpack.c.l.b16 %v5619
    %v6244 = vunpack.c.h.b16 %v5619
    %v6245 = vunpack.c.l.b16 %v5620
    %v6246 = vunpack.c.h.b16 %v5620
    %v6247 = vunpack.c.l.b16 %v5621
    %v6248 = vunpack.c.h.b16 %v5621
    %v6249 = vunpack.c.l.b16 %v5622
    %v6250 = vunpack.c.h.b16 %v5622
    %v6251 = vunpack.c.l.b16 %v5623
    %v6252 = vunpack.c.h.b16 %v5623
    %v6253 = vunpack.c.l.b16 %v5624
    %v6254 = vunpack.c.h.b16 %v5624
    %v6255 = vunpack.c.l.b16 %v5625
    %v6256 = vunpack.c.h.b16 %v5625
    %v6257 = vunpack.c.l.b16 %v5626
    %v6258 = vunpack.c.h.b16 %v5626
    %v6259 = vunpack.c.l.b16 %v5627
    %v6260 = vunpack.c.h.b16 %v5627
    %v6261 = vunpack.c.l.b16 %v5628
    %v6262 = vunpack.c.h.b16 %v5628
    %v6263 = vunpack.c.l.b16 %v5629
    %v6264 = vunpack.c.h.b16 %v5629
    %v6265 = vunpack.c.l.b16 %v5630
    %v6266 = vunpack.c.h.b16 %v5630
    %v6267 = vunpack.c.l.b16 %v5631
    %v6268 = vunpack.c.h.b16 %v5631
    %v6269 = vunpack.c.l.b16 %v5632
    %v6270 = vunpack.c.h.b16 %v5632
    %v6271 = vunpack.c.l.b16 %v5633
    %v6272 = vunpack.c.h.b16 %v5633
    %v6273 = vunpack.c.l.b16 %v5634
    %v6274 = vunpack.c.h.b16 %v5634
    %v6275 = vunpack.c.l.b16 %v5635
    %v6276 = vunpack.c.h.b16 %v5635
    %v6277 = vunpack.c.l.b16 %v5636
    %v6278 = vunpack.c.h.b16 %v5636
    %v6279 = vunpack.c.l.b16 %v5637
    %v6280 = vunpack.c.h.b16 %v5637
    %v6281 = vunpack.c.l.b16 %v5638
    %v6282 = vunpack.c.h.b16 %v5638
    %v6283 = vunpack.c.l.b16 %v5639
    %v6284 = vunpack.c.h.b16 %v5639
    %v6285 = vunpack.c.l.b16 %v5640
    %v6286 = vunpack.c.h.b16 %v5640
    %v6287 = vunpack.c.l.b16 %v5641
    %v6288 = vunpack.c.h.b16 %v5641
    %v6289 = vunpack.c.l.b16 %v5642
    %v6290 = vunpack.c.h.b16 %v5642
    %v6291 = vunpack.c.l.b16 %v5643
    %v6292 = vunpack.c.h.b16 %v5643
    %v6293 = vunpack.c.l.b16 %v5644
    %v6294 = vunpack.c.h.b16 %v5644
    %v6295 = vunpack.c.l.b16 %v5645
    %v6296 = vunpack.c.h.b16 %v5645
    %v6297 = vunpack.c.l.b16 %v5646
    %v6298 = vunpack.c.h.b16 %v5646
    %v6299 = vunpack.c.l.b16 %v5647
    %v6300 = vunpack.c.h.b16 %v5647
    %v6301 = vunpack.c.l.b16 %v5648
    %v6302 = vunpack.c.h.b16 %v5648
    %v6303 = vunpack.c.l.b16 %v5649
    %v6304 = vunpack.c.h.b16 %v5649
    %v6305 = vunpack.c.l.b16 %v5650
    %v6306 = vunpack.c.h.b16 %v5650
    %v6307 = vunpack.c.l.b16 %v5651
    %v6308 = vunpack.c.h.b16 %v5651
    %v6309 = vunpack.c.l.b16 %v5652
    %v6310 = vunpack.c.h.b16 %v5652
    %v6311 = vunpack.c.l.b16 %v5653
    %v6312 = vunpack.c.h.b16 %v5653
    %v6313 = vunpack.c.l.b16 %v5654
    %v6314 = vunpack.c.h.b16 %v5654
    %v6315 = vunpack.c.l.b16 %v5655
    %v6316 = vunpack.c.h.b16 %v5655
    %v6317 = vunpack.c.l.b16 %v5656
    %v6318 = vunpack.c.h.b16 %v5656
    %v6319 = vunpack.c.l.b16 %v5657
    %v6320 = vunpack.c.h.b16 %v5657
    %v6321 = vunpack.c.l.b16 %v5658
    %v6322 = vunpack.c.h.b16 %v5658
    %v6323 = vunpack.c.l.b16 %v5659
    %v6324 = vunpack.c.h.b16 %v5659
    %v6325 = vunpack.c.l.b16 %v5660
    %v6326 = vunpack.c.h.b16 %v5660
    %v6327 = vunpack.c.l.b16 %v5661
    %v6328 = vunpack.c.h.b16 %v5661
    %v6329 = vunpack.c.l.b16 %v5662
    %v6330 = vunpack.c.h.b16 %v5662
    %v6331 = vunpack.c.l.b16 %v5663
    %v6332 = vunpack.c.h.b16 %v5663
    %v6333 = vunpack.c.l.b16 %v5664
    %v6334 = vunpack.c.h.b16 %v5664
    %v6335 = vunpack.c.l.b16 %v5665
    %v6336 = vunpack.c.h.b16 %v5665
    %v6337 = vunpack.c.l.b16 %v5666
    %v6338 = vunpack.c.h.b16 %v5666
    %v6339 = vunpack.c.l.b16 %v5667
    %v6340 = vunpack.c.h.b16 %v5667
    %v6341 = vunpack.c.l.b16 %v5668
    %v6342 = vunpack.c.h.b16 %v5668
    %v6343 = vunpack.c.l.b16 %v5669
    %v6344 = vunpack.c.h.b16 %v5669
    %v6345 = vunpack.c.l.b16 %v5670
    %v6346 = vunpack.c.h.b16 %v5670
    %v6347 = vunpack.c.l.b16 %v5671
    %v6348 = vunpack.c.h.b16 %v5671
    %v6349 = vunpack.c.l.b16 %v5672
    %v6350 = vunpack.c.h.b16 %v5672
    %v6351 = vunpack.c.l.b16 %v5673
    %v6352 = vunpack.c.h.b16 %v5673
    %v6353 = vunpack.c.l.b16 %v5674
    %v6354 = vunpack.c.h.b16 %v5674
    %v6355 = vunpack.c.l.b16 %v5675
    %v6356 = vunpack.c.h.b16 %v5675
    %v6357 = vunpack.c.l.b16 %v5676
    %v6358 = vunpack.c.h.b16 %v5676
    %v6359 = vunpack.c.l.b16 %v5677
    %v6360 = vunpack.c.h.b16 %v5677
    %v6361 = vunpack.c.l.b16 %v5678
    %v6362 = vunpack.c.h.b16 %v5678
    %v6363 = vunpack.c.l.b16 %v5679
    %v6364 = vunpack.c.h.b16 %v5679
    %v6365 = vunpack.c.l.b16 %v5680
    %v6366 = vunpack.c.h.b16 %v5680
    %v6367 = vunpack.c.l.b16 %v5681
    %v6368 = vunpack.c.h.b16 %v5681
    %v6369 = vunpack.c.l.b16 %v5682
    %v6370 = vunpack.c.h.b16 %v5682
    %v6371 = vunpack.c.l.b16 %v5683
    %v6372 = vunpack.c.h.b16 %v5683
    %v6373 = vunpack.c.l.b16 %v5684
    %v6374 = vunpack.c.h.b16 %v5684
    %v6375 = vunpack.c.l.b16 %v5685
    %v6376 = vunpack.c.h.b16 %v5685
    %v6377 = vunpack.c.l.b16 %v5686
    %v6378 = vunpack.c.h.b16 %v5686
    %v6379 = vunpack.c.l.b16 %v5687
    %v6380 = vunpack.c.h.b16 %v5687
    %v6381 = vunpack.c.l.b16 %v5688
    %v6382 = vunpack.c.h.b16 %v5688
    %v6383 = vunpack.c.l.b16 %v5689
    %v6384 = vunpack.c.h.b16 %v5689
    %v6385 = vunpack.c.l.b16 %v5690
    %v6386 = vunpack.c.h.b16 %v5690
    %v6387 = vunpack.c.l.b16 %v5691
    %v6388 = vunpack.c.h.b16 %v5691
    %v6389 = vunpack.c.l.b16 %v5692
    %v6390 = vunpack.c.h.b16 %v5692
    %v6391 = vunpack.c.l.b16 %v5693
    %v6392 = vunpack.c.h.b16 %v5693
    %v6393 = vunpack.c.l.b16 %v5694
    %v6394 = vunpack.c.h.b16 %v5694
    %v6395 = vunpack.c.l.b16 %v5695
    %v6396 = vunpack.c.h.b16 %v5695
    %v6397 = vunpack.c.l.b16 %v5696
    %v6398 = vunpack.c.h.b16 %v5696
    %v6399 = vunpack.c.l.b16 %v5697
    %v6400 = vunpack.c.h.b16 %v5697
    %v6401 = vunpack.c.l.b16 %v5698
    %v6402 = vunpack.c.h.b16 %v5698
    %v6403 = vunpack.c.l.b16 %v5699
    %v6404 = vunpack.c.h.b16 %v5699
    %v6405 = vunpack.c.l.b16 %v5700
    %v6406 = vunpack.c.h.b16 %v5700
    %v6407 = vunpack.c.l.b16 %v5701
    %v6408 = vunpack.c.h.b16 %v5701
    %v6409 = vunpack.c.l.b16 %v5702
    %v6410 = vunpack.c.h.b16 %v5702
    %v6411 = vunpack.c.l.b16 %v5703
    %v6412 = vunpack.c.h.b16 %v5703
    %v6413 = vunpack.c.l.b16 %v5704
    %v6414 = vunpack.c.h.b16 %v5704
    %v6415 = vunpack.c.l.b16 %v5705
    %v6416 = vunpack.c.h.b16 %v5705
    %v6417 = vunpack.c.l.b16 %v5706
    %v6418 = vunpack.c.h.b16 %v5706
    %v6419 = vunpack.c.l.b16 %v5707
    %v6420 = vunpack.c.h.b16 %v5707
    %v6421 = vunpack.c.l.b16 %v5708
    %v6422 = vunpack.c.h.b16 %v5708
    %v6423 = vunpack.c.l.b16 %v5709
    %v6424 = vunpack.c.h.b16 %v5709
    %v6425 = vunpack.c.l.b16 %v5710
    %v6426 = vunpack.c.h.b16 %v5710
    %v6427 = vunpack.c.l.b16 %v5711
    %v6428 = vunpack.c.h.b16 %v5711
    %v6429 = vunpack.c.l.b16 %v5712
    %v6430 = vunpack.c.h.b16 %v5712
    %v6431 = vunpack.c.l.b16 %v5713
    %v6432 = vunpack.c.h.b16 %v5713
    %v6433 = vunpack.c.l.b16 %v5714
    %v6434 = vunpack.c.h.b16 %v5714
    %v6435 = vunpack.c.l.b16 %v5715
    %v6436 = vunpack.c.h.b16 %v5715
    %v6437 = vunpack.c.l.b16 %v5716
    %v6438 = vunpack.c.h.b16 %v5716
    %v6439 = vunpack.c.l.b16 %v5717
    %v6440 = vunpack.c.h.b16 %v5717
    %v6441 = vunpack.c.l.b16 %v5718
    %v6442 = vunpack.c.h.b16 %v5718
    %v6443 = vunpack.c.l.b16 %v5719
    %v6444 = vunpack.c.h.b16 %v5719
    %v6445 = vunpack.c.l.b16 %v5720
    %v6446 = vunpack.c.h.b16 %v5720
    %v6447 = vunpack.c.l.b16 %v5721
    %v6448 = vunpack.c.h.b16 %v5721
    %v6449 = vunpack.c.l.b16 %v5722
    %v6450 = vunpack.c.h.b16 %v5722
    %v6451 = vunpack.c.l.b16 %v5723
    %v6452 = vunpack.c.h.b16 %v5723
    %v6453 = vunpack.c.l.b16 %v5724
    %v6454 = vunpack.c.h.b16 %v5724
    %v6455 = vunpack.c.l.b16 %v5725
    %v6456 = vunpack.c.h.b16 %v5725
    %v6457 = vunpack.c.l.b16 %v5726
    %v6458 = vunpack.c.h.b16 %v5726
    %v6459 = vunpack.c.l.b16 %v5727
    %v6460 = vunpack.c.h.b16 %v5727
    %v6461 = vunpack.c.l.b16 %v5728
    %v6462 = vunpack.c.h.b16 %v5728
    %v6463 = vunpack.c.l.b16 %v5729
    %v6464 = vunpack.c.h.b16 %v5729
    %v6465 = vunpack.c.l.b16 %v5730
    %v6466 = vunpack.c.h.b16 %v5730
    %v6467 = vunpack.c.l.b16 %v5731
    %v6468 = vunpack.c.h.b16 %v5731
    %v6469 = vunpack.c.l.b16 %v5732
    %v6470 = vunpack.c.h.b16 %v5732
    %v6471 = vunpack.c.l.b16 %v5733
    %v6472 = vunpack.c.h.b16 %v5733
    %v6473 = vunpack.c.l.b16 %v5734
    %v6474 = vunpack.c.h.b16 %v5734
    %v6475 = vunpack.c.l.b16 %v5735
    %v6476 = vunpack.c.h.b16 %v5735
    %v6477 = vunpack.c.l.b16 %v5736
    %v6478 = vunpack.c.h.b16 %v5736
    %v6479 = vunpack.c.l.b16 %v5737
    %v6480 = vunpack.c.h.b16 %v5737
    %v6481 = vunpack.c.l.b16 %v5738
    %v6482 = vunpack.c.h.b16 %v5738
    %v6483 = vunpack.c.l.b16 %v5739
    %v6484 = vunpack.c.h.b16 %v5739
    %v6485 = vunpack.c.l.b16 %v5740
    %v6486 = vunpack.c.h.b16 %v5740
    %v6487 = vunpack.c.l.b16 %v5741
    %v6488 = vunpack.c.h.b16 %v5741
    %v6489 = vunpack.c.l.b16 %v5742
    %v6490 = vunpack.c.h.b16 %v5742
    %v6491 = vunpack.c.l.b16 %v5743
    %v6492 = vunpack.c.h.b16 %v5743
    %v6493 = vunpack.c.l.b16 %v5744
    %v6494 = vunpack.c.h.b16 %v5744
    %v6495 = vunpack.c.l.b16 %v5745
    %v6496 = vunpack.c.h.b16 %v5745
    %v6497 = vunpack.c.l.b16 %v5746
    %v6498 = vunpack.c.h.b16 %v5746
    %v6499 = vunpack.c.l.b16 %v5747
    %v6500 = vunpack.c.h.b16 %v5747
    %v6501 = vunpack.c.l.b16 %v5748
    %v6502 = vunpack.c.h.b16 %v5748
    %v6503 = vunpack.c.l.b16 %v5749
    %v6504 = vunpack.c.h.b16 %v5749
    %v6505 = vunpack.c.l.b16 %v5750
    %v6506 = vunpack.c.h.b16 %v5750
    %v6507 = vunpack.c.l.b16 %v5751
    %v6508 = vunpack.c.h.b16 %v5751
    %v6509 = vunpack.c.l.b16 %v5752
    %v6510 = vunpack.c.h.b16 %v5752
    %v6511 = vunpack.c.l.b16 %v5753
    %v6512 = vunpack.c.h.b16 %v5753
    %v6513 = vunpack.c.l.b16 %v5754
    %v6514 = vunpack.c.h.b16 %v5754
    %v6515 = vunpack.c.l.b16 %v5755
    %v6516 = vunpack.c.h.b16 %v5755
    %v6517 = vunpack.c.l.b16 %v5756
    %v6518 = vunpack.c.h.b16 %v5756
    %v6519 = vunpack.c.l.b16 %v5757
    %v6520 = vunpack.c.h.b16 %v5757
    %v6521 = vunpack.c.l.b16 %v5758
    %v6522 = vunpack.c.h.b16 %v5758
    %v6523 = vunpack.c.l.b16 %v5759
    %v6524 = vunpack.c.h.b16 %v5759
    %v6525 = vunpack.c.l.b16 %v5760
    %v6526 = vunpack.c.h.b16 %v5760
    %v6527 = vunpack.c.l.b16 %v5761
    %v6528 = vunpack.c.h.b16 %v5761
    %v6529 = vunpack.c.l.b16 %v5762
    %v6530 = vunpack.c.h.b16 %v5762
    %v6531 = vunpack.c.l.b16 %v5763
    %v6532 = vunpack.c.h.b16 %v5763
    %v6533 = vunpack.c.l.b16 %v5764
    %v6534 = vunpack.c.h.b16 %v5764
    %v6535 = vunpack.c.l.b16 %v5765
    %v6536 = vunpack.c.h.b16 %v5765
    %v6537 = vunpack.c.l.b16 %v5766
    %v6538 = vunpack.c.h.b16 %v5766
    %v6539 = vunpack.c.l.b16 %v5767
    %v6540 = vunpack.c.h.b16 %v5767
    %v6541 = vunpack.c.l.b16 %v5768
    %v6542 = vunpack.c.h.b16 %v5768
    %v6543 = vunpack.c.l.b16 %v5769
    %v6544 = vunpack.c.h.b16 %v5769
    %v6545 = vunpack.c.l.b16 %v5770
    %v6546 = vunpack.c.h.b16 %v5770
    %v6547 = vunpack.c.l.b16 %v5771
    %v6548 = vunpack.c.h.b16 %v5771
    %v6549 = vunpack.c.l.b16 %v5772
    %v6550 = vunpack.c.h.b16 %v5772
    %v6551 = vunpack.c.l.b16 %v5773
    %v6552 = vunpack.c.h.b16 %v5773
    %v6553 = vunpack.c.l.b16 %v5774
    %v6554 = vunpack.c.h.b16 %v5774
    %v6555 = vunpack.c.l.b16 %v5775
    %v6556 = vunpack.c.h.b16 %v5775
    %v6557 = vunpack.c.l.b16 %v5776
    %v6558 = vunpack.c.h.b16 %v5776
    %v6559 = vunpack.c.l.b16 %v5777
    %v6560 = vunpack.c.h.b16 %v5777
    %v6561 = vunpack.c.l.b16 %v5778
    %v6562 = vunpack.c.h.b16 %v5778
    %v6563 = vunpack.c.l.b16 %v5779
    %v6564 = vunpack.c.h.b16 %v5779
    %v6565 = vunpack.c.l.b16 %v5780
    %v6566 = vunpack.c.h.b16 %v5780
    %v6567 = vunpack.c.l.b16 %v5781
    %v6568 = vunpack.c.h.b16 %v5781
    %v6569 = vunpack.c.l.b16 %v5782
    %v6570 = vunpack.c.h.b16 %v5782
    %v6571 = vunpack.c.l.b16 %v5783
    %v6572 = vunpack.c.h.b16 %v5783
    %v6573 = vunpack.c.l.b16 %v5784
    %v6574 = vunpack.c.h.b16 %v5784
    %v6575 = vpack.c.b16 %v6067, %v6063
    %v6576 = vpack.c.b16 %v6068, %v6064
    %v6577 = vpack.c.b16 %v6069, %v6065
    %v6578 = vpack.c.b16 %v6070, %v6066
    %v6579 = vpack.c.b16 %v6075, %v6071
    %v6580 = vpack.c.b16 %v6076, %v6072
    %v6581 = vpack.c.b16 %v6077, %v6073
    %v6582 = vpack.c.b16 %v6078, %v6074
    %v6583 = vpack.c.b16 %v6083, %v6079
    %v6584 = vpack.c.b16 %v6084, %v6080
    %v6585 = vpack.c.b16 %v6085, %v6081
    %v6586 = vpack.c.b16 %v6086, %v6082
    %v6587 = vpack.c.b16 %v6091, %v6087
    %v6588 = vpack.c.b16 %v6092, %v6088
    %v6589 = vpack.c.b16 %v6093, %v6089
    %v6590 = vpack.c.b16 %v6094, %v6090
    %v6591 = vpack.c.b16 %v6099, %v6095
    %v6592 = vpack.c.b16 %v6100, %v6096
    %v6593 = vpack.c.b16 %v6101, %v6097
    %v6594 = vpack.c.b16 %v6102, %v6098
    %v6595 = vpack.c.b16 %v6107, %v6103
    %v6596 = vpack.c.b16 %v6108, %v6104
    %v6597 = vpack.c.b16 %v6109, %v6105
    %v6598 = vpack.c.b16 %v6110, %v6106
    %v6599 = vpack.c.b16 %v6115, %v6111
    %v6600 = vpack.c.b16 %v6116, %v6112
    %v6601 = vpack.c.b16 %v6117, %v6113
    %v6602 = vpack.c.b16 %v6118, %v6114
    %v6603 = vpack.c.b16 %v6123, %v6119
    %v6604 = vpack.c.b16 %v6124, %v6120
    %v6605 = vpack.c.b16 %v6125, %v6121
    %v6606 = vpack.c.b16 %v6126, %v6122
    %v6607 = vpack.c.b16 %v6131, %v6127
    %v6608 = vpack.c.b16 %v6132, %v6128
    %v6609 = vpack.c.b16 %v6133, %v6129
    %v6610 = vpack.c.b16 %v6134, %v6130
    %v6611 = vpack.c.b16 %v6139, %v6135
    %v6612 = vpack.c.b16 %v6140, %v6136
    %v6613 = vpack.c.b16 %v6141, %v6137
    %v6614 = vpack.c.b16 %v6142, %v6138
    %v6615 = vpack.c.b16 %v6147, %v6143
    %v6616 = vpack.c.b16 %v6148, %v6144
    %v6617 = vpack.c.b16 %v6149, %v6145
    %v6618 = vpack.c.b16 %v6150, %v6146
    %v6619 = vpack.c.b16 %v6155, %v6151
    %v6620 = vpack.c.b16 %v6156, %v6152
    %v6621 = vpack.c.b16 %v6157, %v6153
    %v6622 = vpack.c.b16 %v6158, %v6154
    %v6623 = vpack.c.b16 %v6163, %v6159
    %v6624 = vpack.c.b16 %v6164, %v6160
    %v6625 = vpack.c.b16 %v6165, %v6161
    %v6626 = vpack.c.b16 %v6166, %v6162
    %v6627 = vpack.c.b16 %v6171, %v6167
    %v6628 = vpack.c.b16 %v6172, %v6168
    %v6629 = vpack.c.b16 %v6173, %v6169
    %v6630 = vpack.c.b16 %v6174, %v6170
    %v6631 = vpack.c.b16 %v6179, %v6175
    %v6632 = vpack.c.b16 %v6180, %v6176
    %v6633 = vpack.c.b16 %v6181, %v6177
    %v6634 = vpack.c.b16 %v6182, %v6178
    %v6635 = vpack.c.b16 %v6187, %v6183
    %v6636 = vpack.c.b16 %v6188, %v6184
    %v6637 = vpack.c.b16 %v6189, %v6185
    %v6638 = vpack.c.b16 %v6190, %v6186
    %v6639 = vpack.c.b16 %v6195, %v6191
    %v6640 = vpack.c.b16 %v6196, %v6192
    %v6641 = vpack.c.b16 %v6197, %v6193
    %v6642 = vpack.c.b16 %v6198, %v6194
    %v6643 = vpack.c.b16 %v6203, %v6199
    %v6644 = vpack.c.b16 %v6204, %v6200
    %v6645 = vpack.c.b16 %v6205, %v6201
    %v6646 = vpack.c.b16 %v6206, %v6202
    %v6647 = vpack.c.b16 %v6211, %v6207
    %v6648 = vpack.c.b16 %v6212, %v6208
    %v6649 = vpack.c.b16 %v6213, %v6209
    %v6650 = vpack.c.b16 %v6214, %v6210
    %v6651 = vpack.c.b16 %v6219, %v6215
    %v6652 = vpack.c.b16 %v6220, %v6216
    %v6653 = vpack.c.b16 %v6221, %v6217
    %v6654 = vpack.c.b16 %v6222, %v6218
    %v6655 = vpack.c.b16 %v6227, %v6223
    %v6656 = vpack.c.b16 %v6228, %v6224
    %v6657 = vpack.c.b16 %v6229, %v6225
    %v6658 = vpack.c.b16 %v6230, %v6226
    %v6659 = vpack.c.b16 %v6235, %v6231
    %v6660 = vpack.c.b16 %v6236, %v6232
    %v6661 = vpack.c.b16 %v6237, %v6233
    %v6662 = vpack.c.b16 %v6238, %v6234
    %v6663 = vpack.c.b16 %v6243, %v6239
    %v6664 = vpack.c.b16 %v6244, %v6240
    %v6665 = vpack.c.b16 %v6245, %v6241
    %v6666 = vpack.c.b16 %v6246, %v6242
    %v6667 = vpack.c.b16 %v6251, %v6247
    %v6668 = vpack.c.b16 %v6252, %v6248
    %v6669 = vpack.c.b16 %v6253, %v6249
    %v6670 = vpack.c.b16 %v6254, %v6250
    %v6671 = vpack.c.b16 %v6259, %v6255
    %v6672 = vpack.c.b16 %v6260, %v6256
    %v6673 = vpack.c.b16 %v6261, %v6257
    %v6674 = vpack.c.b16 %v6262, %v6258
    %v6675 = vpack.c.b16 %v6267, %v6263
    %v6676 = vpack.c.b16 %v6268, %v6264
    %v6677 = vpack.c.b16 %v6269, %v6265
    %v6678 = vpack.c.b16 %v6270, %v6266
    %v6679 = vpack.c.b16 %v6275, %v6271
    %v6680 = vpack.c.b16 %v6276, %v6272
    %v6681 = vpack.c.b16 %v6277, %v6273
    %v6682 = vpack.c.b16 %v6278, %v6274
    %v6683 = vpack.c.b16 %v6283, %v6279
    %v6684 = vpack.c.b16 %v6284, %v6280
    %v6685 = vpack.c.b16 %v6285, %v6281
    %v6686 = vpack.c.b16 %v6286, %v6282
    %v6687 = vpack.c.b16 %v6291, %v6287
    %v6688 = vpack.c.b16 %v6292, %v6288
    %v6689 = vpack.c.b16 %v6293, %v6289
    %v6690 = vpack.c.b16 %v6294, %v6290
    %v6691 = vpack.c.b16 %v6299, %v6295
    %v6692 = vpack.c.b16 %v6300, %v6296
    %v6693 = vpack.c.b16 %v6301, %v6297
    %v6694 = vpack.c.b16 %v6302, %v6298
    %v6695 = vpack.c.b16 %v6307, %v6303
    %v6696 = vpack.c.b16 %v6308, %v6304
    %v6697 = vpack.c.b16 %v6309, %v6305
    %v6698 = vpack.c.b16 %v6310, %v6306
    %v6699 = vpack.c.b16 %v6315, %v6311
    %v6700 = vpack.c.b16 %v6316, %v6312
    %v6701 = vpack.c.b16 %v6317, %v6313
    %v6702 = vpack.c.b16 %v6318, %v6314
    %v6703 = vpack.c.b16 %v6323, %v6319
    %v6704 = vpack.c.b16 %v6324, %v6320
    %v6705 = vpack.c.b16 %v6325, %v6321
    %v6706 = vpack.c.b16 %v6326, %v6322
    %v6707 = vpack.c.b16 %v6331, %v6327
    %v6708 = vpack.c.b16 %v6332, %v6328
    %v6709 = vpack.c.b16 %v6333, %v6329
    %v6710 = vpack.c.b16 %v6334, %v6330
    %v6711 = vpack.c.b16 %v6339, %v6335
    %v6712 = vpack.c.b16 %v6340, %v6336
    %v6713 = vpack.c.b16 %v6341, %v6337
    %v6714 = vpack.c.b16 %v6342, %v6338
    %v6715 = vpack.c.b16 %v6347, %v6343
    %v6716 = vpack.c.b16 %v6348, %v6344
    %v6717 = vpack.c.b16 %v6349, %v6345
    %v6718 = vpack.c.b16 %v6350, %v6346
    %v6719 = vpack.c.b16 %v6355, %v6351
    %v6720 = vpack.c.b16 %v6356, %v6352
    %v6721 = vpack.c.b16 %v6357, %v6353
    %v6722 = vpack.c.b16 %v6358, %v6354
    %v6723 = vpack.c.b16 %v6363, %v6359
    %v6724 = vpack.c.b16 %v6364, %v6360
    %v6725 = vpack.c.b16 %v6365, %v6361
    %v6726 = vpack.c.b16 %v6366, %v6362
    %v6727 = vpack.c.b16 %v6371, %v6367
    %v6728 = vpack.c.b16 %v6372, %v6368
    %v6729 = vpack.c.b16 %v6373, %v6369
    %v6730 = vpack.c.b16 %v6374, %v6370
    %v6731 = vpack.c.b16 %v6379, %v6375
    %v6732 = vpack.c.b16 %v6380, %v6376
    %v6733 = vpack.c.b16 %v6381, %v6377
    %v6734 = vpack.c.b16 %v6382, %v6378
    %v6735 = vpack.c.b16 %v6387, %v6383
    %v6736 = vpack.c.b16 %v6388, %v6384
    %v6737 = vpack.c.b16 %v6389, %v6385
    %v6738 = vpack.c.b16 %v6390, %v6386
    %v6739 = vpack.c.b16 %v6395, %v6391
    %v6740 = vpack.c.b16 %v6396, %v6392
    %v6741 = vpack.c.b16 %v6397, %v6393
    %v6742 = vpack.c.b16 %v6398, %v6394
    %v6743 = vpack.c.b16 %v6403, %v6399
    %v6744 = vpack.c.b16 %v6404, %v6400
    %v6745 = vpack.c.b16 %v6405, %v6401
    %v6746 = vpack.c.b16 %v6406, %v6402
    %v6747 = vpack.c.b16 %v6411, %v6407
    %v6748 = vpack.c.b16 %v6412, %v6408
    %v6749 = vpack.c.b16 %v6413, %v6409
    %v6750 = vpack.c.b16 %v6414, %v6410
    %v6751 = vpack.c.b16 %v6419, %v6415
    %v6752 = vpack.c.b16 %v6420, %v6416
    %v6753 = vpack.c.b16 %v6421, %v6417
    %v6754 = vpack.c.b16 %v6422, %v6418
    %v6755 = vpack.c.b16 %v6427, %v6423
    %v6756 = vpack.c.b16 %v6428, %v6424
    %v6757 = vpack.c.b16 %v6429, %v6425
    %v6758 = vpack.c.b16 %v6430, %v6426
    %v6759 = vpack.c.b16 %v6435, %v6431
    %v6760 = vpack.c.b16 %v6436, %v6432
    %v6761 = vpack.c.b16 %v6437, %v6433
    %v6762 = vpack.c.b16 %v6438, %v6434
    %v6763 = vpack.c.b16 %v6443, %v6439
    %v6764 = vpack.c.b16 %v6444, %v6440
    %v6765 = vpack.c.b16 %v6445, %v6441
    %v6766 = vpack.c.b16 %v6446, %v6442
    %v6767 = vpack.c.b16 %v6451, %v6447
    %v6768 = vpack.c.b16 %v6452, %v6448
    %v6769 = vpack.c.b16 %v6453, %v6449
    %v6770 = vpack.c.b16 %v6454, %v6450
    %v6771 = vpack.c.b16 %v6459, %v6455
    %v6772 = vpack.c.b16 %v6460, %v6456
    %v6773 = vpack.c.b16 %v6461, %v6457
    %v6774 = vpack.c.b16 %v6462, %v6458
    %v6775 = vpack.c.b16 %v6467, %v6463
    %v6776 = vpack.c.b16 %v6468, %v6464
    %v6777 = vpack.c.b16 %v6469, %v6465
    %v6778 = vpack.c.b16 %v6470, %v6466
    %v6779 = vpack.c.b16 %v6475, %v6471
    %v6780 = vpack.c.b16 %v6476, %v6472
    %v6781 = vpack.c.b16 %v6477, %v6473
    %v6782 = vpack.c.b16 %v6478, %v6474
    %v6783 = vpack.c.b16 %v6483, %v6479
    %v6784 = vpack.c.b16 %v6484, %v6480
    %v6785 = vpack.c.b16 %v6485, %v6481
    %v6786 = vpack.c.b16 %v6486, %v6482
    %v6787 = vpack.c.b16 %v6491, %v6487
    %v6788 = vpack.c.b16 %v6492, %v6488
    %v6789 = vpack.c.b16 %v6493, %v6489
    %v6790 = vpack.c.b16 %v6494, %v6490
    %v6791 = vpack.c.b16 %v6499, %v6495
    %v6792 = vpack.c.b16 %v6500, %v6496
    %v6793 = vpack.c.b16 %v6501, %v6497
    %v6794 = vpack.c.b16 %v6502, %v6498
    %v6795 = vpack.c.b16 %v6507, %v6503
    %v6796 = vpack.c.b16 %v6508, %v6504
    %v6797 = vpack.c.b16 %v6509, %v6505
    %v6798 = vpack.c.b16 %v6510, %v6506
    %v6799 = vpack.c.b16 %v6515, %v6511
    %v6800 = vpack.c.b16 %v6516, %v6512
    %v6801 = vpack.c.b16 %v6517, %v6513
    %v6802 = vpack.c.b16 %v6518, %v6514
    %v6803 = vpack.c.b16 %v6523, %v6519
    %v6804 = vpack.c.b16 %v6524, %v6520
    %v6805 = vpack.c.b16 %v6525, %v6521
    %v6806 = vpack.c.b16 %v6526, %v6522
    %v6807 = vpack.c.b16 %v6531, %v6527
    %v6808 = vpack.c.b16 %v6532, %v6528
    %v6809 = vpack.c.b16 %v6533, %v6529
    %v6810 = vpack.c.b16 %v6534, %v6530
    %v6811 = vpack.c.b16 %v6539, %v6535
    %v6812 = vpack.c.b16 %v6540, %v6536
    %v6813 = vpack.c.b16 %v6541, %v6537
    %v6814 = vpack.c.b16 %v6542, %v6538
    %v6815 = vpack.c.b16 %v6547, %v6543
    %v6816 = vpack.c.b16 %v6548, %v6544
    %v6817 = vpack.c.b16 %v6549, %v6545
    %v6818 = vpack.c.b16 %v6550, %v6546
    %v6819 = vpack.c.b16 %v6555, %v6551
    %v6820 = vpack.c.b16 %v6556, %v6552
    %v6821 = vpack.c.b16 %v6557, %v6553
    %v6822 = vpack.c.b16 %v6558, %v6554
    %v6823 = vpack.c.b16 %v6563, %v6559
    %v6824 = vpack.c.b16 %v6564, %v6560
    %v6825 = vpack.c.b16 %v6565, %v6561
    %v6826 = vpack.c.b16 %v6566, %v6562
    %v6827 = vpack.c.b16 %v6571, %v6567
    %v6828 = vpack.c.b16 %v6572, %v6568
    %v6829 = vpack.c.b16 %v6573, %v6569
    %v6830 = vpack.c.b16 %v6574, %v6570
    %7087 = vmatprep.subr.bf16.mxu0 %v6576
    %7088 = vmatpush1.bf16.msra.mxu0 %v6575
    %7089 = vmatprep.subr.bf16.mxu0 %v6580
    %7090 = vmatpush1.bf16.msra.mxu0 %v6579
    %7091 = vmatprep.subr.bf16.mxu0 %v6584
    %7092 = vmatpush1.bf16.msra.mxu0 %v6583
    %7093 = vmatprep.subr.bf16.mxu0 %v6588
    %7094 = vmatpush1.bf16.msra.mxu0 %v6587
    %7095 = vmatprep.subr.bf16.mxu0 %v6592
    %7096 = vmatpush1.bf16.msra.mxu0 %v6591
    %7097 = vmatprep.subr.bf16.mxu0 %v6596
    %7098 = vmatpush1.bf16.msra.mxu0 %v6595
    %7099 = vmatprep.subr.bf16.mxu0 %v6600
    %7100 = vmatpush1.bf16.msra.mxu0 %v6599
    %7101 = vmatprep.subr.bf16.mxu0 %v6604
    %7102 = vmatpush1.bf16.msra.mxu0 %v6603
    %7103 = vmatprep.subr.bf16.mxu0 %v6608
    %7104 = vmatpush1.bf16.msra.mxu0 %v6607
    %7105 = vmatprep.subr.bf16.mxu0 %v6612
    %7106 = vmatpush1.bf16.msra.mxu0 %v6611
    %7107 = vmatprep.subr.bf16.mxu0 %v6616
    %7108 = vmatpush1.bf16.msra.mxu0 %v6615
    %7109 = vmatprep.subr.bf16.mxu0 %v6620
    %7110 = vmatpush1.bf16.msra.mxu0 %v6619
    %7111 = vmatprep.subr.bf16.mxu0 %v6624
    %7112 = vmatpush1.bf16.msra.mxu0 %v6623
    %7113 = vmatprep.subr.bf16.mxu0 %v6628
    %7114 = vmatpush1.bf16.msra.mxu0 %v6627
    %7115 = vmatprep.subr.bf16.mxu0 %v6632
    %7116 = vmatpush1.bf16.msra.mxu0 %v6631
    %7117 = vmatprep.subr.bf16.mxu0 %v6636
    %7118 = vmatpush1.bf16.msra.mxu0 %v6635
    %7119 = vmatprep.mubr.bf16.mxu0 %v5522
    %7120 = vmatmul.mubr.bf16.gmra.mrb[0].mxu0 %v5521
    %v7121 = vpop.f32.mrb[0].mxu0
    %v7122 = vadd.f32 %v5790, %v7121
    %v7123 = vpop.f32.mrb[0].mxu0
    %v7124 = vadd.f32 %v5794, %v7123
    %v7125 = vpop.f32.mrb[0].mxu0
    %v7126 = vpop.f32.mrb[0].mxu0
    %7127 = vdwg.mxu0
    %7128 = vmatprep.subr.bf16.mxu0 %v6640
    %7129 = vmatpush1.bf16.msra.mxu0 %v6639
    %7130 = vmatprep.subr.bf16.mxu0 %v6644
    %7131 = vmatpush1.bf16.msra.mxu0 %v6643
    %7132 = vmatprep.subr.bf16.mxu0 %v6648
    %7133 = vmatpush1.bf16.msra.mxu0 %v6647
    %7134 = vmatprep.subr.bf16.mxu0 %v6652
    %7135 = vmatpush1.bf16.msra.mxu0 %v6651
    %7136 = vmatprep.subr.bf16.mxu0 %v6656
    %7137 = vmatpush1.bf16.msra.mxu0 %v6655
    %7138 = vmatprep.subr.bf16.mxu0 %v6660
    %7139 = vmatpush1.bf16.msra.mxu0 %v6659
    %7140 = vmatprep.subr.bf16.mxu0 %v6664
    %7141 = vmatpush1.bf16.msra.mxu0 %v6663
    %7142 = vmatprep.subr.bf16.mxu0 %v6668
    %7143 = vmatpush1.bf16.msra.mxu0 %v6667
    %7144 = vmatprep.subr.bf16.mxu0 %v6672
    %7145 = vmatpush1.bf16.msra.mxu0 %v6671
    %7146 = vmatprep.subr.bf16.mxu0 %v6676
    %7147 = vmatpush1.bf16.msra.mxu0 %v6675
    %7148 = vmatprep.subr.bf16.mxu0 %v6680
    %7149 = vmatpush1.bf16.msra.mxu0 %v6679
    %7150 = vmatprep.subr.bf16.mxu0 %v6684
    %7151 = vmatpush1.bf16.msra.mxu0 %v6683
    %7152 = vmatprep.subr.bf16.mxu0 %v6688
    %7153 = vmatpush1.bf16.msra.mxu0 %v6687
    %7154 = vmatprep.subr.bf16.mxu0 %v6692
    %7155 = vmatpush1.bf16.msra.mxu0 %v6691
    %7156 = vmatprep.subr.bf16.mxu0 %v6696
    %7157 = vmatpush1.bf16.msra.mxu0 %v6695
    %7158 = vmatprep.subr.bf16.mxu0 %v6700
    %7159 = vmatpush1.bf16.msra.mxu0 %v6699
    %7160 = vmatprep.mubr.bf16.mxu0 %v5524
    %7161 = vmatmul.mubr.bf16.gmra.mrb[0].mxu0 %v5523
    %v7162 = vpop.f32.mrb[0].mxu0
    %v7163 = vadd.f32 %v7122, %v7162
    %v7164 = vpop.f32.mrb[0].mxu0
    %v7165 = vadd.f32 %v7124, %v7164
    %v7166 = vpop.f32.mrb[0].mxu0
    %v7167 = vpop.f32.mrb[0].mxu0
    %7168 = vdwg.mxu0
    %7169 = vmatprep.subr.bf16.mxu0 %v6704
    %7170 = vmatpush1.bf16.msra.mxu0 %v6703
    %7171 = vmatprep.subr.bf16.mxu0 %v6708
    %7172 = vmatpush1.bf16.msra.mxu0 %v6707
    %7173 = vmatprep.subr.bf16.mxu0 %v6712
    %7174 = vmatpush1.bf16.msra.mxu0 %v6711
    %7175 = vmatprep.subr.bf16.mxu0 %v6716
    %7176 = vmatpush1.bf16.msra.mxu0 %v6715
    %7177 = vmatprep.subr.bf16.mxu0 %v6720
    %7178 = vmatpush1.bf16.msra.mxu0 %v6719
    %7179 = vmatprep.subr.bf16.mxu0 %v6724
    %7180 = vmatpush1.bf16.msra.mxu0 %v6723
    %7181 = vmatprep.subr.bf16.mxu0 %v6728
    %7182 = vmatpush1.bf16.msra.mxu0 %v6727
    %7183 = vmatprep.subr.bf16.mxu0 %v6732
    %7184 = vmatpush1.bf16.msra.mxu0 %v6731
    %7185 = vmatprep.subr.bf16.mxu0 %v6736
    %7186 = vmatpush1.bf16.msra.mxu0 %v6735
    %7187 = vmatprep.subr.bf16.mxu0 %v6740
    %7188 = vmatpush1.bf16.msra.mxu0 %v6739
    %7189 = vmatprep.subr.bf16.mxu0 %v6744
    %7190 = vmatpush1.bf16.msra.mxu0 %v6743
    %7191 = vmatprep.subr.bf16.mxu0 %v6748
    %7192 = vmatpush1.bf16.msra.mxu0 %v6747
    %7193 = vmatprep.subr.bf16.mxu0 %v6752
    %7194 = vmatpush1.bf16.msra.mxu0 %v6751
    %7195 = vmatprep.subr.bf16.mxu0 %v6756
    %7196 = vmatpush1.bf16.msra.mxu0 %v6755
    %7197 = vmatprep.subr.bf16.mxu0 %v6760
    %7198 = vmatpush1.bf16.msra.mxu0 %v6759
    %7199 = vmatprep.subr.bf16.mxu0 %v6764
    %7200 = vmatpush1.bf16.msra.mxu0 %v6763
    %7201 = vmatprep.mubr.bf16.mxu0 %v5526
    %7202 = vmatmul.mubr.bf16.gmra.mrb[0].mxu0 %v5525
    %v7203 = vpop.f32.mrb[0].mxu0
    %v7204 = vadd.f32 %v7163, %v7203
    %v7205 = vpop.f32.mrb[0].mxu0
    %v7206 = vadd.f32 %v7165, %v7205
    %v7207 = vpop.f32.mrb[0].mxu0
    %v7208 = vpop.f32.mrb[0].mxu0
    %7209 = vdwg.mxu0
    %7210 = vmatprep.subr.bf16.mxu0 %v6768
    %7211 = vmatpush1.bf16.msra.mxu0 %v6767
    %7212 = vmatprep.subr.bf16.mxu0 %v6772
    %7213 = vmatpush1.bf16.msra.mxu0 %v6771
    %7214 = vmatprep.subr.bf16.mxu0 %v6776
    %7215 = vmatpush1.bf16.msra.mxu0 %v6775
    %7216 = vmatprep.subr.bf16.mxu0 %v6780
    %7217 = vmatpush1.bf16.msra.mxu0 %v6779
    %7218 = vmatprep.subr.bf16.mxu0 %v6784
    %7219 = vmatpush1.bf16.msra.mxu0 %v6783
    %7220 = vmatprep.subr.bf16.mxu0 %v6788
    %7221 = vmatpush1.bf16.msra.mxu0 %v6787
    %7222 = vmatprep.subr.bf16.mxu0 %v6792
    %7223 = vmatpush1.bf16.msra.mxu0 %v6791
    %7224 = vmatprep.subr.bf16.mxu0 %v6796
    %7225 = vmatpush1.bf16.msra.mxu0 %v6795
    %7226 = vmatprep.subr.bf16.mxu0 %v6800
    %7227 = vmatpush1.bf16.msra.mxu0 %v6799
    %7228 = vmatprep.subr.bf16.mxu0 %v6804
    %7229 = vmatpush1.bf16.msra.mxu0 %v6803
    %7230 = vmatprep.subr.bf16.mxu0 %v6808
    %7231 = vmatpush1.bf16.msra.mxu0 %v6807
    %7232 = vmatprep.subr.bf16.mxu0 %v6812
    %7233 = vmatpush1.bf16.msra.mxu0 %v6811
    %7234 = vmatprep.subr.bf16.mxu0 %v6816
    %7235 = vmatpush1.bf16.msra.mxu0 %v6815
    %7236 = vmatprep.subr.bf16.mxu0 %v6820
    %7237 = vmatpush1.bf16.msra.mxu0 %v6819
    %7238 = vmatprep.subr.bf16.mxu0 %v6824
    %7239 = vmatpush1.bf16.msra.mxu0 %v6823
    %7240 = vmatprep.subr.bf16.mxu0 %v6828
    %7241 = vmatpush1.bf16.msra.mxu0 %v6827
    %7242 = vmatprep.mubr.bf16.mxu0 %v5528
    %7243 = vmatmul.mubr.bf16.gmra.mrb[0].mxu0 %v5527
    %v7244 = vpop.f32.mrb[0].mxu0
    %v7245 = vadd.f32 %v7204, %v7244
    %v7246 = vpop.f32.mrb[0].mxu0
    %v7247 = vadd.f32 %v7206, %v7246
    %v7248 = vpop.f32.mrb[0].mxu0
    %v7249 = vpop.f32.mrb[0].mxu0
    %7250 = vdwg.mxu0
    %7251 = vmatprep.subr.bf16.mxu0 %v6578
    %7252 = vmatpush1.bf16.msra.mxu0 %v6577
    %7253 = vmatprep.subr.bf16.mxu0 %v6582
    %7254 = vmatpush1.bf16.msra.mxu0 %v6581
    %7255 = vmatprep.subr.bf16.mxu0 %v6586
    %7256 = vmatpush1.bf16.msra.mxu0 %v6585
    %7257 = vmatprep.subr.bf16.mxu0 %v6590
    %7258 = vmatpush1.bf16.msra.mxu0 %v6589
    %7259 = vmatprep.subr.bf16.mxu0 %v6594
    %7260 = vmatpush1.bf16.msra.mxu0 %v6593
    %7261 = vmatprep.subr.bf16.mxu0 %v6598
    %7262 = vmatpush1.bf16.msra.mxu0 %v6597
    %7263 = vmatprep.subr.bf16.mxu0 %v6602
    %7264 = vmatpush1.bf16.msra.mxu0 %v6601
    %7265 = vmatprep.subr.bf16.mxu0 %v6606
    %7266 = vmatpush1.bf16.msra.mxu0 %v6605
    %7267 = vmatprep.subr.bf16.mxu0 %v6610
    %7268 = vmatpush1.bf16.msra.mxu0 %v6609
    %7269 = vmatprep.subr.bf16.mxu0 %v6614
    %7270 = vmatpush1.bf16.msra.mxu0 %v6613
    %7271 = vmatprep.subr.bf16.mxu0 %v6618
    %7272 = vmatpush1.bf16.msra.mxu0 %v6617
    %7273 = vmatprep.subr.bf16.mxu0 %v6622
    %7274 = vmatpush1.bf16.msra.mxu0 %v6621
    %7275 = vmatprep.subr.bf16.mxu0 %v6626
    %7276 = vmatpush1.bf16.msra.mxu0 %v6625
    %7277 = vmatprep.subr.bf16.mxu0 %v6630
    %7278 = vmatpush1.bf16.msra.mxu0 %v6629
    %7279 = vmatprep.subr.bf16.mxu0 %v6634
    %7280 = vmatpush1.bf16.msra.mxu0 %v6633
    %7281 = vmatprep.subr.bf16.mxu0 %v6638
    %7282 = vmatpush1.bf16.msra.mxu0 %v6637
    %7283 = vmatprep.mubr.bf16.mxu0 %v5522
    %7284 = vmatmul.mubr.bf16.gmra.mrb[0].mxu0 %v5521
    %v7285 = vpop.f32.mrb[0].mxu0
    %v7286 = vadd.f32 %v5798, %v7285
    %v7287 = vpop.f32.mrb[0].mxu0
    %v7288 = vadd.f32 %v5802, %v7287
    %v7289 = vpop.f32.mrb[0].mxu0
    %v7290 = vpop.f32.mrb[0].mxu0
    %7291 = vdwg.mxu0
    %7292 = vmatprep.subr.bf16.mxu0 %v6642
    %7293 = vmatpush1.bf16.msra.mxu0 %v6641
    %7294 = vmatprep.subr.bf16.mxu0 %v6646
    %7295 = vmatpush1.bf16.msra.mxu0 %v6645
    %7296 = vmatprep.subr.bf16.mxu0 %v6650
    %7297 = vmatpush1.bf16.msra.mxu0 %v6649
    %7298 = vmatprep.subr.bf16.mxu0 %v6654
    %7299 = vmatpush1.bf16.msra.mxu0 %v6653
    %7300 = vmatprep.subr.bf16.mxu0 %v6658
    %7301 = vmatpush1.bf16.msra.mxu0 %v6657
    %7302 = vmatprep.subr.bf16.mxu0 %v6662
    %7303 = vmatpush1.bf16.msra.mxu0 %v6661
    %7304 = vmatprep.subr.bf16.mxu0 %v6666
    %7305 = vmatpush1.bf16.msra.mxu0 %v6665
    %7306 = vmatprep.subr.bf16.mxu0 %v6670
    %7307 = vmatpush1.bf16.msra.mxu0 %v6669
    %7308 = vmatprep.subr.bf16.mxu0 %v6674
    %7309 = vmatpush1.bf16.msra.mxu0 %v6673
    %7310 = vmatprep.subr.bf16.mxu0 %v6678
    %7311 = vmatpush1.bf16.msra.mxu0 %v6677
    %7312 = vmatprep.subr.bf16.mxu0 %v6682
    %7313 = vmatpush1.bf16.msra.mxu0 %v6681
    %7314 = vmatprep.subr.bf16.mxu0 %v6686
    %7315 = vmatpush1.bf16.msra.mxu0 %v6685
    %7316 = vmatprep.subr.bf16.mxu0 %v6690
    %7317 = vmatpush1.bf16.msra.mxu0 %v6689
    %7318 = vmatprep.subr.bf16.mxu0 %v6694
    %7319 = vmatpush1.bf16.msra.mxu0 %v6693
    %7320 = vmatprep.subr.bf16.mxu0 %v6698
    %7321 = vmatpush1.bf16.msra.mxu0 %v6697
    %7322 = vmatprep.subr.bf16.mxu0 %v6702
    %7323 = vmatpush1.bf16.msra.mxu0 %v6701
    %7324 = vmatprep.mubr.bf16.mxu0 %v5524
    %7325 = vmatmul.mubr.bf16.gmra.mrb[0].mxu0 %v5523
    %v7326 = vpop.f32.mrb[0].mxu0
    %v7327 = vadd.f32 %v7286, %v7326
    %v7328 = vpop.f32.mrb[0].mxu0
    %v7329 = vadd.f32 %v7288, %v7328
    %v7330 = vpop.f32.mrb[0].mxu0
    %v7331 = vpop.f32.mrb[0].mxu0
    %7332 = vdwg.mxu0
    %7333 = vmatprep.subr.bf16.mxu0 %v6706
    %7334 = vmatpush1.bf16.msra.mxu0 %v6705
    %7335 = vmatprep.subr.bf16.mxu0 %v6710
    %7336 = vmatpush1.bf16.msra.mxu0 %v6709
    %7337 = vmatprep.subr.bf16.mxu0 %v6714
    %7338 = vmatpush1.bf16.msra.mxu0 %v6713
    %7339 = vmatprep.subr.bf16.mxu0 %v6718
    %7340 = vmatpush1.bf16.msra.mxu0 %v6717
    %7341 = vmatprep.subr.bf16.mxu0 %v6722
    %7342 = vmatpush1.bf16.msra.mxu0 %v6721
    %7343 = vmatprep.subr.bf16.mxu0 %v6726
    %7344 = vmatpush1.bf16.msra.mxu0 %v6725
    %7345 = vmatprep.subr.bf16.mxu0 %v6730
    %7346 = vmatpush1.bf16.msra.mxu0 %v6729
    %7347 = vmatprep.subr.bf16.mxu0 %v6734
    %7348 = vmatpush1.bf16.msra.mxu0 %v6733
    %7349 = vmatprep.subr.bf16.mxu0 %v6738
    %7350 = vmatpush1.bf16.msra.mxu0 %v6737
    %7351 = vmatprep.subr.bf16.mxu0 %v6742
    %7352 = vmatpush1.bf16.msra.mxu0 %v6741
    %7353 = vmatprep.subr.bf16.mxu0 %v6746
    %7354 = vmatpush1.bf16.msra.mxu0 %v6745
    %7355 = vmatprep.subr.bf16.mxu0 %v6750
    %7356 = vmatpush1.bf16.msra.mxu0 %v6749
    %7357 = vmatprep.subr.bf16.mxu0 %v6754
    %7358 = vmatpush1.bf16.msra.mxu0 %v6753
    %7359 = vmatprep.subr.bf16.mxu0 %v6758
    %7360 = vmatpush1.bf16.msra.mxu0 %v6757
    %7361 = vmatprep.subr.bf16.mxu0 %v6762
    %7362 = vmatpush1.bf16.msra.mxu0 %v6761
    %7363 = vmatprep.subr.bf16.mxu0 %v6766
    %7364 = vmatpush1.bf16.msra.mxu0 %v6765
    %7365 = vmatprep.mubr.bf16.mxu0 %v5526
    %7366 = vmatmul.mubr.bf16.gmra.mrb[0].mxu0 %v5525
    %v7367 = vpop.f32.mrb[0].mxu0
    %v7368 = vadd.f32 %v7327, %v7367
    %v7369 = vpop.f32.mrb[0].mxu0
    %v7370 = vadd.f32 %v7329, %v7369
    %v7371 = vpop.f32.mrb[0].mxu0
    %v7372 = vpop.f32.mrb[0].mxu0
    %7373 = vdwg.mxu0
    %7374 = vmatprep.subr.bf16.mxu0 %v6770
    %7375 = vmatpush1.bf16.msra.mxu0 %v6769
    %7376 = vmatprep.subr.bf16.mxu0 %v6774
    %7377 = vmatpush1.bf16.msra.mxu0 %v6773
    %7378 = vmatprep.subr.bf16.mxu0 %v6778
    %7379 = vmatpush1.bf16.msra.mxu0 %v6777
    %7380 = vmatprep.subr.bf16.mxu0 %v6782
    %7381 = vmatpush1.bf16.msra.mxu0 %v6781
    %7382 = vmatprep.subr.bf16.mxu0 %v6786
    %7383 = vmatpush1.bf16.msra.mxu0 %v6785
    %7384 = vmatprep.subr.bf16.mxu0 %v6790
    %7385 = vmatpush1.bf16.msra.mxu0 %v6789
    %7386 = vmatprep.subr.bf16.mxu0 %v6794
    %7387 = vmatpush1.bf16.msra.mxu0 %v6793
    %7388 = vmatprep.subr.bf16.mxu0 %v6798
    %7389 = vmatpush1.bf16.msra.mxu0 %v6797
    %7390 = vmatprep.subr.bf16.mxu0 %v6802
    %7391 = vmatpush1.bf16.msra.mxu0 %v6801
    %7392 = vmatprep.subr.bf16.mxu0 %v6806
    %7393 = vmatpush1.bf16.msra.mxu0 %v6805
    %7394 = vmatprep.subr.bf16.mxu0 %v6810
    %7395 = vmatpush1.bf16.msra.mxu0 %v6809
    %7396 = vmatprep.subr.bf16.mxu0 %v6814
    %7397 = vmatpush1.bf16.msra.mxu0 %v6813
    %7398 = vmatprep.subr.bf16.mxu0 %v6818
    %7399 = vmatpush1.bf16.msra.mxu0 %v6817
    %7400 = vmatprep.subr.bf16.mxu0 %v6822
    %7401 = vmatpush1.bf16.msra.mxu0 %v6821
    %7402 = vmatprep.subr.bf16.mxu0 %v6826
    %7403 = vmatpush1.bf16.msra.mxu0 %v6825
    %7404 = vmatprep.subr.bf16.mxu0 %v6830
    %7405 = vmatpush1.bf16.msra.mxu0 %v6829
    %7406 = vmatprep.mubr.bf16.mxu0 %v5528
    %7407 = vmatmul.mubr.bf16.gmra.mrb[0].mxu0 %v5527
    %v7408 = vpop.f32.mrb[0].mxu0
    %v7409 = vadd.f32 %v7368, %v7408
    %v7410 = vpop.f32.mrb[0].mxu0
    %v7411 = vadd.f32 %v7370, %v7410
    %v7412 = vpop.f32.mrb[0].mxu0
    %v7413 = vpop.f32.mrb[0].mxu0
    %7414 = vdwg.mxu0
    %v7415 = vmax.f32 %v7245, 0.0
    %v7416 = vmax.f32 %v7247, 0.0
    %v7417 = vmax.f32 %v7409, 0.0
    %v7418 = vmax.f32 %v7411, 0.0
    %v7419 = vpack.c.bf16 %v7415, %v7415
    %v7420 = vpack.c.bf16 %v7416, %v7416
    %v7421 = vpack.c.bf16 %v7417, %v7417
    %v7422 = vpack.c.bf16 %v7418, %v7418
    %v7423 = vld [vmem:[#allocation17] sm:$0xf]
    %v7424 = vld [vmem:[#allocation17 + $0x4] sm:$0xf]
    %v7425 = vld [vmem:[#allocation17 + $0x8] sm:$0xf]
    %v7426 = vld [vmem:[#allocation17 + $0xc] sm:$0xf]
    %v7427 = vld [vmem:[#allocation17 + $0x10] sm:$0xf]
    %v7428 = vld [vmem:[#allocation17 + $0x14] sm:$0xf]
    %v7429 = vld [vmem:[#allocation17 + $0x18] sm:$0xf]
    %v7430 = vld [vmem:[#allocation17 + $0x1c] sm:$0xf]
    %v7431 = vld [vmem:[#allocation17 + $0x20] sm:$0xf]
    %v7432 = vld [vmem:[#allocation17 + $0x24] sm:$0xf]
    %v7433 = vld [vmem:[#allocation17 + $0x28] sm:$0xf]
    %v7434 = vld [vmem:[#allocation17 + $0x2c] sm:$0xf]
    %v7435 = vld [vmem:[#allocation17 + $0x30] sm:$0xf]
    %v7436 = vld [vmem:[#allocation17 + $0x34] sm:$0xf]
    %v7437 = vld [vmem:[#allocation17 + $0x38] sm:$0xf]
    %v7438 = vld [vmem:[#allocation17 + $0x3c] sm:$0xf]
    %v7439 = vld [vmem:[#allocation17 + $0x40] sm:$0xf]
    %v7440 = vld [vmem:[#allocation17 + $0x44] sm:$0xf]
    %v7441 = vld [vmem:[#allocation17 + $0x48] sm:$0xf]
    %v7442 = vld [vmem:[#allocation17 + $0x4c] sm:$0xf]
    %v7443 = vld [vmem:[#allocation17 + $0x50] sm:$0xf]
    %v7444 = vld [vmem:[#allocation17 + $0x54] sm:$0xf]
    %v7445 = vld [vmem:[#allocation17 + $0x58] sm:$0xf]
    %v7446 = vld [vmem:[#allocation17 + $0x5c] sm:$0xf]
    %v7447 = vld [vmem:[#allocation17 + $0x60] sm:$0xf]
    %v7448 = vld [vmem:[#allocation17 + $0x64] sm:$0xf]
    %v7449 = vld [vmem:[#allocation17 + $0x68] sm:$0xf]
    %v7450 = vld [vmem:[#allocation17 + $0x6c] sm:$0xf]
    %v7451 = vld [vmem:[#allocation17 + $0x70] sm:$0xf]
    %v7452 = vld [vmem:[#allocation17 + $0x74] sm:$0xf]
    %v7453 = vld [vmem:[#allocation17 + $0x78] sm:$0xf]
    %v7454 = vld [vmem:[#allocation17 + $0x7c] sm:$0xf]
    %v7455 = vld [vmem:[#allocation17 + $0x80] sm:$0xf]
    %v7456 = vld [vmem:[#allocation17 + $0x84] sm:$0xf]
    %v7457 = vld [vmem:[#allocation17 + $0x88] sm:$0xf]
    %v7458 = vld [vmem:[#allocation17 + $0x8c] sm:$0xf]
    %v7459 = vld [vmem:[#allocation17 + $0x90] sm:$0xf]
    %v7460 = vld [vmem:[#allocation17 + $0x94] sm:$0xf]
    %v7461 = vld [vmem:[#allocation17 + $0x98] sm:$0xf]
    %v7462 = vld [vmem:[#allocation17 + $0x9c] sm:$0xf]
    %v7463 = vld [vmem:[#allocation17 + $0xa0] sm:$0xf]
    %v7464 = vld [vmem:[#allocation17 + $0xa4] sm:$0xf]
    %v7465 = vld [vmem:[#allocation17 + $0xa8] sm:$0xf]
    %v7466 = vld [vmem:[#allocation17 + $0xac] sm:$0xf]
    %v7467 = vld [vmem:[#allocation17 + $0xb0] sm:$0xf]
    %v7468 = vld [vmem:[#allocation17 + $0xb4] sm:$0xf]
    %v7469 = vld [vmem:[#allocation17 + $0xb8] sm:$0xf]
    %v7470 = vld [vmem:[#allocation17 + $0xbc] sm:$0xf]
    %v7471 = vld [vmem:[#allocation17 + $0xc0] sm:$0xf]
    %v7472 = vld [vmem:[#allocation17 + $0xc4] sm:$0xf]
    %v7473 = vld [vmem:[#allocation17 + $0xc8] sm:$0xf]
    %v7474 = vld [vmem:[#allocation17 + $0xcc] sm:$0xf]
    %v7475 = vld [vmem:[#allocation17 + $0xd0] sm:$0xf]
    %v7476 = vld [vmem:[#allocation17 + $0xd4] sm:$0xf]
    %v7477 = vld [vmem:[#allocation17 + $0xd8] sm:$0xf]
    %v7478 = vld [vmem:[#allocation17 + $0xdc] sm:$0xf]
    %v7479 = vld [vmem:[#allocation17 + $0xe0] sm:$0xf]
    %v7480 = vld [vmem:[#allocation17 + $0xe4] sm:$0xf]
    %v7481 = vld [vmem:[#allocation17 + $0xe8] sm:$0xf]
    %v7482 = vld [vmem:[#allocation17 + $0xec] sm:$0xf]
    %v7483 = vld [vmem:[#allocation17 + $0xf0] sm:$0xf]
    %v7484 = vld [vmem:[#allocation17 + $0xf4] sm:$0xf]
    %v7485 = vld [vmem:[#allocation17 + $0xf8] sm:$0xf]
    %v7486 = vld [vmem:[#allocation17 + $0xfc] sm:$0xf]
    %v7487 = vld [vmem:[#allocation19] sm:$0x1]
    %v7489 = vlaneseq
    %v7490 = vshrl.u32 %v7489, 7
    %v7491 = vsub.s32 0, %v7490
    %v7492 = vrot.slane %v7487, %v7491
    %v7558 = vunpack.c.l.b16 %v7423
    %v7559 = vunpack.c.l.b16 %v7424
    %v7560 = vunpack.c.l.b16 %v7425
    %v7561 = vunpack.c.l.b16 %v7426
    %v7562 = vunpack.c.l.b16 %v7427
    %v7563 = vunpack.c.l.b16 %v7428
    %v7564 = vunpack.c.l.b16 %v7429
    %v7565 = vunpack.c.l.b16 %v7430
    %v7566 = vunpack.c.l.b16 %v7431
    %v7567 = vunpack.c.l.b16 %v7432
    %v7568 = vunpack.c.l.b16 %v7433
    %v7569 = vunpack.c.l.b16 %v7434
    %v7570 = vunpack.c.l.b16 %v7435
    %v7571 = vunpack.c.l.b16 %v7436
    %v7572 = vunpack.c.l.b16 %v7437
    %v7573 = vunpack.c.l.b16 %v7438
    %v7574 = vunpack.c.l.b16 %v7439
    %v7575 = vunpack.c.l.b16 %v7440
    %v7576 = vunpack.c.l.b16 %v7441
    %v7577 = vunpack.c.l.b16 %v7442
    %v7578 = vunpack.c.l.b16 %v7443
    %v7579 = vunpack.c.l.b16 %v7444
    %v7580 = vunpack.c.l.b16 %v7445
    %v7581 = vunpack.c.l.b16 %v7446
    %v7582 = vunpack.c.l.b16 %v7447
    %v7583 = vunpack.c.l.b16 %v7448
    %v7584 = vunpack.c.l.b16 %v7449
    %v7585 = vunpack.c.l.b16 %v7450
    %v7586 = vunpack.c.l.b16 %v7451
    %v7587 = vunpack.c.l.b16 %v7452
    %v7588 = vunpack.c.l.b16 %v7453
    %v7589 = vunpack.c.l.b16 %v7454
    %v7590 = vunpack.c.l.b16 %v7455
    %v7591 = vunpack.c.l.b16 %v7456
    %v7592 = vunpack.c.l.b16 %v7457
    %v7593 = vunpack.c.l.b16 %v7458
    %v7594 = vunpack.c.l.b16 %v7459
    %v7595 = vunpack.c.l.b16 %v7460
    %v7596 = vunpack.c.l.b16 %v7461
    %v7597 = vunpack.c.l.b16 %v7462
    %v7598 = vunpack.c.l.b16 %v7463
    %v7599 = vunpack.c.l.b16 %v7464
    %v7600 = vunpack.c.l.b16 %v7465
    %v7601 = vunpack.c.l.b16 %v7466
    %v7602 = vunpack.c.l.b16 %v7467
    %v7603 = vunpack.c.l.b16 %v7468
    %v7604 = vunpack.c.l.b16 %v7469
    %v7605 = vunpack.c.l.b16 %v7470
    %v7606 = vunpack.c.l.b16 %v7471
    %v7607 = vunpack.c.l.b16 %v7472
    %v7608 = vunpack.c.l.b16 %v7473
    %v7609 = vunpack.c.l.b16 %v7474
    %v7610 = vunpack.c.l.b16 %v7475
    %v7611 = vunpack.c.l.b16 %v7476
    %v7612 = vunpack.c.l.b16 %v7477
    %v7613 = vunpack.c.l.b16 %v7478
    %v7614 = vunpack.c.l.b16 %v7479
    %v7615 = vunpack.c.l.b16 %v7480
    %v7616 = vunpack.c.l.b16 %v7481
    %v7617 = vunpack.c.l.b16 %v7482
    %v7618 = vunpack.c.l.b16 %v7483
    %v7619 = vunpack.c.l.b16 %v7484
    %v7620 = vunpack.c.l.b16 %v7485
    %v7621 = vunpack.c.l.b16 %v7486
    %v7622 = vpack.c.b16 %v7559, %v7558
    %v7623 = vpack.c.b16 %v7561, %v7560
    %v7624 = vpack.c.b16 %v7563, %v7562
    %v7625 = vpack.c.b16 %v7565, %v7564
    %v7626 = vpack.c.b16 %v7567, %v7566
    %v7627 = vpack.c.b16 %v7569, %v7568
    %v7628 = vpack.c.b16 %v7571, %v7570
    %v7629 = vpack.c.b16 %v7573, %v7572
    %v7630 = vpack.c.b16 %v7575, %v7574
    %v7631 = vpack.c.b16 %v7577, %v7576
    %v7632 = vpack.c.b16 %v7579, %v7578
    %v7633 = vpack.c.b16 %v7581, %v7580
    %v7634 = vpack.c.b16 %v7583, %v7582
    %v7635 = vpack.c.b16 %v7585, %v7584
    %v7636 = vpack.c.b16 %v7587, %v7586
    %v7637 = vpack.c.b16 %v7589, %v7588
    %v7638 = vpack.c.b16 %v7591, %v7590
    %v7639 = vpack.c.b16 %v7593, %v7592
    %v7640 = vpack.c.b16 %v7595, %v7594
    %v7641 = vpack.c.b16 %v7597, %v7596
    %v7642 = vpack.c.b16 %v7599, %v7598
    %v7643 = vpack.c.b16 %v7601, %v7600
    %v7644 = vpack.c.b16 %v7603, %v7602
    %v7645 = vpack.c.b16 %v7605, %v7604
    %v7646 = vpack.c.b16 %v7607, %v7606
    %v7647 = vpack.c.b16 %v7609, %v7608
    %v7648 = vpack.c.b16 %v7611, %v7610
    %v7649 = vpack.c.b16 %v7613, %v7612
    %v7650 = vpack.c.b16 %v7615, %v7614
    %v7651 = vpack.c.b16 %v7617, %v7616
    %v7652 = vpack.c.b16 %v7619, %v7618
    %v7653 = vpack.c.b16 %v7621, %v7620
    %7686 = vmatprep.subr.bf16.mxu0 0
    %7687 = vmatpush1.bf16.msra.mxu0 %v7622
    %7688 = vmatprep.subr.bf16.mxu0 0
    %7689 = vmatpush1.bf16.msra.mxu0 %v7623
    %7690 = vmatprep.subr.bf16.mxu0 0
    %7691 = vmatpush1.bf16.msra.mxu0 %v7624
    %7692 = vmatprep.subr.bf16.mxu0 0
    %7693 = vmatpush1.bf16.msra.mxu0 %v7625
    %7694 = vmatprep.subr.bf16.mxu0 0
    %7695 = vmatpush1.bf16.msra.mxu0 %v7626
    %7696 = vmatprep.subr.bf16.mxu0 0
    %7697 = vmatpush1.bf16.msra.mxu0 %v7627
    %7698 = vmatprep.subr.bf16.mxu0 0
    %7699 = vmatpush1.bf16.msra.mxu0 %v7628
    %7700 = vmatprep.subr.bf16.mxu0 0
    %7701 = vmatpush1.bf16.msra.mxu0 %v7629
    %7702 = vmatprep.subr.bf16.mxu0 0
    %7703 = vmatpush1.bf16.msra.mxu0 %v7630
    %7704 = vmatprep.subr.bf16.mxu0 0
    %7705 = vmatpush1.bf16.msra.mxu0 %v7631
    %7706 = vmatprep.subr.bf16.mxu0 0
    %7707 = vmatpush1.bf16.msra.mxu0 %v7632
    %7708 = vmatprep.subr.bf16.mxu0 0
    %7709 = vmatpush1.bf16.msra.mxu0 %v7633
    %7710 = vmatprep.subr.bf16.mxu0 0
    %7711 = vmatpush1.bf16.msra.mxu0 %v7634
    %7712 = vmatprep.subr.bf16.mxu0 0
    %7713 = vmatpush1.bf16.msra.mxu0 %v7635
    %7714 = vmatprep.subr.bf16.mxu0 0
    %7715 = vmatpush1.bf16.msra.mxu0 %v7636
    %7716 = vmatprep.subr.bf16.mxu0 0
    %7717 = vmatpush1.bf16.msra.mxu0 %v7637
    %7718 = vmatprep.mubr.bf16.mxu0 %v7420
    %7719 = vmatmul.mubr.bf16.gmra.mrb[0].mxu0 %v7419
    %v7720 = vpop.f32.mrb[0].mxu0
    %v7721 = vadd.f32 %v7492, %v7720
    %v7722 = vpop.f32.mrb[0].mxu0
    %v7723 = vpop.f32.mrb[0].mxu0
    %v7724 = vpop.f32.mrb[0].mxu0
    %7725 = vdwg.mxu0
    %7726 = vmatprep.subr.bf16.mxu0 0
    %7727 = vmatpush1.bf16.msra.mxu0 %v7638
    %7728 = vmatprep.subr.bf16.mxu0 0
    %7729 = vmatpush1.bf16.msra.mxu0 %v7639
    %7730 = vmatprep.subr.bf16.mxu0 0
    %7731 = vmatpush1.bf16.msra.mxu0 %v7640
    %7732 = vmatprep.subr.bf16.mxu0 0
    %7733 = vmatpush1.bf16.msra.mxu0 %v7641
    %7734 = vmatprep.subr.bf16.mxu0 0
    %7735 = vmatpush1.bf16.msra.mxu0 %v7642
    %7736 = vmatprep.subr.bf16.mxu0 0
    %7737 = vmatpush1.bf16.msra.mxu0 %v7643
    %7738 = vmatprep.subr.bf16.mxu0 0
    %7739 = vmatpush1.bf16.msra.mxu0 %v7644
    %7740 = vmatprep.subr.bf16.mxu0 0
    %7741 = vmatpush1.bf16.msra.mxu0 %v7645
    %7742 = vmatprep.subr.bf16.mxu0 0
    %7743 = vmatpush1.bf16.msra.mxu0 %v7646
    %7744 = vmatprep.subr.bf16.mxu0 0
    %7745 = vmatpush1.bf16.msra.mxu0 %v7647
    %7746 = vmatprep.subr.bf16.mxu0 0
    %7747 = vmatpush1.bf16.msra.mxu0 %v7648
    %7748 = vmatprep.subr.bf16.mxu0 0
    %7749 = vmatpush1.bf16.msra.mxu0 %v7649
    %7750 = vmatprep.subr.bf16.mxu0 0
    %7751 = vmatpush1.bf16.msra.mxu0 %v7650
    %7752 = vmatprep.subr.bf16.mxu0 0
    %7753 = vmatpush1.bf16.msra.mxu0 %v7651
    %7754 = vmatprep.subr.bf16.mxu0 0
    %7755 = vmatpush1.bf16.msra.mxu0 %v7652
    %7756 = vmatprep.subr.bf16.mxu0 0
    %7757 = vmatpush1.bf16.msra.mxu0 %v7653
    %7758 = vmatprep.mubr.bf16.mxu0 %v7422
    %7759 = vmatmul.mubr.bf16.gmra.mrb[0].mxu0 %v7421
    %v7760 = vpop.f32.mrb[0].mxu0
    %v7761 = vadd.f32 %v7721, %v7760
    %v7762 = vpop.f32.mrb[0].mxu0
    %v7763 = vpop.f32.mrb[0].mxu0
    %v7764 = vpop.f32.mrb[0].mxu0
    %7765 = vdwg.mxu0
    %7766 = vst [vmem:[#allocation20] sm:$0xff] %v7761
    // Predicated region
    $region98: #{dqn_forward.1} parent=1 // pred_check
      _
    $region99: #{dqn_forward.1} parent=1 // pred_check_branch
      %7768 = sbr.rel (0) target = $region101
    $region100: #{dqn_forward.1} parent=1 // pred_region
      %s7770 = ssub.s32 128, 128
      %7771 = vsyncadd [#allocation4], %s7770
      %s7773 = sshll.u32 [#allocation20], 4
      %s7774 = int_to_ptr.vmem [resolvable:$true] %s7773
      %7776 = dma.vmem_to_hbm [thread:$0]  %s7774, 128, %s13, [#allocation4]
    $region101: #{dqn_forward.1} parent=1 // pred_fallthru
      _
    // Predicated region
    $region102: #{dqn_forward.1} parent=1 // pred_check
      _
    $region103: #{dqn_forward.1} parent=1 // pred_check_branch
      %7778 = sbr.rel (0) target = $region105
    $region104: #{dqn_forward.1} parent=1 // pred_region
      %7779 = dma.done [#allocation4], 128
    $region105: #{dqn_forward.1} parent=1 // pred_fallthru
      _
    %7780 = vsyncpa [#allocation3], 1
    %7781 = vsyncpa [#allocation6], 1
    %7782 = vsyncpa [#allocation9], 1
    %7783 = vsyncpa [#allocation12], 1
    %7784 = vsyncpa [#allocation15], 1
    %7785 = vsyncpa [#allocation18], 1
    %7786 = vsyncpa [#allocation4], 1

</llo_original>
